<compile_context>
chip_gen: v6e
topology: v6e:2x2x1
jax: 0.10.0
libtpu: 0.0.40
codegen_flags: <defaults>
</compile_context>

<pallas_src>
import functools

import jax
import jax.numpy as jnp
from jax import lax
from jax.experimental import pallas as pl
from jax.experimental.pallas import tpu as pltpu


def _round_up(x, m):
    return (x + m - 1) // m * m


def _fused_bottleneck_kernel(x_ref, w1_ref, b1_ref, w2_ref, b2_ref, mask_ref,
                             o_ref, mid_ref, *, hwp, wp, kh, kw, shift,
                             compute_dtype):
    """One image per grid step, both convs fused.

    x_ref   : (1, LP, C1p)       flattened, halo- and channel-padded input
    w1_ref  : (KH*KW, C1p, C2p)  conv1 weights, one (K, N) matmul tile per tap
    b1_ref  : (1, C2p)
    w2_ref  : (KH*KW, C2p, C2p)  conv2 weights
    b2_ref  : (1, C2p)
    mask_ref: (H*Wp, 1)          1.0 on valid columns, 0.0 on row-wrap columns
    o_ref   : (1, H*Wp, C2p)     lane-dense flattened output (wrapper strips wrap cols)
    mid_ref : (LP, C2p) VMEM     zero-padded intermediate activation (stays on-chip)
    """
    cdt = compute_dtype
    taps = [(t // kw) * wp + (t % kw) for t in range(kh * kw)]

    # ---- conv1: each tap is one contiguous sublane-shifted slice -> one MXU matmul
    acc = jnp.zeros((hwp, w1_ref.shape[2]), jnp.float32)
    for t, off in enumerate(taps):
        acc = acc + jnp.dot(x_ref[0, off:off + hwp, :].astype(cdt), w1_ref[t],
                            preferred_element_type=jnp.float32)
    # f32 bias + ReLU epilogue; the mask zeroes the row-wrap columns so they land
    # exactly on the zero-padding positions of the intermediate below.
    mid = jnp.maximum(acc + b1_ref[...], 0.0) * mask_ref[...]

    # ---- intermediate kept in VMEM (fused stages; no HBM round-trip) ----
    mid_ref[...] = jnp.zeros_like(mid_ref)
    mid_ref[shift:shift + hwp, :] = mid.astype(mid_ref.dtype)

    # ---- conv2: same flattened-tap structure over the padded intermediate ----
    acc = jnp.zeros((hwp, w2_ref.shape[2]), jnp.float32)
    for t, off in enumerate(taps):
        acc = acc + jnp.dot(mid_ref[off:off + hwp, :].astype(cdt), w2_ref[t],
                            preferred_element_type=jnp.float32)
    o_ref[0] = jnp.maximum(acc + b2_ref[...], 0.0).astype(o_ref.dtype)


def unet_bottleneck(x_nchw, params, *, compute_dtype=jnp.float32):
    """Forward pass of UnetBottleneck. Input/output in NCHW (PyTorch convention)."""
    N, Cin, H, W = x_nchw.shape
    KH, KW, wcin, planes = params["w1"].shape
    assert wcin == Cin
    assert KH == KW and KH % 2 == 1, "odd kernel_size, dilation=1 only"
    pad = (KH - 1) // 2                      # get_same_padding(k, dilation=1)

    C1p = _round_up(Cin, 128)                # lane-dense input channels
    C2p = _round_up(planes, 128)             # lane-dense output channels
    Hp, Wp = H + 2 * pad, W + 2 * pad
    LP = (Hp + 1) * Wp                       # +1 zero row so every tap slice stays in bounds
    HWp = H * Wp
    shift = pad * (Wp + 1)                   # interior offset inside the padded intermediate

    # NCHW -> NHWC; halo + channel padding as a single pad (one XLA pass); then
    # flatten the spatial dims row-major (free reshape).
    x = jnp.transpose(x_nchw, (0, 2, 3, 1))
    x = jnp.pad(x, ((0, 0), (pad, pad + 1), (pad, pad), (0, C1p - Cin)))
    x_flat = x.reshape(N, LP, C1p)

    w1 = jnp.pad(params["w1"], ((0, 0), (0, 0), (0, C1p - Cin), (0, C2p - planes)))
    w1 = w1.reshape(KH * KW, C1p, C2p).astype(compute_dtype)
    w2 = jnp.pad(params["w2"], ((0, 0), (0, 0), (0, C2p - planes), (0, C2p - planes)))
    w2 = w2.reshape(KH * KW, C2p, C2p).astype(compute_dtype)
    b1 = jnp.pad(params["b1"], (0, C2p - planes)).reshape(1, C2p).astype(jnp.float32)
    b2 = jnp.pad(params["b2"], (0, C2p - planes)).reshape(1, C2p).astype(jnp.float32)
    mask = ((jnp.arange(HWp) % Wp) < W).astype(jnp.float32).reshape(HWp, 1)

    kernel = functools.partial(
        _fused_bottleneck_kernel, hwp=HWp, wp=Wp, kh=KH, kw=KW, shift=shift,
        compute_dtype=compute_dtype)

    out_flat = pl.pallas_call(
        kernel,
        out_shape=jax.ShapeDtypeStruct((N, HWp, C2p), x_nchw.dtype),
        grid_spec=pltpu.PrefetchScalarGridSpec(
            num_scalar_prefetch=0,
            grid=(N,),
            in_specs=[
                pl.BlockSpec((1, LP, C1p), lambda n: (n, 0, 0)),
                pl.BlockSpec((KH * KW, C1p, C2p), lambda n: (0, 0, 0)),
                pl.BlockSpec((1, C2p), lambda n: (0, 0)),
                pl.BlockSpec((KH * KW, C2p, C2p), lambda n: (0, 0, 0)),
                pl.BlockSpec((1, C2p), lambda n: (0, 0)),
                pl.BlockSpec((HWp, 1), lambda n: (0, 0)),
            ],
            out_specs=pl.BlockSpec((1, HWp, C2p), lambda n: (n, 0, 0)),
            scratch_shapes=[pltpu.VMEM((LP, C2p), jnp.float32)],
        ),
        compiler_params=pltpu.CompilerParams(
            dimension_semantics=("parallel",),        # v7x: shard batch across 2 TCs
            vmem_limit_bytes=32 * 1024 * 1024,        # >= v5e's 16 MiB scoped default
        ),
    )(x_flat, w1, b1, w2, b2, mask)

    # Strip row-wrap columns + channel padding, back to NCHW.
    out = out_flat.reshape(N, H, Wp, C2p)[:, :, :W, :planes]
    return jnp.transpose(out, (0, 3, 1, 2))


def init_params(key, inplanes, planes, kernel_size=3, dtype=jnp.float32):
    k1, k2, k3, k4 = jax.random.split(key, 4)
    s1 = (2.0 / (inplanes * kernel_size * kernel_size)) ** 0.5
    s2 = (2.0 / (planes * kernel_size * kernel_size)) ** 0.5
    return {
        "w1": jax.random.normal(k1, (kernel_size, kernel_size, inplanes, planes), dtype) * s1,
        "b1": jax.random.normal(k2, (planes,), dtype) * 0.01,
        "w2": jax.random.normal(k3, (kernel_size, kernel_size, planes, planes), dtype) * s2,
        "b2": jax.random.normal(k4, (planes,), dtype) * 0.01,
    }


def _reference(x_nchw, params):
    """Pure-JAX reference (lax.conv) for correctness checking."""
    x = jnp.transpose(x_nchw, (0, 2, 3, 1))
    dn = ("NHWC", "HWIO", "NHWC")
    out = lax.conv_general_dilated(x, params["w1"], (1, 1), "SAME", dimension_numbers=dn)
    out = jnp.maximum(out + params["b1"], 0.0)
    out = lax.conv_general_dilated(out, params["w2"], (1, 1), "SAME", dimension_numbers=dn)
    out = jnp.maximum(out + params["b2"], 0.0)
    return jnp.transpose(out, (0, 3, 1, 2))


if __name__ == "__main__":
    key = jax.random.PRNGKey(0)
    kx, kp = jax.random.split(key)

    N, inplanes, planes, H, W = 2, 4, 8, 16, 16
    x = jax.random.normal(kx, (N, inplanes, H, W), jnp.float32)  # NCHW like PyTorch
    params = init_params(kp, inplanes, planes)

    ref = jax.block_until_ready(_reference(x, params))

    # f32 path: exact check against the lax.conv reference.
    out = jax.block_until_ready(jax.jit(unet_bottleneck)(x, params))
    assert out.shape == (N, planes, H, W), out.shape
    assert jnp.allclose(out, ref, atol=1e-4, rtol=1e-4), "f32 mismatch vs reference conv"

    # bf16 MXU path: bf16 matmul operands, f32 accumulation/epilogue (loose check).
    out_bf16 = jax.block_until_ready(
        jax.jit(functools.partial(unet_bottleneck, compute_dtype=jnp.bfloat16))(x, params))
    assert out_bf16.shape == (N, planes, H, W), out_bf16.shape
    assert jnp.allclose(out_bf16, ref, atol=2e-1, rtol=2e-1), "bf16 mismatch vs reference conv"

    print("KERNEL_OK")
</pallas_src>

<mosaic_0001>
module attributes {stable_mosaic.version = 11 : i64} {
  func.func @_fused_bottleneck_kernel(%arg0: i32, %arg1: memref<1x342x128xf32, #tpu.memory_space<vmem>>, %arg2: memref<9x128x128xf32, #tpu.memory_space<vmem>>, %arg3: memref<1x128xf32, #tpu.memory_space<vmem>>, %arg4: memref<9x128x128xf32, #tpu.memory_space<vmem>>, %arg5: memref<1x128xf32, #tpu.memory_space<vmem>>, %arg6: memref<288x1xf32, #tpu.memory_space<vmem>>, %arg7: memref<1x288x128xf32, #tpu.memory_space<vmem>>, %arg8: memref<342x128xf32, #tpu.memory_space<vmem>>) attributes {dimension_semantics = [#tpu.dimension_semantics<parallel>], iteration_bounds = array<i64: 2>, scalar_prefetch = 0 : i64, scratch_operands = 1 : i64, tpu.core_type = #tpu.core_type<tc>, window_params = [{transform_indices = @transform_0, window_bounds = array<i64: 1, 342, 128>}, {pipeline_mode = #tpu.pipeline_mode<synchronous>, transform_indices = @transform_1, window_bounds = array<i64: 9, 128, 128>}, {pipeline_mode = #tpu.pipeline_mode<synchronous>, transform_indices = @transform_2, window_bounds = array<i64: 1, 128>}, {pipeline_mode = #tpu.pipeline_mode<synchronous>, transform_indices = @transform_3, window_bounds = array<i64: 9, 128, 128>}, {pipeline_mode = #tpu.pipeline_mode<synchronous>, transform_indices = @transform_4, window_bounds = array<i64: 1, 128>}, {pipeline_mode = #tpu.pipeline_mode<synchronous>, transform_indices = @transform_5, window_bounds = array<i64: 288, 1>}, {transform_indices = @transform_6, window_bounds = array<i64: 1, 288, 128>}]} {
    %cst = arith.constant 0.000000e+00 : f32
    %0 = vector.broadcast %cst : f32 to vector<288x128xf32>
    %c0 = arith.constant 0 : index
    %c0_0 = arith.constant 0 : index
    %c0_1 = arith.constant 0 : index
    %1 = vector.load %arg1[%c0, %c0_0, %c0_1] : memref<1x342x128xf32, #tpu.memory_space<vmem>>, vector<1x288x128xf32>
    %2 = vector.shape_cast %1 : vector<1x288x128xf32> to vector<288x128xf32>
    %c0_2 = arith.constant 0 : index
    %c0_3 = arith.constant 0 : index
    %c0_4 = arith.constant 0 : index
    %3 = vector.load %arg2[%c0_2, %c0_3, %c0_4] : memref<9x128x128xf32, #tpu.memory_space<vmem>>, vector<1x128x128xf32>
    %4 = vector.shape_cast %3 : vector<1x128x128xf32> to vector<128x128xf32>
    %cst_5 = arith.constant dense<0.000000e+00> : vector<288x128xf32>
    %5 = tpu.matmul %2, %4, %cst_5 {dimension_numbers = #tpu.dot_dimension_numbers<[1], [0], [0], [1], [0, 0, 1, 1], [], []>} : vector<288x128xf32>, vector<128x128xf32>, vector<288x128xf32> -> vector<288x128xf32>
    %6 = arith.addf %0, %5 : vector<288x128xf32>
    %c0_6 = arith.constant 0 : index
    %c1 = arith.constant 1 : index
    %c0_7 = arith.constant 0 : index
    %7 = vector.load %arg1[%c0_6, %c1, %c0_7] : memref<1x342x128xf32, #tpu.memory_space<vmem>>, vector<1x288x128xf32>
    %8 = vector.shape_cast %7 : vector<1x288x128xf32> to vector<288x128xf32>
    %c1_8 = arith.constant 1 : index
    %c0_9 = arith.constant 0 : index
    %c0_10 = arith.constant 0 : index
    %9 = vector.load %arg2[%c1_8, %c0_9, %c0_10] : memref<9x128x128xf32, #tpu.memory_space<vmem>>, vector<1x128x128xf32>
    %10 = vector.shape_cast %9 : vector<1x128x128xf32> to vector<128x128xf32>
    %cst_11 = arith.constant dense<0.000000e+00> : vector<288x128xf32>
    %11 = tpu.matmul %8, %10, %cst_11 {dimension_numbers = #tpu.dot_dimension_numbers<[1], [0], [0], [1], [0, 0, 1, 1], [], []>} : vector<288x128xf32>, vector<128x128xf32>, vector<288x128xf32> -> vector<288x128xf32>
    %12 = arith.addf %6, %11 : vector<288x128xf32>
    %c0_12 = arith.constant 0 : index
    %c2 = arith.constant 2 : index
    %c0_13 = arith.constant 0 : index
    %13 = vector.load %arg1[%c0_12, %c2, %c0_13] : memref<1x342x128xf32, #tpu.memory_space<vmem>>, vector<1x288x128xf32>
    %14 = vector.shape_cast %13 : vector<1x288x128xf32> to vector<288x128xf32>
    %c2_14 = arith.constant 2 : index
    %c0_15 = arith.constant 0 : index
    %c0_16 = arith.constant 0 : index
    %15 = vector.load %arg2[%c2_14, %c0_15, %c0_16] : memref<9x128x128xf32, #tpu.memory_space<vmem>>, vector<1x128x128xf32>
    %16 = vector.shape_cast %15 : vector<1x128x128xf32> to vector<128x128xf32>
    %cst_17 = arith.constant dense<0.000000e+00> : vector<288x128xf32>
    %17 = tpu.matmul %14, %16, %cst_17 {dimension_numbers = #tpu.dot_dimension_numbers<[1], [0], [0], [1], [0, 0, 1, 1], [], []>} : vector<288x128xf32>, vector<128x128xf32>, vector<288x128xf32> -> vector<288x128xf32>
    %18 = arith.addf %12, %17 : vector<288x128xf32>
    %c0_18 = arith.constant 0 : index
    %c18 = arith.constant 18 : index
    %c0_19 = arith.constant 0 : index
    %19 = vector.load %arg1[%c0_18, %c18, %c0_19] : memref<1x342x128xf32, #tpu.memory_space<vmem>>, vector<1x288x128xf32>
    %20 = vector.shape_cast %19 : vector<1x288x128xf32> to vector<288x128xf32>
    %c3 = arith.constant 3 : index
    %c0_20 = arith.constant 0 : index
    %c0_21 = arith.constant 0 : index
    %21 = vector.load %arg2[%c3, %c0_20, %c0_21] : memref<9x128x128xf32, #tpu.memory_space<vmem>>, vector<1x128x128xf32>
    %22 = vector.shape_cast %21 : vector<1x128x128xf32> to vector<128x128xf32>
    %cst_22 = arith.constant dense<0.000000e+00> : vector<288x128xf32>
    %23 = tpu.matmul %20, %22, %cst_22 {dimension_numbers = #tpu.dot_dimension_numbers<[1], [0], [0], [1], [0, 0, 1, 1], [], []>} : vector<288x128xf32>, vector<128x128xf32>, vector<288x128xf32> -> vector<288x128xf32>
    %24 = arith.addf %18, %23 : vector<288x128xf32>
    %c0_23 = arith.constant 0 : index
    %c19 = arith.constant 19 : index
    %c0_24 = arith.constant 0 : index
    %25 = vector.load %arg1[%c0_23, %c19, %c0_24] : memref<1x342x128xf32, #tpu.memory_space<vmem>>, vector<1x288x128xf32>
    %26 = vector.shape_cast %25 : vector<1x288x128xf32> to vector<288x128xf32>
    %c4 = arith.constant 4 : index
    %c0_25 = arith.constant 0 : index
    %c0_26 = arith.constant 0 : index
    %27 = vector.load %arg2[%c4, %c0_25, %c0_26] : memref<9x128x128xf32, #tpu.memory_space<vmem>>, vector<1x128x128xf32>
    %28 = vector.shape_cast %27 : vector<1x128x128xf32> to vector<128x128xf32>
    %cst_27 = arith.constant dense<0.000000e+00> : vector<288x128xf32>
    %29 = tpu.matmul %26, %28, %cst_27 {dimension_numbers = #tpu.dot_dimension_numbers<[1], [0], [0], [1], [0, 0, 1, 1], [], []>} : vector<288x128xf32>, vector<128x128xf32>, vector<288x128xf32> -> vector<288x128xf32>
    %30 = arith.addf %24, %29 : vector<288x128xf32>
    %c0_28 = arith.constant 0 : index
    %c20 = arith.constant 20 : index
    %c0_29 = arith.constant 0 : index
    %31 = vector.load %arg1[%c0_28, %c20, %c0_29] : memref<1x342x128xf32, #tpu.memory_space<vmem>>, vector<1x288x128xf32>
    %32 = vector.shape_cast %31 : vector<1x288x128xf32> to vector<288x128xf32>
    %c5 = arith.constant 5 : index
    %c0_30 = arith.constant 0 : index
    %c0_31 = arith.constant 0 : index
    %33 = vector.load %arg2[%c5, %c0_30, %c0_31] : memref<9x128x128xf32, #tpu.memory_space<vmem>>, vector<1x128x128xf32>
    %34 = vector.shape_cast %33 : vector<1x128x128xf32> to vector<128x128xf32>
    %cst_32 = arith.constant dense<0.000000e+00> : vector<288x128xf32>
    %35 = tpu.matmul %32, %34, %cst_32 {dimension_numbers = #tpu.dot_dimension_numbers<[1], [0], [0], [1], [0, 0, 1, 1], [], []>} : vector<288x128xf32>, vector<128x128xf32>, vector<288x128xf32> -> vector<288x128xf32>
    %36 = arith.addf %30, %35 : vector<288x128xf32>
    %c0_33 = arith.constant 0 : index
    %c36 = arith.constant 36 : index
    %c0_34 = arith.constant 0 : index
    %37 = vector.load %arg1[%c0_33, %c36, %c0_34] : memref<1x342x128xf32, #tpu.memory_space<vmem>>, vector<1x288x128xf32>
    %38 = vector.shape_cast %37 : vector<1x288x128xf32> to vector<288x128xf32>
    %c6 = arith.constant 6 : index
    %c0_35 = arith.constant 0 : index
    %c0_36 = arith.constant 0 : index
    %39 = vector.load %arg2[%c6, %c0_35, %c0_36] : memref<9x128x128xf32, #tpu.memory_space<vmem>>, vector<1x128x128xf32>
    %40 = vector.shape_cast %39 : vector<1x128x128xf32> to vector<128x128xf32>
    %cst_37 = arith.constant dense<0.000000e+00> : vector<288x128xf32>
    %41 = tpu.matmul %38, %40, %cst_37 {dimension_numbers = #tpu.dot_dimension_numbers<[1], [0], [0], [1], [0, 0, 1, 1], [], []>} : vector<288x128xf32>, vector<128x128xf32>, vector<288x128xf32> -> vector<288x128xf32>
    %42 = arith.addf %36, %41 : vector<288x128xf32>
    %c0_38 = arith.constant 0 : index
    %c37 = arith.constant 37 : index
    %c0_39 = arith.constant 0 : index
    %43 = vector.load %arg1[%c0_38, %c37, %c0_39] : memref<1x342x128xf32, #tpu.memory_space<vmem>>, vector<1x288x128xf32>
    %44 = vector.shape_cast %43 : vector<1x288x128xf32> to vector<288x128xf32>
    %c7 = arith.constant 7 : index
    %c0_40 = arith.constant 0 : index
    %c0_41 = arith.constant 0 : index
    %45 = vector.load %arg2[%c7, %c0_40, %c0_41] : memref<9x128x128xf32, #tpu.memory_space<vmem>>, vector<1x128x128xf32>
    %46 = vector.shape_cast %45 : vector<1x128x128xf32> to vector<128x128xf32>
    %cst_42 = arith.constant dense<0.000000e+00> : vector<288x128xf32>
    %47 = tpu.matmul %44, %46, %cst_42 {dimension_numbers = #tpu.dot_dimension_numbers<[1], [0], [0], [1], [0, 0, 1, 1], [], []>} : vector<288x128xf32>, vector<128x128xf32>, vector<288x128xf32> -> vector<288x128xf32>
    %48 = arith.addf %42, %47 : vector<288x128xf32>
    %c0_43 = arith.constant 0 : index
    %c38 = arith.constant 38 : index
    %c0_44 = arith.constant 0 : index
    %49 = vector.load %arg1[%c0_43, %c38, %c0_44] : memref<1x342x128xf32, #tpu.memory_space<vmem>>, vector<1x288x128xf32>
    %50 = vector.shape_cast %49 : vector<1x288x128xf32> to vector<288x128xf32>
    %c8 = arith.constant 8 : index
    %c0_45 = arith.constant 0 : index
    %c0_46 = arith.constant 0 : index
    %51 = vector.load %arg2[%c8, %c0_45, %c0_46] : memref<9x128x128xf32, #tpu.memory_space<vmem>>, vector<1x128x128xf32>
    %52 = vector.shape_cast %51 : vector<1x128x128xf32> to vector<128x128xf32>
    %cst_47 = arith.constant dense<0.000000e+00> : vector<288x128xf32>
    %53 = tpu.matmul %50, %52, %cst_47 {dimension_numbers = #tpu.dot_dimension_numbers<[1], [0], [0], [1], [0, 0, 1, 1], [], []>} : vector<288x128xf32>, vector<128x128xf32>, vector<288x128xf32> -> vector<288x128xf32>
    %54 = arith.addf %48, %53 : vector<288x128xf32>
    %c0_48 = arith.constant 0 : index
    %c0_49 = arith.constant 0 : index
    %55 = vector.load %arg3[%c0_48, %c0_49] : memref<1x128xf32, #tpu.memory_space<vmem>>, vector<1x128xf32>
    %56 = vector.broadcast %55 : vector<1x128xf32> to vector<288x128xf32>
    %57 = arith.addf %54, %56 : vector<288x128xf32>
    %cst_50 = arith.constant 0.000000e+00 : f32
    %58 = vector.broadcast %cst_50 : f32 to vector<288x128xf32>
    %59 = arith.maximumf %57, %58 : vector<288x128xf32>
    %c0_51 = arith.constant 0 : index
    %c0_52 = arith.constant 0 : index
    %60 = vector.load %arg6[%c0_51, %c0_52] : memref<288x1xf32, #tpu.memory_space<vmem>>, vector<288x1xf32>
    %61 = vector.broadcast %60 : vector<288x1xf32> to vector<288x128xf32>
    %62 = arith.mulf %59, %61 : vector<288x128xf32>
    %cst_53 = arith.constant 0.000000e+00 : f32
    %63 = vector.broadcast %cst_53 : f32 to vector<342x128xf32>
    %c0_54 = arith.constant 0 : index
    %c0_55 = arith.constant 0 : index
    %64 = vector.load %arg8[%c0_54, %c0_55] : memref<342x128xf32, #tpu.memory_space<vmem>>, vector<342x128xf32>
    tpu.vector_store %arg8[%c0_54, %c0_55], %63 {strides = array<i32>} : memref<342x128xf32, #tpu.memory_space<vmem>>, vector<342x128xf32>,
    %c19_56 = arith.constant 19 : index
    %c0_57 = arith.constant 0 : index
    %65 = vector.load %arg8[%c19_56, %c0_57] : memref<342x128xf32, #tpu.memory_space<vmem>>, vector<288x128xf32>
    tpu.vector_store %arg8[%c19_56, %c0_57], %62 {strides = array<i32>} : memref<342x128xf32, #tpu.memory_space<vmem>>, vector<288x128xf32>,
    %cst_58 = arith.constant 0.000000e+00 : f32
    %66 = vector.broadcast %cst_58 : f32 to vector<288x128xf32>
    %c0_59 = arith.constant 0 : index
    %c0_60 = arith.constant 0 : index
    %67 = vector.load %arg8[%c0_59, %c0_60] : memref<342x128xf32, #tpu.memory_space<vmem>>, vector<288x128xf32>
    %c0_61 = arith.constant 0 : index
    %c0_62 = arith.constant 0 : index
    %c0_63 = arith.constant 0 : index
    %68 = vector.load %arg4[%c0_61, %c0_62, %c0_63] : memref<9x128x128xf32, #tpu.memory_space<vmem>>, vector<1x128x128xf32>
    %69 = vector.shape_cast %68 : vector<1x128x128xf32> to vector<128x128xf32>
    %cst_64 = arith.constant dense<0.000000e+00> : vector<288x128xf32>
    %70 = tpu.matmul %67, %69, %cst_64 {dimension_numbers = #tpu.dot_dimension_numbers<[1], [0], [0], [1], [0, 0, 1, 1], [], []>} : vector<288x128xf32>, vector<128x128xf32>, vector<288x128xf32> -> vector<288x128xf32>
    %71 = arith.addf %66, %70 : vector<288x128xf32>
    %c1_65 = arith.constant 1 : index
    %c0_66 = arith.constant 0 : index
    %72 = vector.load %arg8[%c1_65, %c0_66] : memref<342x128xf32, #tpu.memory_space<vmem>>, vector<288x128xf32>
    %c1_67 = arith.constant 1 : index
    %c0_68 = arith.constant 0 : index
    %c0_69 = arith.constant 0 : index
    %73 = vector.load %arg4[%c1_67, %c0_68, %c0_69] : memref<9x128x128xf32, #tpu.memory_space<vmem>>, vector<1x128x128xf32>
    %74 = vector.shape_cast %73 : vector<1x128x128xf32> to vector<128x128xf32>
    %cst_70 = arith.constant dense<0.000000e+00> : vector<288x128xf32>
    %75 = tpu.matmul %72, %74, %cst_70 {dimension_numbers = #tpu.dot_dimension_numbers<[1], [0], [0], [1], [0, 0, 1, 1], [], []>} : vector<288x128xf32>, vector<128x128xf32>, vector<288x128xf32> -> vector<288x128xf32>
    %76 = arith.addf %71, %75 : vector<288x128xf32>
    %c2_71 = arith.constant 2 : index
    %c0_72 = arith.constant 0 : index
    %77 = vector.load %arg8[%c2_71, %c0_72] : memref<342x128xf32, #tpu.memory_space<vmem>>, vector<288x128xf32>
    %c2_73 = arith.constant 2 : index
    %c0_74 = arith.constant 0 : index
    %c0_75 = arith.constant 0 : index
    %78 = vector.load %arg4[%c2_73, %c0_74, %c0_75] : memref<9x128x128xf32, #tpu.memory_space<vmem>>, vector<1x128x128xf32>
    %79 = vector.shape_cast %78 : vector<1x128x128xf32> to vector<128x128xf32>
    %cst_76 = arith.constant dense<0.000000e+00> : vector<288x128xf32>
    %80 = tpu.matmul %77, %79, %cst_76 {dimension_numbers = #tpu.dot_dimension_numbers<[1], [0], [0], [1], [0, 0, 1, 1], [], []>} : vector<288x128xf32>, vector<128x128xf32>, vector<288x128xf32> -> vector<288x128xf32>
    %81 = arith.addf %76, %80 : vector<288x128xf32>
    %c18_77 = arith.constant 18 : index
    %c0_78 = arith.constant 0 : index
    %82 = vector.load %arg8[%c18_77, %c0_78] : memref<342x128xf32, #tpu.memory_space<vmem>>, vector<288x128xf32>
    %c3_79 = arith.constant 3 : index
    %c0_80 = arith.constant 0 : index
    %c0_81 = arith.constant 0 : index
    %83 = vector.load %arg4[%c3_79, %c0_80, %c0_81] : memref<9x128x128xf32, #tpu.memory_space<vmem>>, vector<1x128x128xf32>
    %84 = vector.shape_cast %83 : vector<1x128x128xf32> to vector<128x128xf32>
    %cst_82 = arith.constant dense<0.000000e+00> : vector<288x128xf32>
    %85 = tpu.matmul %82, %84, %cst_82 {dimension_numbers = #tpu.dot_dimension_numbers<[1], [0], [0], [1], [0, 0, 1, 1], [], []>} : vector<288x128xf32>, vector<128x128xf32>, vector<288x128xf32> -> vector<288x128xf32>
    %86 = arith.addf %81, %85 : vector<288x128xf32>
    %c19_83 = arith.constant 19 : index
    %c0_84 = arith.constant 0 : index
    %87 = vector.load %arg8[%c19_83, %c0_84] : memref<342x128xf32, #tpu.memory_space<vmem>>, vector<288x128xf32>
    %c4_85 = arith.constant 4 : index
    %c0_86 = arith.constant 0 : index
    %c0_87 = arith.constant 0 : index
    %88 = vector.load %arg4[%c4_85, %c0_86, %c0_87] : memref<9x128x128xf32, #tpu.memory_space<vmem>>, vector<1x128x128xf32>
    %89 = vector.shape_cast %88 : vector<1x128x128xf32> to vector<128x128xf32>
    %cst_88 = arith.constant dense<0.000000e+00> : vector<288x128xf32>
    %90 = tpu.matmul %87, %89, %cst_88 {dimension_numbers = #tpu.dot_dimension_numbers<[1], [0], [0], [1], [0, 0, 1, 1], [], []>} : vector<288x128xf32>, vector<128x128xf32>, vector<288x128xf32> -> vector<288x128xf32>
    %91 = arith.addf %86, %90 : vector<288x128xf32>
    %c20_89 = arith.constant 20 : index
    %c0_90 = arith.constant 0 : index
    %92 = vector.load %arg8[%c20_89, %c0_90] : memref<342x128xf32, #tpu.memory_space<vmem>>, vector<288x128xf32>
    %c5_91 = arith.constant 5 : index
    %c0_92 = arith.constant 0 : index
    %c0_93 = arith.constant 0 : index
    %93 = vector.load %arg4[%c5_91, %c0_92, %c0_93] : memref<9x128x128xf32, #tpu.memory_space<vmem>>, vector<1x128x128xf32>
    %94 = vector.shape_cast %93 : vector<1x128x128xf32> to vector<128x128xf32>
    %cst_94 = arith.constant dense<0.000000e+00> : vector<288x128xf32>
    %95 = tpu.matmul %92, %94, %cst_94 {dimension_numbers = #tpu.dot_dimension_numbers<[1], [0], [0], [1], [0, 0, 1, 1], [], []>} : vector<288x128xf32>, vector<128x128xf32>, vector<288x128xf32> -> vector<288x128xf32>
    %96 = arith.addf %91, %95 : vector<288x128xf32>
    %c36_95 = arith.constant 36 : index
    %c0_96 = arith.constant 0 : index
    %97 = vector.load %arg8[%c36_95, %c0_96] : memref<342x128xf32, #tpu.memory_space<vmem>>, vector<288x128xf32>
    %c6_97 = arith.constant 6 : index
    %c0_98 = arith.constant 0 : index
    %c0_99 = arith.constant 0 : index
    %98 = vector.load %arg4[%c6_97, %c0_98, %c0_99] : memref<9x128x128xf32, #tpu.memory_space<vmem>>, vector<1x128x128xf32>
    %99 = vector.shape_cast %98 : vector<1x128x128xf32> to vector<128x128xf32>
    %cst_100 = arith.constant dense<0.000000e+00> : vector<288x128xf32>
    %100 = tpu.matmul %97, %99, %cst_100 {dimension_numbers = #tpu.dot_dimension_numbers<[1], [0], [0], [1], [0, 0, 1, 1], [], []>} : vector<288x128xf32>, vector<128x128xf32>, vector<288x128xf32> -> vector<288x128xf32>
    %101 = arith.addf %96, %100 : vector<288x128xf32>
    %c37_101 = arith.constant 37 : index
    %c0_102 = arith.constant 0 : index
    %102 = vector.load %arg8[%c37_101, %c0_102] : memref<342x128xf32, #tpu.memory_space<vmem>>, vector<288x128xf32>
    %c7_103 = arith.constant 7 : index
    %c0_104 = arith.constant 0 : index
    %c0_105 = arith.constant 0 : index
    %103 = vector.load %arg4[%c7_103, %c0_104, %c0_105] : memref<9x128x128xf32, #tpu.memory_space<vmem>>, vector<1x128x128xf32>
    %104 = vector.shape_cast %103 : vector<1x128x128xf32> to vector<128x128xf32>
    %cst_106 = arith.constant dense<0.000000e+00> : vector<288x128xf32>
    %105 = tpu.matmul %102, %104, %cst_106 {dimension_numbers = #tpu.dot_dimension_numbers<[1], [0], [0], [1], [0, 0, 1, 1], [], []>} : vector<288x128xf32>, vector<128x128xf32>, vector<288x128xf32> -> vector<288x128xf32>
    %106 = arith.addf %101, %105 : vector<288x128xf32>
    %c38_107 = arith.constant 38 : index
    %c0_108 = arith.constant 0 : index
    %107 = vector.load %arg8[%c38_107, %c0_108] : memref<342x128xf32, #tpu.memory_space<vmem>>, vector<288x128xf32>
    %c8_109 = arith.constant 8 : index
    %c0_110 = arith.constant 0 : index
    %c0_111 = arith.constant 0 : index
    %108 = vector.load %arg4[%c8_109, %c0_110, %c0_111] : memref<9x128x128xf32, #tpu.memory_space<vmem>>, vector<1x128x128xf32>
    %109 = vector.shape_cast %108 : vector<1x128x128xf32> to vector<128x128xf32>
    %cst_112 = arith.constant dense<0.000000e+00> : vector<288x128xf32>
    %110 = tpu.matmul %107, %109, %cst_112 {dimension_numbers = #tpu.dot_dimension_numbers<[1], [0], [0], [1], [0, 0, 1, 1], [], []>} : vector<288x128xf32>, vector<128x128xf32>, vector<288x128xf32> -> vector<288x128xf32>
    %111 = arith.addf %106, %110 : vector<288x128xf32>
    %c0_113 = arith.constant 0 : index
    %c0_114 = arith.constant 0 : index
    %112 = vector.load %arg5[%c0_113, %c0_114] : memref<1x128xf32, #tpu.memory_space<vmem>>, vector<1x128xf32>
    %113 = vector.broadcast %112 : vector<1x128xf32> to vector<288x128xf32>
    %114 = arith.addf %111, %113 : vector<288x128xf32>
    %cst_115 = arith.constant 0.000000e+00 : f32
    %115 = vector.broadcast %cst_115 : f32 to vector<288x128xf32>
    %116 = arith.maximumf %114, %115 : vector<288x128xf32>
    %c0_116 = arith.constant 0 : index
    %c0_117 = arith.constant 0 : index
    %c0_118 = arith.constant 0 : index
    %117 = vector.load %arg7[%c0_116, %c0_117, %c0_118] : memref<1x288x128xf32, #tpu.memory_space<vmem>>, vector<1x288x128xf32>
    %118 = vector.shape_cast %117 : vector<1x288x128xf32> to vector<288x128xf32>
    %119 = vector.shape_cast %116 : vector<288x128xf32> to vector<1x288x128xf32>
    tpu.vector_store %arg7[%c0_116, %c0_117, %c0_118], %119 {strides = array<i32>} : memref<1x288x128xf32, #tpu.memory_space<vmem>>, vector<1x288x128xf32>,
    return
  }
  func.func @transform_0(%arg0: i32) -> (i32, i32, i32) {
    %c0_i32 = arith.constant 0 : i32
    %c0_i32_0 = arith.constant 0 : i32
    %c0_i32_1 = arith.constant 0 : i32
    return %arg0, %c0_i32, %c0_i32_0 : i32, i32, i32
  }
  func.func @transform_1(%arg0: i32) -> (i32, i32, i32) {
    %c0_i32 = arith.constant 0 : i32
    %c0_i32_0 = arith.constant 0 : i32
    %c0_i32_1 = arith.constant 0 : i32
    %c0_i32_2 = arith.constant 0 : i32
    return %c0_i32, %c0_i32_0, %c0_i32_1 : i32, i32, i32
  }
  func.func @transform_2(%arg0: i32) -> (i32, i32) {
    %c0_i32 = arith.constant 0 : i32
    %c0_i32_0 = arith.constant 0 : i32
    %c0_i32_1 = arith.constant 0 : i32
    return %c0_i32, %c0_i32_0 : i32, i32
  }
  func.func @transform_3(%arg0: i32) -> (i32, i32, i32) {
    %c0_i32 = arith.constant 0 : i32
    %c0_i32_0 = arith.constant 0 : i32
    %c0_i32_1 = arith.constant 0 : i32
    %c0_i32_2 = arith.constant 0 : i32
    return %c0_i32, %c0_i32_0, %c0_i32_1 : i32, i32, i32
  }
  func.func @transform_4(%arg0: i32) -> (i32, i32) {
    %c0_i32 = arith.constant 0 : i32
    %c0_i32_0 = arith.constant 0 : i32
    %c0_i32_1 = arith.constant 0 : i32
    return %c0_i32, %c0_i32_0 : i32, i32
  }
  func.func @transform_5(%arg0: i32) -> (i32, i32) {
    %c0_i32 = arith.constant 0 : i32
    %c0_i32_0 = arith.constant 0 : i32
    %c0_i32_1 = arith.constant 0 : i32
    return %c0_i32, %c0_i32_0 : i32, i32
  }
  func.func @transform_6(%arg0: i32) -> (i32, i32, i32) {
    %c0_i32 = arith.constant 0 : i32
    %c0_i32_0 = arith.constant 0 : i32
    %c0_i32_1 = arith.constant 0 : i32
    return %arg0, %c0_i32, %c0_i32_0 : i32, i32, i32
  }
}

</mosaic_0001>

<llo_original>
// kernel: unet_bottleneck.1
$region0: #{unet_bottleneck.1}
  #allocation0 [shape = 'u32[]', space=smem, size = 0x4, offset = 0x4, fixed_abs, tag = 'smem constant byte address 0x4 - core index']
  #allocation1 [shape = 'u32[144,128]{1,0:T(1,128)}', space=vmem, size = 0x12000, scoped, tag = 'internal scratch']
  #allocation2 [shape = 'f32[342,128]{1,0:T(8,128)}', space=vmem, size = 0x2b000, scoped, tag = 'scratch operand']
  %s0 = inlined_call_operand.vmem [shape: f32[2,342,128], index: 0, kind: input, shape index: {}]
  %s1 = inlined_call_operand.vmem [shape: f32[9,128,128], index: 1, kind: input, shape index: {}]
  %s2 = inlined_call_operand.vmem [shape: f32[1,128], index: 2, kind: input, shape index: {}]
  %s3 = inlined_call_operand.vmem [shape: f32[9,128,128], index: 3, kind: input, shape index: {}]
  %s4 = inlined_call_operand.vmem [shape: f32[1,128], index: 4, kind: input, shape index: {}]
  %s5 = inlined_call_operand.vmem [shape: f32[288,1], index: 5, kind: input, shape index: {}]
  %s6 = inlined_call_operand.vmem [shape: f32[2,288,128], index: 6, kind: output, shape index: {}]
  %s7 = sld [smem:[#allocation0]]
  $region57: #{unet_bottleneck.1} parent=0
    _
  %s9 = ssub.s32 1, %s7
  %s10 = scalar_select 0, %s9, %s7
  loop: start=0, step=1, limit=4
  $region2: #{unet_bottleneck.1} parent=0 // loop_pre_header
    _
  $region3: #{unet_bottleneck.1} parent=0 // loop_header
    %s12 = sphi 0, %s16
    %p13 = scmp.ge.s32.totalorder %s12, 4
    %s22 = sphi 0, %s24
    %s25 = sphi 0, %s22
    %s26 = sphi 0, %s25
    %s42 = sphi 0, %s26
    %s46 = sphi 0, %s46
    %s48 = sphi 0, %s46
    %s49 = sphi 0, %s48
    %s63 = sphi 0, %s49
    %s67 = sphi 0, %s67
    %s69 = sphi 0, %s67
    %s70 = sphi 0, %s69
    %s84 = sphi 0, %s70
    %s88 = sphi 0, %s88
    %s90 = sphi 0, %s88
    %s91 = sphi 0, %s90
    %s105 = sphi 0, %s91
    %s109 = sphi 0, %s109
    %s111 = sphi 0, %s109
    %s112 = sphi 0, %s111
    %s126 = sphi 0, %s112
    %s130 = sphi 0, %s130
    %s132 = sphi 0, %s130
    %s133 = sphi 0, %s132
    %s147 = sphi 0, %s133
    %s153 = sphi 0, %s155
    %s156 = sphi 0, %s153
    %s157 = sphi 0, %s156
    %s173 = sphi 0, %s157
  $region4: #{unet_bottleneck.1} parent=0 // loop_header_branch
    %15 = sbr.rel (%p13) target = $region8
  $region5: #{unet_bottleneck.1} parent=0 // loop_body
    %s17 = ssub.s32 %s12, 1
    %s18 = ssub.s32 %s12, 2
    %s19 = sadd.s32 %s12, 1
    %s20 = ssub.s32 %s12, %s19
    %p21 = scmp.eq.s32.totalorder %s20, 0
    %s23 = sadd.s32 %s22, 1
    %s24 = scalar_select %p21, %s22, %s23
    %p27 = pneg %p21
    %p28 = scmp.eq.s32.totalorder %s12, 1
    %p29 = por %p27, %p28
    %p30 = scmp.ne.s32.totalorder %s22, %s25
    %p31 = scmp.eq.s32.totalorder %s12, 0
    %p32 = por %p30, %p31
    %p33 = scmp.ne.s32.totalorder %s22, %s25
    %p34 = scmp.eq.s32.totalorder %s17, 1
    %p35 = por %p33, %p34
    %p36 = scmp.ne.s32.totalorder %s25, %s26
    %p37 = scmp.eq.s32.totalorder %s17, 0
    %p38 = por %p36, %p37
    %p39 = scmp.ne.s32.totalorder %s25, %s26
    %p40 = scmp.eq.s32.totalorder %s18, 1
    %p41 = por %p39, %p40
    %p43 = scmp.ne.s32.totalorder %s26, %s42
    %p44 = scmp.eq.s32.totalorder %s18, 0
    %p45 = por %p43, %p44
    %s47 = sadd.s32 %s46, 1
    %p50 = scmp.eq.s32.totalorder %s12, 1
    %p51 = scmp.ne.s32.totalorder %s46, %s48
    %p52 = scmp.eq.s32.totalorder %s12, 0
    %p53 = por %p51, %p52
    %p54 = scmp.ne.s32.totalorder %s46, %s48
    %p55 = scmp.eq.s32.totalorder %s17, 1
    %p56 = por %p54, %p55
    %p57 = scmp.ne.s32.totalorder %s48, %s49
    %p58 = scmp.eq.s32.totalorder %s17, 0
    %p59 = por %p57, %p58
    %p60 = scmp.ne.s32.totalorder %s48, %s49
    %p61 = scmp.eq.s32.totalorder %s18, 1
    %p62 = por %p60, %p61
    %p64 = scmp.ne.s32.totalorder %s49, %s63
    %p65 = scmp.eq.s32.totalorder %s18, 0
    %p66 = por %p64, %p65
    %s68 = sadd.s32 %s67, 1
    %p71 = scmp.eq.s32.totalorder %s12, 1
    %p72 = scmp.ne.s32.totalorder %s67, %s69
    %p73 = scmp.eq.s32.totalorder %s12, 0
    %p74 = por %p72, %p73
    %p75 = scmp.ne.s32.totalorder %s67, %s69
    %p76 = scmp.eq.s32.totalorder %s17, 1
    %p77 = por %p75, %p76
    %p78 = scmp.ne.s32.totalorder %s69, %s70
    %p79 = scmp.eq.s32.totalorder %s17, 0
    %p80 = por %p78, %p79
    %p81 = scmp.ne.s32.totalorder %s69, %s70
    %p82 = scmp.eq.s32.totalorder %s18, 1
    %p83 = por %p81, %p82
    %p85 = scmp.ne.s32.totalorder %s70, %s84
    %p86 = scmp.eq.s32.totalorder %s18, 0
    %p87 = por %p85, %p86
    %s89 = sadd.s32 %s88, 1
    %p92 = scmp.eq.s32.totalorder %s12, 1
    %p93 = scmp.ne.s32.totalorder %s88, %s90
    %p94 = scmp.eq.s32.totalorder %s12, 0
    %p95 = por %p93, %p94
    %p96 = scmp.ne.s32.totalorder %s88, %s90
    %p97 = scmp.eq.s32.totalorder %s17, 1
    %p98 = por %p96, %p97
    %p99 = scmp.ne.s32.totalorder %s90, %s91
    %p100 = scmp.eq.s32.totalorder %s17, 0
    %p101 = por %p99, %p100
    %p102 = scmp.ne.s32.totalorder %s90, %s91
    %p103 = scmp.eq.s32.totalorder %s18, 1
    %p104 = por %p102, %p103
    %p106 = scmp.ne.s32.totalorder %s91, %s105
    %p107 = scmp.eq.s32.totalorder %s18, 0
    %p108 = por %p106, %p107
    %s110 = sadd.s32 %s109, 1
    %p113 = scmp.eq.s32.totalorder %s12, 1
    %p114 = scmp.ne.s32.totalorder %s109, %s111
    %p115 = scmp.eq.s32.totalorder %s12, 0
    %p116 = por %p114, %p115
    %p117 = scmp.ne.s32.totalorder %s109, %s111
    %p118 = scmp.eq.s32.totalorder %s17, 1
    %p119 = por %p117, %p118
    %p120 = scmp.ne.s32.totalorder %s111, %s112
    %p121 = scmp.eq.s32.totalorder %s17, 0
    %p122 = por %p120, %p121
    %p123 = scmp.ne.s32.totalorder %s111, %s112
    %p124 = scmp.eq.s32.totalorder %s18, 1
    %p125 = por %p123, %p124
    %p127 = scmp.ne.s32.totalorder %s112, %s126
    %p128 = scmp.eq.s32.totalorder %s18, 0
    %p129 = por %p127, %p128
    %s131 = sadd.s32 %s130, 1
    %p134 = scmp.eq.s32.totalorder %s12, 1
    %p135 = scmp.ne.s32.totalorder %s130, %s132
    %p136 = scmp.eq.s32.totalorder %s12, 0
    %p137 = por %p135, %p136
    %p138 = scmp.ne.s32.totalorder %s130, %s132
    %p139 = scmp.eq.s32.totalorder %s17, 1
    %p140 = por %p138, %p139
    %p141 = scmp.ne.s32.totalorder %s132, %s133
    %p142 = scmp.eq.s32.totalorder %s17, 0
    %p143 = por %p141, %p142
    %p144 = scmp.ne.s32.totalorder %s132, %s133
    %p145 = scmp.eq.s32.totalorder %s18, 1
    %p146 = por %p144, %p145
    %p148 = scmp.ne.s32.totalorder %s133, %s147
    %p149 = scmp.eq.s32.totalorder %s18, 0
    %p150 = por %p148, %p149
    %s151 = ssub.s32 %s12, %s19
    %p152 = scmp.eq.s32.totalorder %s151, 0
    %s154 = sadd.s32 %s153, 1
    %s155 = scalar_select %p152, %s153, %s154
    %p158 = pneg %p152
    %p159 = scmp.eq.s32.totalorder %s12, 1
    %p160 = por %p158, %p159
    %p161 = scmp.ne.s32.totalorder %s153, %s156
    %p162 = scmp.eq.s32.totalorder %s12, 0
    %p163 = por %p161, %p162
    %p164 = scmp.ne.s32.totalorder %s153, %s156
    %p165 = scmp.eq.s32.totalorder %s17, 1
    %p166 = por %p164, %p165
    %p167 = scmp.ne.s32.totalorder %s156, %s157
    %p168 = scmp.eq.s32.totalorder %s17, 0
    %p169 = por %p167, %p168
    %p170 = scmp.ne.s32.totalorder %s156, %s157
    %p171 = scmp.eq.s32.totalorder %s18, 1
    %p172 = por %p170, %p171
    %p174 = scmp.ne.s32.totalorder %s157, %s173
    %p175 = scmp.eq.s32.totalorder %s18, 0
    %p176 = por %p174, %p175
    %p177 = scmp.le.s32.totalorder 1, %s12
    %p178 = scmp.lt.s32.totalorder %s12, 3
    %p179 = pnand %p177, %p178
    %p180 = pneg %p179
    // Predicated region
    $region9: #{unet_bottleneck.1} parent=5 // pred_check
      _
    $region10: #{unet_bottleneck.1} parent=5 // pred_check_branch
      %182 = sbr.rel (%p179) target = $region12
    $region11: #{unet_bottleneck.1} parent=5 // pred_region
      %s183 = ssub.s32 %s12, 1
      // Predicated region
      $region13: #{unet_bottleneck.1} parent=11 // pred_check
        %p184 = pneg %p59
      $region14: #{unet_bottleneck.1} parent=11 // pred_check_branch
        %186 = sbr.rel (%p184) target = $region16
      $region15: #{unet_bottleneck.1} parent=11 // pred_region
        _
      $region16: #{unet_bottleneck.1} parent=11 // pred_fallthru
        _
      // Predicated region
      $region17: #{unet_bottleneck.1} parent=11 // pred_check
        %p187 = pneg %p80
      $region18: #{unet_bottleneck.1} parent=11 // pred_check_branch
        %189 = sbr.rel (%p187) target = $region20
      $region19: #{unet_bottleneck.1} parent=11 // pred_region
        _
      $region20: #{unet_bottleneck.1} parent=11 // pred_fallthru
        _
      // Predicated region
      $region21: #{unet_bottleneck.1} parent=11 // pred_check
        %p190 = pneg %p101
      $region22: #{unet_bottleneck.1} parent=11 // pred_check_branch
        %192 = sbr.rel (%p190) target = $region24
      $region23: #{unet_bottleneck.1} parent=11 // pred_region
        _
      $region24: #{unet_bottleneck.1} parent=11 // pred_fallthru
        _
      // Predicated region
      $region25: #{unet_bottleneck.1} parent=11 // pred_check
        %p193 = pneg %p122
      $region26: #{unet_bottleneck.1} parent=11 // pred_check_branch
        %195 = sbr.rel (%p193) target = $region28
      $region27: #{unet_bottleneck.1} parent=11 // pred_region
        _
      $region28: #{unet_bottleneck.1} parent=11 // pred_fallthru
        _
      // Predicated region
      $region29: #{unet_bottleneck.1} parent=11 // pred_check
        %p196 = pneg %p143
      $region30: #{unet_bottleneck.1} parent=11 // pred_check_branch
        %198 = sbr.rel (%p196) target = $region32
      $region31: #{unet_bottleneck.1} parent=11 // pred_region
        _
      $region32: #{unet_bottleneck.1} parent=11 // pred_fallthru
        _
    $region12: #{unet_bottleneck.1} parent=5 // pred_fallthru
      _
    %p199 = scmp.lt.s32.totalorder %s12, 2
    // Predicated region
    $region33: #{unet_bottleneck.1} parent=5 // pred_check
      %p200 = pneg %p199
    $region34: #{unet_bottleneck.1} parent=5 // pred_check_branch
      %202 = sbr.rel (%p200) target = $region36
    $region35: #{unet_bottleneck.1} parent=5 // pred_region
      // Predicated region
      $region37: #{unet_bottleneck.1} parent=35 // pred_check
        %p203 = pneg %p32
      $region38: #{unet_bottleneck.1} parent=35 // pred_check_branch
        %205 = sbr.rel (%p203) target = $region40
      $region39: #{unet_bottleneck.1} parent=35 // pred_region
        %p206 = scmp.lt.s32.totalorder %s12, 1
        %s207 = scalar_select %p206, %s12, 1
        %s208 = smul.addr %s207, 43
        %s209 = smul.addr %s208, 8
        %s210 = scalar_lea.vmem %s0, %s209
      $region40: #{unet_bottleneck.1} parent=35 // pred_fallthru
        _
    $region36: #{unet_bottleneck.1} parent=5 // pred_fallthru
      _
    %p211 = scmp.le.s32.totalorder 1, %s12
    %p212 = scmp.lt.s32.totalorder %s12, 3
    %p213 = pnand %p211, %p212
    %p214 = pneg %p213
    // Predicated region
    $region41: #{unet_bottleneck.1} parent=5 // pred_check
      _
    $region42: #{unet_bottleneck.1} parent=5 // pred_check_branch
      %216 = sbr.rel (%p213) target = $region44
    $region43: #{unet_bottleneck.1} parent=5 // pred_region
      %s217 = ssub.s32 %s12, 1
      %p218 = scmp.lt.s32.totalorder %s17, 1
      %s219 = scalar_select %p218, %s17, 1
      %s220 = smul.addr %s219, 43
      %s221 = smul.addr %s220, 8
      %s222 = scalar_lea.vmem %s0, %s221
      %p223 = pneg %p38
      %p224 = pneg %p35
      %p225 = pneg %p59
      %p226 = pneg %p56
      %p227 = pneg %p80
      %p228 = pneg %p77
      %p229 = pneg %p101
      %p230 = pneg %p98
      %p231 = pneg %p122
      %p232 = pneg %p119
      %p233 = pneg %p143
      %p234 = pneg %p140
      %p235 = pneg %p169
      %p236 = pneg %p166
      %p237 = scmp.lt.s32.totalorder %s17, 1
      %s238 = scalar_select %p237, %s17, 1
      %s239 = smul.addr %s238, 36
      %s240 = smul.addr %s239, 8
      %s241 = scalar_lea.vmem %s6, %s240
      %p242 = scmp.lt.s32.totalorder %s17, 1
      %s243 = scalar_select %p242, %s17, 1
      %s244 = smul.addr %s243, 43
      %s245 = smul.addr %s244, 8
      %s246 = scalar_lea.vmem %s0, %s245
      %p247 = scmp.lt.s32.totalorder %s17, 1
      %s248 = scalar_select %p247, %s17, 1
      %s249 = smul.addr %s248, 36
      %s250 = smul.addr %s249, 8
      %s251 = scalar_lea.vmem %s6, %s250
      %v252 = vld [vmem:[%s246] sm:$0xff]
      %v253 = vld [vmem:[%s246 + $0x8] sm:$0xff]
      %v254 = vld [vmem:[%s246 + $0x10] sm:$0xff]
      %v255 = vld [vmem:[%s246 + $0x18] sm:$0xff]
      %v256 = vld [vmem:[%s246 + $0x20] sm:$0xff]
      %v257 = vld [vmem:[%s246 + $0x28] sm:$0xff]
      %v258 = vld [vmem:[%s246 + $0x30] sm:$0xff]
      %v259 = vld [vmem:[%s246 + $0x38] sm:$0xff]
      %v260 = vld [vmem:[%s246 + $0x40] sm:$0xff]
      %v261 = vld [vmem:[%s246 + $0x48] sm:$0xff]
      %v262 = vld [vmem:[%s246 + $0x50] sm:$0xff]
      %v263 = vld [vmem:[%s246 + $0x58] sm:$0xff]
      %v264 = vld [vmem:[%s246 + $0x60] sm:$0xff]
      %v265 = vld [vmem:[%s246 + $0x68] sm:$0xff]
      %v266 = vld [vmem:[%s246 + $0x70] sm:$0xff]
      %v267 = vld [vmem:[%s246 + $0x78] sm:$0xff]
      %v268 = vld [vmem:[%s246 + $0x80] sm:$0xff]
      %v269 = vld [vmem:[%s246 + $0x88] sm:$0xff]
      %v270 = vld [vmem:[%s246 + $0x90] sm:$0xff]
      %v271 = vld [vmem:[%s246 + $0x98] sm:$0xff]
      %v272 = vld [vmem:[%s246 + $0xa0] sm:$0xff]
      %v273 = vld [vmem:[%s246 + $0xa8] sm:$0xff]
      %v274 = vld [vmem:[%s246 + $0xb0] sm:$0xff]
      %v275 = vld [vmem:[%s246 + $0xb8] sm:$0xff]
      %v276 = vld [vmem:[%s246 + $0xc0] sm:$0xff]
      %v277 = vld [vmem:[%s246 + $0xc8] sm:$0xff]
      %v278 = vld [vmem:[%s246 + $0xd0] sm:$0xff]
      %v279 = vld [vmem:[%s246 + $0xd8] sm:$0xff]
      %v280 = vld [vmem:[%s246 + $0xe0] sm:$0xff]
      %v281 = vld [vmem:[%s246 + $0xe8] sm:$0xff]
      %v282 = vld [vmem:[%s246 + $0xf0] sm:$0xff]
      %v283 = vld [vmem:[%s246 + $0xf8] sm:$0xff]
      %v284 = vld [vmem:[%s246 + $0x100] sm:$0xff]
      %v285 = vld [vmem:[%s246 + $0x108] sm:$0xff]
      %v286 = vld [vmem:[%s246 + $0x110] sm:$0xff]
      %v287 = vld [vmem:[%s246 + $0x118] sm:$0xff]
      %v288 = vld [vmem:[%s1] sm:$0xff]
      %v289 = vld [vmem:[%s1 + $0x8] sm:$0xff]
      %v290 = vld [vmem:[%s1 + $0x10] sm:$0xff]
      %v291 = vld [vmem:[%s1 + $0x18] sm:$0xff]
      %v292 = vld [vmem:[%s1 + $0x20] sm:$0xff]
      %v293 = vld [vmem:[%s1 + $0x28] sm:$0xff]
      %v294 = vld [vmem:[%s1 + $0x30] sm:$0xff]
      %v295 = vld [vmem:[%s1 + $0x38] sm:$0xff]
      %v296 = vld [vmem:[%s1 + $0x40] sm:$0xff]
      %v297 = vld [vmem:[%s1 + $0x48] sm:$0xff]
      %v298 = vld [vmem:[%s1 + $0x50] sm:$0xff]
      %v299 = vld [vmem:[%s1 + $0x58] sm:$0xff]
      %v300 = vld [vmem:[%s1 + $0x60] sm:$0xff]
      %v301 = vld [vmem:[%s1 + $0x68] sm:$0xff]
      %v302 = vld [vmem:[%s1 + $0x70] sm:$0xff]
      %v303 = vld [vmem:[%s1 + $0x78] sm:$0xff]
      %v304 = vld [vmem:[%s246 + $0x1] sm:$0xff]
      %v305 = vld [vmem:[%s246 + $0x9] sm:$0xff]
      %v306 = vld [vmem:[%s246 + $0x11] sm:$0xff]
      %v307 = vld [vmem:[%s246 + $0x19] sm:$0xff]
      %v308 = vld [vmem:[%s246 + $0x21] sm:$0xff]
      %v309 = vld [vmem:[%s246 + $0x29] sm:$0xff]
      %v310 = vld [vmem:[%s246 + $0x31] sm:$0xff]
      %v311 = vld [vmem:[%s246 + $0x39] sm:$0xff]
      %v312 = vld [vmem:[%s246 + $0x41] sm:$0xff]
      %v313 = vld [vmem:[%s246 + $0x49] sm:$0xff]
      %v314 = vld [vmem:[%s246 + $0x51] sm:$0xff]
      %v315 = vld [vmem:[%s246 + $0x59] sm:$0xff]
      %v316 = vld [vmem:[%s246 + $0x61] sm:$0xff]
      %v317 = vld [vmem:[%s246 + $0x69] sm:$0xff]
      %v318 = vld [vmem:[%s246 + $0x71] sm:$0xff]
      %v319 = vld [vmem:[%s246 + $0x79] sm:$0xff]
      %v320 = vld [vmem:[%s246 + $0x81] sm:$0xff]
      %v321 = vld [vmem:[%s246 + $0x89] sm:$0xff]
      %v322 = vld [vmem:[%s246 + $0x91] sm:$0xff]
      %v323 = vld [vmem:[%s246 + $0x99] sm:$0xff]
      %v324 = vld [vmem:[%s246 + $0xa1] sm:$0xff]
      %v325 = vld [vmem:[%s246 + $0xa9] sm:$0xff]
      %v326 = vld [vmem:[%s246 + $0xb1] sm:$0xff]
      %v327 = vld [vmem:[%s246 + $0xb9] sm:$0xff]
      %v328 = vld [vmem:[%s246 + $0xc1] sm:$0xff]
      %v329 = vld [vmem:[%s246 + $0xc9] sm:$0xff]
      %v330 = vld [vmem:[%s246 + $0xd1] sm:$0xff]
      %v331 = vld [vmem:[%s246 + $0xd9] sm:$0xff]
      %v332 = vld [vmem:[%s246 + $0xe1] sm:$0xff]
      %v333 = vld [vmem:[%s246 + $0xe9] sm:$0xff]
      %v334 = vld [vmem:[%s246 + $0xf1] sm:$0xff]
      %v335 = vld [vmem:[%s246 + $0xf9] sm:$0xff]
      %v336 = vld [vmem:[%s246 + $0x101] sm:$0xff]
      %v337 = vld [vmem:[%s246 + $0x109] sm:$0xff]
      %v338 = vld [vmem:[%s246 + $0x111] sm:$0xff]
      %v339 = vld [vmem:[%s246 + $0x119] sm:$0xff]
      %s340 = scalar_lea.vmem %s1, 128
      %v341 = vld [vmem:[%s340] sm:$0xff]
      %v342 = vld [vmem:[%s340 + $0x8] sm:$0xff]
      %v343 = vld [vmem:[%s340 + $0x10] sm:$0xff]
      %v344 = vld [vmem:[%s340 + $0x18] sm:$0xff]
      %v345 = vld [vmem:[%s340 + $0x20] sm:$0xff]
      %v346 = vld [vmem:[%s340 + $0x28] sm:$0xff]
      %v347 = vld [vmem:[%s340 + $0x30] sm:$0xff]
      %v348 = vld [vmem:[%s340 + $0x38] sm:$0xff]
      %v349 = vld [vmem:[%s340 + $0x40] sm:$0xff]
      %v350 = vld [vmem:[%s340 + $0x48] sm:$0xff]
      %v351 = vld [vmem:[%s340 + $0x50] sm:$0xff]
      %v352 = vld [vmem:[%s340 + $0x58] sm:$0xff]
      %v353 = vld [vmem:[%s340 + $0x60] sm:$0xff]
      %v354 = vld [vmem:[%s340 + $0x68] sm:$0xff]
      %v355 = vld [vmem:[%s340 + $0x70] sm:$0xff]
      %v356 = vld [vmem:[%s340 + $0x78] sm:$0xff]
      %357 = vmatprep.subr.mxu0 0.0
      %358 = vmatpush1.msra.mxu0 %v356
      %359 = vmatprep.subr.mxu0 0.0
      %360 = vmatpush1.msra.mxu0 %v355
      %361 = vmatprep.subr.mxu0 0.0
      %362 = vmatpush1.msra.mxu0 %v354
      %363 = vmatprep.subr.mxu0 0.0
      %364 = vmatpush1.msra.mxu0 %v353
      %365 = vmatprep.subr.mxu0 0.0
      %366 = vmatpush1.msra.mxu0 %v352
      %367 = vmatprep.subr.mxu0 0.0
      %368 = vmatpush1.msra.mxu0 %v351
      %369 = vmatprep.subr.mxu0 0.0
      %370 = vmatpush1.msra.mxu0 %v350
      %371 = vmatprep.subr.mxu0 0.0
      %372 = vmatpush1.msra.mxu0 %v349
      %373 = vmatprep.subr.mxu0 0.0
      %374 = vmatpush1.msra.mxu0 %v348
      %375 = vmatprep.subr.mxu0 0.0
      %376 = vmatpush1.msra.mxu0 %v347
      %377 = vmatprep.subr.mxu0 0.0
      %378 = vmatpush1.msra.mxu0 %v346
      %379 = vmatprep.subr.mxu0 0.0
      %380 = vmatpush1.msra.mxu0 %v345
      %381 = vmatprep.subr.mxu0 0.0
      %382 = vmatpush1.msra.mxu0 %v344
      %383 = vmatprep.subr.mxu0 0.0
      %384 = vmatpush1.msra.mxu0 %v343
      %385 = vmatprep.subr.mxu0 0.0
      %386 = vmatpush1.msra.mxu0 %v342
      %387 = vmatprep.subr.mxu0 0.0
      %388 = vmatpush1.msra.mxu0 %v341
      %389 = vmatprep.subr.mxu0 0.0
      %390 = vmatpush2.msra.mxu0 0.0
      %391 = vmatprep.subr.mxu0 0.0
      %392 = vmatpush2.msra.mxu0 0.0
      %393 = vmatprep.subr.mxu0 0.0
      %394 = vmatpush2.msra.mxu0 0.0
      %395 = vmatprep.subr.mxu0 0.0
      %396 = vmatpush2.msra.mxu0 0.0
      %397 = vmatprep.subr.mxu0 0.0
      %398 = vmatpush2.msra.mxu0 0.0
      %399 = vmatprep.subr.mxu0 0.0
      %400 = vmatpush2.msra.mxu0 0.0
      %401 = vmatprep.subr.mxu0 0.0
      %402 = vmatpush2.msra.mxu0 0.0
      %403 = vmatprep.subr.mxu0 0.0
      %404 = vmatpush2.msra.mxu0 0.0
      %405 = vmatprep.subr.mxu0 0.0
      %406 = vmatpush2.msra.mxu0 0.0
      %407 = vmatprep.subr.mxu0 0.0
      %408 = vmatpush2.msra.mxu0 0.0
      %409 = vmatprep.subr.mxu0 0.0
      %410 = vmatpush2.msra.mxu0 0.0
      %411 = vmatprep.subr.mxu0 0.0
      %412 = vmatpush2.msra.mxu0 0.0
      %413 = vmatprep.subr.mxu0 0.0
      %414 = vmatpush2.msra.mxu0 0.0
      %415 = vmatprep.subr.mxu0 0.0
      %416 = vmatpush2.msra.mxu0 0.0
      %417 = vmatprep.subr.mxu0 0.0
      %418 = vmatpush2.msra.mxu0 0.0
      %419 = vmatprep.subr.mxu0 0.0
      %420 = vmatpush2.msra.mxu0 0.0
      %421 = vmatprep.mubr.f32.mxu0 0.0
      %422 = vmatmul.mubr.f32.gmra.mxu0 %v304
      %v423 = vpop.f32.mrf.mxu0
      %v424 = vadd.f32 0.0, %v423
      %v425 = vpop.f32.mrf.mxu0
      %426 = vmatprep.mubr.f32.mxu0 0.0
      %427 = vmatmul.mubr.f32.gmra.mxu0 %v305
      %v428 = vpop.f32.mrf.mxu0
      %v429 = vadd.f32 0.0, %v428
      %v430 = vpop.f32.mrf.mxu0
      %431 = vmatprep.mubr.f32.mxu0 0.0
      %432 = vmatmul.mubr.f32.gmra.mxu0 %v306
      %v433 = vpop.f32.mrf.mxu0
      %v434 = vadd.f32 0.0, %v433
      %v435 = vpop.f32.mrf.mxu0
      %436 = vmatprep.mubr.f32.mxu0 0.0
      %437 = vmatmul.mubr.f32.gmra.mxu0 %v307
      %v438 = vpop.f32.mrf.mxu0
      %v439 = vadd.f32 0.0, %v438
      %v440 = vpop.f32.mrf.mxu0
      %441 = vmatprep.mubr.f32.mxu0 0.0
      %442 = vmatmul.mubr.f32.gmra.mxu0 %v308
      %v443 = vpop.f32.mrf.mxu0
      %v444 = vadd.f32 0.0, %v443
      %v445 = vpop.f32.mrf.mxu0
      %446 = vmatprep.mubr.f32.mxu0 0.0
      %447 = vmatmul.mubr.f32.gmra.mxu0 %v309
      %v448 = vpop.f32.mrf.mxu0
      %v449 = vadd.f32 0.0, %v448
      %v450 = vpop.f32.mrf.mxu0
      %451 = vmatprep.mubr.f32.mxu0 0.0
      %452 = vmatmul.mubr.f32.gmra.mxu0 %v310
      %v453 = vpop.f32.mrf.mxu0
      %v454 = vadd.f32 0.0, %v453
      %v455 = vpop.f32.mrf.mxu0
      %456 = vmatprep.mubr.f32.mxu0 0.0
      %457 = vmatmul.mubr.f32.gmra.mxu0 %v311
      %v458 = vpop.f32.mrf.mxu0
      %v459 = vadd.f32 0.0, %v458
      %v460 = vpop.f32.mrf.mxu0
      %461 = vmatprep.mubr.f32.mxu0 0.0
      %462 = vmatmul.mubr.f32.gmra.mxu0 %v312
      %v463 = vpop.f32.mrf.mxu0
      %v464 = vadd.f32 0.0, %v463
      %v465 = vpop.f32.mrf.mxu0
      %466 = vmatprep.mubr.f32.mxu0 0.0
      %467 = vmatmul.mubr.f32.gmra.mxu0 %v313
      %v468 = vpop.f32.mrf.mxu0
      %v469 = vadd.f32 0.0, %v468
      %v470 = vpop.f32.mrf.mxu0
      %471 = vmatprep.mubr.f32.mxu0 0.0
      %472 = vmatmul.mubr.f32.gmra.mxu0 %v314
      %v473 = vpop.f32.mrf.mxu0
      %v474 = vadd.f32 0.0, %v473
      %v475 = vpop.f32.mrf.mxu0
      %476 = vmatprep.mubr.f32.mxu0 0.0
      %477 = vmatmul.mubr.f32.gmra.mxu0 %v315
      %v478 = vpop.f32.mrf.mxu0
      %v479 = vadd.f32 0.0, %v478
      %v480 = vpop.f32.mrf.mxu0
      %481 = vmatprep.mubr.f32.mxu0 0.0
      %482 = vmatmul.mubr.f32.gmra.mxu0 %v316
      %v483 = vpop.f32.mrf.mxu0
      %v484 = vadd.f32 0.0, %v483
      %v485 = vpop.f32.mrf.mxu0
      %486 = vmatprep.mubr.f32.mxu0 0.0
      %487 = vmatmul.mubr.f32.gmra.mxu0 %v317
      %v488 = vpop.f32.mrf.mxu0
      %v489 = vadd.f32 0.0, %v488
      %v490 = vpop.f32.mrf.mxu0
      %491 = vmatprep.mubr.f32.mxu0 0.0
      %492 = vmatmul.mubr.f32.gmra.mxu0 %v318
      %v493 = vpop.f32.mrf.mxu0
      %v494 = vadd.f32 0.0, %v493
      %v495 = vpop.f32.mrf.mxu0
      %496 = vmatprep.mubr.f32.mxu0 0.0
      %497 = vmatmul.mubr.f32.gmra.mxu0 %v319
      %v498 = vpop.f32.mrf.mxu0
      %v499 = vadd.f32 0.0, %v498
      %v500 = vpop.f32.mrf.mxu0
      %501 = vmatprep.mubr.f32.mxu0 0.0
      %502 = vmatmul.mubr.f32.gmra.mxu0 %v320
      %v503 = vpop.f32.mrf.mxu0
      %v504 = vadd.f32 0.0, %v503
      %v505 = vpop.f32.mrf.mxu0
      %506 = vmatprep.mubr.f32.mxu0 0.0
      %507 = vmatmul.mubr.f32.gmra.mxu0 %v321
      %v508 = vpop.f32.mrf.mxu0
      %v509 = vadd.f32 0.0, %v508
      %v510 = vpop.f32.mrf.mxu0
      %511 = vmatprep.mubr.f32.mxu0 0.0
      %512 = vmatmul.mubr.f32.gmra.mxu0 %v322
      %v513 = vpop.f32.mrf.mxu0
      %v514 = vadd.f32 0.0, %v513
      %v515 = vpop.f32.mrf.mxu0
      %516 = vmatprep.mubr.f32.mxu0 0.0
      %517 = vmatmul.mubr.f32.gmra.mxu0 %v323
      %v518 = vpop.f32.mrf.mxu0
      %v519 = vadd.f32 0.0, %v518
      %v520 = vpop.f32.mrf.mxu0
      %521 = vmatprep.mubr.f32.mxu0 0.0
      %522 = vmatmul.mubr.f32.gmra.mxu0 %v324
      %v523 = vpop.f32.mrf.mxu0
      %v524 = vadd.f32 0.0, %v523
      %v525 = vpop.f32.mrf.mxu0
      %526 = vmatprep.mubr.f32.mxu0 0.0
      %527 = vmatmul.mubr.f32.gmra.mxu0 %v325
      %v528 = vpop.f32.mrf.mxu0
      %v529 = vadd.f32 0.0, %v528
      %v530 = vpop.f32.mrf.mxu0
      %531 = vmatprep.mubr.f32.mxu0 0.0
      %532 = vmatmul.mubr.f32.gmra.mxu0 %v326
      %v533 = vpop.f32.mrf.mxu0
      %v534 = vadd.f32 0.0, %v533
      %v535 = vpop.f32.mrf.mxu0
      %536 = vmatprep.mubr.f32.mxu0 0.0
      %537 = vmatmul.mubr.f32.gmra.mxu0 %v327
      %v538 = vpop.f32.mrf.mxu0
      %v539 = vadd.f32 0.0, %v538
      %v540 = vpop.f32.mrf.mxu0
      %541 = vmatprep.mubr.f32.mxu0 0.0
      %542 = vmatmul.mubr.f32.gmra.mxu0 %v328
      %v543 = vpop.f32.mrf.mxu0
      %v544 = vadd.f32 0.0, %v543
      %v545 = vpop.f32.mrf.mxu0
      %546 = vmatprep.mubr.f32.mxu0 0.0
      %547 = vmatmul.mubr.f32.gmra.mxu0 %v329
      %v548 = vpop.f32.mrf.mxu0
      %v549 = vadd.f32 0.0, %v548
      %v550 = vpop.f32.mrf.mxu0
      %551 = vmatprep.mubr.f32.mxu0 0.0
      %552 = vmatmul.mubr.f32.gmra.mxu0 %v330
      %v553 = vpop.f32.mrf.mxu0
      %v554 = vadd.f32 0.0, %v553
      %v555 = vpop.f32.mrf.mxu0
      %556 = vmatprep.mubr.f32.mxu0 0.0
      %557 = vmatmul.mubr.f32.gmra.mxu0 %v331
      %v558 = vpop.f32.mrf.mxu0
      %v559 = vadd.f32 0.0, %v558
      %v560 = vpop.f32.mrf.mxu0
      %561 = vmatprep.mubr.f32.mxu0 0.0
      %562 = vmatmul.mubr.f32.gmra.mxu0 %v332
      %v563 = vpop.f32.mrf.mxu0
      %v564 = vadd.f32 0.0, %v563
      %v565 = vpop.f32.mrf.mxu0
      %566 = vmatprep.mubr.f32.mxu0 0.0
      %567 = vmatmul.mubr.f32.gmra.mxu0 %v333
      %v568 = vpop.f32.mrf.mxu0
      %v569 = vadd.f32 0.0, %v568
      %v570 = vpop.f32.mrf.mxu0
      %571 = vmatprep.mubr.f32.mxu0 0.0
      %572 = vmatmul.mubr.f32.gmra.mxu0 %v334
      %v573 = vpop.f32.mrf.mxu0
      %v574 = vadd.f32 0.0, %v573
      %v575 = vpop.f32.mrf.mxu0
      %576 = vmatprep.mubr.f32.mxu0 0.0
      %577 = vmatmul.mubr.f32.gmra.mxu0 %v335
      %v578 = vpop.f32.mrf.mxu0
      %v579 = vadd.f32 0.0, %v578
      %v580 = vpop.f32.mrf.mxu0
      %581 = vmatprep.mubr.f32.mxu0 0.0
      %582 = vmatmul.mubr.f32.gmra.mxu0 %v336
      %v583 = vpop.f32.mrf.mxu0
      %v584 = vadd.f32 0.0, %v583
      %v585 = vpop.f32.mrf.mxu0
      %586 = vmatprep.mubr.f32.mxu0 0.0
      %587 = vmatmul.mubr.f32.gmra.mxu0 %v337
      %v588 = vpop.f32.mrf.mxu0
      %v589 = vadd.f32 0.0, %v588
      %v590 = vpop.f32.mrf.mxu0
      %591 = vmatprep.mubr.f32.mxu0 0.0
      %592 = vmatmul.mubr.f32.gmra.mxu0 %v338
      %v593 = vpop.f32.mrf.mxu0
      %v594 = vadd.f32 0.0, %v593
      %v595 = vpop.f32.mrf.mxu0
      %596 = vmatprep.mubr.f32.mxu0 0.0
      %597 = vmatmul.mubr.f32.gmra.mxu0 %v339
      %v598 = vpop.f32.mrf.mxu0
      %v599 = vadd.f32 0.0, %v598
      %v600 = vpop.f32.mrf.mxu0
      %601 = vdwg.mxu0
      %602 = vmatprep.subr.mxu0 0.0
      %603 = vmatpush1.msra.mxu0 %v303
      %604 = vmatprep.subr.mxu0 0.0
      %605 = vmatpush1.msra.mxu0 %v302
      %606 = vmatprep.subr.mxu0 0.0
      %607 = vmatpush1.msra.mxu0 %v301
      %608 = vmatprep.subr.mxu0 0.0
      %609 = vmatpush1.msra.mxu0 %v300
      %610 = vmatprep.subr.mxu0 0.0
      %611 = vmatpush1.msra.mxu0 %v299
      %612 = vmatprep.subr.mxu0 0.0
      %613 = vmatpush1.msra.mxu0 %v298
      %614 = vmatprep.subr.mxu0 0.0
      %615 = vmatpush1.msra.mxu0 %v297
      %616 = vmatprep.subr.mxu0 0.0
      %617 = vmatpush1.msra.mxu0 %v296
      %618 = vmatprep.subr.mxu0 0.0
      %619 = vmatpush1.msra.mxu0 %v295
      %620 = vmatprep.subr.mxu0 0.0
      %621 = vmatpush1.msra.mxu0 %v294
      %622 = vmatprep.subr.mxu0 0.0
      %623 = vmatpush1.msra.mxu0 %v293
      %624 = vmatprep.subr.mxu0 0.0
      %625 = vmatpush1.msra.mxu0 %v292
      %626 = vmatprep.subr.mxu0 0.0
      %627 = vmatpush1.msra.mxu0 %v291
      %628 = vmatprep.subr.mxu0 0.0
      %629 = vmatpush1.msra.mxu0 %v290
      %630 = vmatprep.subr.mxu0 0.0
      %631 = vmatpush1.msra.mxu0 %v289
      %632 = vmatprep.subr.mxu0 0.0
      %633 = vmatpush1.msra.mxu0 %v288
      %634 = vmatprep.subr.mxu0 0.0
      %635 = vmatpush2.msra.mxu0 0.0
      %636 = vmatprep.subr.mxu0 0.0
      %637 = vmatpush2.msra.mxu0 0.0
      %638 = vmatprep.subr.mxu0 0.0
      %639 = vmatpush2.msra.mxu0 0.0
      %640 = vmatprep.subr.mxu0 0.0
      %641 = vmatpush2.msra.mxu0 0.0
      %642 = vmatprep.subr.mxu0 0.0
      %643 = vmatpush2.msra.mxu0 0.0
      %644 = vmatprep.subr.mxu0 0.0
      %645 = vmatpush2.msra.mxu0 0.0
      %646 = vmatprep.subr.mxu0 0.0
      %647 = vmatpush2.msra.mxu0 0.0
      %648 = vmatprep.subr.mxu0 0.0
      %649 = vmatpush2.msra.mxu0 0.0
      %650 = vmatprep.subr.mxu0 0.0
      %651 = vmatpush2.msra.mxu0 0.0
      %652 = vmatprep.subr.mxu0 0.0
      %653 = vmatpush2.msra.mxu0 0.0
      %654 = vmatprep.subr.mxu0 0.0
      %655 = vmatpush2.msra.mxu0 0.0
      %656 = vmatprep.subr.mxu0 0.0
      %657 = vmatpush2.msra.mxu0 0.0
      %658 = vmatprep.subr.mxu0 0.0
      %659 = vmatpush2.msra.mxu0 0.0
      %660 = vmatprep.subr.mxu0 0.0
      %661 = vmatpush2.msra.mxu0 0.0
      %662 = vmatprep.subr.mxu0 0.0
      %663 = vmatpush2.msra.mxu0 0.0
      %664 = vmatprep.subr.mxu0 0.0
      %665 = vmatpush2.msra.mxu0 0.0
      %666 = vmatprep.mubr.f32.mxu0 0.0
      %667 = vmatmul.mubr.f32.gmra.mxu0 %v252
      %v668 = vpop.f32.mrf.mxu0
      %v669 = vadd.f32 %v424, %v668
      %v670 = vpop.f32.mrf.mxu0
      %671 = vmatprep.mubr.f32.mxu0 0.0
      %672 = vmatmul.mubr.f32.gmra.mxu0 %v253
      %v673 = vpop.f32.mrf.mxu0
      %v674 = vadd.f32 %v429, %v673
      %v675 = vpop.f32.mrf.mxu0
      %676 = vmatprep.mubr.f32.mxu0 0.0
      %677 = vmatmul.mubr.f32.gmra.mxu0 %v254
      %v678 = vpop.f32.mrf.mxu0
      %v679 = vadd.f32 %v434, %v678
      %v680 = vpop.f32.mrf.mxu0
      %681 = vmatprep.mubr.f32.mxu0 0.0
      %682 = vmatmul.mubr.f32.gmra.mxu0 %v255
      %v683 = vpop.f32.mrf.mxu0
      %v684 = vadd.f32 %v439, %v683
      %v685 = vpop.f32.mrf.mxu0
      %686 = vmatprep.mubr.f32.mxu0 0.0
      %687 = vmatmul.mubr.f32.gmra.mxu0 %v256
      %v688 = vpop.f32.mrf.mxu0
      %v689 = vadd.f32 %v444, %v688
      %v690 = vpop.f32.mrf.mxu0
      %691 = vmatprep.mubr.f32.mxu0 0.0
      %692 = vmatmul.mubr.f32.gmra.mxu0 %v257
      %v693 = vpop.f32.mrf.mxu0
      %v694 = vadd.f32 %v449, %v693
      %v695 = vpop.f32.mrf.mxu0
      %696 = vmatprep.mubr.f32.mxu0 0.0
      %697 = vmatmul.mubr.f32.gmra.mxu0 %v258
      %v698 = vpop.f32.mrf.mxu0
      %v699 = vadd.f32 %v454, %v698
      %v700 = vpop.f32.mrf.mxu0
      %701 = vmatprep.mubr.f32.mxu0 0.0
      %702 = vmatmul.mubr.f32.gmra.mxu0 %v259
      %v703 = vpop.f32.mrf.mxu0
      %v704 = vadd.f32 %v459, %v703
      %v705 = vpop.f32.mrf.mxu0
      %706 = vmatprep.mubr.f32.mxu0 0.0
      %707 = vmatmul.mubr.f32.gmra.mxu0 %v260
      %v708 = vpop.f32.mrf.mxu0
      %v709 = vadd.f32 %v464, %v708
      %v710 = vpop.f32.mrf.mxu0
      %711 = vmatprep.mubr.f32.mxu0 0.0
      %712 = vmatmul.mubr.f32.gmra.mxu0 %v261
      %v713 = vpop.f32.mrf.mxu0
      %v714 = vadd.f32 %v469, %v713
      %v715 = vpop.f32.mrf.mxu0
      %716 = vmatprep.mubr.f32.mxu0 0.0
      %717 = vmatmul.mubr.f32.gmra.mxu0 %v262
      %v718 = vpop.f32.mrf.mxu0
      %v719 = vadd.f32 %v474, %v718
      %v720 = vpop.f32.mrf.mxu0
      %721 = vmatprep.mubr.f32.mxu0 0.0
      %722 = vmatmul.mubr.f32.gmra.mxu0 %v263
      %v723 = vpop.f32.mrf.mxu0
      %v724 = vadd.f32 %v479, %v723
      %v725 = vpop.f32.mrf.mxu0
      %726 = vmatprep.mubr.f32.mxu0 0.0
      %727 = vmatmul.mubr.f32.gmra.mxu0 %v264
      %v728 = vpop.f32.mrf.mxu0
      %v729 = vadd.f32 %v484, %v728
      %v730 = vpop.f32.mrf.mxu0
      %731 = vmatprep.mubr.f32.mxu0 0.0
      %732 = vmatmul.mubr.f32.gmra.mxu0 %v265
      %v733 = vpop.f32.mrf.mxu0
      %v734 = vadd.f32 %v489, %v733
      %v735 = vpop.f32.mrf.mxu0
      %736 = vmatprep.mubr.f32.mxu0 0.0
      %737 = vmatmul.mubr.f32.gmra.mxu0 %v266
      %v738 = vpop.f32.mrf.mxu0
      %v739 = vadd.f32 %v494, %v738
      %v740 = vpop.f32.mrf.mxu0
      %741 = vmatprep.mubr.f32.mxu0 0.0
      %742 = vmatmul.mubr.f32.gmra.mxu0 %v267
      %v743 = vpop.f32.mrf.mxu0
      %v744 = vadd.f32 %v499, %v743
      %v745 = vpop.f32.mrf.mxu0
      %746 = vmatprep.mubr.f32.mxu0 0.0
      %747 = vmatmul.mubr.f32.gmra.mxu0 %v268
      %v748 = vpop.f32.mrf.mxu0
      %v749 = vadd.f32 %v504, %v748
      %v750 = vpop.f32.mrf.mxu0
      %751 = vmatprep.mubr.f32.mxu0 0.0
      %752 = vmatmul.mubr.f32.gmra.mxu0 %v269
      %v753 = vpop.f32.mrf.mxu0
      %v754 = vadd.f32 %v509, %v753
      %v755 = vpop.f32.mrf.mxu0
      %756 = vmatprep.mubr.f32.mxu0 0.0
      %757 = vmatmul.mubr.f32.gmra.mxu0 %v270
      %v758 = vpop.f32.mrf.mxu0
      %v759 = vadd.f32 %v514, %v758
      %v760 = vpop.f32.mrf.mxu0
      %761 = vmatprep.mubr.f32.mxu0 0.0
      %762 = vmatmul.mubr.f32.gmra.mxu0 %v271
      %v763 = vpop.f32.mrf.mxu0
      %v764 = vadd.f32 %v519, %v763
      %v765 = vpop.f32.mrf.mxu0
      %766 = vmatprep.mubr.f32.mxu0 0.0
      %767 = vmatmul.mubr.f32.gmra.mxu0 %v272
      %v768 = vpop.f32.mrf.mxu0
      %v769 = vadd.f32 %v524, %v768
      %v770 = vpop.f32.mrf.mxu0
      %771 = vmatprep.mubr.f32.mxu0 0.0
      %772 = vmatmul.mubr.f32.gmra.mxu0 %v273
      %v773 = vpop.f32.mrf.mxu0
      %v774 = vadd.f32 %v529, %v773
      %v775 = vpop.f32.mrf.mxu0
      %776 = vmatprep.mubr.f32.mxu0 0.0
      %777 = vmatmul.mubr.f32.gmra.mxu0 %v274
      %v778 = vpop.f32.mrf.mxu0
      %v779 = vadd.f32 %v534, %v778
      %v780 = vpop.f32.mrf.mxu0
      %781 = vmatprep.mubr.f32.mxu0 0.0
      %782 = vmatmul.mubr.f32.gmra.mxu0 %v275
      %v783 = vpop.f32.mrf.mxu0
      %v784 = vadd.f32 %v539, %v783
      %v785 = vpop.f32.mrf.mxu0
      %786 = vmatprep.mubr.f32.mxu0 0.0
      %787 = vmatmul.mubr.f32.gmra.mxu0 %v276
      %v788 = vpop.f32.mrf.mxu0
      %v789 = vadd.f32 %v544, %v788
      %v790 = vpop.f32.mrf.mxu0
      %791 = vmatprep.mubr.f32.mxu0 0.0
      %792 = vmatmul.mubr.f32.gmra.mxu0 %v277
      %v793 = vpop.f32.mrf.mxu0
      %v794 = vadd.f32 %v549, %v793
      %v795 = vpop.f32.mrf.mxu0
      %796 = vmatprep.mubr.f32.mxu0 0.0
      %797 = vmatmul.mubr.f32.gmra.mxu0 %v278
      %v798 = vpop.f32.mrf.mxu0
      %v799 = vadd.f32 %v554, %v798
      %v800 = vpop.f32.mrf.mxu0
      %801 = vmatprep.mubr.f32.mxu0 0.0
      %802 = vmatmul.mubr.f32.gmra.mxu0 %v279
      %v803 = vpop.f32.mrf.mxu0
      %v804 = vadd.f32 %v559, %v803
      %v805 = vpop.f32.mrf.mxu0
      %806 = vmatprep.mubr.f32.mxu0 0.0
      %807 = vmatmul.mubr.f32.gmra.mxu0 %v280
      %v808 = vpop.f32.mrf.mxu0
      %v809 = vadd.f32 %v564, %v808
      %v810 = vpop.f32.mrf.mxu0
      %811 = vmatprep.mubr.f32.mxu0 0.0
      %812 = vmatmul.mubr.f32.gmra.mxu0 %v281
      %v813 = vpop.f32.mrf.mxu0
      %v814 = vadd.f32 %v569, %v813
      %v815 = vpop.f32.mrf.mxu0
      %816 = vmatprep.mubr.f32.mxu0 0.0
      %817 = vmatmul.mubr.f32.gmra.mxu0 %v282
      %v818 = vpop.f32.mrf.mxu0
      %v819 = vadd.f32 %v574, %v818
      %v820 = vpop.f32.mrf.mxu0
      %821 = vmatprep.mubr.f32.mxu0 0.0
      %822 = vmatmul.mubr.f32.gmra.mxu0 %v283
      %v823 = vpop.f32.mrf.mxu0
      %v824 = vadd.f32 %v579, %v823
      %v825 = vpop.f32.mrf.mxu0
      %826 = vmatprep.mubr.f32.mxu0 0.0
      %827 = vmatmul.mubr.f32.gmra.mxu0 %v284
      %v828 = vpop.f32.mrf.mxu0
      %v829 = vadd.f32 %v584, %v828
      %v830 = vpop.f32.mrf.mxu0
      %831 = vmatprep.mubr.f32.mxu0 0.0
      %832 = vmatmul.mubr.f32.gmra.mxu0 %v285
      %v833 = vpop.f32.mrf.mxu0
      %v834 = vadd.f32 %v589, %v833
      %v835 = vpop.f32.mrf.mxu0
      %836 = vmatprep.mubr.f32.mxu0 0.0
      %837 = vmatmul.mubr.f32.gmra.mxu0 %v286
      %v838 = vpop.f32.mrf.mxu0
      %v839 = vadd.f32 %v594, %v838
      %v840 = vpop.f32.mrf.mxu0
      %841 = vmatprep.mubr.f32.mxu0 0.0
      %842 = vmatmul.mubr.f32.gmra.mxu0 %v287
      %v843 = vpop.f32.mrf.mxu0
      %v844 = vadd.f32 %v599, %v843
      %v845 = vpop.f32.mrf.mxu0
      %846 = vdwg.mxu0
      %v847 = vld [vmem:[%s246 + $0x2] sm:$0xff]
      %v848 = vld [vmem:[%s246 + $0xa] sm:$0xff]
      %v849 = vld [vmem:[%s246 + $0x12] sm:$0xff]
      %v850 = vld [vmem:[%s246 + $0x1a] sm:$0xff]
      %v851 = vld [vmem:[%s246 + $0x22] sm:$0xff]
      %v852 = vld [vmem:[%s246 + $0x2a] sm:$0xff]
      %v853 = vld [vmem:[%s246 + $0x32] sm:$0xff]
      %v854 = vld [vmem:[%s246 + $0x3a] sm:$0xff]
      %v855 = vld [vmem:[%s246 + $0x42] sm:$0xff]
      %v856 = vld [vmem:[%s246 + $0x4a] sm:$0xff]
      %v857 = vld [vmem:[%s246 + $0x52] sm:$0xff]
      %v858 = vld [vmem:[%s246 + $0x5a] sm:$0xff]
      %v859 = vld [vmem:[%s246 + $0x62] sm:$0xff]
      %v860 = vld [vmem:[%s246 + $0x6a] sm:$0xff]
      %v861 = vld [vmem:[%s246 + $0x72] sm:$0xff]
      %v862 = vld [vmem:[%s246 + $0x7a] sm:$0xff]
      %v863 = vld [vmem:[%s246 + $0x82] sm:$0xff]
      %v864 = vld [vmem:[%s246 + $0x8a] sm:$0xff]
      %v865 = vld [vmem:[%s246 + $0x92] sm:$0xff]
      %v866 = vld [vmem:[%s246 + $0x9a] sm:$0xff]
      %v867 = vld [vmem:[%s246 + $0xa2] sm:$0xff]
      %v868 = vld [vmem:[%s246 + $0xaa] sm:$0xff]
      %v869 = vld [vmem:[%s246 + $0xb2] sm:$0xff]
      %v870 = vld [vmem:[%s246 + $0xba] sm:$0xff]
      %v871 = vld [vmem:[%s246 + $0xc2] sm:$0xff]
      %v872 = vld [vmem:[%s246 + $0xca] sm:$0xff]
      %v873 = vld [vmem:[%s246 + $0xd2] sm:$0xff]
      %v874 = vld [vmem:[%s246 + $0xda] sm:$0xff]
      %v875 = vld [vmem:[%s246 + $0xe2] sm:$0xff]
      %v876 = vld [vmem:[%s246 + $0xea] sm:$0xff]
      %v877 = vld [vmem:[%s246 + $0xf2] sm:$0xff]
      %v878 = vld [vmem:[%s246 + $0xfa] sm:$0xff]
      %v879 = vld [vmem:[%s246 + $0x102] sm:$0xff]
      %v880 = vld [vmem:[%s246 + $0x10a] sm:$0xff]
      %v881 = vld [vmem:[%s246 + $0x112] sm:$0xff]
      %v882 = vld [vmem:[%s246 + $0x11a] sm:$0xff]
      %s883 = scalar_lea.vmem %s1, 256
      %v884 = vld [vmem:[%s883] sm:$0xff]
      %v885 = vld [vmem:[%s883 + $0x8] sm:$0xff]
      %v886 = vld [vmem:[%s883 + $0x10] sm:$0xff]
      %v887 = vld [vmem:[%s883 + $0x18] sm:$0xff]
      %v888 = vld [vmem:[%s883 + $0x20] sm:$0xff]
      %v889 = vld [vmem:[%s883 + $0x28] sm:$0xff]
      %v890 = vld [vmem:[%s883 + $0x30] sm:$0xff]
      %v891 = vld [vmem:[%s883 + $0x38] sm:$0xff]
      %v892 = vld [vmem:[%s883 + $0x40] sm:$0xff]
      %v893 = vld [vmem:[%s883 + $0x48] sm:$0xff]
      %v894 = vld [vmem:[%s883 + $0x50] sm:$0xff]
      %v895 = vld [vmem:[%s883 + $0x58] sm:$0xff]
      %v896 = vld [vmem:[%s883 + $0x60] sm:$0xff]
      %v897 = vld [vmem:[%s883 + $0x68] sm:$0xff]
      %v898 = vld [vmem:[%s883 + $0x70] sm:$0xff]
      %v899 = vld [vmem:[%s883 + $0x78] sm:$0xff]
      %900 = vmatprep.subr.mxu0 0.0
      %901 = vmatpush1.msra.mxu0 %v899
      %902 = vmatprep.subr.mxu0 0.0
      %903 = vmatpush1.msra.mxu0 %v898
      %904 = vmatprep.subr.mxu0 0.0
      %905 = vmatpush1.msra.mxu0 %v897
      %906 = vmatprep.subr.mxu0 0.0
      %907 = vmatpush1.msra.mxu0 %v896
      %908 = vmatprep.subr.mxu0 0.0
      %909 = vmatpush1.msra.mxu0 %v895
      %910 = vmatprep.subr.mxu0 0.0
      %911 = vmatpush1.msra.mxu0 %v894
      %912 = vmatprep.subr.mxu0 0.0
      %913 = vmatpush1.msra.mxu0 %v893
      %914 = vmatprep.subr.mxu0 0.0
      %915 = vmatpush1.msra.mxu0 %v892
      %916 = vmatprep.subr.mxu0 0.0
      %917 = vmatpush1.msra.mxu0 %v891
      %918 = vmatprep.subr.mxu0 0.0
      %919 = vmatpush1.msra.mxu0 %v890
      %920 = vmatprep.subr.mxu0 0.0
      %921 = vmatpush1.msra.mxu0 %v889
      %922 = vmatprep.subr.mxu0 0.0
      %923 = vmatpush1.msra.mxu0 %v888
      %924 = vmatprep.subr.mxu0 0.0
      %925 = vmatpush1.msra.mxu0 %v887
      %926 = vmatprep.subr.mxu0 0.0
      %927 = vmatpush1.msra.mxu0 %v886
      %928 = vmatprep.subr.mxu0 0.0
      %929 = vmatpush1.msra.mxu0 %v885
      %930 = vmatprep.subr.mxu0 0.0
      %931 = vmatpush1.msra.mxu0 %v884
      %932 = vmatprep.subr.mxu0 0.0
      %933 = vmatpush2.msra.mxu0 0.0
      %934 = vmatprep.subr.mxu0 0.0
      %935 = vmatpush2.msra.mxu0 0.0
      %936 = vmatprep.subr.mxu0 0.0
      %937 = vmatpush2.msra.mxu0 0.0
      %938 = vmatprep.subr.mxu0 0.0
      %939 = vmatpush2.msra.mxu0 0.0
      %940 = vmatprep.subr.mxu0 0.0
      %941 = vmatpush2.msra.mxu0 0.0
      %942 = vmatprep.subr.mxu0 0.0
      %943 = vmatpush2.msra.mxu0 0.0
      %944 = vmatprep.subr.mxu0 0.0
      %945 = vmatpush2.msra.mxu0 0.0
      %946 = vmatprep.subr.mxu0 0.0
      %947 = vmatpush2.msra.mxu0 0.0
      %948 = vmatprep.subr.mxu0 0.0
      %949 = vmatpush2.msra.mxu0 0.0
      %950 = vmatprep.subr.mxu0 0.0
      %951 = vmatpush2.msra.mxu0 0.0
      %952 = vmatprep.subr.mxu0 0.0
      %953 = vmatpush2.msra.mxu0 0.0
      %954 = vmatprep.subr.mxu0 0.0
      %955 = vmatpush2.msra.mxu0 0.0
      %956 = vmatprep.subr.mxu0 0.0
      %957 = vmatpush2.msra.mxu0 0.0
      %958 = vmatprep.subr.mxu0 0.0
      %959 = vmatpush2.msra.mxu0 0.0
      %960 = vmatprep.subr.mxu0 0.0
      %961 = vmatpush2.msra.mxu0 0.0
      %962 = vmatprep.subr.mxu0 0.0
      %963 = vmatpush2.msra.mxu0 0.0
      %964 = vmatprep.mubr.f32.mxu0 0.0
      %965 = vmatmul.mubr.f32.gmra.mxu0 %v847
      %v966 = vpop.f32.mrf.mxu0
      %v967 = vadd.f32 0.0, %v966
      %v968 = vpop.f32.mrf.mxu0
      %969 = vmatprep.mubr.f32.mxu0 0.0
      %970 = vmatmul.mubr.f32.gmra.mxu0 %v848
      %v971 = vpop.f32.mrf.mxu0
      %v972 = vadd.f32 0.0, %v971
      %v973 = vpop.f32.mrf.mxu0
      %974 = vmatprep.mubr.f32.mxu0 0.0
      %975 = vmatmul.mubr.f32.gmra.mxu0 %v849
      %v976 = vpop.f32.mrf.mxu0
      %v977 = vadd.f32 0.0, %v976
      %v978 = vpop.f32.mrf.mxu0
      %979 = vmatprep.mubr.f32.mxu0 0.0
      %980 = vmatmul.mubr.f32.gmra.mxu0 %v850
      %v981 = vpop.f32.mrf.mxu0
      %v982 = vadd.f32 0.0, %v981
      %v983 = vpop.f32.mrf.mxu0
      %984 = vmatprep.mubr.f32.mxu0 0.0
      %985 = vmatmul.mubr.f32.gmra.mxu0 %v851
      %v986 = vpop.f32.mrf.mxu0
      %v987 = vadd.f32 0.0, %v986
      %v988 = vpop.f32.mrf.mxu0
      %989 = vmatprep.mubr.f32.mxu0 0.0
      %990 = vmatmul.mubr.f32.gmra.mxu0 %v852
      %v991 = vpop.f32.mrf.mxu0
      %v992 = vadd.f32 0.0, %v991
      %v993 = vpop.f32.mrf.mxu0
      %994 = vmatprep.mubr.f32.mxu0 0.0
      %995 = vmatmul.mubr.f32.gmra.mxu0 %v853
      %v996 = vpop.f32.mrf.mxu0
      %v997 = vadd.f32 0.0, %v996
      %v998 = vpop.f32.mrf.mxu0
      %999 = vmatprep.mubr.f32.mxu0 0.0
      %1000 = vmatmul.mubr.f32.gmra.mxu0 %v854
      %v1001 = vpop.f32.mrf.mxu0
      %v1002 = vadd.f32 0.0, %v1001
      %v1003 = vpop.f32.mrf.mxu0
      %1004 = vmatprep.mubr.f32.mxu0 0.0
      %1005 = vmatmul.mubr.f32.gmra.mxu0 %v855
      %v1006 = vpop.f32.mrf.mxu0
      %v1007 = vadd.f32 0.0, %v1006
      %v1008 = vpop.f32.mrf.mxu0
      %1009 = vmatprep.mubr.f32.mxu0 0.0
      %1010 = vmatmul.mubr.f32.gmra.mxu0 %v856
      %v1011 = vpop.f32.mrf.mxu0
      %v1012 = vadd.f32 0.0, %v1011
      %v1013 = vpop.f32.mrf.mxu0
      %1014 = vmatprep.mubr.f32.mxu0 0.0
      %1015 = vmatmul.mubr.f32.gmra.mxu0 %v857
      %v1016 = vpop.f32.mrf.mxu0
      %v1017 = vadd.f32 0.0, %v1016
      %v1018 = vpop.f32.mrf.mxu0
      %1019 = vmatprep.mubr.f32.mxu0 0.0
      %1020 = vmatmul.mubr.f32.gmra.mxu0 %v858
      %v1021 = vpop.f32.mrf.mxu0
      %v1022 = vadd.f32 0.0, %v1021
      %v1023 = vpop.f32.mrf.mxu0
      %1024 = vmatprep.mubr.f32.mxu0 0.0
      %1025 = vmatmul.mubr.f32.gmra.mxu0 %v859
      %v1026 = vpop.f32.mrf.mxu0
      %v1027 = vadd.f32 0.0, %v1026
      %v1028 = vpop.f32.mrf.mxu0
      %1029 = vmatprep.mubr.f32.mxu0 0.0
      %1030 = vmatmul.mubr.f32.gmra.mxu0 %v860
      %v1031 = vpop.f32.mrf.mxu0
      %v1032 = vadd.f32 0.0, %v1031
      %v1033 = vpop.f32.mrf.mxu0
      %1034 = vmatprep.mubr.f32.mxu0 0.0
      %1035 = vmatmul.mubr.f32.gmra.mxu0 %v861
      %v1036 = vpop.f32.mrf.mxu0
      %v1037 = vadd.f32 0.0, %v1036
      %v1038 = vpop.f32.mrf.mxu0
      %1039 = vmatprep.mubr.f32.mxu0 0.0
      %1040 = vmatmul.mubr.f32.gmra.mxu0 %v862
      %v1041 = vpop.f32.mrf.mxu0
      %v1042 = vadd.f32 0.0, %v1041
      %v1043 = vpop.f32.mrf.mxu0
      %1044 = vmatprep.mubr.f32.mxu0 0.0
      %1045 = vmatmul.mubr.f32.gmra.mxu0 %v863
      %v1046 = vpop.f32.mrf.mxu0
      %v1047 = vadd.f32 0.0, %v1046
      %v1048 = vpop.f32.mrf.mxu0
      %1049 = vmatprep.mubr.f32.mxu0 0.0
      %1050 = vmatmul.mubr.f32.gmra.mxu0 %v864
      %v1051 = vpop.f32.mrf.mxu0
      %v1052 = vadd.f32 0.0, %v1051
      %v1053 = vpop.f32.mrf.mxu0
      %1054 = vmatprep.mubr.f32.mxu0 0.0
      %1055 = vmatmul.mubr.f32.gmra.mxu0 %v865
      %v1056 = vpop.f32.mrf.mxu0
      %v1057 = vadd.f32 0.0, %v1056
      %v1058 = vpop.f32.mrf.mxu0
      %1059 = vmatprep.mubr.f32.mxu0 0.0
      %1060 = vmatmul.mubr.f32.gmra.mxu0 %v866
      %v1061 = vpop.f32.mrf.mxu0
      %v1062 = vadd.f32 0.0, %v1061
      %v1063 = vpop.f32.mrf.mxu0
      %1064 = vmatprep.mubr.f32.mxu0 0.0
      %1065 = vmatmul.mubr.f32.gmra.mxu0 %v867
      %v1066 = vpop.f32.mrf.mxu0
      %v1067 = vadd.f32 0.0, %v1066
      %v1068 = vpop.f32.mrf.mxu0
      %1069 = vmatprep.mubr.f32.mxu0 0.0
      %1070 = vmatmul.mubr.f32.gmra.mxu0 %v868
      %v1071 = vpop.f32.mrf.mxu0
      %v1072 = vadd.f32 0.0, %v1071
      %v1073 = vpop.f32.mrf.mxu0
      %1074 = vmatprep.mubr.f32.mxu0 0.0
      %1075 = vmatmul.mubr.f32.gmra.mxu0 %v869
      %v1076 = vpop.f32.mrf.mxu0
      %v1077 = vadd.f32 0.0, %v1076
      %v1078 = vpop.f32.mrf.mxu0
      %1079 = vmatprep.mubr.f32.mxu0 0.0
      %1080 = vmatmul.mubr.f32.gmra.mxu0 %v870
      %v1081 = vpop.f32.mrf.mxu0
      %v1082 = vadd.f32 0.0, %v1081
      %v1083 = vpop.f32.mrf.mxu0
      %1084 = vmatprep.mubr.f32.mxu0 0.0
      %1085 = vmatmul.mubr.f32.gmra.mxu0 %v871
      %v1086 = vpop.f32.mrf.mxu0
      %v1087 = vadd.f32 0.0, %v1086
      %v1088 = vpop.f32.mrf.mxu0
      %1089 = vmatprep.mubr.f32.mxu0 0.0
      %1090 = vmatmul.mubr.f32.gmra.mxu0 %v872
      %v1091 = vpop.f32.mrf.mxu0
      %v1092 = vadd.f32 0.0, %v1091
      %v1093 = vpop.f32.mrf.mxu0
      %1094 = vmatprep.mubr.f32.mxu0 0.0
      %1095 = vmatmul.mubr.f32.gmra.mxu0 %v873
      %v1096 = vpop.f32.mrf.mxu0
      %v1097 = vadd.f32 0.0, %v1096
      %v1098 = vpop.f32.mrf.mxu0
      %1099 = vmatprep.mubr.f32.mxu0 0.0
      %1100 = vmatmul.mubr.f32.gmra.mxu0 %v874
      %v1101 = vpop.f32.mrf.mxu0
      %v1102 = vadd.f32 0.0, %v1101
      %v1103 = vpop.f32.mrf.mxu0
      %1104 = vmatprep.mubr.f32.mxu0 0.0
      %1105 = vmatmul.mubr.f32.gmra.mxu0 %v875
      %v1106 = vpop.f32.mrf.mxu0
      %v1107 = vadd.f32 0.0, %v1106
      %v1108 = vpop.f32.mrf.mxu0
      %1109 = vmatprep.mubr.f32.mxu0 0.0
      %1110 = vmatmul.mubr.f32.gmra.mxu0 %v876
      %v1111 = vpop.f32.mrf.mxu0
      %v1112 = vadd.f32 0.0, %v1111
      %v1113 = vpop.f32.mrf.mxu0
      %1114 = vmatprep.mubr.f32.mxu0 0.0
      %1115 = vmatmul.mubr.f32.gmra.mxu0 %v877
      %v1116 = vpop.f32.mrf.mxu0
      %v1117 = vadd.f32 0.0, %v1116
      %v1118 = vpop.f32.mrf.mxu0
      %1119 = vmatprep.mubr.f32.mxu0 0.0
      %1120 = vmatmul.mubr.f32.gmra.mxu0 %v878
      %v1121 = vpop.f32.mrf.mxu0
      %v1122 = vadd.f32 0.0, %v1121
      %v1123 = vpop.f32.mrf.mxu0
      %1124 = vmatprep.mubr.f32.mxu0 0.0
      %1125 = vmatmul.mubr.f32.gmra.mxu0 %v879
      %v1126 = vpop.f32.mrf.mxu0
      %v1127 = vadd.f32 0.0, %v1126
      %v1128 = vpop.f32.mrf.mxu0
      %1129 = vmatprep.mubr.f32.mxu0 0.0
      %1130 = vmatmul.mubr.f32.gmra.mxu0 %v880
      %v1131 = vpop.f32.mrf.mxu0
      %v1132 = vadd.f32 0.0, %v1131
      %v1133 = vpop.f32.mrf.mxu0
      %1134 = vmatprep.mubr.f32.mxu0 0.0
      %1135 = vmatmul.mubr.f32.gmra.mxu0 %v881
      %v1136 = vpop.f32.mrf.mxu0
      %v1137 = vadd.f32 0.0, %v1136
      %v1138 = vpop.f32.mrf.mxu0
      %1139 = vmatprep.mubr.f32.mxu0 0.0
      %1140 = vmatmul.mubr.f32.gmra.mxu0 %v882
      %v1141 = vpop.f32.mrf.mxu0
      %v1142 = vadd.f32 0.0, %v1141
      %v1143 = vpop.f32.mrf.mxu0
      %1144 = vdwg.mxu0
      %v1145 = vadd.f32 %v669, %v967
      %v1146 = vadd.f32 %v674, %v972
      %v1147 = vadd.f32 %v679, %v977
      %v1148 = vadd.f32 %v684, %v982
      %v1149 = vadd.f32 %v689, %v987
      %v1150 = vadd.f32 %v694, %v992
      %v1151 = vadd.f32 %v699, %v997
      %v1152 = vadd.f32 %v704, %v1002
      %v1153 = vadd.f32 %v709, %v1007
      %v1154 = vadd.f32 %v714, %v1012
      %v1155 = vadd.f32 %v719, %v1017
      %v1156 = vadd.f32 %v724, %v1022
      %v1157 = vadd.f32 %v729, %v1027
      %v1158 = vadd.f32 %v734, %v1032
      %v1159 = vadd.f32 %v739, %v1037
      %v1160 = vadd.f32 %v744, %v1042
      %v1161 = vadd.f32 %v749, %v1047
      %v1162 = vadd.f32 %v754, %v1052
      %v1163 = vadd.f32 %v759, %v1057
      %v1164 = vadd.f32 %v764, %v1062
      %v1165 = vadd.f32 %v769, %v1067
      %v1166 = vadd.f32 %v774, %v1072
      %v1167 = vadd.f32 %v779, %v1077
      %v1168 = vadd.f32 %v784, %v1082
      %v1169 = vadd.f32 %v789, %v1087
      %v1170 = vadd.f32 %v794, %v1092
      %v1171 = vadd.f32 %v799, %v1097
      %v1172 = vadd.f32 %v804, %v1102
      %v1173 = vadd.f32 %v809, %v1107
      %v1174 = vadd.f32 %v814, %v1112
      %v1175 = vadd.f32 %v819, %v1117
      %v1176 = vadd.f32 %v824, %v1122
      %v1177 = vadd.f32 %v829, %v1127
      %v1178 = vadd.f32 %v834, %v1132
      %v1179 = vadd.f32 %v839, %v1137
      %v1180 = vadd.f32 %v844, %v1142
      %v1181 = vld [vmem:[%s246 + $0x12] sm:$0xff]
      %v1182 = vld [vmem:[%s246 + $0x1a] sm:$0xff]
      %v1183 = vld [vmem:[%s246 + $0x22] sm:$0xff]
      %v1184 = vld [vmem:[%s246 + $0x2a] sm:$0xff]
      %v1185 = vld [vmem:[%s246 + $0x32] sm:$0xff]
      %v1186 = vld [vmem:[%s246 + $0x3a] sm:$0xff]
      %v1187 = vld [vmem:[%s246 + $0x42] sm:$0xff]
      %v1188 = vld [vmem:[%s246 + $0x4a] sm:$0xff]
      %v1189 = vld [vmem:[%s246 + $0x52] sm:$0xff]
      %v1190 = vld [vmem:[%s246 + $0x5a] sm:$0xff]
      %v1191 = vld [vmem:[%s246 + $0x62] sm:$0xff]
      %v1192 = vld [vmem:[%s246 + $0x6a] sm:$0xff]
      %v1193 = vld [vmem:[%s246 + $0x72] sm:$0xff]
      %v1194 = vld [vmem:[%s246 + $0x7a] sm:$0xff]
      %v1195 = vld [vmem:[%s246 + $0x82] sm:$0xff]
      %v1196 = vld [vmem:[%s246 + $0x8a] sm:$0xff]
      %v1197 = vld [vmem:[%s246 + $0x92] sm:$0xff]
      %v1198 = vld [vmem:[%s246 + $0x9a] sm:$0xff]
      %v1199 = vld [vmem:[%s246 + $0xa2] sm:$0xff]
      %v1200 = vld [vmem:[%s246 + $0xaa] sm:$0xff]
      %v1201 = vld [vmem:[%s246 + $0xb2] sm:$0xff]
      %v1202 = vld [vmem:[%s246 + $0xba] sm:$0xff]
      %v1203 = vld [vmem:[%s246 + $0xc2] sm:$0xff]
      %v1204 = vld [vmem:[%s246 + $0xca] sm:$0xff]
      %v1205 = vld [vmem:[%s246 + $0xd2] sm:$0xff]
      %v1206 = vld [vmem:[%s246 + $0xda] sm:$0xff]
      %v1207 = vld [vmem:[%s246 + $0xe2] sm:$0xff]
      %v1208 = vld [vmem:[%s246 + $0xea] sm:$0xff]
      %v1209 = vld [vmem:[%s246 + $0xf2] sm:$0xff]
      %v1210 = vld [vmem:[%s246 + $0xfa] sm:$0xff]
      %v1211 = vld [vmem:[%s246 + $0x102] sm:$0xff]
      %v1212 = vld [vmem:[%s246 + $0x10a] sm:$0xff]
      %v1213 = vld [vmem:[%s246 + $0x112] sm:$0xff]
      %v1214 = vld [vmem:[%s246 + $0x11a] sm:$0xff]
      %v1215 = vld [vmem:[%s246 + $0x122] sm:$0xff]
      %v1216 = vld [vmem:[%s246 + $0x12a] sm:$0xff]
      %s1217 = scalar_lea.vmem %s1, 384
      %v1218 = vld [vmem:[%s1217] sm:$0xff]
      %v1219 = vld [vmem:[%s1217 + $0x8] sm:$0xff]
      %v1220 = vld [vmem:[%s1217 + $0x10] sm:$0xff]
      %v1221 = vld [vmem:[%s1217 + $0x18] sm:$0xff]
      %v1222 = vld [vmem:[%s1217 + $0x20] sm:$0xff]
      %v1223 = vld [vmem:[%s1217 + $0x28] sm:$0xff]
      %v1224 = vld [vmem:[%s1217 + $0x30] sm:$0xff]
      %v1225 = vld [vmem:[%s1217 + $0x38] sm:$0xff]
      %v1226 = vld [vmem:[%s1217 + $0x40] sm:$0xff]
      %v1227 = vld [vmem:[%s1217 + $0x48] sm:$0xff]
      %v1228 = vld [vmem:[%s1217 + $0x50] sm:$0xff]
      %v1229 = vld [vmem:[%s1217 + $0x58] sm:$0xff]
      %v1230 = vld [vmem:[%s1217 + $0x60] sm:$0xff]
      %v1231 = vld [vmem:[%s1217 + $0x68] sm:$0xff]
      %v1232 = vld [vmem:[%s1217 + $0x70] sm:$0xff]
      %v1233 = vld [vmem:[%s1217 + $0x78] sm:$0xff]
      %1234 = vmatprep.subr.mxu0 0.0
      %1235 = vmatpush1.msra.mxu0 %v1233
      %1236 = vmatprep.subr.mxu0 0.0
      %1237 = vmatpush1.msra.mxu0 %v1232
      %1238 = vmatprep.subr.mxu0 0.0
      %1239 = vmatpush1.msra.mxu0 %v1231
      %1240 = vmatprep.subr.mxu0 0.0
      %1241 = vmatpush1.msra.mxu0 %v1230
      %1242 = vmatprep.subr.mxu0 0.0
      %1243 = vmatpush1.msra.mxu0 %v1229
      %1244 = vmatprep.subr.mxu0 0.0
      %1245 = vmatpush1.msra.mxu0 %v1228
      %1246 = vmatprep.subr.mxu0 0.0
      %1247 = vmatpush1.msra.mxu0 %v1227
      %1248 = vmatprep.subr.mxu0 0.0
      %1249 = vmatpush1.msra.mxu0 %v1226
      %1250 = vmatprep.subr.mxu0 0.0
      %1251 = vmatpush1.msra.mxu0 %v1225
      %1252 = vmatprep.subr.mxu0 0.0
      %1253 = vmatpush1.msra.mxu0 %v1224
      %1254 = vmatprep.subr.mxu0 0.0
      %1255 = vmatpush1.msra.mxu0 %v1223
      %1256 = vmatprep.subr.mxu0 0.0
      %1257 = vmatpush1.msra.mxu0 %v1222
      %1258 = vmatprep.subr.mxu0 0.0
      %1259 = vmatpush1.msra.mxu0 %v1221
      %1260 = vmatprep.subr.mxu0 0.0
      %1261 = vmatpush1.msra.mxu0 %v1220
      %1262 = vmatprep.subr.mxu0 0.0
      %1263 = vmatpush1.msra.mxu0 %v1219
      %1264 = vmatprep.subr.mxu0 0.0
      %1265 = vmatpush1.msra.mxu0 %v1218
      %1266 = vmatprep.subr.mxu0 0.0
      %1267 = vmatpush2.msra.mxu0 0.0
      %1268 = vmatprep.subr.mxu0 0.0
      %1269 = vmatpush2.msra.mxu0 0.0
      %1270 = vmatprep.subr.mxu0 0.0
      %1271 = vmatpush2.msra.mxu0 0.0
      %1272 = vmatprep.subr.mxu0 0.0
      %1273 = vmatpush2.msra.mxu0 0.0
      %1274 = vmatprep.subr.mxu0 0.0
      %1275 = vmatpush2.msra.mxu0 0.0
      %1276 = vmatprep.subr.mxu0 0.0
      %1277 = vmatpush2.msra.mxu0 0.0
      %1278 = vmatprep.subr.mxu0 0.0
      %1279 = vmatpush2.msra.mxu0 0.0
      %1280 = vmatprep.subr.mxu0 0.0
      %1281 = vmatpush2.msra.mxu0 0.0
      %1282 = vmatprep.subr.mxu0 0.0
      %1283 = vmatpush2.msra.mxu0 0.0
      %1284 = vmatprep.subr.mxu0 0.0
      %1285 = vmatpush2.msra.mxu0 0.0
      %1286 = vmatprep.subr.mxu0 0.0
      %1287 = vmatpush2.msra.mxu0 0.0
      %1288 = vmatprep.subr.mxu0 0.0
      %1289 = vmatpush2.msra.mxu0 0.0
      %1290 = vmatprep.subr.mxu0 0.0
      %1291 = vmatpush2.msra.mxu0 0.0
      %1292 = vmatprep.subr.mxu0 0.0
      %1293 = vmatpush2.msra.mxu0 0.0
      %1294 = vmatprep.subr.mxu0 0.0
      %1295 = vmatpush2.msra.mxu0 0.0
      %1296 = vmatprep.subr.mxu0 0.0
      %1297 = vmatpush2.msra.mxu0 0.0
      %1298 = vmatprep.mubr.f32.mxu0 0.0
      %1299 = vmatmul.mubr.f32.gmra.mxu0 %v1181
      %v1300 = vpop.f32.mrf.mxu0
      %v1301 = vadd.f32 0.0, %v1300
      %v1302 = vpop.f32.mrf.mxu0
      %1303 = vmatprep.mubr.f32.mxu0 0.0
      %1304 = vmatmul.mubr.f32.gmra.mxu0 %v1182
      %v1305 = vpop.f32.mrf.mxu0
      %v1306 = vadd.f32 0.0, %v1305
      %v1307 = vpop.f32.mrf.mxu0
      %1308 = vmatprep.mubr.f32.mxu0 0.0
      %1309 = vmatmul.mubr.f32.gmra.mxu0 %v1183
      %v1310 = vpop.f32.mrf.mxu0
      %v1311 = vadd.f32 0.0, %v1310
      %v1312 = vpop.f32.mrf.mxu0
      %1313 = vmatprep.mubr.f32.mxu0 0.0
      %1314 = vmatmul.mubr.f32.gmra.mxu0 %v1184
      %v1315 = vpop.f32.mrf.mxu0
      %v1316 = vadd.f32 0.0, %v1315
      %v1317 = vpop.f32.mrf.mxu0
      %1318 = vmatprep.mubr.f32.mxu0 0.0
      %1319 = vmatmul.mubr.f32.gmra.mxu0 %v1185
      %v1320 = vpop.f32.mrf.mxu0
      %v1321 = vadd.f32 0.0, %v1320
      %v1322 = vpop.f32.mrf.mxu0
      %1323 = vmatprep.mubr.f32.mxu0 0.0
      %1324 = vmatmul.mubr.f32.gmra.mxu0 %v1186
      %v1325 = vpop.f32.mrf.mxu0
      %v1326 = vadd.f32 0.0, %v1325
      %v1327 = vpop.f32.mrf.mxu0
      %1328 = vmatprep.mubr.f32.mxu0 0.0
      %1329 = vmatmul.mubr.f32.gmra.mxu0 %v1187
      %v1330 = vpop.f32.mrf.mxu0
      %v1331 = vadd.f32 0.0, %v1330
      %v1332 = vpop.f32.mrf.mxu0
      %1333 = vmatprep.mubr.f32.mxu0 0.0
      %1334 = vmatmul.mubr.f32.gmra.mxu0 %v1188
      %v1335 = vpop.f32.mrf.mxu0
      %v1336 = vadd.f32 0.0, %v1335
      %v1337 = vpop.f32.mrf.mxu0
      %1338 = vmatprep.mubr.f32.mxu0 0.0
      %1339 = vmatmul.mubr.f32.gmra.mxu0 %v1189
      %v1340 = vpop.f32.mrf.mxu0
      %v1341 = vadd.f32 0.0, %v1340
      %v1342 = vpop.f32.mrf.mxu0
      %1343 = vmatprep.mubr.f32.mxu0 0.0
      %1344 = vmatmul.mubr.f32.gmra.mxu0 %v1190
      %v1345 = vpop.f32.mrf.mxu0
      %v1346 = vadd.f32 0.0, %v1345
      %v1347 = vpop.f32.mrf.mxu0
      %1348 = vmatprep.mubr.f32.mxu0 0.0
      %1349 = vmatmul.mubr.f32.gmra.mxu0 %v1191
      %v1350 = vpop.f32.mrf.mxu0
      %v1351 = vadd.f32 0.0, %v1350
      %v1352 = vpop.f32.mrf.mxu0
      %1353 = vmatprep.mubr.f32.mxu0 0.0
      %1354 = vmatmul.mubr.f32.gmra.mxu0 %v1192
      %v1355 = vpop.f32.mrf.mxu0
      %v1356 = vadd.f32 0.0, %v1355
      %v1357 = vpop.f32.mrf.mxu0
      %1358 = vmatprep.mubr.f32.mxu0 0.0
      %1359 = vmatmul.mubr.f32.gmra.mxu0 %v1193
      %v1360 = vpop.f32.mrf.mxu0
      %v1361 = vadd.f32 0.0, %v1360
      %v1362 = vpop.f32.mrf.mxu0
      %1363 = vmatprep.mubr.f32.mxu0 0.0
      %1364 = vmatmul.mubr.f32.gmra.mxu0 %v1194
      %v1365 = vpop.f32.mrf.mxu0
      %v1366 = vadd.f32 0.0, %v1365
      %v1367 = vpop.f32.mrf.mxu0
      %1368 = vmatprep.mubr.f32.mxu0 0.0
      %1369 = vmatmul.mubr.f32.gmra.mxu0 %v1195
      %v1370 = vpop.f32.mrf.mxu0
      %v1371 = vadd.f32 0.0, %v1370
      %v1372 = vpop.f32.mrf.mxu0
      %1373 = vmatprep.mubr.f32.mxu0 0.0
      %1374 = vmatmul.mubr.f32.gmra.mxu0 %v1196
      %v1375 = vpop.f32.mrf.mxu0
      %v1376 = vadd.f32 0.0, %v1375
      %v1377 = vpop.f32.mrf.mxu0
      %1378 = vmatprep.mubr.f32.mxu0 0.0
      %1379 = vmatmul.mubr.f32.gmra.mxu0 %v1197
      %v1380 = vpop.f32.mrf.mxu0
      %v1381 = vadd.f32 0.0, %v1380
      %v1382 = vpop.f32.mrf.mxu0
      %1383 = vmatprep.mubr.f32.mxu0 0.0
      %1384 = vmatmul.mubr.f32.gmra.mxu0 %v1198
      %v1385 = vpop.f32.mrf.mxu0
      %v1386 = vadd.f32 0.0, %v1385
      %v1387 = vpop.f32.mrf.mxu0
      %1388 = vmatprep.mubr.f32.mxu0 0.0
      %1389 = vmatmul.mubr.f32.gmra.mxu0 %v1199
      %v1390 = vpop.f32.mrf.mxu0
      %v1391 = vadd.f32 0.0, %v1390
      %v1392 = vpop.f32.mrf.mxu0
      %1393 = vmatprep.mubr.f32.mxu0 0.0
      %1394 = vmatmul.mubr.f32.gmra.mxu0 %v1200
      %v1395 = vpop.f32.mrf.mxu0
      %v1396 = vadd.f32 0.0, %v1395
      %v1397 = vpop.f32.mrf.mxu0
      %1398 = vmatprep.mubr.f32.mxu0 0.0
      %1399 = vmatmul.mubr.f32.gmra.mxu0 %v1201
      %v1400 = vpop.f32.mrf.mxu0
      %v1401 = vadd.f32 0.0, %v1400
      %v1402 = vpop.f32.mrf.mxu0
      %1403 = vmatprep.mubr.f32.mxu0 0.0
      %1404 = vmatmul.mubr.f32.gmra.mxu0 %v1202
      %v1405 = vpop.f32.mrf.mxu0
      %v1406 = vadd.f32 0.0, %v1405
      %v1407 = vpop.f32.mrf.mxu0
      %1408 = vmatprep.mubr.f32.mxu0 0.0
      %1409 = vmatmul.mubr.f32.gmra.mxu0 %v1203
      %v1410 = vpop.f32.mrf.mxu0
      %v1411 = vadd.f32 0.0, %v1410
      %v1412 = vpop.f32.mrf.mxu0
      %1413 = vmatprep.mubr.f32.mxu0 0.0
      %1414 = vmatmul.mubr.f32.gmra.mxu0 %v1204
      %v1415 = vpop.f32.mrf.mxu0
      %v1416 = vadd.f32 0.0, %v1415
      %v1417 = vpop.f32.mrf.mxu0
      %1418 = vmatprep.mubr.f32.mxu0 0.0
      %1419 = vmatmul.mubr.f32.gmra.mxu0 %v1205
      %v1420 = vpop.f32.mrf.mxu0
      %v1421 = vadd.f32 0.0, %v1420
      %v1422 = vpop.f32.mrf.mxu0
      %1423 = vmatprep.mubr.f32.mxu0 0.0
      %1424 = vmatmul.mubr.f32.gmra.mxu0 %v1206
      %v1425 = vpop.f32.mrf.mxu0
      %v1426 = vadd.f32 0.0, %v1425
      %v1427 = vpop.f32.mrf.mxu0
      %1428 = vmatprep.mubr.f32.mxu0 0.0
      %1429 = vmatmul.mubr.f32.gmra.mxu0 %v1207
      %v1430 = vpop.f32.mrf.mxu0
      %v1431 = vadd.f32 0.0, %v1430
      %v1432 = vpop.f32.mrf.mxu0
      %1433 = vmatprep.mubr.f32.mxu0 0.0
      %1434 = vmatmul.mubr.f32.gmra.mxu0 %v1208
      %v1435 = vpop.f32.mrf.mxu0
      %v1436 = vadd.f32 0.0, %v1435
      %v1437 = vpop.f32.mrf.mxu0
      %1438 = vmatprep.mubr.f32.mxu0 0.0
      %1439 = vmatmul.mubr.f32.gmra.mxu0 %v1209
      %v1440 = vpop.f32.mrf.mxu0
      %v1441 = vadd.f32 0.0, %v1440
      %v1442 = vpop.f32.mrf.mxu0
      %1443 = vmatprep.mubr.f32.mxu0 0.0
      %1444 = vmatmul.mubr.f32.gmra.mxu0 %v1210
      %v1445 = vpop.f32.mrf.mxu0
      %v1446 = vadd.f32 0.0, %v1445
      %v1447 = vpop.f32.mrf.mxu0
      %1448 = vmatprep.mubr.f32.mxu0 0.0
      %1449 = vmatmul.mubr.f32.gmra.mxu0 %v1211
      %v1450 = vpop.f32.mrf.mxu0
      %v1451 = vadd.f32 0.0, %v1450
      %v1452 = vpop.f32.mrf.mxu0
      %1453 = vmatprep.mubr.f32.mxu0 0.0
      %1454 = vmatmul.mubr.f32.gmra.mxu0 %v1212
      %v1455 = vpop.f32.mrf.mxu0
      %v1456 = vadd.f32 0.0, %v1455
      %v1457 = vpop.f32.mrf.mxu0
      %1458 = vmatprep.mubr.f32.mxu0 0.0
      %1459 = vmatmul.mubr.f32.gmra.mxu0 %v1213
      %v1460 = vpop.f32.mrf.mxu0
      %v1461 = vadd.f32 0.0, %v1460
      %v1462 = vpop.f32.mrf.mxu0
      %1463 = vmatprep.mubr.f32.mxu0 0.0
      %1464 = vmatmul.mubr.f32.gmra.mxu0 %v1214
      %v1465 = vpop.f32.mrf.mxu0
      %v1466 = vadd.f32 0.0, %v1465
      %v1467 = vpop.f32.mrf.mxu0
      %1468 = vmatprep.mubr.f32.mxu0 0.0
      %1469 = vmatmul.mubr.f32.gmra.mxu0 %v1215
      %v1470 = vpop.f32.mrf.mxu0
      %v1471 = vadd.f32 0.0, %v1470
      %v1472 = vpop.f32.mrf.mxu0
      %1473 = vmatprep.mubr.f32.mxu0 0.0
      %1474 = vmatmul.mubr.f32.gmra.mxu0 %v1216
      %v1475 = vpop.f32.mrf.mxu0
      %v1476 = vadd.f32 0.0, %v1475
      %v1477 = vpop.f32.mrf.mxu0
      %1478 = vdwg.mxu0
      %v1479 = vadd.f32 %v1145, %v1301
      %v1480 = vadd.f32 %v1146, %v1306
      %v1481 = vadd.f32 %v1147, %v1311
      %v1482 = vadd.f32 %v1148, %v1316
      %v1483 = vadd.f32 %v1149, %v1321
      %v1484 = vadd.f32 %v1150, %v1326
      %v1485 = vadd.f32 %v1151, %v1331
      %v1486 = vadd.f32 %v1152, %v1336
      %v1487 = vadd.f32 %v1153, %v1341
      %v1488 = vadd.f32 %v1154, %v1346
      %v1489 = vadd.f32 %v1155, %v1351
      %v1490 = vadd.f32 %v1156, %v1356
      %v1491 = vadd.f32 %v1157, %v1361
      %v1492 = vadd.f32 %v1158, %v1366
      %v1493 = vadd.f32 %v1159, %v1371
      %v1494 = vadd.f32 %v1160, %v1376
      %v1495 = vadd.f32 %v1161, %v1381
      %v1496 = vadd.f32 %v1162, %v1386
      %v1497 = vadd.f32 %v1163, %v1391
      %v1498 = vadd.f32 %v1164, %v1396
      %v1499 = vadd.f32 %v1165, %v1401
      %v1500 = vadd.f32 %v1166, %v1406
      %v1501 = vadd.f32 %v1167, %v1411
      %v1502 = vadd.f32 %v1168, %v1416
      %v1503 = vadd.f32 %v1169, %v1421
      %v1504 = vadd.f32 %v1170, %v1426
      %v1505 = vadd.f32 %v1171, %v1431
      %v1506 = vadd.f32 %v1172, %v1436
      %v1507 = vadd.f32 %v1173, %v1441
      %v1508 = vadd.f32 %v1174, %v1446
      %v1509 = vadd.f32 %v1175, %v1451
      %v1510 = vadd.f32 %v1176, %v1456
      %v1511 = vadd.f32 %v1177, %v1461
      %v1512 = vadd.f32 %v1178, %v1466
      %v1513 = vadd.f32 %v1179, %v1471
      %v1514 = vadd.f32 %v1180, %v1476
      %v1515 = vld [vmem:[%s246 + $0x13] sm:$0xff]
      %v1516 = vld [vmem:[%s246 + $0x1b] sm:$0xff]
      %v1517 = vld [vmem:[%s246 + $0x23] sm:$0xff]
      %v1518 = vld [vmem:[%s246 + $0x2b] sm:$0xff]
      %v1519 = vld [vmem:[%s246 + $0x33] sm:$0xff]
      %v1520 = vld [vmem:[%s246 + $0x3b] sm:$0xff]
      %v1521 = vld [vmem:[%s246 + $0x43] sm:$0xff]
      %v1522 = vld [vmem:[%s246 + $0x4b] sm:$0xff]
      %v1523 = vld [vmem:[%s246 + $0x53] sm:$0xff]
      %v1524 = vld [vmem:[%s246 + $0x5b] sm:$0xff]
      %v1525 = vld [vmem:[%s246 + $0x63] sm:$0xff]
      %v1526 = vld [vmem:[%s246 + $0x6b] sm:$0xff]
      %v1527 = vld [vmem:[%s246 + $0x73] sm:$0xff]
      %v1528 = vld [vmem:[%s246 + $0x7b] sm:$0xff]
      %v1529 = vld [vmem:[%s246 + $0x83] sm:$0xff]
      %v1530 = vld [vmem:[%s246 + $0x8b] sm:$0xff]
      %v1531 = vld [vmem:[%s246 + $0x93] sm:$0xff]
      %v1532 = vld [vmem:[%s246 + $0x9b] sm:$0xff]
      %v1533 = vld [vmem:[%s246 + $0xa3] sm:$0xff]
      %v1534 = vld [vmem:[%s246 + $0xab] sm:$0xff]
      %v1535 = vld [vmem:[%s246 + $0xb3] sm:$0xff]
      %v1536 = vld [vmem:[%s246 + $0xbb] sm:$0xff]
      %v1537 = vld [vmem:[%s246 + $0xc3] sm:$0xff]
      %v1538 = vld [vmem:[%s246 + $0xcb] sm:$0xff]
      %v1539 = vld [vmem:[%s246 + $0xd3] sm:$0xff]
      %v1540 = vld [vmem:[%s246 + $0xdb] sm:$0xff]
      %v1541 = vld [vmem:[%s246 + $0xe3] sm:$0xff]
      %v1542 = vld [vmem:[%s246 + $0xeb] sm:$0xff]
      %v1543 = vld [vmem:[%s246 + $0xf3] sm:$0xff]
      %v1544 = vld [vmem:[%s246 + $0xfb] sm:$0xff]
      %v1545 = vld [vmem:[%s246 + $0x103] sm:$0xff]
      %v1546 = vld [vmem:[%s246 + $0x10b] sm:$0xff]
      %v1547 = vld [vmem:[%s246 + $0x113] sm:$0xff]
      %v1548 = vld [vmem:[%s246 + $0x11b] sm:$0xff]
      %v1549 = vld [vmem:[%s246 + $0x123] sm:$0xff]
      %v1550 = vld [vmem:[%s246 + $0x12b] sm:$0xff]
      %s1551 = scalar_lea.vmem %s1, 512
      %v1552 = vld [vmem:[%s1551] sm:$0xff]
      %v1553 = vld [vmem:[%s1551 + $0x8] sm:$0xff]
      %v1554 = vld [vmem:[%s1551 + $0x10] sm:$0xff]
      %v1555 = vld [vmem:[%s1551 + $0x18] sm:$0xff]
      %v1556 = vld [vmem:[%s1551 + $0x20] sm:$0xff]
      %v1557 = vld [vmem:[%s1551 + $0x28] sm:$0xff]
      %v1558 = vld [vmem:[%s1551 + $0x30] sm:$0xff]
      %v1559 = vld [vmem:[%s1551 + $0x38] sm:$0xff]
      %v1560 = vld [vmem:[%s1551 + $0x40] sm:$0xff]
      %v1561 = vld [vmem:[%s1551 + $0x48] sm:$0xff]
      %v1562 = vld [vmem:[%s1551 + $0x50] sm:$0xff]
      %v1563 = vld [vmem:[%s1551 + $0x58] sm:$0xff]
      %v1564 = vld [vmem:[%s1551 + $0x60] sm:$0xff]
      %v1565 = vld [vmem:[%s1551 + $0x68] sm:$0xff]
      %v1566 = vld [vmem:[%s1551 + $0x70] sm:$0xff]
      %v1567 = vld [vmem:[%s1551 + $0x78] sm:$0xff]
      %1568 = vmatprep.subr.mxu0 0.0
      %1569 = vmatpush1.msra.mxu0 %v1567
      %1570 = vmatprep.subr.mxu0 0.0
      %1571 = vmatpush1.msra.mxu0 %v1566
      %1572 = vmatprep.subr.mxu0 0.0
      %1573 = vmatpush1.msra.mxu0 %v1565
      %1574 = vmatprep.subr.mxu0 0.0
      %1575 = vmatpush1.msra.mxu0 %v1564
      %1576 = vmatprep.subr.mxu0 0.0
      %1577 = vmatpush1.msra.mxu0 %v1563
      %1578 = vmatprep.subr.mxu0 0.0
      %1579 = vmatpush1.msra.mxu0 %v1562
      %1580 = vmatprep.subr.mxu0 0.0
      %1581 = vmatpush1.msra.mxu0 %v1561
      %1582 = vmatprep.subr.mxu0 0.0
      %1583 = vmatpush1.msra.mxu0 %v1560
      %1584 = vmatprep.subr.mxu0 0.0
      %1585 = vmatpush1.msra.mxu0 %v1559
      %1586 = vmatprep.subr.mxu0 0.0
      %1587 = vmatpush1.msra.mxu0 %v1558
      %1588 = vmatprep.subr.mxu0 0.0
      %1589 = vmatpush1.msra.mxu0 %v1557
      %1590 = vmatprep.subr.mxu0 0.0
      %1591 = vmatpush1.msra.mxu0 %v1556
      %1592 = vmatprep.subr.mxu0 0.0
      %1593 = vmatpush1.msra.mxu0 %v1555
      %1594 = vmatprep.subr.mxu0 0.0
      %1595 = vmatpush1.msra.mxu0 %v1554
      %1596 = vmatprep.subr.mxu0 0.0
      %1597 = vmatpush1.msra.mxu0 %v1553
      %1598 = vmatprep.subr.mxu0 0.0
      %1599 = vmatpush1.msra.mxu0 %v1552
      %1600 = vmatprep.subr.mxu0 0.0
      %1601 = vmatpush2.msra.mxu0 0.0
      %1602 = vmatprep.subr.mxu0 0.0
      %1603 = vmatpush2.msra.mxu0 0.0
      %1604 = vmatprep.subr.mxu0 0.0
      %1605 = vmatpush2.msra.mxu0 0.0
      %1606 = vmatprep.subr.mxu0 0.0
      %1607 = vmatpush2.msra.mxu0 0.0
      %1608 = vmatprep.subr.mxu0 0.0
      %1609 = vmatpush2.msra.mxu0 0.0
      %1610 = vmatprep.subr.mxu0 0.0
      %1611 = vmatpush2.msra.mxu0 0.0
      %1612 = vmatprep.subr.mxu0 0.0
      %1613 = vmatpush2.msra.mxu0 0.0
      %1614 = vmatprep.subr.mxu0 0.0
      %1615 = vmatpush2.msra.mxu0 0.0
      %1616 = vmatprep.subr.mxu0 0.0
      %1617 = vmatpush2.msra.mxu0 0.0
      %1618 = vmatprep.subr.mxu0 0.0
      %1619 = vmatpush2.msra.mxu0 0.0
      %1620 = vmatprep.subr.mxu0 0.0
      %1621 = vmatpush2.msra.mxu0 0.0
      %1622 = vmatprep.subr.mxu0 0.0
      %1623 = vmatpush2.msra.mxu0 0.0
      %1624 = vmatprep.subr.mxu0 0.0
      %1625 = vmatpush2.msra.mxu0 0.0
      %1626 = vmatprep.subr.mxu0 0.0
      %1627 = vmatpush2.msra.mxu0 0.0
      %1628 = vmatprep.subr.mxu0 0.0
      %1629 = vmatpush2.msra.mxu0 0.0
      %1630 = vmatprep.subr.mxu0 0.0
      %1631 = vmatpush2.msra.mxu0 0.0
      %1632 = vmatprep.mubr.f32.mxu0 0.0
      %1633 = vmatmul.mubr.f32.gmra.mxu0 %v1515
      %v1634 = vpop.f32.mrf.mxu0
      %v1635 = vadd.f32 0.0, %v1634
      %v1636 = vpop.f32.mrf.mxu0
      %1637 = vmatprep.mubr.f32.mxu0 0.0
      %1638 = vmatmul.mubr.f32.gmra.mxu0 %v1516
      %v1639 = vpop.f32.mrf.mxu0
      %v1640 = vadd.f32 0.0, %v1639
      %v1641 = vpop.f32.mrf.mxu0
      %1642 = vmatprep.mubr.f32.mxu0 0.0
      %1643 = vmatmul.mubr.f32.gmra.mxu0 %v1517
      %v1644 = vpop.f32.mrf.mxu0
      %v1645 = vadd.f32 0.0, %v1644
      %v1646 = vpop.f32.mrf.mxu0
      %1647 = vmatprep.mubr.f32.mxu0 0.0
      %1648 = vmatmul.mubr.f32.gmra.mxu0 %v1518
      %v1649 = vpop.f32.mrf.mxu0
      %v1650 = vadd.f32 0.0, %v1649
      %v1651 = vpop.f32.mrf.mxu0
      %1652 = vmatprep.mubr.f32.mxu0 0.0
      %1653 = vmatmul.mubr.f32.gmra.mxu0 %v1519
      %v1654 = vpop.f32.mrf.mxu0
      %v1655 = vadd.f32 0.0, %v1654
      %v1656 = vpop.f32.mrf.mxu0
      %1657 = vmatprep.mubr.f32.mxu0 0.0
      %1658 = vmatmul.mubr.f32.gmra.mxu0 %v1520
      %v1659 = vpop.f32.mrf.mxu0
      %v1660 = vadd.f32 0.0, %v1659
      %v1661 = vpop.f32.mrf.mxu0
      %1662 = vmatprep.mubr.f32.mxu0 0.0
      %1663 = vmatmul.mubr.f32.gmra.mxu0 %v1521
      %v1664 = vpop.f32.mrf.mxu0
      %v1665 = vadd.f32 0.0, %v1664
      %v1666 = vpop.f32.mrf.mxu0
      %1667 = vmatprep.mubr.f32.mxu0 0.0
      %1668 = vmatmul.mubr.f32.gmra.mxu0 %v1522
      %v1669 = vpop.f32.mrf.mxu0
      %v1670 = vadd.f32 0.0, %v1669
      %v1671 = vpop.f32.mrf.mxu0
      %1672 = vmatprep.mubr.f32.mxu0 0.0
      %1673 = vmatmul.mubr.f32.gmra.mxu0 %v1523
      %v1674 = vpop.f32.mrf.mxu0
      %v1675 = vadd.f32 0.0, %v1674
      %v1676 = vpop.f32.mrf.mxu0
      %1677 = vmatprep.mubr.f32.mxu0 0.0
      %1678 = vmatmul.mubr.f32.gmra.mxu0 %v1524
      %v1679 = vpop.f32.mrf.mxu0
      %v1680 = vadd.f32 0.0, %v1679
      %v1681 = vpop.f32.mrf.mxu0
      %1682 = vmatprep.mubr.f32.mxu0 0.0
      %1683 = vmatmul.mubr.f32.gmra.mxu0 %v1525
      %v1684 = vpop.f32.mrf.mxu0
      %v1685 = vadd.f32 0.0, %v1684
      %v1686 = vpop.f32.mrf.mxu0
      %1687 = vmatprep.mubr.f32.mxu0 0.0
      %1688 = vmatmul.mubr.f32.gmra.mxu0 %v1526
      %v1689 = vpop.f32.mrf.mxu0
      %v1690 = vadd.f32 0.0, %v1689
      %v1691 = vpop.f32.mrf.mxu0
      %1692 = vmatprep.mubr.f32.mxu0 0.0
      %1693 = vmatmul.mubr.f32.gmra.mxu0 %v1527
      %v1694 = vpop.f32.mrf.mxu0
      %v1695 = vadd.f32 0.0, %v1694
      %v1696 = vpop.f32.mrf.mxu0
      %1697 = vmatprep.mubr.f32.mxu0 0.0
      %1698 = vmatmul.mubr.f32.gmra.mxu0 %v1528
      %v1699 = vpop.f32.mrf.mxu0
      %v1700 = vadd.f32 0.0, %v1699
      %v1701 = vpop.f32.mrf.mxu0
      %1702 = vmatprep.mubr.f32.mxu0 0.0
      %1703 = vmatmul.mubr.f32.gmra.mxu0 %v1529
      %v1704 = vpop.f32.mrf.mxu0
      %v1705 = vadd.f32 0.0, %v1704
      %v1706 = vpop.f32.mrf.mxu0
      %1707 = vmatprep.mubr.f32.mxu0 0.0
      %1708 = vmatmul.mubr.f32.gmra.mxu0 %v1530
      %v1709 = vpop.f32.mrf.mxu0
      %v1710 = vadd.f32 0.0, %v1709
      %v1711 = vpop.f32.mrf.mxu0
      %1712 = vmatprep.mubr.f32.mxu0 0.0
      %1713 = vmatmul.mubr.f32.gmra.mxu0 %v1531
      %v1714 = vpop.f32.mrf.mxu0
      %v1715 = vadd.f32 0.0, %v1714
      %v1716 = vpop.f32.mrf.mxu0
      %1717 = vmatprep.mubr.f32.mxu0 0.0
      %1718 = vmatmul.mubr.f32.gmra.mxu0 %v1532
      %v1719 = vpop.f32.mrf.mxu0
      %v1720 = vadd.f32 0.0, %v1719
      %v1721 = vpop.f32.mrf.mxu0
      %1722 = vmatprep.mubr.f32.mxu0 0.0
      %1723 = vmatmul.mubr.f32.gmra.mxu0 %v1533
      %v1724 = vpop.f32.mrf.mxu0
      %v1725 = vadd.f32 0.0, %v1724
      %v1726 = vpop.f32.mrf.mxu0
      %1727 = vmatprep.mubr.f32.mxu0 0.0
      %1728 = vmatmul.mubr.f32.gmra.mxu0 %v1534
      %v1729 = vpop.f32.mrf.mxu0
      %v1730 = vadd.f32 0.0, %v1729
      %v1731 = vpop.f32.mrf.mxu0
      %1732 = vmatprep.mubr.f32.mxu0 0.0
      %1733 = vmatmul.mubr.f32.gmra.mxu0 %v1535
      %v1734 = vpop.f32.mrf.mxu0
      %v1735 = vadd.f32 0.0, %v1734
      %v1736 = vpop.f32.mrf.mxu0
      %1737 = vmatprep.mubr.f32.mxu0 0.0
      %1738 = vmatmul.mubr.f32.gmra.mxu0 %v1536
      %v1739 = vpop.f32.mrf.mxu0
      %v1740 = vadd.f32 0.0, %v1739
      %v1741 = vpop.f32.mrf.mxu0
      %1742 = vmatprep.mubr.f32.mxu0 0.0
      %1743 = vmatmul.mubr.f32.gmra.mxu0 %v1537
      %v1744 = vpop.f32.mrf.mxu0
      %v1745 = vadd.f32 0.0, %v1744
      %v1746 = vpop.f32.mrf.mxu0
      %1747 = vmatprep.mubr.f32.mxu0 0.0
      %1748 = vmatmul.mubr.f32.gmra.mxu0 %v1538
      %v1749 = vpop.f32.mrf.mxu0
      %v1750 = vadd.f32 0.0, %v1749
      %v1751 = vpop.f32.mrf.mxu0
      %1752 = vmatprep.mubr.f32.mxu0 0.0
      %1753 = vmatmul.mubr.f32.gmra.mxu0 %v1539
      %v1754 = vpop.f32.mrf.mxu0
      %v1755 = vadd.f32 0.0, %v1754
      %v1756 = vpop.f32.mrf.mxu0
      %1757 = vmatprep.mubr.f32.mxu0 0.0
      %1758 = vmatmul.mubr.f32.gmra.mxu0 %v1540
      %v1759 = vpop.f32.mrf.mxu0
      %v1760 = vadd.f32 0.0, %v1759
      %v1761 = vpop.f32.mrf.mxu0
      %1762 = vmatprep.mubr.f32.mxu0 0.0
      %1763 = vmatmul.mubr.f32.gmra.mxu0 %v1541
      %v1764 = vpop.f32.mrf.mxu0
      %v1765 = vadd.f32 0.0, %v1764
      %v1766 = vpop.f32.mrf.mxu0
      %1767 = vmatprep.mubr.f32.mxu0 0.0
      %1768 = vmatmul.mubr.f32.gmra.mxu0 %v1542
      %v1769 = vpop.f32.mrf.mxu0
      %v1770 = vadd.f32 0.0, %v1769
      %v1771 = vpop.f32.mrf.mxu0
      %1772 = vmatprep.mubr.f32.mxu0 0.0
      %1773 = vmatmul.mubr.f32.gmra.mxu0 %v1543
      %v1774 = vpop.f32.mrf.mxu0
      %v1775 = vadd.f32 0.0, %v1774
      %v1776 = vpop.f32.mrf.mxu0
      %1777 = vmatprep.mubr.f32.mxu0 0.0
      %1778 = vmatmul.mubr.f32.gmra.mxu0 %v1544
      %v1779 = vpop.f32.mrf.mxu0
      %v1780 = vadd.f32 0.0, %v1779
      %v1781 = vpop.f32.mrf.mxu0
      %1782 = vmatprep.mubr.f32.mxu0 0.0
      %1783 = vmatmul.mubr.f32.gmra.mxu0 %v1545
      %v1784 = vpop.f32.mrf.mxu0
      %v1785 = vadd.f32 0.0, %v1784
      %v1786 = vpop.f32.mrf.mxu0
      %1787 = vmatprep.mubr.f32.mxu0 0.0
      %1788 = vmatmul.mubr.f32.gmra.mxu0 %v1546
      %v1789 = vpop.f32.mrf.mxu0
      %v1790 = vadd.f32 0.0, %v1789
      %v1791 = vpop.f32.mrf.mxu0
      %1792 = vmatprep.mubr.f32.mxu0 0.0
      %1793 = vmatmul.mubr.f32.gmra.mxu0 %v1547
      %v1794 = vpop.f32.mrf.mxu0
      %v1795 = vadd.f32 0.0, %v1794
      %v1796 = vpop.f32.mrf.mxu0
      %1797 = vmatprep.mubr.f32.mxu0 0.0
      %1798 = vmatmul.mubr.f32.gmra.mxu0 %v1548
      %v1799 = vpop.f32.mrf.mxu0
      %v1800 = vadd.f32 0.0, %v1799
      %v1801 = vpop.f32.mrf.mxu0
      %1802 = vmatprep.mubr.f32.mxu0 0.0
      %1803 = vmatmul.mubr.f32.gmra.mxu0 %v1549
      %v1804 = vpop.f32.mrf.mxu0
      %v1805 = vadd.f32 0.0, %v1804
      %v1806 = vpop.f32.mrf.mxu0
      %1807 = vmatprep.mubr.f32.mxu0 0.0
      %1808 = vmatmul.mubr.f32.gmra.mxu0 %v1550
      %v1809 = vpop.f32.mrf.mxu0
      %v1810 = vadd.f32 0.0, %v1809
      %v1811 = vpop.f32.mrf.mxu0
      %1812 = vdwg.mxu0
      %v1813 = vadd.f32 %v1479, %v1635
      %v1814 = vadd.f32 %v1480, %v1640
      %v1815 = vadd.f32 %v1481, %v1645
      %v1816 = vadd.f32 %v1482, %v1650
      %v1817 = vadd.f32 %v1483, %v1655
      %v1818 = vadd.f32 %v1484, %v1660
      %v1819 = vadd.f32 %v1485, %v1665
      %v1820 = vadd.f32 %v1486, %v1670
      %v1821 = vadd.f32 %v1487, %v1675
      %v1822 = vadd.f32 %v1488, %v1680
      %v1823 = vadd.f32 %v1489, %v1685
      %v1824 = vadd.f32 %v1490, %v1690
      %v1825 = vadd.f32 %v1491, %v1695
      %v1826 = vadd.f32 %v1492, %v1700
      %v1827 = vadd.f32 %v1493, %v1705
      %v1828 = vadd.f32 %v1494, %v1710
      %v1829 = vadd.f32 %v1495, %v1715
      %v1830 = vadd.f32 %v1496, %v1720
      %v1831 = vadd.f32 %v1497, %v1725
      %v1832 = vadd.f32 %v1498, %v1730
      %v1833 = vadd.f32 %v1499, %v1735
      %v1834 = vadd.f32 %v1500, %v1740
      %v1835 = vadd.f32 %v1501, %v1745
      %v1836 = vadd.f32 %v1502, %v1750
      %v1837 = vadd.f32 %v1503, %v1755
      %v1838 = vadd.f32 %v1504, %v1760
      %v1839 = vadd.f32 %v1505, %v1765
      %v1840 = vadd.f32 %v1506, %v1770
      %v1841 = vadd.f32 %v1507, %v1775
      %v1842 = vadd.f32 %v1508, %v1780
      %v1843 = vadd.f32 %v1509, %v1785
      %v1844 = vadd.f32 %v1510, %v1790
      %v1845 = vadd.f32 %v1511, %v1795
      %v1846 = vadd.f32 %v1512, %v1800
      %v1847 = vadd.f32 %v1513, %v1805
      %v1848 = vadd.f32 %v1514, %v1810
      %v1849 = vld [vmem:[%s246 + $0x14] sm:$0xff]
      %v1850 = vld [vmem:[%s246 + $0x1c] sm:$0xff]
      %v1851 = vld [vmem:[%s246 + $0x24] sm:$0xff]
      %v1852 = vld [vmem:[%s246 + $0x2c] sm:$0xff]
      %v1853 = vld [vmem:[%s246 + $0x34] sm:$0xff]
      %v1854 = vld [vmem:[%s246 + $0x3c] sm:$0xff]
      %v1855 = vld [vmem:[%s246 + $0x44] sm:$0xff]
      %v1856 = vld [vmem:[%s246 + $0x4c] sm:$0xff]
      %v1857 = vld [vmem:[%s246 + $0x54] sm:$0xff]
      %v1858 = vld [vmem:[%s246 + $0x5c] sm:$0xff]
      %v1859 = vld [vmem:[%s246 + $0x64] sm:$0xff]
      %v1860 = vld [vmem:[%s246 + $0x6c] sm:$0xff]
      %v1861 = vld [vmem:[%s246 + $0x74] sm:$0xff]
      %v1862 = vld [vmem:[%s246 + $0x7c] sm:$0xff]
      %v1863 = vld [vmem:[%s246 + $0x84] sm:$0xff]
      %v1864 = vld [vmem:[%s246 + $0x8c] sm:$0xff]
      %v1865 = vld [vmem:[%s246 + $0x94] sm:$0xff]
      %v1866 = vld [vmem:[%s246 + $0x9c] sm:$0xff]
      %v1867 = vld [vmem:[%s246 + $0xa4] sm:$0xff]
      %v1868 = vld [vmem:[%s246 + $0xac] sm:$0xff]
      %v1869 = vld [vmem:[%s246 + $0xb4] sm:$0xff]
      %v1870 = vld [vmem:[%s246 + $0xbc] sm:$0xff]
      %v1871 = vld [vmem:[%s246 + $0xc4] sm:$0xff]
      %v1872 = vld [vmem:[%s246 + $0xcc] sm:$0xff]
      %v1873 = vld [vmem:[%s246 + $0xd4] sm:$0xff]
      %v1874 = vld [vmem:[%s246 + $0xdc] sm:$0xff]
      %v1875 = vld [vmem:[%s246 + $0xe4] sm:$0xff]
      %v1876 = vld [vmem:[%s246 + $0xec] sm:$0xff]
      %v1877 = vld [vmem:[%s246 + $0xf4] sm:$0xff]
      %v1878 = vld [vmem:[%s246 + $0xfc] sm:$0xff]
      %v1879 = vld [vmem:[%s246 + $0x104] sm:$0xff]
      %v1880 = vld [vmem:[%s246 + $0x10c] sm:$0xff]
      %v1881 = vld [vmem:[%s246 + $0x114] sm:$0xff]
      %v1882 = vld [vmem:[%s246 + $0x11c] sm:$0xff]
      %v1883 = vld [vmem:[%s246 + $0x124] sm:$0xff]
      %v1884 = vld [vmem:[%s246 + $0x12c] sm:$0xff]
      %s1885 = scalar_lea.vmem %s1, 640
      %v1886 = vld [vmem:[%s1885] sm:$0xff]
      %v1887 = vld [vmem:[%s1885 + $0x8] sm:$0xff]
      %v1888 = vld [vmem:[%s1885 + $0x10] sm:$0xff]
      %v1889 = vld [vmem:[%s1885 + $0x18] sm:$0xff]
      %v1890 = vld [vmem:[%s1885 + $0x20] sm:$0xff]
      %v1891 = vld [vmem:[%s1885 + $0x28] sm:$0xff]
      %v1892 = vld [vmem:[%s1885 + $0x30] sm:$0xff]
      %v1893 = vld [vmem:[%s1885 + $0x38] sm:$0xff]
      %v1894 = vld [vmem:[%s1885 + $0x40] sm:$0xff]
      %v1895 = vld [vmem:[%s1885 + $0x48] sm:$0xff]
      %v1896 = vld [vmem:[%s1885 + $0x50] sm:$0xff]
      %v1897 = vld [vmem:[%s1885 + $0x58] sm:$0xff]
      %v1898 = vld [vmem:[%s1885 + $0x60] sm:$0xff]
      %v1899 = vld [vmem:[%s1885 + $0x68] sm:$0xff]
      %v1900 = vld [vmem:[%s1885 + $0x70] sm:$0xff]
      %v1901 = vld [vmem:[%s1885 + $0x78] sm:$0xff]
      %1902 = vmatprep.subr.mxu0 0.0
      %1903 = vmatpush1.msra.mxu0 %v1901
      %1904 = vmatprep.subr.mxu0 0.0
      %1905 = vmatpush1.msra.mxu0 %v1900
      %1906 = vmatprep.subr.mxu0 0.0
      %1907 = vmatpush1.msra.mxu0 %v1899
      %1908 = vmatprep.subr.mxu0 0.0
      %1909 = vmatpush1.msra.mxu0 %v1898
      %1910 = vmatprep.subr.mxu0 0.0
      %1911 = vmatpush1.msra.mxu0 %v1897
      %1912 = vmatprep.subr.mxu0 0.0
      %1913 = vmatpush1.msra.mxu0 %v1896
      %1914 = vmatprep.subr.mxu0 0.0
      %1915 = vmatpush1.msra.mxu0 %v1895
      %1916 = vmatprep.subr.mxu0 0.0
      %1917 = vmatpush1.msra.mxu0 %v1894
      %1918 = vmatprep.subr.mxu0 0.0
      %1919 = vmatpush1.msra.mxu0 %v1893
      %1920 = vmatprep.subr.mxu0 0.0
      %1921 = vmatpush1.msra.mxu0 %v1892
      %1922 = vmatprep.subr.mxu0 0.0
      %1923 = vmatpush1.msra.mxu0 %v1891
      %1924 = vmatprep.subr.mxu0 0.0
      %1925 = vmatpush1.msra.mxu0 %v1890
      %1926 = vmatprep.subr.mxu0 0.0
      %1927 = vmatpush1.msra.mxu0 %v1889
      %1928 = vmatprep.subr.mxu0 0.0
      %1929 = vmatpush1.msra.mxu0 %v1888
      %1930 = vmatprep.subr.mxu0 0.0
      %1931 = vmatpush1.msra.mxu0 %v1887
      %1932 = vmatprep.subr.mxu0 0.0
      %1933 = vmatpush1.msra.mxu0 %v1886
      %1934 = vmatprep.subr.mxu0 0.0
      %1935 = vmatpush2.msra.mxu0 0.0
      %1936 = vmatprep.subr.mxu0 0.0
      %1937 = vmatpush2.msra.mxu0 0.0
      %1938 = vmatprep.subr.mxu0 0.0
      %1939 = vmatpush2.msra.mxu0 0.0
      %1940 = vmatprep.subr.mxu0 0.0
      %1941 = vmatpush2.msra.mxu0 0.0
      %1942 = vmatprep.subr.mxu0 0.0
      %1943 = vmatpush2.msra.mxu0 0.0
      %1944 = vmatprep.subr.mxu0 0.0
      %1945 = vmatpush2.msra.mxu0 0.0
      %1946 = vmatprep.subr.mxu0 0.0
      %1947 = vmatpush2.msra.mxu0 0.0
      %1948 = vmatprep.subr.mxu0 0.0
      %1949 = vmatpush2.msra.mxu0 0.0
      %1950 = vmatprep.subr.mxu0 0.0
      %1951 = vmatpush2.msra.mxu0 0.0
      %1952 = vmatprep.subr.mxu0 0.0
      %1953 = vmatpush2.msra.mxu0 0.0
      %1954 = vmatprep.subr.mxu0 0.0
      %1955 = vmatpush2.msra.mxu0 0.0
      %1956 = vmatprep.subr.mxu0 0.0
      %1957 = vmatpush2.msra.mxu0 0.0
      %1958 = vmatprep.subr.mxu0 0.0
      %1959 = vmatpush2.msra.mxu0 0.0
      %1960 = vmatprep.subr.mxu0 0.0
      %1961 = vmatpush2.msra.mxu0 0.0
      %1962 = vmatprep.subr.mxu0 0.0
      %1963 = vmatpush2.msra.mxu0 0.0
      %1964 = vmatprep.subr.mxu0 0.0
      %1965 = vmatpush2.msra.mxu0 0.0
      %1966 = vmatprep.mubr.f32.mxu0 0.0
      %1967 = vmatmul.mubr.f32.gmra.mxu0 %v1849
      %v1968 = vpop.f32.mrf.mxu0
      %v1969 = vadd.f32 0.0, %v1968
      %v1970 = vpop.f32.mrf.mxu0
      %1971 = vmatprep.mubr.f32.mxu0 0.0
      %1972 = vmatmul.mubr.f32.gmra.mxu0 %v1850
      %v1973 = vpop.f32.mrf.mxu0
      %v1974 = vadd.f32 0.0, %v1973
      %v1975 = vpop.f32.mrf.mxu0
      %1976 = vmatprep.mubr.f32.mxu0 0.0
      %1977 = vmatmul.mubr.f32.gmra.mxu0 %v1851
      %v1978 = vpop.f32.mrf.mxu0
      %v1979 = vadd.f32 0.0, %v1978
      %v1980 = vpop.f32.mrf.mxu0
      %1981 = vmatprep.mubr.f32.mxu0 0.0
      %1982 = vmatmul.mubr.f32.gmra.mxu0 %v1852
      %v1983 = vpop.f32.mrf.mxu0
      %v1984 = vadd.f32 0.0, %v1983
      %v1985 = vpop.f32.mrf.mxu0
      %1986 = vmatprep.mubr.f32.mxu0 0.0
      %1987 = vmatmul.mubr.f32.gmra.mxu0 %v1853
      %v1988 = vpop.f32.mrf.mxu0
      %v1989 = vadd.f32 0.0, %v1988
      %v1990 = vpop.f32.mrf.mxu0
      %1991 = vmatprep.mubr.f32.mxu0 0.0
      %1992 = vmatmul.mubr.f32.gmra.mxu0 %v1854
      %v1993 = vpop.f32.mrf.mxu0
      %v1994 = vadd.f32 0.0, %v1993
      %v1995 = vpop.f32.mrf.mxu0
      %1996 = vmatprep.mubr.f32.mxu0 0.0
      %1997 = vmatmul.mubr.f32.gmra.mxu0 %v1855
      %v1998 = vpop.f32.mrf.mxu0
      %v1999 = vadd.f32 0.0, %v1998
      %v2000 = vpop.f32.mrf.mxu0
      %2001 = vmatprep.mubr.f32.mxu0 0.0
      %2002 = vmatmul.mubr.f32.gmra.mxu0 %v1856
      %v2003 = vpop.f32.mrf.mxu0
      %v2004 = vadd.f32 0.0, %v2003
      %v2005 = vpop.f32.mrf.mxu0
      %2006 = vmatprep.mubr.f32.mxu0 0.0
      %2007 = vmatmul.mubr.f32.gmra.mxu0 %v1857
      %v2008 = vpop.f32.mrf.mxu0
      %v2009 = vadd.f32 0.0, %v2008
      %v2010 = vpop.f32.mrf.mxu0
      %2011 = vmatprep.mubr.f32.mxu0 0.0
      %2012 = vmatmul.mubr.f32.gmra.mxu0 %v1858
      %v2013 = vpop.f32.mrf.mxu0
      %v2014 = vadd.f32 0.0, %v2013
      %v2015 = vpop.f32.mrf.mxu0
      %2016 = vmatprep.mubr.f32.mxu0 0.0
      %2017 = vmatmul.mubr.f32.gmra.mxu0 %v1859
      %v2018 = vpop.f32.mrf.mxu0
      %v2019 = vadd.f32 0.0, %v2018
      %v2020 = vpop.f32.mrf.mxu0
      %2021 = vmatprep.mubr.f32.mxu0 0.0
      %2022 = vmatmul.mubr.f32.gmra.mxu0 %v1860
      %v2023 = vpop.f32.mrf.mxu0
      %v2024 = vadd.f32 0.0, %v2023
      %v2025 = vpop.f32.mrf.mxu0
      %2026 = vmatprep.mubr.f32.mxu0 0.0
      %2027 = vmatmul.mubr.f32.gmra.mxu0 %v1861
      %v2028 = vpop.f32.mrf.mxu0
      %v2029 = vadd.f32 0.0, %v2028
      %v2030 = vpop.f32.mrf.mxu0
      %2031 = vmatprep.mubr.f32.mxu0 0.0
      %2032 = vmatmul.mubr.f32.gmra.mxu0 %v1862
      %v2033 = vpop.f32.mrf.mxu0
      %v2034 = vadd.f32 0.0, %v2033
      %v2035 = vpop.f32.mrf.mxu0
      %2036 = vmatprep.mubr.f32.mxu0 0.0
      %2037 = vmatmul.mubr.f32.gmra.mxu0 %v1863
      %v2038 = vpop.f32.mrf.mxu0
      %v2039 = vadd.f32 0.0, %v2038
      %v2040 = vpop.f32.mrf.mxu0
      %2041 = vmatprep.mubr.f32.mxu0 0.0
      %2042 = vmatmul.mubr.f32.gmra.mxu0 %v1864
      %v2043 = vpop.f32.mrf.mxu0
      %v2044 = vadd.f32 0.0, %v2043
      %v2045 = vpop.f32.mrf.mxu0
      %2046 = vmatprep.mubr.f32.mxu0 0.0
      %2047 = vmatmul.mubr.f32.gmra.mxu0 %v1865
      %v2048 = vpop.f32.mrf.mxu0
      %v2049 = vadd.f32 0.0, %v2048
      %v2050 = vpop.f32.mrf.mxu0
      %2051 = vmatprep.mubr.f32.mxu0 0.0
      %2052 = vmatmul.mubr.f32.gmra.mxu0 %v1866
      %v2053 = vpop.f32.mrf.mxu0
      %v2054 = vadd.f32 0.0, %v2053
      %v2055 = vpop.f32.mrf.mxu0
      %2056 = vmatprep.mubr.f32.mxu0 0.0
      %2057 = vmatmul.mubr.f32.gmra.mxu0 %v1867
      %v2058 = vpop.f32.mrf.mxu0
      %v2059 = vadd.f32 0.0, %v2058
      %v2060 = vpop.f32.mrf.mxu0
      %2061 = vmatprep.mubr.f32.mxu0 0.0
      %2062 = vmatmul.mubr.f32.gmra.mxu0 %v1868
      %v2063 = vpop.f32.mrf.mxu0
      %v2064 = vadd.f32 0.0, %v2063
      %v2065 = vpop.f32.mrf.mxu0
      %2066 = vmatprep.mubr.f32.mxu0 0.0
      %2067 = vmatmul.mubr.f32.gmra.mxu0 %v1869
      %v2068 = vpop.f32.mrf.mxu0
      %v2069 = vadd.f32 0.0, %v2068
      %v2070 = vpop.f32.mrf.mxu0
      %2071 = vmatprep.mubr.f32.mxu0 0.0
      %2072 = vmatmul.mubr.f32.gmra.mxu0 %v1870
      %v2073 = vpop.f32.mrf.mxu0
      %v2074 = vadd.f32 0.0, %v2073
      %v2075 = vpop.f32.mrf.mxu0
      %2076 = vmatprep.mubr.f32.mxu0 0.0
      %2077 = vmatmul.mubr.f32.gmra.mxu0 %v1871
      %v2078 = vpop.f32.mrf.mxu0
      %v2079 = vadd.f32 0.0, %v2078
      %v2080 = vpop.f32.mrf.mxu0
      %2081 = vmatprep.mubr.f32.mxu0 0.0
      %2082 = vmatmul.mubr.f32.gmra.mxu0 %v1872
      %v2083 = vpop.f32.mrf.mxu0
      %v2084 = vadd.f32 0.0, %v2083
      %v2085 = vpop.f32.mrf.mxu0
      %2086 = vmatprep.mubr.f32.mxu0 0.0
      %2087 = vmatmul.mubr.f32.gmra.mxu0 %v1873
      %v2088 = vpop.f32.mrf.mxu0
      %v2089 = vadd.f32 0.0, %v2088
      %v2090 = vpop.f32.mrf.mxu0
      %2091 = vmatprep.mubr.f32.mxu0 0.0
      %2092 = vmatmul.mubr.f32.gmra.mxu0 %v1874
      %v2093 = vpop.f32.mrf.mxu0
      %v2094 = vadd.f32 0.0, %v2093
      %v2095 = vpop.f32.mrf.mxu0
      %2096 = vmatprep.mubr.f32.mxu0 0.0
      %2097 = vmatmul.mubr.f32.gmra.mxu0 %v1875
      %v2098 = vpop.f32.mrf.mxu0
      %v2099 = vadd.f32 0.0, %v2098
      %v2100 = vpop.f32.mrf.mxu0
      %2101 = vmatprep.mubr.f32.mxu0 0.0
      %2102 = vmatmul.mubr.f32.gmra.mxu0 %v1876
      %v2103 = vpop.f32.mrf.mxu0
      %v2104 = vadd.f32 0.0, %v2103
      %v2105 = vpop.f32.mrf.mxu0
      %2106 = vmatprep.mubr.f32.mxu0 0.0
      %2107 = vmatmul.mubr.f32.gmra.mxu0 %v1877
      %v2108 = vpop.f32.mrf.mxu0
      %v2109 = vadd.f32 0.0, %v2108
      %v2110 = vpop.f32.mrf.mxu0
      %2111 = vmatprep.mubr.f32.mxu0 0.0
      %2112 = vmatmul.mubr.f32.gmra.mxu0 %v1878
      %v2113 = vpop.f32.mrf.mxu0
      %v2114 = vadd.f32 0.0, %v2113
      %v2115 = vpop.f32.mrf.mxu0
      %2116 = vmatprep.mubr.f32.mxu0 0.0
      %2117 = vmatmul.mubr.f32.gmra.mxu0 %v1879
      %v2118 = vpop.f32.mrf.mxu0
      %v2119 = vadd.f32 0.0, %v2118
      %v2120 = vpop.f32.mrf.mxu0
      %2121 = vmatprep.mubr.f32.mxu0 0.0
      %2122 = vmatmul.mubr.f32.gmra.mxu0 %v1880
      %v2123 = vpop.f32.mrf.mxu0
      %v2124 = vadd.f32 0.0, %v2123
      %v2125 = vpop.f32.mrf.mxu0
      %2126 = vmatprep.mubr.f32.mxu0 0.0
      %2127 = vmatmul.mubr.f32.gmra.mxu0 %v1881
      %v2128 = vpop.f32.mrf.mxu0
      %v2129 = vadd.f32 0.0, %v2128
      %v2130 = vpop.f32.mrf.mxu0
      %2131 = vmatprep.mubr.f32.mxu0 0.0
      %2132 = vmatmul.mubr.f32.gmra.mxu0 %v1882
      %v2133 = vpop.f32.mrf.mxu0
      %v2134 = vadd.f32 0.0, %v2133
      %v2135 = vpop.f32.mrf.mxu0
      %2136 = vmatprep.mubr.f32.mxu0 0.0
      %2137 = vmatmul.mubr.f32.gmra.mxu0 %v1883
      %v2138 = vpop.f32.mrf.mxu0
      %v2139 = vadd.f32 0.0, %v2138
      %v2140 = vpop.f32.mrf.mxu0
      %2141 = vmatprep.mubr.f32.mxu0 0.0
      %2142 = vmatmul.mubr.f32.gmra.mxu0 %v1884
      %v2143 = vpop.f32.mrf.mxu0
      %v2144 = vadd.f32 0.0, %v2143
      %v2145 = vpop.f32.mrf.mxu0
      %2146 = vdwg.mxu0
      %v2147 = vadd.f32 %v1813, %v1969
      %v2148 = vadd.f32 %v1814, %v1974
      %v2149 = vadd.f32 %v1815, %v1979
      %v2150 = vadd.f32 %v1816, %v1984
      %v2151 = vadd.f32 %v1817, %v1989
      %v2152 = vadd.f32 %v1818, %v1994
      %v2153 = vadd.f32 %v1819, %v1999
      %v2154 = vadd.f32 %v1820, %v2004
      %v2155 = vadd.f32 %v1821, %v2009
      %v2156 = vadd.f32 %v1822, %v2014
      %v2157 = vadd.f32 %v1823, %v2019
      %v2158 = vadd.f32 %v1824, %v2024
      %v2159 = vadd.f32 %v1825, %v2029
      %v2160 = vadd.f32 %v1826, %v2034
      %v2161 = vadd.f32 %v1827, %v2039
      %v2162 = vadd.f32 %v1828, %v2044
      %v2163 = vadd.f32 %v1829, %v2049
      %v2164 = vadd.f32 %v1830, %v2054
      %v2165 = vadd.f32 %v1831, %v2059
      %v2166 = vadd.f32 %v1832, %v2064
      %v2167 = vadd.f32 %v1833, %v2069
      %v2168 = vadd.f32 %v1834, %v2074
      %v2169 = vadd.f32 %v1835, %v2079
      %v2170 = vadd.f32 %v1836, %v2084
      %v2171 = vadd.f32 %v1837, %v2089
      %v2172 = vadd.f32 %v1838, %v2094
      %v2173 = vadd.f32 %v1839, %v2099
      %v2174 = vadd.f32 %v1840, %v2104
      %v2175 = vadd.f32 %v1841, %v2109
      %v2176 = vadd.f32 %v1842, %v2114
      %v2177 = vadd.f32 %v1843, %v2119
      %v2178 = vadd.f32 %v1844, %v2124
      %v2179 = vadd.f32 %v1845, %v2129
      %v2180 = vadd.f32 %v1846, %v2134
      %v2181 = vadd.f32 %v1847, %v2139
      %v2182 = vadd.f32 %v1848, %v2144
      %v2183 = vld [vmem:[%s246 + $0x24] sm:$0xff]
      %v2184 = vld [vmem:[%s246 + $0x2c] sm:$0xff]
      %v2185 = vld [vmem:[%s246 + $0x34] sm:$0xff]
      %v2186 = vld [vmem:[%s246 + $0x3c] sm:$0xff]
      %v2187 = vld [vmem:[%s246 + $0x44] sm:$0xff]
      %v2188 = vld [vmem:[%s246 + $0x4c] sm:$0xff]
      %v2189 = vld [vmem:[%s246 + $0x54] sm:$0xff]
      %v2190 = vld [vmem:[%s246 + $0x5c] sm:$0xff]
      %v2191 = vld [vmem:[%s246 + $0x64] sm:$0xff]
      %v2192 = vld [vmem:[%s246 + $0x6c] sm:$0xff]
      %v2193 = vld [vmem:[%s246 + $0x74] sm:$0xff]
      %v2194 = vld [vmem:[%s246 + $0x7c] sm:$0xff]
      %v2195 = vld [vmem:[%s246 + $0x84] sm:$0xff]
      %v2196 = vld [vmem:[%s246 + $0x8c] sm:$0xff]
      %v2197 = vld [vmem:[%s246 + $0x94] sm:$0xff]
      %v2198 = vld [vmem:[%s246 + $0x9c] sm:$0xff]
      %v2199 = vld [vmem:[%s246 + $0xa4] sm:$0xff]
      %v2200 = vld [vmem:[%s246 + $0xac] sm:$0xff]
      %v2201 = vld [vmem:[%s246 + $0xb4] sm:$0xff]
      %v2202 = vld [vmem:[%s246 + $0xbc] sm:$0xff]
      %v2203 = vld [vmem:[%s246 + $0xc4] sm:$0xff]
      %v2204 = vld [vmem:[%s246 + $0xcc] sm:$0xff]
      %v2205 = vld [vmem:[%s246 + $0xd4] sm:$0xff]
      %v2206 = vld [vmem:[%s246 + $0xdc] sm:$0xff]
      %v2207 = vld [vmem:[%s246 + $0xe4] sm:$0xff]
      %v2208 = vld [vmem:[%s246 + $0xec] sm:$0xff]
      %v2209 = vld [vmem:[%s246 + $0xf4] sm:$0xff]
      %v2210 = vld [vmem:[%s246 + $0xfc] sm:$0xff]
      %v2211 = vld [vmem:[%s246 + $0x104] sm:$0xff]
      %v2212 = vld [vmem:[%s246 + $0x10c] sm:$0xff]
      %v2213 = vld [vmem:[%s246 + $0x114] sm:$0xff]
      %v2214 = vld [vmem:[%s246 + $0x11c] sm:$0xff]
      %v2215 = vld [vmem:[%s246 + $0x124] sm:$0xff]
      %v2216 = vld [vmem:[%s246 + $0x12c] sm:$0xff]
      %v2217 = vld [vmem:[%s246 + $0x134] sm:$0xff]
      %v2218 = vld [vmem:[%s246 + $0x13c] sm:$0xff]
      %s2219 = scalar_lea.vmem %s1, 768
      %v2220 = vld [vmem:[%s2219] sm:$0xff]
      %v2221 = vld [vmem:[%s2219 + $0x8] sm:$0xff]
      %v2222 = vld [vmem:[%s2219 + $0x10] sm:$0xff]
      %v2223 = vld [vmem:[%s2219 + $0x18] sm:$0xff]
      %v2224 = vld [vmem:[%s2219 + $0x20] sm:$0xff]
      %v2225 = vld [vmem:[%s2219 + $0x28] sm:$0xff]
      %v2226 = vld [vmem:[%s2219 + $0x30] sm:$0xff]
      %v2227 = vld [vmem:[%s2219 + $0x38] sm:$0xff]
      %v2228 = vld [vmem:[%s2219 + $0x40] sm:$0xff]
      %v2229 = vld [vmem:[%s2219 + $0x48] sm:$0xff]
      %v2230 = vld [vmem:[%s2219 + $0x50] sm:$0xff]
      %v2231 = vld [vmem:[%s2219 + $0x58] sm:$0xff]
      %v2232 = vld [vmem:[%s2219 + $0x60] sm:$0xff]
      %v2233 = vld [vmem:[%s2219 + $0x68] sm:$0xff]
      %v2234 = vld [vmem:[%s2219 + $0x70] sm:$0xff]
      %v2235 = vld [vmem:[%s2219 + $0x78] sm:$0xff]
      %2236 = vmatprep.subr.mxu0 0.0
      %2237 = vmatpush1.msra.mxu0 %v2235
      %2238 = vmatprep.subr.mxu0 0.0
      %2239 = vmatpush1.msra.mxu0 %v2234
      %2240 = vmatprep.subr.mxu0 0.0
      %2241 = vmatpush1.msra.mxu0 %v2233
      %2242 = vmatprep.subr.mxu0 0.0
      %2243 = vmatpush1.msra.mxu0 %v2232
      %2244 = vmatprep.subr.mxu0 0.0
      %2245 = vmatpush1.msra.mxu0 %v2231
      %2246 = vmatprep.subr.mxu0 0.0
      %2247 = vmatpush1.msra.mxu0 %v2230
      %2248 = vmatprep.subr.mxu0 0.0
      %2249 = vmatpush1.msra.mxu0 %v2229
      %2250 = vmatprep.subr.mxu0 0.0
      %2251 = vmatpush1.msra.mxu0 %v2228
      %2252 = vmatprep.subr.mxu0 0.0
      %2253 = vmatpush1.msra.mxu0 %v2227
      %2254 = vmatprep.subr.mxu0 0.0
      %2255 = vmatpush1.msra.mxu0 %v2226
      %2256 = vmatprep.subr.mxu0 0.0
      %2257 = vmatpush1.msra.mxu0 %v2225
      %2258 = vmatprep.subr.mxu0 0.0
      %2259 = vmatpush1.msra.mxu0 %v2224
      %2260 = vmatprep.subr.mxu0 0.0
      %2261 = vmatpush1.msra.mxu0 %v2223
      %2262 = vmatprep.subr.mxu0 0.0
      %2263 = vmatpush1.msra.mxu0 %v2222
      %2264 = vmatprep.subr.mxu0 0.0
      %2265 = vmatpush1.msra.mxu0 %v2221
      %2266 = vmatprep.subr.mxu0 0.0
      %2267 = vmatpush1.msra.mxu0 %v2220
      %2268 = vmatprep.subr.mxu0 0.0
      %2269 = vmatpush2.msra.mxu0 0.0
      %2270 = vmatprep.subr.mxu0 0.0
      %2271 = vmatpush2.msra.mxu0 0.0
      %2272 = vmatprep.subr.mxu0 0.0
      %2273 = vmatpush2.msra.mxu0 0.0
      %2274 = vmatprep.subr.mxu0 0.0
      %2275 = vmatpush2.msra.mxu0 0.0
      %2276 = vmatprep.subr.mxu0 0.0
      %2277 = vmatpush2.msra.mxu0 0.0
      %2278 = vmatprep.subr.mxu0 0.0
      %2279 = vmatpush2.msra.mxu0 0.0
      %2280 = vmatprep.subr.mxu0 0.0
      %2281 = vmatpush2.msra.mxu0 0.0
      %2282 = vmatprep.subr.mxu0 0.0
      %2283 = vmatpush2.msra.mxu0 0.0
      %2284 = vmatprep.subr.mxu0 0.0
      %2285 = vmatpush2.msra.mxu0 0.0
      %2286 = vmatprep.subr.mxu0 0.0
      %2287 = vmatpush2.msra.mxu0 0.0
      %2288 = vmatprep.subr.mxu0 0.0
      %2289 = vmatpush2.msra.mxu0 0.0
      %2290 = vmatprep.subr.mxu0 0.0
      %2291 = vmatpush2.msra.mxu0 0.0
      %2292 = vmatprep.subr.mxu0 0.0
      %2293 = vmatpush2.msra.mxu0 0.0
      %2294 = vmatprep.subr.mxu0 0.0
      %2295 = vmatpush2.msra.mxu0 0.0
      %2296 = vmatprep.subr.mxu0 0.0
      %2297 = vmatpush2.msra.mxu0 0.0
      %2298 = vmatprep.subr.mxu0 0.0
      %2299 = vmatpush2.msra.mxu0 0.0
      %2300 = vmatprep.mubr.f32.mxu0 0.0
      %2301 = vmatmul.mubr.f32.gmra.mxu0 %v2183
      %v2302 = vpop.f32.mrf.mxu0
      %v2303 = vadd.f32 0.0, %v2302
      %v2304 = vpop.f32.mrf.mxu0
      %2305 = vmatprep.mubr.f32.mxu0 0.0
      %2306 = vmatmul.mubr.f32.gmra.mxu0 %v2184
      %v2307 = vpop.f32.mrf.mxu0
      %v2308 = vadd.f32 0.0, %v2307
      %v2309 = vpop.f32.mrf.mxu0
      %2310 = vmatprep.mubr.f32.mxu0 0.0
      %2311 = vmatmul.mubr.f32.gmra.mxu0 %v2185
      %v2312 = vpop.f32.mrf.mxu0
      %v2313 = vadd.f32 0.0, %v2312
      %v2314 = vpop.f32.mrf.mxu0
      %2315 = vmatprep.mubr.f32.mxu0 0.0
      %2316 = vmatmul.mubr.f32.gmra.mxu0 %v2186
      %v2317 = vpop.f32.mrf.mxu0
      %v2318 = vadd.f32 0.0, %v2317
      %v2319 = vpop.f32.mrf.mxu0
      %2320 = vmatprep.mubr.f32.mxu0 0.0
      %2321 = vmatmul.mubr.f32.gmra.mxu0 %v2187
      %v2322 = vpop.f32.mrf.mxu0
      %v2323 = vadd.f32 0.0, %v2322
      %v2324 = vpop.f32.mrf.mxu0
      %2325 = vmatprep.mubr.f32.mxu0 0.0
      %2326 = vmatmul.mubr.f32.gmra.mxu0 %v2188
      %v2327 = vpop.f32.mrf.mxu0
      %v2328 = vadd.f32 0.0, %v2327
      %v2329 = vpop.f32.mrf.mxu0
      %2330 = vmatprep.mubr.f32.mxu0 0.0
      %2331 = vmatmul.mubr.f32.gmra.mxu0 %v2189
      %v2332 = vpop.f32.mrf.mxu0
      %v2333 = vadd.f32 0.0, %v2332
      %v2334 = vpop.f32.mrf.mxu0
      %2335 = vmatprep.mubr.f32.mxu0 0.0
      %2336 = vmatmul.mubr.f32.gmra.mxu0 %v2190
      %v2337 = vpop.f32.mrf.mxu0
      %v2338 = vadd.f32 0.0, %v2337
      %v2339 = vpop.f32.mrf.mxu0
      %2340 = vmatprep.mubr.f32.mxu0 0.0
      %2341 = vmatmul.mubr.f32.gmra.mxu0 %v2191
      %v2342 = vpop.f32.mrf.mxu0
      %v2343 = vadd.f32 0.0, %v2342
      %v2344 = vpop.f32.mrf.mxu0
      %2345 = vmatprep.mubr.f32.mxu0 0.0
      %2346 = vmatmul.mubr.f32.gmra.mxu0 %v2192
      %v2347 = vpop.f32.mrf.mxu0
      %v2348 = vadd.f32 0.0, %v2347
      %v2349 = vpop.f32.mrf.mxu0
      %2350 = vmatprep.mubr.f32.mxu0 0.0
      %2351 = vmatmul.mubr.f32.gmra.mxu0 %v2193
      %v2352 = vpop.f32.mrf.mxu0
      %v2353 = vadd.f32 0.0, %v2352
      %v2354 = vpop.f32.mrf.mxu0
      %2355 = vmatprep.mubr.f32.mxu0 0.0
      %2356 = vmatmul.mubr.f32.gmra.mxu0 %v2194
      %v2357 = vpop.f32.mrf.mxu0
      %v2358 = vadd.f32 0.0, %v2357
      %v2359 = vpop.f32.mrf.mxu0
      %2360 = vmatprep.mubr.f32.mxu0 0.0
      %2361 = vmatmul.mubr.f32.gmra.mxu0 %v2195
      %v2362 = vpop.f32.mrf.mxu0
      %v2363 = vadd.f32 0.0, %v2362
      %v2364 = vpop.f32.mrf.mxu0
      %2365 = vmatprep.mubr.f32.mxu0 0.0
      %2366 = vmatmul.mubr.f32.gmra.mxu0 %v2196
      %v2367 = vpop.f32.mrf.mxu0
      %v2368 = vadd.f32 0.0, %v2367
      %v2369 = vpop.f32.mrf.mxu0
      %2370 = vmatprep.mubr.f32.mxu0 0.0
      %2371 = vmatmul.mubr.f32.gmra.mxu0 %v2197
      %v2372 = vpop.f32.mrf.mxu0
      %v2373 = vadd.f32 0.0, %v2372
      %v2374 = vpop.f32.mrf.mxu0
      %2375 = vmatprep.mubr.f32.mxu0 0.0
      %2376 = vmatmul.mubr.f32.gmra.mxu0 %v2198
      %v2377 = vpop.f32.mrf.mxu0
      %v2378 = vadd.f32 0.0, %v2377
      %v2379 = vpop.f32.mrf.mxu0
      %2380 = vmatprep.mubr.f32.mxu0 0.0
      %2381 = vmatmul.mubr.f32.gmra.mxu0 %v2199
      %v2382 = vpop.f32.mrf.mxu0
      %v2383 = vadd.f32 0.0, %v2382
      %v2384 = vpop.f32.mrf.mxu0
      %2385 = vmatprep.mubr.f32.mxu0 0.0
      %2386 = vmatmul.mubr.f32.gmra.mxu0 %v2200
      %v2387 = vpop.f32.mrf.mxu0
      %v2388 = vadd.f32 0.0, %v2387
      %v2389 = vpop.f32.mrf.mxu0
      %2390 = vmatprep.mubr.f32.mxu0 0.0
      %2391 = vmatmul.mubr.f32.gmra.mxu0 %v2201
      %v2392 = vpop.f32.mrf.mxu0
      %v2393 = vadd.f32 0.0, %v2392
      %v2394 = vpop.f32.mrf.mxu0
      %2395 = vmatprep.mubr.f32.mxu0 0.0
      %2396 = vmatmul.mubr.f32.gmra.mxu0 %v2202
      %v2397 = vpop.f32.mrf.mxu0
      %v2398 = vadd.f32 0.0, %v2397
      %v2399 = vpop.f32.mrf.mxu0
      %2400 = vmatprep.mubr.f32.mxu0 0.0
      %2401 = vmatmul.mubr.f32.gmra.mxu0 %v2203
      %v2402 = vpop.f32.mrf.mxu0
      %v2403 = vadd.f32 0.0, %v2402
      %v2404 = vpop.f32.mrf.mxu0
      %2405 = vmatprep.mubr.f32.mxu0 0.0
      %2406 = vmatmul.mubr.f32.gmra.mxu0 %v2204
      %v2407 = vpop.f32.mrf.mxu0
      %v2408 = vadd.f32 0.0, %v2407
      %v2409 = vpop.f32.mrf.mxu0
      %2410 = vmatprep.mubr.f32.mxu0 0.0
      %2411 = vmatmul.mubr.f32.gmra.mxu0 %v2205
      %v2412 = vpop.f32.mrf.mxu0
      %v2413 = vadd.f32 0.0, %v2412
      %v2414 = vpop.f32.mrf.mxu0
      %2415 = vmatprep.mubr.f32.mxu0 0.0
      %2416 = vmatmul.mubr.f32.gmra.mxu0 %v2206
      %v2417 = vpop.f32.mrf.mxu0
      %v2418 = vadd.f32 0.0, %v2417
      %v2419 = vpop.f32.mrf.mxu0
      %2420 = vmatprep.mubr.f32.mxu0 0.0
      %2421 = vmatmul.mubr.f32.gmra.mxu0 %v2207
      %v2422 = vpop.f32.mrf.mxu0
      %v2423 = vadd.f32 0.0, %v2422
      %v2424 = vpop.f32.mrf.mxu0
      %2425 = vmatprep.mubr.f32.mxu0 0.0
      %2426 = vmatmul.mubr.f32.gmra.mxu0 %v2208
      %v2427 = vpop.f32.mrf.mxu0
      %v2428 = vadd.f32 0.0, %v2427
      %v2429 = vpop.f32.mrf.mxu0
      %2430 = vmatprep.mubr.f32.mxu0 0.0
      %2431 = vmatmul.mubr.f32.gmra.mxu0 %v2209
      %v2432 = vpop.f32.mrf.mxu0
      %v2433 = vadd.f32 0.0, %v2432
      %v2434 = vpop.f32.mrf.mxu0
      %2435 = vmatprep.mubr.f32.mxu0 0.0
      %2436 = vmatmul.mubr.f32.gmra.mxu0 %v2210
      %v2437 = vpop.f32.mrf.mxu0
      %v2438 = vadd.f32 0.0, %v2437
      %v2439 = vpop.f32.mrf.mxu0
      %2440 = vmatprep.mubr.f32.mxu0 0.0
      %2441 = vmatmul.mubr.f32.gmra.mxu0 %v2211
      %v2442 = vpop.f32.mrf.mxu0
      %v2443 = vadd.f32 0.0, %v2442
      %v2444 = vpop.f32.mrf.mxu0
      %2445 = vmatprep.mubr.f32.mxu0 0.0
      %2446 = vmatmul.mubr.f32.gmra.mxu0 %v2212
      %v2447 = vpop.f32.mrf.mxu0
      %v2448 = vadd.f32 0.0, %v2447
      %v2449 = vpop.f32.mrf.mxu0
      %2450 = vmatprep.mubr.f32.mxu0 0.0
      %2451 = vmatmul.mubr.f32.gmra.mxu0 %v2213
      %v2452 = vpop.f32.mrf.mxu0
      %v2453 = vadd.f32 0.0, %v2452
      %v2454 = vpop.f32.mrf.mxu0
      %2455 = vmatprep.mubr.f32.mxu0 0.0
      %2456 = vmatmul.mubr.f32.gmra.mxu0 %v2214
      %v2457 = vpop.f32.mrf.mxu0
      %v2458 = vadd.f32 0.0, %v2457
      %v2459 = vpop.f32.mrf.mxu0
      %2460 = vmatprep.mubr.f32.mxu0 0.0
      %2461 = vmatmul.mubr.f32.gmra.mxu0 %v2215
      %v2462 = vpop.f32.mrf.mxu0
      %v2463 = vadd.f32 0.0, %v2462
      %v2464 = vpop.f32.mrf.mxu0
      %2465 = vmatprep.mubr.f32.mxu0 0.0
      %2466 = vmatmul.mubr.f32.gmra.mxu0 %v2216
      %v2467 = vpop.f32.mrf.mxu0
      %v2468 = vadd.f32 0.0, %v2467
      %v2469 = vpop.f32.mrf.mxu0
      %2470 = vmatprep.mubr.f32.mxu0 0.0
      %2471 = vmatmul.mubr.f32.gmra.mxu0 %v2217
      %v2472 = vpop.f32.mrf.mxu0
      %v2473 = vadd.f32 0.0, %v2472
      %v2474 = vpop.f32.mrf.mxu0
      %2475 = vmatprep.mubr.f32.mxu0 0.0
      %2476 = vmatmul.mubr.f32.gmra.mxu0 %v2218
      %v2477 = vpop.f32.mrf.mxu0
      %v2478 = vadd.f32 0.0, %v2477
      %v2479 = vpop.f32.mrf.mxu0
      %2480 = vdwg.mxu0
      %v2481 = vadd.f32 %v2147, %v2303
      %v2482 = vadd.f32 %v2148, %v2308
      %v2483 = vadd.f32 %v2149, %v2313
      %v2484 = vadd.f32 %v2150, %v2318
      %v2485 = vadd.f32 %v2151, %v2323
      %v2486 = vadd.f32 %v2152, %v2328
      %v2487 = vadd.f32 %v2153, %v2333
      %v2488 = vadd.f32 %v2154, %v2338
      %v2489 = vadd.f32 %v2155, %v2343
      %v2490 = vadd.f32 %v2156, %v2348
      %v2491 = vadd.f32 %v2157, %v2353
      %v2492 = vadd.f32 %v2158, %v2358
      %v2493 = vadd.f32 %v2159, %v2363
      %v2494 = vadd.f32 %v2160, %v2368
      %v2495 = vadd.f32 %v2161, %v2373
      %v2496 = vadd.f32 %v2162, %v2378
      %v2497 = vadd.f32 %v2163, %v2383
      %v2498 = vadd.f32 %v2164, %v2388
      %v2499 = vadd.f32 %v2165, %v2393
      %v2500 = vadd.f32 %v2166, %v2398
      %v2501 = vadd.f32 %v2167, %v2403
      %v2502 = vadd.f32 %v2168, %v2408
      %v2503 = vadd.f32 %v2169, %v2413
      %v2504 = vadd.f32 %v2170, %v2418
      %v2505 = vadd.f32 %v2171, %v2423
      %v2506 = vadd.f32 %v2172, %v2428
      %v2507 = vadd.f32 %v2173, %v2433
      %v2508 = vadd.f32 %v2174, %v2438
      %v2509 = vadd.f32 %v2175, %v2443
      %v2510 = vadd.f32 %v2176, %v2448
      %v2511 = vadd.f32 %v2177, %v2453
      %v2512 = vadd.f32 %v2178, %v2458
      %v2513 = vadd.f32 %v2179, %v2463
      %v2514 = vadd.f32 %v2180, %v2468
      %v2515 = vadd.f32 %v2181, %v2473
      %v2516 = vadd.f32 %v2182, %v2478
      %v2517 = vld [vmem:[%s246 + $0x25] sm:$0xff]
      %v2518 = vld [vmem:[%s246 + $0x2d] sm:$0xff]
      %v2519 = vld [vmem:[%s246 + $0x35] sm:$0xff]
      %v2520 = vld [vmem:[%s246 + $0x3d] sm:$0xff]
      %v2521 = vld [vmem:[%s246 + $0x45] sm:$0xff]
      %v2522 = vld [vmem:[%s246 + $0x4d] sm:$0xff]
      %v2523 = vld [vmem:[%s246 + $0x55] sm:$0xff]
      %v2524 = vld [vmem:[%s246 + $0x5d] sm:$0xff]
      %v2525 = vld [vmem:[%s246 + $0x65] sm:$0xff]
      %v2526 = vld [vmem:[%s246 + $0x6d] sm:$0xff]
      %v2527 = vld [vmem:[%s246 + $0x75] sm:$0xff]
      %v2528 = vld [vmem:[%s246 + $0x7d] sm:$0xff]
      %v2529 = vld [vmem:[%s246 + $0x85] sm:$0xff]
      %v2530 = vld [vmem:[%s246 + $0x8d] sm:$0xff]
      %v2531 = vld [vmem:[%s246 + $0x95] sm:$0xff]
      %v2532 = vld [vmem:[%s246 + $0x9d] sm:$0xff]
      %v2533 = vld [vmem:[%s246 + $0xa5] sm:$0xff]
      %v2534 = vld [vmem:[%s246 + $0xad] sm:$0xff]
      %v2535 = vld [vmem:[%s246 + $0xb5] sm:$0xff]
      %v2536 = vld [vmem:[%s246 + $0xbd] sm:$0xff]
      %v2537 = vld [vmem:[%s246 + $0xc5] sm:$0xff]
      %v2538 = vld [vmem:[%s246 + $0xcd] sm:$0xff]
      %v2539 = vld [vmem:[%s246 + $0xd5] sm:$0xff]
      %v2540 = vld [vmem:[%s246 + $0xdd] sm:$0xff]
      %v2541 = vld [vmem:[%s246 + $0xe5] sm:$0xff]
      %v2542 = vld [vmem:[%s246 + $0xed] sm:$0xff]
      %v2543 = vld [vmem:[%s246 + $0xf5] sm:$0xff]
      %v2544 = vld [vmem:[%s246 + $0xfd] sm:$0xff]
      %v2545 = vld [vmem:[%s246 + $0x105] sm:$0xff]
      %v2546 = vld [vmem:[%s246 + $0x10d] sm:$0xff]
      %v2547 = vld [vmem:[%s246 + $0x115] sm:$0xff]
      %v2548 = vld [vmem:[%s246 + $0x11d] sm:$0xff]
      %v2549 = vld [vmem:[%s246 + $0x125] sm:$0xff]
      %v2550 = vld [vmem:[%s246 + $0x12d] sm:$0xff]
      %v2551 = vld [vmem:[%s246 + $0x135] sm:$0xff]
      %v2552 = vld [vmem:[%s246 + $0x13d] sm:$0xff]
      %s2553 = scalar_lea.vmem %s1, 896
      %v2554 = vld [vmem:[%s2553] sm:$0xff]
      %v2555 = vld [vmem:[%s2553 + $0x8] sm:$0xff]
      %v2556 = vld [vmem:[%s2553 + $0x10] sm:$0xff]
      %v2557 = vld [vmem:[%s2553 + $0x18] sm:$0xff]
      %v2558 = vld [vmem:[%s2553 + $0x20] sm:$0xff]
      %v2559 = vld [vmem:[%s2553 + $0x28] sm:$0xff]
      %v2560 = vld [vmem:[%s2553 + $0x30] sm:$0xff]
      %v2561 = vld [vmem:[%s2553 + $0x38] sm:$0xff]
      %v2562 = vld [vmem:[%s2553 + $0x40] sm:$0xff]
      %v2563 = vld [vmem:[%s2553 + $0x48] sm:$0xff]
      %v2564 = vld [vmem:[%s2553 + $0x50] sm:$0xff]
      %v2565 = vld [vmem:[%s2553 + $0x58] sm:$0xff]
      %v2566 = vld [vmem:[%s2553 + $0x60] sm:$0xff]
      %v2567 = vld [vmem:[%s2553 + $0x68] sm:$0xff]
      %v2568 = vld [vmem:[%s2553 + $0x70] sm:$0xff]
      %v2569 = vld [vmem:[%s2553 + $0x78] sm:$0xff]
      %2570 = vmatprep.subr.mxu0 0.0
      %2571 = vmatpush1.msra.mxu0 %v2569
      %2572 = vmatprep.subr.mxu0 0.0
      %2573 = vmatpush1.msra.mxu0 %v2568
      %2574 = vmatprep.subr.mxu0 0.0
      %2575 = vmatpush1.msra.mxu0 %v2567
      %2576 = vmatprep.subr.mxu0 0.0
      %2577 = vmatpush1.msra.mxu0 %v2566
      %2578 = vmatprep.subr.mxu0 0.0
      %2579 = vmatpush1.msra.mxu0 %v2565
      %2580 = vmatprep.subr.mxu0 0.0
      %2581 = vmatpush1.msra.mxu0 %v2564
      %2582 = vmatprep.subr.mxu0 0.0
      %2583 = vmatpush1.msra.mxu0 %v2563
      %2584 = vmatprep.subr.mxu0 0.0
      %2585 = vmatpush1.msra.mxu0 %v2562
      %2586 = vmatprep.subr.mxu0 0.0
      %2587 = vmatpush1.msra.mxu0 %v2561
      %2588 = vmatprep.subr.mxu0 0.0
      %2589 = vmatpush1.msra.mxu0 %v2560
      %2590 = vmatprep.subr.mxu0 0.0
      %2591 = vmatpush1.msra.mxu0 %v2559
      %2592 = vmatprep.subr.mxu0 0.0
      %2593 = vmatpush1.msra.mxu0 %v2558
      %2594 = vmatprep.subr.mxu0 0.0
      %2595 = vmatpush1.msra.mxu0 %v2557
      %2596 = vmatprep.subr.mxu0 0.0
      %2597 = vmatpush1.msra.mxu0 %v2556
      %2598 = vmatprep.subr.mxu0 0.0
      %2599 = vmatpush1.msra.mxu0 %v2555
      %2600 = vmatprep.subr.mxu0 0.0
      %2601 = vmatpush1.msra.mxu0 %v2554
      %2602 = vmatprep.subr.mxu0 0.0
      %2603 = vmatpush2.msra.mxu0 0.0
      %2604 = vmatprep.subr.mxu0 0.0
      %2605 = vmatpush2.msra.mxu0 0.0
      %2606 = vmatprep.subr.mxu0 0.0
      %2607 = vmatpush2.msra.mxu0 0.0
      %2608 = vmatprep.subr.mxu0 0.0
      %2609 = vmatpush2.msra.mxu0 0.0
      %2610 = vmatprep.subr.mxu0 0.0
      %2611 = vmatpush2.msra.mxu0 0.0
      %2612 = vmatprep.subr.mxu0 0.0
      %2613 = vmatpush2.msra.mxu0 0.0
      %2614 = vmatprep.subr.mxu0 0.0
      %2615 = vmatpush2.msra.mxu0 0.0
      %2616 = vmatprep.subr.mxu0 0.0
      %2617 = vmatpush2.msra.mxu0 0.0
      %2618 = vmatprep.subr.mxu0 0.0
      %2619 = vmatpush2.msra.mxu0 0.0
      %2620 = vmatprep.subr.mxu0 0.0
      %2621 = vmatpush2.msra.mxu0 0.0
      %2622 = vmatprep.subr.mxu0 0.0
      %2623 = vmatpush2.msra.mxu0 0.0
      %2624 = vmatprep.subr.mxu0 0.0
      %2625 = vmatpush2.msra.mxu0 0.0
      %2626 = vmatprep.subr.mxu0 0.0
      %2627 = vmatpush2.msra.mxu0 0.0
      %2628 = vmatprep.subr.mxu0 0.0
      %2629 = vmatpush2.msra.mxu0 0.0
      %2630 = vmatprep.subr.mxu0 0.0
      %2631 = vmatpush2.msra.mxu0 0.0
      %2632 = vmatprep.subr.mxu0 0.0
      %2633 = vmatpush2.msra.mxu0 0.0
      %2634 = vmatprep.mubr.f32.mxu0 0.0
      %2635 = vmatmul.mubr.f32.gmra.mxu0 %v2517
      %v2636 = vpop.f32.mrf.mxu0
      %v2637 = vadd.f32 0.0, %v2636
      %v2638 = vpop.f32.mrf.mxu0
      %2639 = vmatprep.mubr.f32.mxu0 0.0
      %2640 = vmatmul.mubr.f32.gmra.mxu0 %v2518
      %v2641 = vpop.f32.mrf.mxu0
      %v2642 = vadd.f32 0.0, %v2641
      %v2643 = vpop.f32.mrf.mxu0
      %2644 = vmatprep.mubr.f32.mxu0 0.0
      %2645 = vmatmul.mubr.f32.gmra.mxu0 %v2519
      %v2646 = vpop.f32.mrf.mxu0
      %v2647 = vadd.f32 0.0, %v2646
      %v2648 = vpop.f32.mrf.mxu0
      %2649 = vmatprep.mubr.f32.mxu0 0.0
      %2650 = vmatmul.mubr.f32.gmra.mxu0 %v2520
      %v2651 = vpop.f32.mrf.mxu0
      %v2652 = vadd.f32 0.0, %v2651
      %v2653 = vpop.f32.mrf.mxu0
      %2654 = vmatprep.mubr.f32.mxu0 0.0
      %2655 = vmatmul.mubr.f32.gmra.mxu0 %v2521
      %v2656 = vpop.f32.mrf.mxu0
      %v2657 = vadd.f32 0.0, %v2656
      %v2658 = vpop.f32.mrf.mxu0
      %2659 = vmatprep.mubr.f32.mxu0 0.0
      %2660 = vmatmul.mubr.f32.gmra.mxu0 %v2522
      %v2661 = vpop.f32.mrf.mxu0
      %v2662 = vadd.f32 0.0, %v2661
      %v2663 = vpop.f32.mrf.mxu0
      %2664 = vmatprep.mubr.f32.mxu0 0.0
      %2665 = vmatmul.mubr.f32.gmra.mxu0 %v2523
      %v2666 = vpop.f32.mrf.mxu0
      %v2667 = vadd.f32 0.0, %v2666
      %v2668 = vpop.f32.mrf.mxu0
      %2669 = vmatprep.mubr.f32.mxu0 0.0
      %2670 = vmatmul.mubr.f32.gmra.mxu0 %v2524
      %v2671 = vpop.f32.mrf.mxu0
      %v2672 = vadd.f32 0.0, %v2671
      %v2673 = vpop.f32.mrf.mxu0
      %2674 = vmatprep.mubr.f32.mxu0 0.0
      %2675 = vmatmul.mubr.f32.gmra.mxu0 %v2525
      %v2676 = vpop.f32.mrf.mxu0
      %v2677 = vadd.f32 0.0, %v2676
      %v2678 = vpop.f32.mrf.mxu0
      %2679 = vmatprep.mubr.f32.mxu0 0.0
      %2680 = vmatmul.mubr.f32.gmra.mxu0 %v2526
      %v2681 = vpop.f32.mrf.mxu0
      %v2682 = vadd.f32 0.0, %v2681
      %v2683 = vpop.f32.mrf.mxu0
      %2684 = vmatprep.mubr.f32.mxu0 0.0
      %2685 = vmatmul.mubr.f32.gmra.mxu0 %v2527
      %v2686 = vpop.f32.mrf.mxu0
      %v2687 = vadd.f32 0.0, %v2686
      %v2688 = vpop.f32.mrf.mxu0
      %2689 = vmatprep.mubr.f32.mxu0 0.0
      %2690 = vmatmul.mubr.f32.gmra.mxu0 %v2528
      %v2691 = vpop.f32.mrf.mxu0
      %v2692 = vadd.f32 0.0, %v2691
      %v2693 = vpop.f32.mrf.mxu0
      %2694 = vmatprep.mubr.f32.mxu0 0.0
      %2695 = vmatmul.mubr.f32.gmra.mxu0 %v2529
      %v2696 = vpop.f32.mrf.mxu0
      %v2697 = vadd.f32 0.0, %v2696
      %v2698 = vpop.f32.mrf.mxu0
      %2699 = vmatprep.mubr.f32.mxu0 0.0
      %2700 = vmatmul.mubr.f32.gmra.mxu0 %v2530
      %v2701 = vpop.f32.mrf.mxu0
      %v2702 = vadd.f32 0.0, %v2701
      %v2703 = vpop.f32.mrf.mxu0
      %2704 = vmatprep.mubr.f32.mxu0 0.0
      %2705 = vmatmul.mubr.f32.gmra.mxu0 %v2531
      %v2706 = vpop.f32.mrf.mxu0
      %v2707 = vadd.f32 0.0, %v2706
      %v2708 = vpop.f32.mrf.mxu0
      %2709 = vmatprep.mubr.f32.mxu0 0.0
      %2710 = vmatmul.mubr.f32.gmra.mxu0 %v2532
      %v2711 = vpop.f32.mrf.mxu0
      %v2712 = vadd.f32 0.0, %v2711
      %v2713 = vpop.f32.mrf.mxu0
      %2714 = vmatprep.mubr.f32.mxu0 0.0
      %2715 = vmatmul.mubr.f32.gmra.mxu0 %v2533
      %v2716 = vpop.f32.mrf.mxu0
      %v2717 = vadd.f32 0.0, %v2716
      %v2718 = vpop.f32.mrf.mxu0
      %2719 = vmatprep.mubr.f32.mxu0 0.0
      %2720 = vmatmul.mubr.f32.gmra.mxu0 %v2534
      %v2721 = vpop.f32.mrf.mxu0
      %v2722 = vadd.f32 0.0, %v2721
      %v2723 = vpop.f32.mrf.mxu0
      %2724 = vmatprep.mubr.f32.mxu0 0.0
      %2725 = vmatmul.mubr.f32.gmra.mxu0 %v2535
      %v2726 = vpop.f32.mrf.mxu0
      %v2727 = vadd.f32 0.0, %v2726
      %v2728 = vpop.f32.mrf.mxu0
      %2729 = vmatprep.mubr.f32.mxu0 0.0
      %2730 = vmatmul.mubr.f32.gmra.mxu0 %v2536
      %v2731 = vpop.f32.mrf.mxu0
      %v2732 = vadd.f32 0.0, %v2731
      %v2733 = vpop.f32.mrf.mxu0
      %2734 = vmatprep.mubr.f32.mxu0 0.0
      %2735 = vmatmul.mubr.f32.gmra.mxu0 %v2537
      %v2736 = vpop.f32.mrf.mxu0
      %v2737 = vadd.f32 0.0, %v2736
      %v2738 = vpop.f32.mrf.mxu0
      %2739 = vmatprep.mubr.f32.mxu0 0.0
      %2740 = vmatmul.mubr.f32.gmra.mxu0 %v2538
      %v2741 = vpop.f32.mrf.mxu0
      %v2742 = vadd.f32 0.0, %v2741
      %v2743 = vpop.f32.mrf.mxu0
      %2744 = vmatprep.mubr.f32.mxu0 0.0
      %2745 = vmatmul.mubr.f32.gmra.mxu0 %v2539
      %v2746 = vpop.f32.mrf.mxu0
      %v2747 = vadd.f32 0.0, %v2746
      %v2748 = vpop.f32.mrf.mxu0
      %2749 = vmatprep.mubr.f32.mxu0 0.0
      %2750 = vmatmul.mubr.f32.gmra.mxu0 %v2540
      %v2751 = vpop.f32.mrf.mxu0
      %v2752 = vadd.f32 0.0, %v2751
      %v2753 = vpop.f32.mrf.mxu0
      %2754 = vmatprep.mubr.f32.mxu0 0.0
      %2755 = vmatmul.mubr.f32.gmra.mxu0 %v2541
      %v2756 = vpop.f32.mrf.mxu0
      %v2757 = vadd.f32 0.0, %v2756
      %v2758 = vpop.f32.mrf.mxu0
      %2759 = vmatprep.mubr.f32.mxu0 0.0
      %2760 = vmatmul.mubr.f32.gmra.mxu0 %v2542
      %v2761 = vpop.f32.mrf.mxu0
      %v2762 = vadd.f32 0.0, %v2761
      %v2763 = vpop.f32.mrf.mxu0
      %2764 = vmatprep.mubr.f32.mxu0 0.0
      %2765 = vmatmul.mubr.f32.gmra.mxu0 %v2543
      %v2766 = vpop.f32.mrf.mxu0
      %v2767 = vadd.f32 0.0, %v2766
      %v2768 = vpop.f32.mrf.mxu0
      %2769 = vmatprep.mubr.f32.mxu0 0.0
      %2770 = vmatmul.mubr.f32.gmra.mxu0 %v2544
      %v2771 = vpop.f32.mrf.mxu0
      %v2772 = vadd.f32 0.0, %v2771
      %v2773 = vpop.f32.mrf.mxu0
      %2774 = vmatprep.mubr.f32.mxu0 0.0
      %2775 = vmatmul.mubr.f32.gmra.mxu0 %v2545
      %v2776 = vpop.f32.mrf.mxu0
      %v2777 = vadd.f32 0.0, %v2776
      %v2778 = vpop.f32.mrf.mxu0
      %2779 = vmatprep.mubr.f32.mxu0 0.0
      %2780 = vmatmul.mubr.f32.gmra.mxu0 %v2546
      %v2781 = vpop.f32.mrf.mxu0
      %v2782 = vadd.f32 0.0, %v2781
      %v2783 = vpop.f32.mrf.mxu0
      %2784 = vmatprep.mubr.f32.mxu0 0.0
      %2785 = vmatmul.mubr.f32.gmra.mxu0 %v2547
      %v2786 = vpop.f32.mrf.mxu0
      %v2787 = vadd.f32 0.0, %v2786
      %v2788 = vpop.f32.mrf.mxu0
      %2789 = vmatprep.mubr.f32.mxu0 0.0
      %2790 = vmatmul.mubr.f32.gmra.mxu0 %v2548
      %v2791 = vpop.f32.mrf.mxu0
      %v2792 = vadd.f32 0.0, %v2791
      %v2793 = vpop.f32.mrf.mxu0
      %2794 = vmatprep.mubr.f32.mxu0 0.0
      %2795 = vmatmul.mubr.f32.gmra.mxu0 %v2549
      %v2796 = vpop.f32.mrf.mxu0
      %v2797 = vadd.f32 0.0, %v2796
      %v2798 = vpop.f32.mrf.mxu0
      %2799 = vmatprep.mubr.f32.mxu0 0.0
      %2800 = vmatmul.mubr.f32.gmra.mxu0 %v2550
      %v2801 = vpop.f32.mrf.mxu0
      %v2802 = vadd.f32 0.0, %v2801
      %v2803 = vpop.f32.mrf.mxu0
      %2804 = vmatprep.mubr.f32.mxu0 0.0
      %2805 = vmatmul.mubr.f32.gmra.mxu0 %v2551
      %v2806 = vpop.f32.mrf.mxu0
      %v2807 = vadd.f32 0.0, %v2806
      %v2808 = vpop.f32.mrf.mxu0
      %2809 = vmatprep.mubr.f32.mxu0 0.0
      %2810 = vmatmul.mubr.f32.gmra.mxu0 %v2552
      %v2811 = vpop.f32.mrf.mxu0
      %v2812 = vadd.f32 0.0, %v2811
      %v2813 = vpop.f32.mrf.mxu0
      %2814 = vdwg.mxu0
      %v2815 = vadd.f32 %v2481, %v2637
      %v2816 = vadd.f32 %v2482, %v2642
      %v2817 = vadd.f32 %v2483, %v2647
      %v2818 = vadd.f32 %v2484, %v2652
      %v2819 = vadd.f32 %v2485, %v2657
      %v2820 = vadd.f32 %v2486, %v2662
      %v2821 = vadd.f32 %v2487, %v2667
      %v2822 = vadd.f32 %v2488, %v2672
      %v2823 = vadd.f32 %v2489, %v2677
      %v2824 = vadd.f32 %v2490, %v2682
      %v2825 = vadd.f32 %v2491, %v2687
      %v2826 = vadd.f32 %v2492, %v2692
      %v2827 = vadd.f32 %v2493, %v2697
      %v2828 = vadd.f32 %v2494, %v2702
      %v2829 = vadd.f32 %v2495, %v2707
      %v2830 = vadd.f32 %v2496, %v2712
      %v2831 = vadd.f32 %v2497, %v2717
      %v2832 = vadd.f32 %v2498, %v2722
      %v2833 = vadd.f32 %v2499, %v2727
      %v2834 = vadd.f32 %v2500, %v2732
      %v2835 = vadd.f32 %v2501, %v2737
      %v2836 = vadd.f32 %v2502, %v2742
      %v2837 = vadd.f32 %v2503, %v2747
      %v2838 = vadd.f32 %v2504, %v2752
      %v2839 = vadd.f32 %v2505, %v2757
      %v2840 = vadd.f32 %v2506, %v2762
      %v2841 = vadd.f32 %v2507, %v2767
      %v2842 = vadd.f32 %v2508, %v2772
      %v2843 = vadd.f32 %v2509, %v2777
      %v2844 = vadd.f32 %v2510, %v2782
      %v2845 = vadd.f32 %v2511, %v2787
      %v2846 = vadd.f32 %v2512, %v2792
      %v2847 = vadd.f32 %v2513, %v2797
      %v2848 = vadd.f32 %v2514, %v2802
      %v2849 = vadd.f32 %v2515, %v2807
      %v2850 = vadd.f32 %v2516, %v2812
      %v2851 = vld [vmem:[%s246 + $0x26] sm:$0xff]
      %v2852 = vld [vmem:[%s246 + $0x2e] sm:$0xff]
      %v2853 = vld [vmem:[%s246 + $0x36] sm:$0xff]
      %v2854 = vld [vmem:[%s246 + $0x3e] sm:$0xff]
      %v2855 = vld [vmem:[%s246 + $0x46] sm:$0xff]
      %v2856 = vld [vmem:[%s246 + $0x4e] sm:$0xff]
      %v2857 = vld [vmem:[%s246 + $0x56] sm:$0xff]
      %v2858 = vld [vmem:[%s246 + $0x5e] sm:$0xff]
      %v2859 = vld [vmem:[%s246 + $0x66] sm:$0xff]
      %v2860 = vld [vmem:[%s246 + $0x6e] sm:$0xff]
      %v2861 = vld [vmem:[%s246 + $0x76] sm:$0xff]
      %v2862 = vld [vmem:[%s246 + $0x7e] sm:$0xff]
      %v2863 = vld [vmem:[%s246 + $0x86] sm:$0xff]
      %v2864 = vld [vmem:[%s246 + $0x8e] sm:$0xff]
      %v2865 = vld [vmem:[%s246 + $0x96] sm:$0xff]
      %v2866 = vld [vmem:[%s246 + $0x9e] sm:$0xff]
      %v2867 = vld [vmem:[%s246 + $0xa6] sm:$0xff]
      %v2868 = vld [vmem:[%s246 + $0xae] sm:$0xff]
      %v2869 = vld [vmem:[%s246 + $0xb6] sm:$0xff]
      %v2870 = vld [vmem:[%s246 + $0xbe] sm:$0xff]
      %v2871 = vld [vmem:[%s246 + $0xc6] sm:$0xff]
      %v2872 = vld [vmem:[%s246 + $0xce] sm:$0xff]
      %v2873 = vld [vmem:[%s246 + $0xd6] sm:$0xff]
      %v2874 = vld [vmem:[%s246 + $0xde] sm:$0xff]
      %v2875 = vld [vmem:[%s246 + $0xe6] sm:$0xff]
      %v2876 = vld [vmem:[%s246 + $0xee] sm:$0xff]
      %v2877 = vld [vmem:[%s246 + $0xf6] sm:$0xff]
      %v2878 = vld [vmem:[%s246 + $0xfe] sm:$0xff]
      %v2879 = vld [vmem:[%s246 + $0x106] sm:$0xff]
      %v2880 = vld [vmem:[%s246 + $0x10e] sm:$0xff]
      %v2881 = vld [vmem:[%s246 + $0x116] sm:$0xff]
      %v2882 = vld [vmem:[%s246 + $0x11e] sm:$0xff]
      %v2883 = vld [vmem:[%s246 + $0x126] sm:$0xff]
      %v2884 = vld [vmem:[%s246 + $0x12e] sm:$0xff]
      %v2885 = vld [vmem:[%s246 + $0x136] sm:$0xff]
      %v2886 = vld [vmem:[%s246 + $0x13e] sm:$0xff]
      %s2887 = scalar_lea.vmem %s1, 1024
      %v2888 = vld [vmem:[%s2887] sm:$0xff]
      %v2889 = vld [vmem:[%s2887 + $0x8] sm:$0xff]
      %v2890 = vld [vmem:[%s2887 + $0x10] sm:$0xff]
      %v2891 = vld [vmem:[%s2887 + $0x18] sm:$0xff]
      %v2892 = vld [vmem:[%s2887 + $0x20] sm:$0xff]
      %v2893 = vld [vmem:[%s2887 + $0x28] sm:$0xff]
      %v2894 = vld [vmem:[%s2887 + $0x30] sm:$0xff]
      %v2895 = vld [vmem:[%s2887 + $0x38] sm:$0xff]
      %v2896 = vld [vmem:[%s2887 + $0x40] sm:$0xff]
      %v2897 = vld [vmem:[%s2887 + $0x48] sm:$0xff]
      %v2898 = vld [vmem:[%s2887 + $0x50] sm:$0xff]
      %v2899 = vld [vmem:[%s2887 + $0x58] sm:$0xff]
      %v2900 = vld [vmem:[%s2887 + $0x60] sm:$0xff]
      %v2901 = vld [vmem:[%s2887 + $0x68] sm:$0xff]
      %v2902 = vld [vmem:[%s2887 + $0x70] sm:$0xff]
      %v2903 = vld [vmem:[%s2887 + $0x78] sm:$0xff]
      %2904 = vmatprep.subr.mxu0 0.0
      %2905 = vmatpush1.msra.mxu0 %v2903
      %2906 = vmatprep.subr.mxu0 0.0
      %2907 = vmatpush1.msra.mxu0 %v2902
      %2908 = vmatprep.subr.mxu0 0.0
      %2909 = vmatpush1.msra.mxu0 %v2901
      %2910 = vmatprep.subr.mxu0 0.0
      %2911 = vmatpush1.msra.mxu0 %v2900
      %2912 = vmatprep.subr.mxu0 0.0
      %2913 = vmatpush1.msra.mxu0 %v2899
      %2914 = vmatprep.subr.mxu0 0.0
      %2915 = vmatpush1.msra.mxu0 %v2898
      %2916 = vmatprep.subr.mxu0 0.0
      %2917 = vmatpush1.msra.mxu0 %v2897
      %2918 = vmatprep.subr.mxu0 0.0
      %2919 = vmatpush1.msra.mxu0 %v2896
      %2920 = vmatprep.subr.mxu0 0.0
      %2921 = vmatpush1.msra.mxu0 %v2895
      %2922 = vmatprep.subr.mxu0 0.0
      %2923 = vmatpush1.msra.mxu0 %v2894
      %2924 = vmatprep.subr.mxu0 0.0
      %2925 = vmatpush1.msra.mxu0 %v2893
      %2926 = vmatprep.subr.mxu0 0.0
      %2927 = vmatpush1.msra.mxu0 %v2892
      %2928 = vmatprep.subr.mxu0 0.0
      %2929 = vmatpush1.msra.mxu0 %v2891
      %2930 = vmatprep.subr.mxu0 0.0
      %2931 = vmatpush1.msra.mxu0 %v2890
      %2932 = vmatprep.subr.mxu0 0.0
      %2933 = vmatpush1.msra.mxu0 %v2889
      %2934 = vmatprep.subr.mxu0 0.0
      %2935 = vmatpush1.msra.mxu0 %v2888
      %2936 = vmatprep.subr.mxu0 0.0
      %2937 = vmatpush2.msra.mxu0 0.0
      %2938 = vmatprep.subr.mxu0 0.0
      %2939 = vmatpush2.msra.mxu0 0.0
      %2940 = vmatprep.subr.mxu0 0.0
      %2941 = vmatpush2.msra.mxu0 0.0
      %2942 = vmatprep.subr.mxu0 0.0
      %2943 = vmatpush2.msra.mxu0 0.0
      %2944 = vmatprep.subr.mxu0 0.0
      %2945 = vmatpush2.msra.mxu0 0.0
      %2946 = vmatprep.subr.mxu0 0.0
      %2947 = vmatpush2.msra.mxu0 0.0
      %2948 = vmatprep.subr.mxu0 0.0
      %2949 = vmatpush2.msra.mxu0 0.0
      %2950 = vmatprep.subr.mxu0 0.0
      %2951 = vmatpush2.msra.mxu0 0.0
      %2952 = vmatprep.subr.mxu0 0.0
      %2953 = vmatpush2.msra.mxu0 0.0
      %2954 = vmatprep.subr.mxu0 0.0
      %2955 = vmatpush2.msra.mxu0 0.0
      %2956 = vmatprep.subr.mxu0 0.0
      %2957 = vmatpush2.msra.mxu0 0.0
      %2958 = vmatprep.subr.mxu0 0.0
      %2959 = vmatpush2.msra.mxu0 0.0
      %2960 = vmatprep.subr.mxu0 0.0
      %2961 = vmatpush2.msra.mxu0 0.0
      %2962 = vmatprep.subr.mxu0 0.0
      %2963 = vmatpush2.msra.mxu0 0.0
      %2964 = vmatprep.subr.mxu0 0.0
      %2965 = vmatpush2.msra.mxu0 0.0
      %2966 = vmatprep.subr.mxu0 0.0
      %2967 = vmatpush2.msra.mxu0 0.0
      %2968 = vmatprep.mubr.f32.mxu0 0.0
      %2969 = vmatmul.mubr.f32.gmra.mxu0 %v2851
      %v2970 = vpop.f32.mrf.mxu0
      %v2971 = vadd.f32 0.0, %v2970
      %v2972 = vpop.f32.mrf.mxu0
      %2973 = vmatprep.mubr.f32.mxu0 0.0
      %2974 = vmatmul.mubr.f32.gmra.mxu0 %v2852
      %v2975 = vpop.f32.mrf.mxu0
      %v2976 = vadd.f32 0.0, %v2975
      %v2977 = vpop.f32.mrf.mxu0
      %2978 = vmatprep.mubr.f32.mxu0 0.0
      %2979 = vmatmul.mubr.f32.gmra.mxu0 %v2853
      %v2980 = vpop.f32.mrf.mxu0
      %v2981 = vadd.f32 0.0, %v2980
      %v2982 = vpop.f32.mrf.mxu0
      %2983 = vmatprep.mubr.f32.mxu0 0.0
      %2984 = vmatmul.mubr.f32.gmra.mxu0 %v2854
      %v2985 = vpop.f32.mrf.mxu0
      %v2986 = vadd.f32 0.0, %v2985
      %v2987 = vpop.f32.mrf.mxu0
      %2988 = vmatprep.mubr.f32.mxu0 0.0
      %2989 = vmatmul.mubr.f32.gmra.mxu0 %v2855
      %v2990 = vpop.f32.mrf.mxu0
      %v2991 = vadd.f32 0.0, %v2990
      %v2992 = vpop.f32.mrf.mxu0
      %2993 = vmatprep.mubr.f32.mxu0 0.0
      %2994 = vmatmul.mubr.f32.gmra.mxu0 %v2856
      %v2995 = vpop.f32.mrf.mxu0
      %v2996 = vadd.f32 0.0, %v2995
      %v2997 = vpop.f32.mrf.mxu0
      %2998 = vmatprep.mubr.f32.mxu0 0.0
      %2999 = vmatmul.mubr.f32.gmra.mxu0 %v2857
      %v3000 = vpop.f32.mrf.mxu0
      %v3001 = vadd.f32 0.0, %v3000
      %v3002 = vpop.f32.mrf.mxu0
      %3003 = vmatprep.mubr.f32.mxu0 0.0
      %3004 = vmatmul.mubr.f32.gmra.mxu0 %v2858
      %v3005 = vpop.f32.mrf.mxu0
      %v3006 = vadd.f32 0.0, %v3005
      %v3007 = vpop.f32.mrf.mxu0
      %3008 = vmatprep.mubr.f32.mxu0 0.0
      %3009 = vmatmul.mubr.f32.gmra.mxu0 %v2859
      %v3010 = vpop.f32.mrf.mxu0
      %v3011 = vadd.f32 0.0, %v3010
      %v3012 = vpop.f32.mrf.mxu0
      %3013 = vmatprep.mubr.f32.mxu0 0.0
      %3014 = vmatmul.mubr.f32.gmra.mxu0 %v2860
      %v3015 = vpop.f32.mrf.mxu0
      %v3016 = vadd.f32 0.0, %v3015
      %v3017 = vpop.f32.mrf.mxu0
      %3018 = vmatprep.mubr.f32.mxu0 0.0
      %3019 = vmatmul.mubr.f32.gmra.mxu0 %v2861
      %v3020 = vpop.f32.mrf.mxu0
      %v3021 = vadd.f32 0.0, %v3020
      %v3022 = vpop.f32.mrf.mxu0
      %3023 = vmatprep.mubr.f32.mxu0 0.0
      %3024 = vmatmul.mubr.f32.gmra.mxu0 %v2862
      %v3025 = vpop.f32.mrf.mxu0
      %v3026 = vadd.f32 0.0, %v3025
      %v3027 = vpop.f32.mrf.mxu0
      %3028 = vmatprep.mubr.f32.mxu0 0.0
      %3029 = vmatmul.mubr.f32.gmra.mxu0 %v2863
      %v3030 = vpop.f32.mrf.mxu0
      %v3031 = vadd.f32 0.0, %v3030
      %v3032 = vpop.f32.mrf.mxu0
      %3033 = vmatprep.mubr.f32.mxu0 0.0
      %3034 = vmatmul.mubr.f32.gmra.mxu0 %v2864
      %v3035 = vpop.f32.mrf.mxu0
      %v3036 = vadd.f32 0.0, %v3035
      %v3037 = vpop.f32.mrf.mxu0
      %3038 = vmatprep.mubr.f32.mxu0 0.0
      %3039 = vmatmul.mubr.f32.gmra.mxu0 %v2865
      %v3040 = vpop.f32.mrf.mxu0
      %v3041 = vadd.f32 0.0, %v3040
      %v3042 = vpop.f32.mrf.mxu0
      %3043 = vmatprep.mubr.f32.mxu0 0.0
      %3044 = vmatmul.mubr.f32.gmra.mxu0 %v2866
      %v3045 = vpop.f32.mrf.mxu0
      %v3046 = vadd.f32 0.0, %v3045
      %v3047 = vpop.f32.mrf.mxu0
      %3048 = vmatprep.mubr.f32.mxu0 0.0
      %3049 = vmatmul.mubr.f32.gmra.mxu0 %v2867
      %v3050 = vpop.f32.mrf.mxu0
      %v3051 = vadd.f32 0.0, %v3050
      %v3052 = vpop.f32.mrf.mxu0
      %3053 = vmatprep.mubr.f32.mxu0 0.0
      %3054 = vmatmul.mubr.f32.gmra.mxu0 %v2868
      %v3055 = vpop.f32.mrf.mxu0
      %v3056 = vadd.f32 0.0, %v3055
      %v3057 = vpop.f32.mrf.mxu0
      %3058 = vmatprep.mubr.f32.mxu0 0.0
      %3059 = vmatmul.mubr.f32.gmra.mxu0 %v2869
      %v3060 = vpop.f32.mrf.mxu0
      %v3061 = vadd.f32 0.0, %v3060
      %v3062 = vpop.f32.mrf.mxu0
      %3063 = vmatprep.mubr.f32.mxu0 0.0
      %3064 = vmatmul.mubr.f32.gmra.mxu0 %v2870
      %v3065 = vpop.f32.mrf.mxu0
      %v3066 = vadd.f32 0.0, %v3065
      %v3067 = vpop.f32.mrf.mxu0
      %3068 = vmatprep.mubr.f32.mxu0 0.0
      %3069 = vmatmul.mubr.f32.gmra.mxu0 %v2871
      %v3070 = vpop.f32.mrf.mxu0
      %v3071 = vadd.f32 0.0, %v3070
      %v3072 = vpop.f32.mrf.mxu0
      %3073 = vmatprep.mubr.f32.mxu0 0.0
      %3074 = vmatmul.mubr.f32.gmra.mxu0 %v2872
      %v3075 = vpop.f32.mrf.mxu0
      %v3076 = vadd.f32 0.0, %v3075
      %v3077 = vpop.f32.mrf.mxu0
      %3078 = vmatprep.mubr.f32.mxu0 0.0
      %3079 = vmatmul.mubr.f32.gmra.mxu0 %v2873
      %v3080 = vpop.f32.mrf.mxu0
      %v3081 = vadd.f32 0.0, %v3080
      %v3082 = vpop.f32.mrf.mxu0
      %3083 = vmatprep.mubr.f32.mxu0 0.0
      %3084 = vmatmul.mubr.f32.gmra.mxu0 %v2874
      %v3085 = vpop.f32.mrf.mxu0
      %v3086 = vadd.f32 0.0, %v3085
      %v3087 = vpop.f32.mrf.mxu0
      %3088 = vmatprep.mubr.f32.mxu0 0.0
      %3089 = vmatmul.mubr.f32.gmra.mxu0 %v2875
      %v3090 = vpop.f32.mrf.mxu0
      %v3091 = vadd.f32 0.0, %v3090
      %v3092 = vpop.f32.mrf.mxu0
      %3093 = vmatprep.mubr.f32.mxu0 0.0
      %3094 = vmatmul.mubr.f32.gmra.mxu0 %v2876
      %v3095 = vpop.f32.mrf.mxu0
      %v3096 = vadd.f32 0.0, %v3095
      %v3097 = vpop.f32.mrf.mxu0
      %3098 = vmatprep.mubr.f32.mxu0 0.0
      %3099 = vmatmul.mubr.f32.gmra.mxu0 %v2877
      %v3100 = vpop.f32.mrf.mxu0
      %v3101 = vadd.f32 0.0, %v3100
      %v3102 = vpop.f32.mrf.mxu0
      %3103 = vmatprep.mubr.f32.mxu0 0.0
      %3104 = vmatmul.mubr.f32.gmra.mxu0 %v2878
      %v3105 = vpop.f32.mrf.mxu0
      %v3106 = vadd.f32 0.0, %v3105
      %v3107 = vpop.f32.mrf.mxu0
      %3108 = vmatprep.mubr.f32.mxu0 0.0
      %3109 = vmatmul.mubr.f32.gmra.mxu0 %v2879
      %v3110 = vpop.f32.mrf.mxu0
      %v3111 = vadd.f32 0.0, %v3110
      %v3112 = vpop.f32.mrf.mxu0
      %3113 = vmatprep.mubr.f32.mxu0 0.0
      %3114 = vmatmul.mubr.f32.gmra.mxu0 %v2880
      %v3115 = vpop.f32.mrf.mxu0
      %v3116 = vadd.f32 0.0, %v3115
      %v3117 = vpop.f32.mrf.mxu0
      %3118 = vmatprep.mubr.f32.mxu0 0.0
      %3119 = vmatmul.mubr.f32.gmra.mxu0 %v2881
      %v3120 = vpop.f32.mrf.mxu0
      %v3121 = vadd.f32 0.0, %v3120
      %v3122 = vpop.f32.mrf.mxu0
      %3123 = vmatprep.mubr.f32.mxu0 0.0
      %3124 = vmatmul.mubr.f32.gmra.mxu0 %v2882
      %v3125 = vpop.f32.mrf.mxu0
      %v3126 = vadd.f32 0.0, %v3125
      %v3127 = vpop.f32.mrf.mxu0
      %3128 = vmatprep.mubr.f32.mxu0 0.0
      %3129 = vmatmul.mubr.f32.gmra.mxu0 %v2883
      %v3130 = vpop.f32.mrf.mxu0
      %v3131 = vadd.f32 0.0, %v3130
      %v3132 = vpop.f32.mrf.mxu0
      %3133 = vmatprep.mubr.f32.mxu0 0.0
      %3134 = vmatmul.mubr.f32.gmra.mxu0 %v2884
      %v3135 = vpop.f32.mrf.mxu0
      %v3136 = vadd.f32 0.0, %v3135
      %v3137 = vpop.f32.mrf.mxu0
      %3138 = vmatprep.mubr.f32.mxu0 0.0
      %3139 = vmatmul.mubr.f32.gmra.mxu0 %v2885
      %v3140 = vpop.f32.mrf.mxu0
      %v3141 = vadd.f32 0.0, %v3140
      %v3142 = vpop.f32.mrf.mxu0
      %3143 = vmatprep.mubr.f32.mxu0 0.0
      %3144 = vmatmul.mubr.f32.gmra.mxu0 %v2886
      %v3145 = vpop.f32.mrf.mxu0
      %v3146 = vadd.f32 0.0, %v3145
      %v3147 = vpop.f32.mrf.mxu0
      %3148 = vdwg.mxu0
      %v3149 = vadd.f32 %v2815, %v2971
      %v3150 = vadd.f32 %v2816, %v2976
      %v3151 = vadd.f32 %v2817, %v2981
      %v3152 = vadd.f32 %v2818, %v2986
      %v3153 = vadd.f32 %v2819, %v2991
      %v3154 = vadd.f32 %v2820, %v2996
      %v3155 = vadd.f32 %v2821, %v3001
      %v3156 = vadd.f32 %v2822, %v3006
      %v3157 = vadd.f32 %v2823, %v3011
      %v3158 = vadd.f32 %v2824, %v3016
      %v3159 = vadd.f32 %v2825, %v3021
      %v3160 = vadd.f32 %v2826, %v3026
      %v3161 = vadd.f32 %v2827, %v3031
      %v3162 = vadd.f32 %v2828, %v3036
      %v3163 = vadd.f32 %v2829, %v3041
      %v3164 = vadd.f32 %v2830, %v3046
      %v3165 = vadd.f32 %v2831, %v3051
      %v3166 = vadd.f32 %v2832, %v3056
      %v3167 = vadd.f32 %v2833, %v3061
      %v3168 = vadd.f32 %v2834, %v3066
      %v3169 = vadd.f32 %v2835, %v3071
      %v3170 = vadd.f32 %v2836, %v3076
      %v3171 = vadd.f32 %v2837, %v3081
      %v3172 = vadd.f32 %v2838, %v3086
      %v3173 = vadd.f32 %v2839, %v3091
      %v3174 = vadd.f32 %v2840, %v3096
      %v3175 = vadd.f32 %v2841, %v3101
      %v3176 = vadd.f32 %v2842, %v3106
      %v3177 = vadd.f32 %v2843, %v3111
      %v3178 = vadd.f32 %v2844, %v3116
      %v3179 = vadd.f32 %v2845, %v3121
      %v3180 = vadd.f32 %v2846, %v3126
      %v3181 = vadd.f32 %v2847, %v3131
      %v3182 = vadd.f32 %v2848, %v3136
      %v3183 = vadd.f32 %v2849, %v3141
      %v3184 = vadd.f32 %v2850, %v3146
      %v3185 = vld [vmem:[%s2] sm:$0x1]
      %v3187 = vlaneseq
      %v3188 = vshrl.u32 %v3187, 7
      %v3189 = vsub.s32 0, %v3188
      %v3190 = vrot.slane %v3185, %v3189
      %v3192 = vadd.f32 %v3149, %v3190
      %v3193 = vadd.f32 %v3150, %v3190
      %v3194 = vadd.f32 %v3151, %v3190
      %v3195 = vadd.f32 %v3152, %v3190
      %v3196 = vadd.f32 %v3153, %v3190
      %v3197 = vadd.f32 %v3154, %v3190
      %v3198 = vadd.f32 %v3155, %v3190
      %v3199 = vadd.f32 %v3156, %v3190
      %v3200 = vadd.f32 %v3157, %v3190
      %v3201 = vadd.f32 %v3158, %v3190
      %v3202 = vadd.f32 %v3159, %v3190
      %v3203 = vadd.f32 %v3160, %v3190
      %v3204 = vadd.f32 %v3161, %v3190
      %v3205 = vadd.f32 %v3162, %v3190
      %v3206 = vadd.f32 %v3163, %v3190
      %v3207 = vadd.f32 %v3164, %v3190
      %v3208 = vadd.f32 %v3165, %v3190
      %v3209 = vadd.f32 %v3166, %v3190
      %v3210 = vadd.f32 %v3167, %v3190
      %v3211 = vadd.f32 %v3168, %v3190
      %v3212 = vadd.f32 %v3169, %v3190
      %v3213 = vadd.f32 %v3170, %v3190
      %v3214 = vadd.f32 %v3171, %v3190
      %v3215 = vadd.f32 %v3172, %v3190
      %v3216 = vadd.f32 %v3173, %v3190
      %v3217 = vadd.f32 %v3174, %v3190
      %v3218 = vadd.f32 %v3175, %v3190
      %v3219 = vadd.f32 %v3176, %v3190
      %v3220 = vadd.f32 %v3177, %v3190
      %v3221 = vadd.f32 %v3178, %v3190
      %v3222 = vadd.f32 %v3179, %v3190
      %v3223 = vadd.f32 %v3180, %v3190
      %v3224 = vadd.f32 %v3181, %v3190
      %v3225 = vadd.f32 %v3182, %v3190
      %v3226 = vadd.f32 %v3183, %v3190
      %v3227 = vadd.f32 %v3184, %v3190
      %v3228 = vmax.f32 %v3192, 0.0
      %v3229 = vmax.f32 %v3193, 0.0
      %v3230 = vmax.f32 %v3194, 0.0
      %v3231 = vmax.f32 %v3195, 0.0
      %v3232 = vmax.f32 %v3196, 0.0
      %v3233 = vmax.f32 %v3197, 0.0
      %v3234 = vmax.f32 %v3198, 0.0
      %v3235 = vmax.f32 %v3199, 0.0
      %v3236 = vmax.f32 %v3200, 0.0
      %v3237 = vmax.f32 %v3201, 0.0
      %v3238 = vmax.f32 %v3202, 0.0
      %v3239 = vmax.f32 %v3203, 0.0
      %v3240 = vmax.f32 %v3204, 0.0
      %v3241 = vmax.f32 %v3205, 0.0
      %v3242 = vmax.f32 %v3206, 0.0
      %v3243 = vmax.f32 %v3207, 0.0
      %v3244 = vmax.f32 %v3208, 0.0
      %v3245 = vmax.f32 %v3209, 0.0
      %v3246 = vmax.f32 %v3210, 0.0
      %v3247 = vmax.f32 %v3211, 0.0
      %v3248 = vmax.f32 %v3212, 0.0
      %v3249 = vmax.f32 %v3213, 0.0
      %v3250 = vmax.f32 %v3214, 0.0
      %v3251 = vmax.f32 %v3215, 0.0
      %v3252 = vmax.f32 %v3216, 0.0
      %v3253 = vmax.f32 %v3217, 0.0
      %v3254 = vmax.f32 %v3218, 0.0
      %v3255 = vmax.f32 %v3219, 0.0
      %v3256 = vmax.f32 %v3220, 0.0
      %v3257 = vmax.f32 %v3221, 0.0
      %v3258 = vmax.f32 %v3222, 0.0
      %v3259 = vmax.f32 %v3223, 0.0
      %v3260 = vmax.f32 %v3224, 0.0
      %v3261 = vmax.f32 %v3225, 0.0
      %v3262 = vmax.f32 %v3226, 0.0
      %v3263 = vmax.f32 %v3227, 0.0
      %v3264 = vld [vmem:[%s5] sm:$0xff]
      %v3265 = vld [vmem:[%s5 + $0x8] sm:$0xff]
      %v3266 = vld [vmem:[%s5 + $0x10] sm:$0xff]
      %v3267 = vld [vmem:[%s5 + $0x18] sm:$0xff]
      %v3268 = vld [vmem:[%s5 + $0x20] sm:$0xff]
      %v3269 = vld [vmem:[%s5 + $0x28] sm:$0xff]
      %v3270 = vld [vmem:[%s5 + $0x30] sm:$0xff]
      %v3271 = vld [vmem:[%s5 + $0x38] sm:$0xff]
      %v3272 = vld [vmem:[%s5 + $0x40] sm:$0xff]
      %v3273 = vld [vmem:[%s5 + $0x48] sm:$0xff]
      %v3274 = vld [vmem:[%s5 + $0x50] sm:$0xff]
      %v3275 = vld [vmem:[%s5 + $0x58] sm:$0xff]
      %v3276 = vld [vmem:[%s5 + $0x60] sm:$0xff]
      %v3277 = vld [vmem:[%s5 + $0x68] sm:$0xff]
      %v3278 = vld [vmem:[%s5 + $0x70] sm:$0xff]
      %v3279 = vld [vmem:[%s5 + $0x78] sm:$0xff]
      %v3280 = vld [vmem:[%s5 + $0x80] sm:$0xff]
      %v3281 = vld [vmem:[%s5 + $0x88] sm:$0xff]
      %v3282 = vld [vmem:[%s5 + $0x90] sm:$0xff]
      %v3283 = vld [vmem:[%s5 + $0x98] sm:$0xff]
      %v3284 = vld [vmem:[%s5 + $0xa0] sm:$0xff]
      %v3285 = vld [vmem:[%s5 + $0xa8] sm:$0xff]
      %v3286 = vld [vmem:[%s5 + $0xb0] sm:$0xff]
      %v3287 = vld [vmem:[%s5 + $0xb8] sm:$0xff]
      %v3288 = vld [vmem:[%s5 + $0xc0] sm:$0xff]
      %v3289 = vld [vmem:[%s5 + $0xc8] sm:$0xff]
      %v3290 = vld [vmem:[%s5 + $0xd0] sm:$0xff]
      %v3291 = vld [vmem:[%s5 + $0xd8] sm:$0xff]
      %v3292 = vld [vmem:[%s5 + $0xe0] sm:$0xff]
      %v3293 = vld [vmem:[%s5 + $0xe8] sm:$0xff]
      %v3294 = vld [vmem:[%s5 + $0xf0] sm:$0xff]
      %v3295 = vld [vmem:[%s5 + $0xf8] sm:$0xff]
      %v3296 = vld [vmem:[%s5 + $0x100] sm:$0xff]
      %v3297 = vld [vmem:[%s5 + $0x108] sm:$0xff]
      %v3298 = vld [vmem:[%s5 + $0x110] sm:$0xff]
      %v3299 = vld [vmem:[%s5 + $0x118] sm:$0xff]
      %3301 = vset.pattern.permute.xlu0 0
      %3302 = vperm.xlu0 %3301, %v3264
      %v3303 = vpop.permute.xlu0 %3302
      %3306 = vset.pattern.permute.xlu0 0
      %3307 = vperm.xlu0 %3306, %v3265
      %v3308 = vpop.permute.xlu0 %3307
      %3311 = vset.pattern.permute.xlu0 0
      %3312 = vperm.xlu0 %3311, %v3266
      %v3313 = vpop.permute.xlu0 %3312
      %3316 = vset.pattern.permute.xlu0 0
      %3317 = vperm.xlu0 %3316, %v3267
      %v3318 = vpop.permute.xlu0 %3317
      %3321 = vset.pattern.permute.xlu0 0
      %3322 = vperm.xlu0 %3321, %v3268
      %v3323 = vpop.permute.xlu0 %3322
      %3326 = vset.pattern.permute.xlu0 0
      %3327 = vperm.xlu0 %3326, %v3269
      %v3328 = vpop.permute.xlu0 %3327
      %3331 = vset.pattern.permute.xlu0 0
      %3332 = vperm.xlu0 %3331, %v3270
      %v3333 = vpop.permute.xlu0 %3332
      %3336 = vset.pattern.permute.xlu0 0
      %3337 = vperm.xlu0 %3336, %v3271
      %v3338 = vpop.permute.xlu0 %3337
      %3341 = vset.pattern.permute.xlu0 0
      %3342 = vperm.xlu0 %3341, %v3272
      %v3343 = vpop.permute.xlu0 %3342
      %3346 = vset.pattern.permute.xlu0 0
      %3347 = vperm.xlu0 %3346, %v3273
      %v3348 = vpop.permute.xlu0 %3347
      %3351 = vset.pattern.permute.xlu0 0
      %3352 = vperm.xlu0 %3351, %v3274
      %v3353 = vpop.permute.xlu0 %3352
      %3356 = vset.pattern.permute.xlu0 0
      %3357 = vperm.xlu0 %3356, %v3275
      %v3358 = vpop.permute.xlu0 %3357
      %3361 = vset.pattern.permute.xlu0 0
      %3362 = vperm.xlu0 %3361, %v3276
      %v3363 = vpop.permute.xlu0 %3362
      %3366 = vset.pattern.permute.xlu0 0
      %3367 = vperm.xlu0 %3366, %v3277
      %v3368 = vpop.permute.xlu0 %3367
      %3371 = vset.pattern.permute.xlu0 0
      %3372 = vperm.xlu0 %3371, %v3278
      %v3373 = vpop.permute.xlu0 %3372
      %3376 = vset.pattern.permute.xlu0 0
      %3377 = vperm.xlu0 %3376, %v3279
      %v3378 = vpop.permute.xlu0 %3377
      %3381 = vset.pattern.permute.xlu0 0
      %3382 = vperm.xlu0 %3381, %v3280
      %v3383 = vpop.permute.xlu0 %3382
      %3386 = vset.pattern.permute.xlu0 0
      %3387 = vperm.xlu0 %3386, %v3281
      %v3388 = vpop.permute.xlu0 %3387
      %3391 = vset.pattern.permute.xlu0 0
      %3392 = vperm.xlu0 %3391, %v3282
      %v3393 = vpop.permute.xlu0 %3392
      %3396 = vset.pattern.permute.xlu0 0
      %3397 = vperm.xlu0 %3396, %v3283
      %v3398 = vpop.permute.xlu0 %3397
      %3401 = vset.pattern.permute.xlu0 0
      %3402 = vperm.xlu0 %3401, %v3284
      %v3403 = vpop.permute.xlu0 %3402
      %3406 = vset.pattern.permute.xlu0 0
      %3407 = vperm.xlu0 %3406, %v3285
      %v3408 = vpop.permute.xlu0 %3407
      %3411 = vset.pattern.permute.xlu0 0
      %3412 = vperm.xlu0 %3411, %v3286
      %v3413 = vpop.permute.xlu0 %3412
      %3416 = vset.pattern.permute.xlu0 0
      %3417 = vperm.xlu0 %3416, %v3287
      %v3418 = vpop.permute.xlu0 %3417
      %3421 = vset.pattern.permute.xlu0 0
      %3422 = vperm.xlu0 %3421, %v3288
      %v3423 = vpop.permute.xlu0 %3422
      %3426 = vset.pattern.permute.xlu0 0
      %3427 = vperm.xlu0 %3426, %v3289
      %v3428 = vpop.permute.xlu0 %3427
      %3431 = vset.pattern.permute.xlu0 0
      %3432 = vperm.xlu0 %3431, %v3290
      %v3433 = vpop.permute.xlu0 %3432
      %3436 = vset.pattern.permute.xlu0 0
      %3437 = vperm.xlu0 %3436, %v3291
      %v3438 = vpop.permute.xlu0 %3437
      %3441 = vset.pattern.permute.xlu0 0
      %3442 = vperm.xlu0 %3441, %v3292
      %v3443 = vpop.permute.xlu0 %3442
      %3446 = vset.pattern.permute.xlu0 0
      %3447 = vperm.xlu0 %3446, %v3293
      %v3448 = vpop.permute.xlu0 %3447
      %3451 = vset.pattern.permute.xlu0 0
      %3452 = vperm.xlu0 %3451, %v3294
      %v3453 = vpop.permute.xlu0 %3452
      %3456 = vset.pattern.permute.xlu0 0
      %3457 = vperm.xlu0 %3456, %v3295
      %v3458 = vpop.permute.xlu0 %3457
      %3461 = vset.pattern.permute.xlu0 0
      %3462 = vperm.xlu0 %3461, %v3296
      %v3463 = vpop.permute.xlu0 %3462
      %3466 = vset.pattern.permute.xlu0 0
      %3467 = vperm.xlu0 %3466, %v3297
      %v3468 = vpop.permute.xlu0 %3467
      %3471 = vset.pattern.permute.xlu0 0
      %3472 = vperm.xlu0 %3471, %v3298
      %v3473 = vpop.permute.xlu0 %3472
      %3476 = vset.pattern.permute.xlu0 0
      %3477 = vperm.xlu0 %3476, %v3299
      %v3478 = vpop.permute.xlu0 %3477
      %v3480 = vmul.f32 %v3228, %v3303
      %v3481 = vmul.f32 %v3229, %v3308
      %v3482 = vmul.f32 %v3230, %v3313
      %v3483 = vmul.f32 %v3231, %v3318
      %v3484 = vmul.f32 %v3232, %v3323
      %v3485 = vmul.f32 %v3233, %v3328
      %v3486 = vmul.f32 %v3234, %v3333
      %v3487 = vmul.f32 %v3235, %v3338
      %v3488 = vmul.f32 %v3236, %v3343
      %v3489 = vmul.f32 %v3237, %v3348
      %v3490 = vmul.f32 %v3238, %v3353
      %v3491 = vmul.f32 %v3239, %v3358
      %v3492 = vmul.f32 %v3240, %v3363
      %v3493 = vmul.f32 %v3241, %v3368
      %v3494 = vmul.f32 %v3242, %v3373
      %v3495 = vmul.f32 %v3243, %v3378
      %v3496 = vmul.f32 %v3244, %v3383
      %v3497 = vmul.f32 %v3245, %v3388
      %v3498 = vmul.f32 %v3246, %v3393
      %v3499 = vmul.f32 %v3247, %v3398
      %v3500 = vmul.f32 %v3248, %v3403
      %v3501 = vmul.f32 %v3249, %v3408
      %v3502 = vmul.f32 %v3250, %v3413
      %v3503 = vmul.f32 %v3251, %v3418
      %v3504 = vmul.f32 %v3252, %v3423
      %v3505 = vmul.f32 %v3253, %v3428
      %v3506 = vmul.f32 %v3254, %v3433
      %v3507 = vmul.f32 %v3255, %v3438
      %v3508 = vmul.f32 %v3256, %v3443
      %v3509 = vmul.f32 %v3257, %v3448
      %v3510 = vmul.f32 %v3258, %v3453
      %v3511 = vmul.f32 %v3259, %v3458
      %v3512 = vmul.f32 %v3260, %v3463
      %v3513 = vmul.f32 %v3261, %v3468
      %v3514 = vmul.f32 %v3262, %v3473
      %v3515 = vmul.f32 %v3263, %v3478
      %3516 = vst [vmem:[#allocation2] sm:$0xff] 0.0
      %3517 = vst [vmem:[#allocation2 + $0x8] sm:$0xff] 0.0
      %3518 = vst [vmem:[#allocation2 + $0x10] sm:$0xff] 0.0
      %3519 = vst [vmem:[#allocation2 + $0x18] sm:$0xff] 0.0
      %3520 = vst [vmem:[#allocation2 + $0x20] sm:$0xff] 0.0
      %3521 = vst [vmem:[#allocation2 + $0x28] sm:$0xff] 0.0
      %3522 = vst [vmem:[#allocation2 + $0x30] sm:$0xff] 0.0
      %3523 = vst [vmem:[#allocation2 + $0x38] sm:$0xff] 0.0
      %3524 = vst [vmem:[#allocation2 + $0x40] sm:$0xff] 0.0
      %3525 = vst [vmem:[#allocation2 + $0x48] sm:$0xff] 0.0
      %3526 = vst [vmem:[#allocation2 + $0x50] sm:$0xff] 0.0
      %3527 = vst [vmem:[#allocation2 + $0x58] sm:$0xff] 0.0
      %3528 = vst [vmem:[#allocation2 + $0x60] sm:$0xff] 0.0
      %3529 = vst [vmem:[#allocation2 + $0x68] sm:$0xff] 0.0
      %3530 = vst [vmem:[#allocation2 + $0x70] sm:$0xff] 0.0
      %3531 = vst [vmem:[#allocation2 + $0x78] sm:$0xff] 0.0
      %3532 = vst [vmem:[#allocation2 + $0x80] sm:$0xff] 0.0
      %3533 = vst [vmem:[#allocation2 + $0x88] sm:$0xff] 0.0
      %3534 = vst [vmem:[#allocation2 + $0x90] sm:$0xff] 0.0
      %3535 = vst [vmem:[#allocation2 + $0x98] sm:$0xff] 0.0
      %3536 = vst [vmem:[#allocation2 + $0xa0] sm:$0xff] 0.0
      %3537 = vst [vmem:[#allocation2 + $0xa8] sm:$0xff] 0.0
      %3538 = vst [vmem:[#allocation2 + $0xb0] sm:$0xff] 0.0
      %3539 = vst [vmem:[#allocation2 + $0xb8] sm:$0xff] 0.0
      %3540 = vst [vmem:[#allocation2 + $0xc0] sm:$0xff] 0.0
      %3541 = vst [vmem:[#allocation2 + $0xc8] sm:$0xff] 0.0
      %3542 = vst [vmem:[#allocation2 + $0xd0] sm:$0xff] 0.0
      %3543 = vst [vmem:[#allocation2 + $0xd8] sm:$0xff] 0.0
      %3544 = vst [vmem:[#allocation2 + $0xe0] sm:$0xff] 0.0
      %3545 = vst [vmem:[#allocation2 + $0xe8] sm:$0xff] 0.0
      %3546 = vst [vmem:[#allocation2 + $0xf0] sm:$0xff] 0.0
      %3547 = vst [vmem:[#allocation2 + $0xf8] sm:$0xff] 0.0
      %3548 = vst [vmem:[#allocation2 + $0x100] sm:$0xff] 0.0
      %3549 = vst [vmem:[#allocation2 + $0x108] sm:$0xff] 0.0
      %3550 = vst [vmem:[#allocation2 + $0x110] sm:$0xff] 0.0
      %3551 = vst [vmem:[#allocation2 + $0x118] sm:$0xff] 0.0
      %3552 = vst [vmem:[#allocation2 + $0x120] sm:$0xff] 0.0
      %3553 = vst [vmem:[#allocation2 + $0x128] sm:$0xff] 0.0
      %3554 = vst [vmem:[#allocation2 + $0x130] sm:$0xff] 0.0
      %3555 = vst [vmem:[#allocation2 + $0x138] sm:$0xff] 0.0
      %3556 = vst [vmem:[#allocation2 + $0x140] sm:$0xff] 0.0
      %3557 = vst [vmem:[#allocation2 + $0x148] sm:$0xff] 0.0
      %3558 = vst [vmem:[#allocation2 + $0x150] sm:$0x3f] 0.0
      %3559 = vst [vmem:[#allocation2 + $0x13] sm:$0xff] %v3480
      %3560 = vst [vmem:[#allocation2 + $0x1b] sm:$0xff] %v3481
      %3561 = vst [vmem:[#allocation2 + $0x23] sm:$0xff] %v3482
      %3562 = vst [vmem:[#allocation2 + $0x2b] sm:$0xff] %v3483
      %3563 = vst [vmem:[#allocation2 + $0x33] sm:$0xff] %v3484
      %3564 = vst [vmem:[#allocation2 + $0x3b] sm:$0xff] %v3485
      %3565 = vst [vmem:[#allocation2 + $0x43] sm:$0xff] %v3486
      %3566 = vst [vmem:[#allocation2 + $0x4b] sm:$0xff] %v3487
      %3567 = vst [vmem:[#allocation2 + $0x53] sm:$0xff] %v3488
      %3568 = vst [vmem:[#allocation2 + $0x5b] sm:$0xff] %v3489
      %3569 = vst [vmem:[#allocation2 + $0x63] sm:$0xff] %v3490
      %3570 = vst [vmem:[#allocation2 + $0x6b] sm:$0xff] %v3491
      %3571 = vst [vmem:[#allocation2 + $0x73] sm:$0xff] %v3492
      %3572 = vst [vmem:[#allocation2 + $0x7b] sm:$0xff] %v3493
      %3573 = vst [vmem:[#allocation2 + $0x83] sm:$0xff] %v3494
      %3574 = vst [vmem:[#allocation2 + $0x8b] sm:$0xff] %v3495
      %3575 = vst [vmem:[#allocation2 + $0x93] sm:$0xff] %v3496
      %3576 = vst [vmem:[#allocation2 + $0x9b] sm:$0xff] %v3497
      %3577 = vst [vmem:[#allocation2 + $0xa3] sm:$0xff] %v3498
      %3578 = vst [vmem:[#allocation2 + $0xab] sm:$0xff] %v3499
      %3579 = vst [vmem:[#allocation2 + $0xb3] sm:$0xff] %v3500
      %3580 = vst [vmem:[#allocation2 + $0xbb] sm:$0xff] %v3501
      %3581 = vst [vmem:[#allocation2 + $0xc3] sm:$0xff] %v3502
      %3582 = vst [vmem:[#allocation2 + $0xcb] sm:$0xff] %v3503
      %3583 = vst [vmem:[#allocation2 + $0xd3] sm:$0xff] %v3504
      %3584 = vst [vmem:[#allocation2 + $0xdb] sm:$0xff] %v3505
      %3585 = vst [vmem:[#allocation2 + $0xe3] sm:$0xff] %v3506
      %3586 = vst [vmem:[#allocation2 + $0xeb] sm:$0xff] %v3507
      %3587 = vst [vmem:[#allocation2 + $0xf3] sm:$0xff] %v3508
      %3588 = vst [vmem:[#allocation2 + $0xfb] sm:$0xff] %v3509
      %3589 = vst [vmem:[#allocation2 + $0x103] sm:$0xff] %v3510
      %3590 = vst [vmem:[#allocation2 + $0x10b] sm:$0xff] %v3511
      %3591 = vst [vmem:[#allocation2 + $0x113] sm:$0xff] %v3512
      %3592 = vst [vmem:[#allocation2 + $0x11b] sm:$0xff] %v3513
      %3593 = vst [vmem:[#allocation2 + $0x123] sm:$0xff] %v3514
      %3594 = vst [vmem:[#allocation2 + $0x12b] sm:$0xff] %v3515
      %v3595 = vld [vmem:[#allocation2] sm:$0xff]
      %v3596 = vld [vmem:[#allocation2 + $0x8] sm:$0xff]
      %v3597 = vld [vmem:[#allocation2 + $0x10] sm:$0xff]
      %v3598 = vld [vmem:[#allocation2 + $0x18] sm:$0xff]
      %v3599 = vld [vmem:[#allocation2 + $0x20] sm:$0xff]
      %v3600 = vld [vmem:[#allocation2 + $0x28] sm:$0xff]
      %v3601 = vld [vmem:[#allocation2 + $0x30] sm:$0xff]
      %v3602 = vld [vmem:[#allocation2 + $0x38] sm:$0xff]
      %v3603 = vld [vmem:[#allocation2 + $0x40] sm:$0xff]
      %v3604 = vld [vmem:[#allocation2 + $0x48] sm:$0xff]
      %v3605 = vld [vmem:[#allocation2 + $0x50] sm:$0xff]
      %v3606 = vld [vmem:[#allocation2 + $0x58] sm:$0xff]
      %v3607 = vld [vmem:[#allocation2 + $0x60] sm:$0xff]
      %v3608 = vld [vmem:[#allocation2 + $0x68] sm:$0xff]
      %v3609 = vld [vmem:[#allocation2 + $0x70] sm:$0xff]
      %v3610 = vld [vmem:[#allocation2 + $0x78] sm:$0xff]
      %v3611 = vld [vmem:[#allocation2 + $0x80] sm:$0xff]
      %v3612 = vld [vmem:[#allocation2 + $0x88] sm:$0xff]
      %v3613 = vld [vmem:[#allocation2 + $0x90] sm:$0xff]
      %v3614 = vld [vmem:[#allocation2 + $0x98] sm:$0xff]
      %v3615 = vld [vmem:[#allocation2 + $0xa0] sm:$0xff]
      %v3616 = vld [vmem:[#allocation2 + $0xa8] sm:$0xff]
      %v3617 = vld [vmem:[#allocation2 + $0xb0] sm:$0xff]
      %v3618 = vld [vmem:[#allocation2 + $0xb8] sm:$0xff]
      %v3619 = vld [vmem:[#allocation2 + $0xc0] sm:$0xff]
      %v3620 = vld [vmem:[#allocation2 + $0xc8] sm:$0xff]
      %v3621 = vld [vmem:[#allocation2 + $0xd0] sm:$0xff]
      %v3622 = vld [vmem:[#allocation2 + $0xd8] sm:$0xff]
      %v3623 = vld [vmem:[#allocation2 + $0xe0] sm:$0xff]
      %v3624 = vld [vmem:[#allocation2 + $0xe8] sm:$0xff]
      %v3625 = vld [vmem:[#allocation2 + $0xf0] sm:$0xff]
      %v3626 = vld [vmem:[#allocation2 + $0xf8] sm:$0xff]
      %v3627 = vld [vmem:[#allocation2 + $0x100] sm:$0xff]
      %v3628 = vld [vmem:[#allocation2 + $0x108] sm:$0xff]
      %v3629 = vld [vmem:[#allocation2 + $0x110] sm:$0xff]
      %v3630 = vld [vmem:[#allocation2 + $0x118] sm:$0xff]
      %v3631 = vld [vmem:[%s3] sm:$0xff]
      %v3632 = vld [vmem:[%s3 + $0x8] sm:$0xff]
      %v3633 = vld [vmem:[%s3 + $0x10] sm:$0xff]
      %v3634 = vld [vmem:[%s3 + $0x18] sm:$0xff]
      %v3635 = vld [vmem:[%s3 + $0x20] sm:$0xff]
      %v3636 = vld [vmem:[%s3 + $0x28] sm:$0xff]
      %v3637 = vld [vmem:[%s3 + $0x30] sm:$0xff]
      %v3638 = vld [vmem:[%s3 + $0x38] sm:$0xff]
      %v3639 = vld [vmem:[%s3 + $0x40] sm:$0xff]
      %v3640 = vld [vmem:[%s3 + $0x48] sm:$0xff]
      %v3641 = vld [vmem:[%s3 + $0x50] sm:$0xff]
      %v3642 = vld [vmem:[%s3 + $0x58] sm:$0xff]
      %v3643 = vld [vmem:[%s3 + $0x60] sm:$0xff]
      %v3644 = vld [vmem:[%s3 + $0x68] sm:$0xff]
      %v3645 = vld [vmem:[%s3 + $0x70] sm:$0xff]
      %v3646 = vld [vmem:[%s3 + $0x78] sm:$0xff]
      %v3647 = vld [vmem:[#allocation2 + $0x1] sm:$0xff]
      %v3648 = vld [vmem:[#allocation2 + $0x9] sm:$0xff]
      %v3649 = vld [vmem:[#allocation2 + $0x11] sm:$0xff]
      %v3650 = vld [vmem:[#allocation2 + $0x19] sm:$0xff]
      %v3651 = vld [vmem:[#allocation2 + $0x21] sm:$0xff]
      %v3652 = vld [vmem:[#allocation2 + $0x29] sm:$0xff]
      %v3653 = vld [vmem:[#allocation2 + $0x31] sm:$0xff]
      %v3654 = vld [vmem:[#allocation2 + $0x39] sm:$0xff]
      %v3655 = vld [vmem:[#allocation2 + $0x41] sm:$0xff]
      %v3656 = vld [vmem:[#allocation2 + $0x49] sm:$0xff]
      %v3657 = vld [vmem:[#allocation2 + $0x51] sm:$0xff]
      %v3658 = vld [vmem:[#allocation2 + $0x59] sm:$0xff]
      %v3659 = vld [vmem:[#allocation2 + $0x61] sm:$0xff]
      %v3660 = vld [vmem:[#allocation2 + $0x69] sm:$0xff]
      %v3661 = vld [vmem:[#allocation2 + $0x71] sm:$0xff]
      %v3662 = vld [vmem:[#allocation2 + $0x79] sm:$0xff]
      %v3663 = vld [vmem:[#allocation2 + $0x81] sm:$0xff]
      %v3664 = vld [vmem:[#allocation2 + $0x89] sm:$0xff]
      %v3665 = vld [vmem:[#allocation2 + $0x91] sm:$0xff]
      %v3666 = vld [vmem:[#allocation2 + $0x99] sm:$0xff]
      %v3667 = vld [vmem:[#allocation2 + $0xa1] sm:$0xff]
      %v3668 = vld [vmem:[#allocation2 + $0xa9] sm:$0xff]
      %v3669 = vld [vmem:[#allocation2 + $0xb1] sm:$0xff]
      %v3670 = vld [vmem:[#allocation2 + $0xb9] sm:$0xff]
      %v3671 = vld [vmem:[#allocation2 + $0xc1] sm:$0xff]
      %v3672 = vld [vmem:[#allocation2 + $0xc9] sm:$0xff]
      %v3673 = vld [vmem:[#allocation2 + $0xd1] sm:$0xff]
      %v3674 = vld [vmem:[#allocation2 + $0xd9] sm:$0xff]
      %v3675 = vld [vmem:[#allocation2 + $0xe1] sm:$0xff]
      %v3676 = vld [vmem:[#allocation2 + $0xe9] sm:$0xff]
      %v3677 = vld [vmem:[#allocation2 + $0xf1] sm:$0xff]
      %v3678 = vld [vmem:[#allocation2 + $0xf9] sm:$0xff]
      %v3679 = vld [vmem:[#allocation2 + $0x101] sm:$0xff]
      %v3680 = vld [vmem:[#allocation2 + $0x109] sm:$0xff]
      %v3681 = vld [vmem:[#allocation2 + $0x111] sm:$0xff]
      %v3682 = vld [vmem:[#allocation2 + $0x119] sm:$0xff]
      %s3683 = scalar_lea.vmem %s3, 128
      %v3684 = vld [vmem:[%s3683] sm:$0xff]
      %v3685 = vld [vmem:[%s3683 + $0x8] sm:$0xff]
      %v3686 = vld [vmem:[%s3683 + $0x10] sm:$0xff]
      %v3687 = vld [vmem:[%s3683 + $0x18] sm:$0xff]
      %v3688 = vld [vmem:[%s3683 + $0x20] sm:$0xff]
      %v3689 = vld [vmem:[%s3683 + $0x28] sm:$0xff]
      %v3690 = vld [vmem:[%s3683 + $0x30] sm:$0xff]
      %v3691 = vld [vmem:[%s3683 + $0x38] sm:$0xff]
      %v3692 = vld [vmem:[%s3683 + $0x40] sm:$0xff]
      %v3693 = vld [vmem:[%s3683 + $0x48] sm:$0xff]
      %v3694 = vld [vmem:[%s3683 + $0x50] sm:$0xff]
      %v3695 = vld [vmem:[%s3683 + $0x58] sm:$0xff]
      %v3696 = vld [vmem:[%s3683 + $0x60] sm:$0xff]
      %v3697 = vld [vmem:[%s3683 + $0x68] sm:$0xff]
      %v3698 = vld [vmem:[%s3683 + $0x70] sm:$0xff]
      %v3699 = vld [vmem:[%s3683 + $0x78] sm:$0xff]
      %3700 = vmatprep.subr.mxu0 0.0
      %3701 = vmatpush1.msra.mxu0 %v3699
      %3702 = vmatprep.subr.mxu0 0.0
      %3703 = vmatpush1.msra.mxu0 %v3698
      %3704 = vmatprep.subr.mxu0 0.0
      %3705 = vmatpush1.msra.mxu0 %v3697
      %3706 = vmatprep.subr.mxu0 0.0
      %3707 = vmatpush1.msra.mxu0 %v3696
      %3708 = vmatprep.subr.mxu0 0.0
      %3709 = vmatpush1.msra.mxu0 %v3695
      %3710 = vmatprep.subr.mxu0 0.0
      %3711 = vmatpush1.msra.mxu0 %v3694
      %3712 = vmatprep.subr.mxu0 0.0
      %3713 = vmatpush1.msra.mxu0 %v3693
      %3714 = vmatprep.subr.mxu0 0.0
      %3715 = vmatpush1.msra.mxu0 %v3692
      %3716 = vmatprep.subr.mxu0 0.0
      %3717 = vmatpush1.msra.mxu0 %v3691
      %3718 = vmatprep.subr.mxu0 0.0
      %3719 = vmatpush1.msra.mxu0 %v3690
      %3720 = vmatprep.subr.mxu0 0.0
      %3721 = vmatpush1.msra.mxu0 %v3689
      %3722 = vmatprep.subr.mxu0 0.0
      %3723 = vmatpush1.msra.mxu0 %v3688
      %3724 = vmatprep.subr.mxu0 0.0
      %3725 = vmatpush1.msra.mxu0 %v3687
      %3726 = vmatprep.subr.mxu0 0.0
      %3727 = vmatpush1.msra.mxu0 %v3686
      %3728 = vmatprep.subr.mxu0 0.0
      %3729 = vmatpush1.msra.mxu0 %v3685
      %3730 = vmatprep.subr.mxu0 0.0
      %3731 = vmatpush1.msra.mxu0 %v3684
      %3732 = vmatprep.subr.mxu0 0.0
      %3733 = vmatpush2.msra.mxu0 0.0
      %3734 = vmatprep.subr.mxu0 0.0
      %3735 = vmatpush2.msra.mxu0 0.0
      %3736 = vmatprep.subr.mxu0 0.0
      %3737 = vmatpush2.msra.mxu0 0.0
      %3738 = vmatprep.subr.mxu0 0.0
      %3739 = vmatpush2.msra.mxu0 0.0
      %3740 = vmatprep.subr.mxu0 0.0
      %3741 = vmatpush2.msra.mxu0 0.0
      %3742 = vmatprep.subr.mxu0 0.0
      %3743 = vmatpush2.msra.mxu0 0.0
      %3744 = vmatprep.subr.mxu0 0.0
      %3745 = vmatpush2.msra.mxu0 0.0
      %3746 = vmatprep.subr.mxu0 0.0
      %3747 = vmatpush2.msra.mxu0 0.0
      %3748 = vmatprep.subr.mxu0 0.0
      %3749 = vmatpush2.msra.mxu0 0.0
      %3750 = vmatprep.subr.mxu0 0.0
      %3751 = vmatpush2.msra.mxu0 0.0
      %3752 = vmatprep.subr.mxu0 0.0
      %3753 = vmatpush2.msra.mxu0 0.0
      %3754 = vmatprep.subr.mxu0 0.0
      %3755 = vmatpush2.msra.mxu0 0.0
      %3756 = vmatprep.subr.mxu0 0.0
      %3757 = vmatpush2.msra.mxu0 0.0
      %3758 = vmatprep.subr.mxu0 0.0
      %3759 = vmatpush2.msra.mxu0 0.0
      %3760 = vmatprep.subr.mxu0 0.0
      %3761 = vmatpush2.msra.mxu0 0.0
      %3762 = vmatprep.subr.mxu0 0.0
      %3763 = vmatpush2.msra.mxu0 0.0
      %3764 = vmatprep.mubr.f32.mxu0 0.0
      %3765 = vmatmul.mubr.f32.gmra.mxu0 %v3647
      %v3766 = vpop.f32.mrf.mxu0
      %v3767 = vadd.f32 0.0, %v3766
      %v3768 = vpop.f32.mrf.mxu0
      %3769 = vmatprep.mubr.f32.mxu0 0.0
      %3770 = vmatmul.mubr.f32.gmra.mxu0 %v3648
      %v3771 = vpop.f32.mrf.mxu0
      %v3772 = vadd.f32 0.0, %v3771
      %v3773 = vpop.f32.mrf.mxu0
      %3774 = vmatprep.mubr.f32.mxu0 0.0
      %3775 = vmatmul.mubr.f32.gmra.mxu0 %v3649
      %v3776 = vpop.f32.mrf.mxu0
      %v3777 = vadd.f32 0.0, %v3776
      %v3778 = vpop.f32.mrf.mxu0
      %3779 = vmatprep.mubr.f32.mxu0 0.0
      %3780 = vmatmul.mubr.f32.gmra.mxu0 %v3650
      %v3781 = vpop.f32.mrf.mxu0
      %v3782 = vadd.f32 0.0, %v3781
      %v3783 = vpop.f32.mrf.mxu0
      %3784 = vmatprep.mubr.f32.mxu0 0.0
      %3785 = vmatmul.mubr.f32.gmra.mxu0 %v3651
      %v3786 = vpop.f32.mrf.mxu0
      %v3787 = vadd.f32 0.0, %v3786
      %v3788 = vpop.f32.mrf.mxu0
      %3789 = vmatprep.mubr.f32.mxu0 0.0
      %3790 = vmatmul.mubr.f32.gmra.mxu0 %v3652
      %v3791 = vpop.f32.mrf.mxu0
      %v3792 = vadd.f32 0.0, %v3791
      %v3793 = vpop.f32.mrf.mxu0
      %3794 = vmatprep.mubr.f32.mxu0 0.0
      %3795 = vmatmul.mubr.f32.gmra.mxu0 %v3653
      %v3796 = vpop.f32.mrf.mxu0
      %v3797 = vadd.f32 0.0, %v3796
      %v3798 = vpop.f32.mrf.mxu0
      %3799 = vmatprep.mubr.f32.mxu0 0.0
      %3800 = vmatmul.mubr.f32.gmra.mxu0 %v3654
      %v3801 = vpop.f32.mrf.mxu0
      %v3802 = vadd.f32 0.0, %v3801
      %v3803 = vpop.f32.mrf.mxu0
      %3804 = vmatprep.mubr.f32.mxu0 0.0
      %3805 = vmatmul.mubr.f32.gmra.mxu0 %v3655
      %v3806 = vpop.f32.mrf.mxu0
      %v3807 = vadd.f32 0.0, %v3806
      %v3808 = vpop.f32.mrf.mxu0
      %3809 = vmatprep.mubr.f32.mxu0 0.0
      %3810 = vmatmul.mubr.f32.gmra.mxu0 %v3656
      %v3811 = vpop.f32.mrf.mxu0
      %v3812 = vadd.f32 0.0, %v3811
      %v3813 = vpop.f32.mrf.mxu0
      %3814 = vmatprep.mubr.f32.mxu0 0.0
      %3815 = vmatmul.mubr.f32.gmra.mxu0 %v3657
      %v3816 = vpop.f32.mrf.mxu0
      %v3817 = vadd.f32 0.0, %v3816
      %v3818 = vpop.f32.mrf.mxu0
      %3819 = vmatprep.mubr.f32.mxu0 0.0
      %3820 = vmatmul.mubr.f32.gmra.mxu0 %v3658
      %v3821 = vpop.f32.mrf.mxu0
      %v3822 = vadd.f32 0.0, %v3821
      %v3823 = vpop.f32.mrf.mxu0
      %3824 = vmatprep.mubr.f32.mxu0 0.0
      %3825 = vmatmul.mubr.f32.gmra.mxu0 %v3659
      %v3826 = vpop.f32.mrf.mxu0
      %v3827 = vadd.f32 0.0, %v3826
      %v3828 = vpop.f32.mrf.mxu0
      %3829 = vmatprep.mubr.f32.mxu0 0.0
      %3830 = vmatmul.mubr.f32.gmra.mxu0 %v3660
      %v3831 = vpop.f32.mrf.mxu0
      %v3832 = vadd.f32 0.0, %v3831
      %v3833 = vpop.f32.mrf.mxu0
      %3834 = vmatprep.mubr.f32.mxu0 0.0
      %3835 = vmatmul.mubr.f32.gmra.mxu0 %v3661
      %v3836 = vpop.f32.mrf.mxu0
      %v3837 = vadd.f32 0.0, %v3836
      %v3838 = vpop.f32.mrf.mxu0
      %3839 = vmatprep.mubr.f32.mxu0 0.0
      %3840 = vmatmul.mubr.f32.gmra.mxu0 %v3662
      %v3841 = vpop.f32.mrf.mxu0
      %v3842 = vadd.f32 0.0, %v3841
      %v3843 = vpop.f32.mrf.mxu0
      %3844 = vmatprep.mubr.f32.mxu0 0.0
      %3845 = vmatmul.mubr.f32.gmra.mxu0 %v3663
      %v3846 = vpop.f32.mrf.mxu0
      %v3847 = vadd.f32 0.0, %v3846
      %v3848 = vpop.f32.mrf.mxu0
      %3849 = vmatprep.mubr.f32.mxu0 0.0
      %3850 = vmatmul.mubr.f32.gmra.mxu0 %v3664
      %v3851 = vpop.f32.mrf.mxu0
      %v3852 = vadd.f32 0.0, %v3851
      %v3853 = vpop.f32.mrf.mxu0
      %3854 = vmatprep.mubr.f32.mxu0 0.0
      %3855 = vmatmul.mubr.f32.gmra.mxu0 %v3665
      %v3856 = vpop.f32.mrf.mxu0
      %v3857 = vadd.f32 0.0, %v3856
      %v3858 = vpop.f32.mrf.mxu0
      %3859 = vmatprep.mubr.f32.mxu0 0.0
      %3860 = vmatmul.mubr.f32.gmra.mxu0 %v3666
      %v3861 = vpop.f32.mrf.mxu0
      %v3862 = vadd.f32 0.0, %v3861
      %v3863 = vpop.f32.mrf.mxu0
      %3864 = vmatprep.mubr.f32.mxu0 0.0
      %3865 = vmatmul.mubr.f32.gmra.mxu0 %v3667
      %v3866 = vpop.f32.mrf.mxu0
      %v3867 = vadd.f32 0.0, %v3866
      %v3868 = vpop.f32.mrf.mxu0
      %3869 = vmatprep.mubr.f32.mxu0 0.0
      %3870 = vmatmul.mubr.f32.gmra.mxu0 %v3668
      %v3871 = vpop.f32.mrf.mxu0
      %v3872 = vadd.f32 0.0, %v3871
      %v3873 = vpop.f32.mrf.mxu0
      %3874 = vmatprep.mubr.f32.mxu0 0.0
      %3875 = vmatmul.mubr.f32.gmra.mxu0 %v3669
      %v3876 = vpop.f32.mrf.mxu0
      %v3877 = vadd.f32 0.0, %v3876
      %v3878 = vpop.f32.mrf.mxu0
      %3879 = vmatprep.mubr.f32.mxu0 0.0
      %3880 = vmatmul.mubr.f32.gmra.mxu0 %v3670
      %v3881 = vpop.f32.mrf.mxu0
      %v3882 = vadd.f32 0.0, %v3881
      %v3883 = vpop.f32.mrf.mxu0
      %3884 = vmatprep.mubr.f32.mxu0 0.0
      %3885 = vmatmul.mubr.f32.gmra.mxu0 %v3671
      %v3886 = vpop.f32.mrf.mxu0
      %v3887 = vadd.f32 0.0, %v3886
      %v3888 = vpop.f32.mrf.mxu0
      %3889 = vmatprep.mubr.f32.mxu0 0.0
      %3890 = vmatmul.mubr.f32.gmra.mxu0 %v3672
      %v3891 = vpop.f32.mrf.mxu0
      %v3892 = vadd.f32 0.0, %v3891
      %v3893 = vpop.f32.mrf.mxu0
      %3894 = vmatprep.mubr.f32.mxu0 0.0
      %3895 = vmatmul.mubr.f32.gmra.mxu0 %v3673
      %v3896 = vpop.f32.mrf.mxu0
      %v3897 = vadd.f32 0.0, %v3896
      %v3898 = vpop.f32.mrf.mxu0
      %3899 = vmatprep.mubr.f32.mxu0 0.0
      %3900 = vmatmul.mubr.f32.gmra.mxu0 %v3674
      %v3901 = vpop.f32.mrf.mxu0
      %v3902 = vadd.f32 0.0, %v3901
      %v3903 = vpop.f32.mrf.mxu0
      %3904 = vmatprep.mubr.f32.mxu0 0.0
      %3905 = vmatmul.mubr.f32.gmra.mxu0 %v3675
      %v3906 = vpop.f32.mrf.mxu0
      %v3907 = vadd.f32 0.0, %v3906
      %v3908 = vpop.f32.mrf.mxu0
      %3909 = vmatprep.mubr.f32.mxu0 0.0
      %3910 = vmatmul.mubr.f32.gmra.mxu0 %v3676
      %v3911 = vpop.f32.mrf.mxu0
      %v3912 = vadd.f32 0.0, %v3911
      %v3913 = vpop.f32.mrf.mxu0
      %3914 = vmatprep.mubr.f32.mxu0 0.0
      %3915 = vmatmul.mubr.f32.gmra.mxu0 %v3677
      %v3916 = vpop.f32.mrf.mxu0
      %v3917 = vadd.f32 0.0, %v3916
      %v3918 = vpop.f32.mrf.mxu0
      %3919 = vmatprep.mubr.f32.mxu0 0.0
      %3920 = vmatmul.mubr.f32.gmra.mxu0 %v3678
      %v3921 = vpop.f32.mrf.mxu0
      %v3922 = vadd.f32 0.0, %v3921
      %v3923 = vpop.f32.mrf.mxu0
      %3924 = vmatprep.mubr.f32.mxu0 0.0
      %3925 = vmatmul.mubr.f32.gmra.mxu0 %v3679
      %v3926 = vpop.f32.mrf.mxu0
      %v3927 = vadd.f32 0.0, %v3926
      %v3928 = vpop.f32.mrf.mxu0
      %3929 = vmatprep.mubr.f32.mxu0 0.0
      %3930 = vmatmul.mubr.f32.gmra.mxu0 %v3680
      %v3931 = vpop.f32.mrf.mxu0
      %v3932 = vadd.f32 0.0, %v3931
      %v3933 = vpop.f32.mrf.mxu0
      %3934 = vmatprep.mubr.f32.mxu0 0.0
      %3935 = vmatmul.mubr.f32.gmra.mxu0 %v3681
      %v3936 = vpop.f32.mrf.mxu0
      %v3937 = vadd.f32 0.0, %v3936
      %v3938 = vpop.f32.mrf.mxu0
      %3939 = vmatprep.mubr.f32.mxu0 0.0
      %3940 = vmatmul.mubr.f32.gmra.mxu0 %v3682
      %v3941 = vpop.f32.mrf.mxu0
      %v3942 = vadd.f32 0.0, %v3941
      %v3943 = vpop.f32.mrf.mxu0
      %3944 = vdwg.mxu0
      %3945 = vmatprep.subr.mxu0 0.0
      %3946 = vmatpush1.msra.mxu0 %v3646
      %3947 = vmatprep.subr.mxu0 0.0
      %3948 = vmatpush1.msra.mxu0 %v3645
      %3949 = vmatprep.subr.mxu0 0.0
      %3950 = vmatpush1.msra.mxu0 %v3644
      %3951 = vmatprep.subr.mxu0 0.0
      %3952 = vmatpush1.msra.mxu0 %v3643
      %3953 = vmatprep.subr.mxu0 0.0
      %3954 = vmatpush1.msra.mxu0 %v3642
      %3955 = vmatprep.subr.mxu0 0.0
      %3956 = vmatpush1.msra.mxu0 %v3641
      %3957 = vmatprep.subr.mxu0 0.0
      %3958 = vmatpush1.msra.mxu0 %v3640
      %3959 = vmatprep.subr.mxu0 0.0
      %3960 = vmatpush1.msra.mxu0 %v3639
      %3961 = vmatprep.subr.mxu0 0.0
      %3962 = vmatpush1.msra.mxu0 %v3638
      %3963 = vmatprep.subr.mxu0 0.0
      %3964 = vmatpush1.msra.mxu0 %v3637
      %3965 = vmatprep.subr.mxu0 0.0
      %3966 = vmatpush1.msra.mxu0 %v3636
      %3967 = vmatprep.subr.mxu0 0.0
      %3968 = vmatpush1.msra.mxu0 %v3635
      %3969 = vmatprep.subr.mxu0 0.0
      %3970 = vmatpush1.msra.mxu0 %v3634
      %3971 = vmatprep.subr.mxu0 0.0
      %3972 = vmatpush1.msra.mxu0 %v3633
      %3973 = vmatprep.subr.mxu0 0.0
      %3974 = vmatpush1.msra.mxu0 %v3632
      %3975 = vmatprep.subr.mxu0 0.0
      %3976 = vmatpush1.msra.mxu0 %v3631
      %3977 = vmatprep.subr.mxu0 0.0
      %3978 = vmatpush2.msra.mxu0 0.0
      %3979 = vmatprep.subr.mxu0 0.0
      %3980 = vmatpush2.msra.mxu0 0.0
      %3981 = vmatprep.subr.mxu0 0.0
      %3982 = vmatpush2.msra.mxu0 0.0
      %3983 = vmatprep.subr.mxu0 0.0
      %3984 = vmatpush2.msra.mxu0 0.0
      %3985 = vmatprep.subr.mxu0 0.0
      %3986 = vmatpush2.msra.mxu0 0.0
      %3987 = vmatprep.subr.mxu0 0.0
      %3988 = vmatpush2.msra.mxu0 0.0
      %3989 = vmatprep.subr.mxu0 0.0
      %3990 = vmatpush2.msra.mxu0 0.0
      %3991 = vmatprep.subr.mxu0 0.0
      %3992 = vmatpush2.msra.mxu0 0.0
      %3993 = vmatprep.subr.mxu0 0.0
      %3994 = vmatpush2.msra.mxu0 0.0
      %3995 = vmatprep.subr.mxu0 0.0
      %3996 = vmatpush2.msra.mxu0 0.0
      %3997 = vmatprep.subr.mxu0 0.0
      %3998 = vmatpush2.msra.mxu0 0.0
      %3999 = vmatprep.subr.mxu0 0.0
      %4000 = vmatpush2.msra.mxu0 0.0
      %4001 = vmatprep.subr.mxu0 0.0
      %4002 = vmatpush2.msra.mxu0 0.0
      %4003 = vmatprep.subr.mxu0 0.0
      %4004 = vmatpush2.msra.mxu0 0.0
      %4005 = vmatprep.subr.mxu0 0.0
      %4006 = vmatpush2.msra.mxu0 0.0
      %4007 = vmatprep.subr.mxu0 0.0
      %4008 = vmatpush2.msra.mxu0 0.0
      %4009 = vmatprep.mubr.f32.mxu0 0.0
      %4010 = vmatmul.mubr.f32.gmra.mxu0 %v3595
      %v4011 = vpop.f32.mrf.mxu0
      %v4012 = vadd.f32 %v3767, %v4011
      %v4013 = vpop.f32.mrf.mxu0
      %4014 = vmatprep.mubr.f32.mxu0 0.0
      %4015 = vmatmul.mubr.f32.gmra.mxu0 %v3596
      %v4016 = vpop.f32.mrf.mxu0
      %v4017 = vadd.f32 %v3772, %v4016
      %v4018 = vpop.f32.mrf.mxu0
      %4019 = vmatprep.mubr.f32.mxu0 0.0
      %4020 = vmatmul.mubr.f32.gmra.mxu0 %v3597
      %v4021 = vpop.f32.mrf.mxu0
      %v4022 = vadd.f32 %v3777, %v4021
      %v4023 = vpop.f32.mrf.mxu0
      %4024 = vmatprep.mubr.f32.mxu0 0.0
      %4025 = vmatmul.mubr.f32.gmra.mxu0 %v3598
      %v4026 = vpop.f32.mrf.mxu0
      %v4027 = vadd.f32 %v3782, %v4026
      %v4028 = vpop.f32.mrf.mxu0
      %4029 = vmatprep.mubr.f32.mxu0 0.0
      %4030 = vmatmul.mubr.f32.gmra.mxu0 %v3599
      %v4031 = vpop.f32.mrf.mxu0
      %v4032 = vadd.f32 %v3787, %v4031
      %v4033 = vpop.f32.mrf.mxu0
      %4034 = vmatprep.mubr.f32.mxu0 0.0
      %4035 = vmatmul.mubr.f32.gmra.mxu0 %v3600
      %v4036 = vpop.f32.mrf.mxu0
      %v4037 = vadd.f32 %v3792, %v4036
      %v4038 = vpop.f32.mrf.mxu0
      %4039 = vmatprep.mubr.f32.mxu0 0.0
      %4040 = vmatmul.mubr.f32.gmra.mxu0 %v3601
      %v4041 = vpop.f32.mrf.mxu0
      %v4042 = vadd.f32 %v3797, %v4041
      %v4043 = vpop.f32.mrf.mxu0
      %4044 = vmatprep.mubr.f32.mxu0 0.0
      %4045 = vmatmul.mubr.f32.gmra.mxu0 %v3602
      %v4046 = vpop.f32.mrf.mxu0
      %v4047 = vadd.f32 %v3802, %v4046
      %v4048 = vpop.f32.mrf.mxu0
      %4049 = vmatprep.mubr.f32.mxu0 0.0
      %4050 = vmatmul.mubr.f32.gmra.mxu0 %v3603
      %v4051 = vpop.f32.mrf.mxu0
      %v4052 = vadd.f32 %v3807, %v4051
      %v4053 = vpop.f32.mrf.mxu0
      %4054 = vmatprep.mubr.f32.mxu0 0.0
      %4055 = vmatmul.mubr.f32.gmra.mxu0 %v3604
      %v4056 = vpop.f32.mrf.mxu0
      %v4057 = vadd.f32 %v3812, %v4056
      %v4058 = vpop.f32.mrf.mxu0
      %4059 = vmatprep.mubr.f32.mxu0 0.0
      %4060 = vmatmul.mubr.f32.gmra.mxu0 %v3605
      %v4061 = vpop.f32.mrf.mxu0
      %v4062 = vadd.f32 %v3817, %v4061
      %v4063 = vpop.f32.mrf.mxu0
      %4064 = vmatprep.mubr.f32.mxu0 0.0
      %4065 = vmatmul.mubr.f32.gmra.mxu0 %v3606
      %v4066 = vpop.f32.mrf.mxu0
      %v4067 = vadd.f32 %v3822, %v4066
      %v4068 = vpop.f32.mrf.mxu0
      %4069 = vmatprep.mubr.f32.mxu0 0.0
      %4070 = vmatmul.mubr.f32.gmra.mxu0 %v3607
      %v4071 = vpop.f32.mrf.mxu0
      %v4072 = vadd.f32 %v3827, %v4071
      %v4073 = vpop.f32.mrf.mxu0
      %4074 = vmatprep.mubr.f32.mxu0 0.0
      %4075 = vmatmul.mubr.f32.gmra.mxu0 %v3608
      %v4076 = vpop.f32.mrf.mxu0
      %v4077 = vadd.f32 %v3832, %v4076
      %v4078 = vpop.f32.mrf.mxu0
      %4079 = vmatprep.mubr.f32.mxu0 0.0
      %4080 = vmatmul.mubr.f32.gmra.mxu0 %v3609
      %v4081 = vpop.f32.mrf.mxu0
      %v4082 = vadd.f32 %v3837, %v4081
      %v4083 = vpop.f32.mrf.mxu0
      %4084 = vmatprep.mubr.f32.mxu0 0.0
      %4085 = vmatmul.mubr.f32.gmra.mxu0 %v3610
      %v4086 = vpop.f32.mrf.mxu0
      %v4087 = vadd.f32 %v3842, %v4086
      %v4088 = vpop.f32.mrf.mxu0
      %4089 = vmatprep.mubr.f32.mxu0 0.0
      %4090 = vmatmul.mubr.f32.gmra.mxu0 %v3611
      %v4091 = vpop.f32.mrf.mxu0
      %v4092 = vadd.f32 %v3847, %v4091
      %v4093 = vpop.f32.mrf.mxu0
      %4094 = vmatprep.mubr.f32.mxu0 0.0
      %4095 = vmatmul.mubr.f32.gmra.mxu0 %v3612
      %v4096 = vpop.f32.mrf.mxu0
      %v4097 = vadd.f32 %v3852, %v4096
      %v4098 = vpop.f32.mrf.mxu0
      %4099 = vmatprep.mubr.f32.mxu0 0.0
      %4100 = vmatmul.mubr.f32.gmra.mxu0 %v3613
      %v4101 = vpop.f32.mrf.mxu0
      %v4102 = vadd.f32 %v3857, %v4101
      %v4103 = vpop.f32.mrf.mxu0
      %4104 = vmatprep.mubr.f32.mxu0 0.0
      %4105 = vmatmul.mubr.f32.gmra.mxu0 %v3614
      %v4106 = vpop.f32.mrf.mxu0
      %v4107 = vadd.f32 %v3862, %v4106
      %v4108 = vpop.f32.mrf.mxu0
      %4109 = vmatprep.mubr.f32.mxu0 0.0
      %4110 = vmatmul.mubr.f32.gmra.mxu0 %v3615
      %v4111 = vpop.f32.mrf.mxu0
      %v4112 = vadd.f32 %v3867, %v4111
      %v4113 = vpop.f32.mrf.mxu0
      %4114 = vmatprep.mubr.f32.mxu0 0.0
      %4115 = vmatmul.mubr.f32.gmra.mxu0 %v3616
      %v4116 = vpop.f32.mrf.mxu0
      %v4117 = vadd.f32 %v3872, %v4116
      %v4118 = vpop.f32.mrf.mxu0
      %4119 = vmatprep.mubr.f32.mxu0 0.0
      %4120 = vmatmul.mubr.f32.gmra.mxu0 %v3617
      %v4121 = vpop.f32.mrf.mxu0
      %v4122 = vadd.f32 %v3877, %v4121
      %v4123 = vpop.f32.mrf.mxu0
      %4124 = vmatprep.mubr.f32.mxu0 0.0
      %4125 = vmatmul.mubr.f32.gmra.mxu0 %v3618
      %v4126 = vpop.f32.mrf.mxu0
      %v4127 = vadd.f32 %v3882, %v4126
      %v4128 = vpop.f32.mrf.mxu0
      %4129 = vmatprep.mubr.f32.mxu0 0.0
      %4130 = vmatmul.mubr.f32.gmra.mxu0 %v3619
      %v4131 = vpop.f32.mrf.mxu0
      %v4132 = vadd.f32 %v3887, %v4131
      %v4133 = vpop.f32.mrf.mxu0
      %4134 = vmatprep.mubr.f32.mxu0 0.0
      %4135 = vmatmul.mubr.f32.gmra.mxu0 %v3620
      %v4136 = vpop.f32.mrf.mxu0
      %v4137 = vadd.f32 %v3892, %v4136
      %v4138 = vpop.f32.mrf.mxu0
      %4139 = vmatprep.mubr.f32.mxu0 0.0
      %4140 = vmatmul.mubr.f32.gmra.mxu0 %v3621
      %v4141 = vpop.f32.mrf.mxu0
      %v4142 = vadd.f32 %v3897, %v4141
      %v4143 = vpop.f32.mrf.mxu0
      %4144 = vmatprep.mubr.f32.mxu0 0.0
      %4145 = vmatmul.mubr.f32.gmra.mxu0 %v3622
      %v4146 = vpop.f32.mrf.mxu0
      %v4147 = vadd.f32 %v3902, %v4146
      %v4148 = vpop.f32.mrf.mxu0
      %4149 = vmatprep.mubr.f32.mxu0 0.0
      %4150 = vmatmul.mubr.f32.gmra.mxu0 %v3623
      %v4151 = vpop.f32.mrf.mxu0
      %v4152 = vadd.f32 %v3907, %v4151
      %v4153 = vpop.f32.mrf.mxu0
      %4154 = vmatprep.mubr.f32.mxu0 0.0
      %4155 = vmatmul.mubr.f32.gmra.mxu0 %v3624
      %v4156 = vpop.f32.mrf.mxu0
      %v4157 = vadd.f32 %v3912, %v4156
      %v4158 = vpop.f32.mrf.mxu0
      %4159 = vmatprep.mubr.f32.mxu0 0.0
      %4160 = vmatmul.mubr.f32.gmra.mxu0 %v3625
      %v4161 = vpop.f32.mrf.mxu0
      %v4162 = vadd.f32 %v3917, %v4161
      %v4163 = vpop.f32.mrf.mxu0
      %4164 = vmatprep.mubr.f32.mxu0 0.0
      %4165 = vmatmul.mubr.f32.gmra.mxu0 %v3626
      %v4166 = vpop.f32.mrf.mxu0
      %v4167 = vadd.f32 %v3922, %v4166
      %v4168 = vpop.f32.mrf.mxu0
      %4169 = vmatprep.mubr.f32.mxu0 0.0
      %4170 = vmatmul.mubr.f32.gmra.mxu0 %v3627
      %v4171 = vpop.f32.mrf.mxu0
      %v4172 = vadd.f32 %v3927, %v4171
      %v4173 = vpop.f32.mrf.mxu0
      %4174 = vmatprep.mubr.f32.mxu0 0.0
      %4175 = vmatmul.mubr.f32.gmra.mxu0 %v3628
      %v4176 = vpop.f32.mrf.mxu0
      %v4177 = vadd.f32 %v3932, %v4176
      %v4178 = vpop.f32.mrf.mxu0
      %4179 = vmatprep.mubr.f32.mxu0 0.0
      %4180 = vmatmul.mubr.f32.gmra.mxu0 %v3629
      %v4181 = vpop.f32.mrf.mxu0
      %v4182 = vadd.f32 %v3937, %v4181
      %v4183 = vpop.f32.mrf.mxu0
      %4184 = vmatprep.mubr.f32.mxu0 0.0
      %4185 = vmatmul.mubr.f32.gmra.mxu0 %v3630
      %v4186 = vpop.f32.mrf.mxu0
      %v4187 = vadd.f32 %v3942, %v4186
      %v4188 = vpop.f32.mrf.mxu0
      %4189 = vdwg.mxu0
      %v4190 = vld [vmem:[#allocation2 + $0x2] sm:$0xff]
      %v4191 = vld [vmem:[#allocation2 + $0xa] sm:$0xff]
      %v4192 = vld [vmem:[#allocation2 + $0x12] sm:$0xff]
      %v4193 = vld [vmem:[#allocation2 + $0x1a] sm:$0xff]
      %v4194 = vld [vmem:[#allocation2 + $0x22] sm:$0xff]
      %v4195 = vld [vmem:[#allocation2 + $0x2a] sm:$0xff]
      %v4196 = vld [vmem:[#allocation2 + $0x32] sm:$0xff]
      %v4197 = vld [vmem:[#allocation2 + $0x3a] sm:$0xff]
      %v4198 = vld [vmem:[#allocation2 + $0x42] sm:$0xff]
      %v4199 = vld [vmem:[#allocation2 + $0x4a] sm:$0xff]
      %v4200 = vld [vmem:[#allocation2 + $0x52] sm:$0xff]
      %v4201 = vld [vmem:[#allocation2 + $0x5a] sm:$0xff]
      %v4202 = vld [vmem:[#allocation2 + $0x62] sm:$0xff]
      %v4203 = vld [vmem:[#allocation2 + $0x6a] sm:$0xff]
      %v4204 = vld [vmem:[#allocation2 + $0x72] sm:$0xff]
      %v4205 = vld [vmem:[#allocation2 + $0x7a] sm:$0xff]
      %v4206 = vld [vmem:[#allocation2 + $0x82] sm:$0xff]
      %v4207 = vld [vmem:[#allocation2 + $0x8a] sm:$0xff]
      %v4208 = vld [vmem:[#allocation2 + $0x92] sm:$0xff]
      %v4209 = vld [vmem:[#allocation2 + $0x9a] sm:$0xff]
      %v4210 = vld [vmem:[#allocation2 + $0xa2] sm:$0xff]
      %v4211 = vld [vmem:[#allocation2 + $0xaa] sm:$0xff]
      %v4212 = vld [vmem:[#allocation2 + $0xb2] sm:$0xff]
      %v4213 = vld [vmem:[#allocation2 + $0xba] sm:$0xff]
      %v4214 = vld [vmem:[#allocation2 + $0xc2] sm:$0xff]
      %v4215 = vld [vmem:[#allocation2 + $0xca] sm:$0xff]
      %v4216 = vld [vmem:[#allocation2 + $0xd2] sm:$0xff]
      %v4217 = vld [vmem:[#allocation2 + $0xda] sm:$0xff]
      %v4218 = vld [vmem:[#allocation2 + $0xe2] sm:$0xff]
      %v4219 = vld [vmem:[#allocation2 + $0xea] sm:$0xff]
      %v4220 = vld [vmem:[#allocation2 + $0xf2] sm:$0xff]
      %v4221 = vld [vmem:[#allocation2 + $0xfa] sm:$0xff]
      %v4222 = vld [vmem:[#allocation2 + $0x102] sm:$0xff]
      %v4223 = vld [vmem:[#allocation2 + $0x10a] sm:$0xff]
      %v4224 = vld [vmem:[#allocation2 + $0x112] sm:$0xff]
      %v4225 = vld [vmem:[#allocation2 + $0x11a] sm:$0xff]
      %s4226 = scalar_lea.vmem %s3, 256
      %v4227 = vld [vmem:[%s4226] sm:$0xff]
      %v4228 = vld [vmem:[%s4226 + $0x8] sm:$0xff]
      %v4229 = vld [vmem:[%s4226 + $0x10] sm:$0xff]
      %v4230 = vld [vmem:[%s4226 + $0x18] sm:$0xff]
      %v4231 = vld [vmem:[%s4226 + $0x20] sm:$0xff]
      %v4232 = vld [vmem:[%s4226 + $0x28] sm:$0xff]
      %v4233 = vld [vmem:[%s4226 + $0x30] sm:$0xff]
      %v4234 = vld [vmem:[%s4226 + $0x38] sm:$0xff]
      %v4235 = vld [vmem:[%s4226 + $0x40] sm:$0xff]
      %v4236 = vld [vmem:[%s4226 + $0x48] sm:$0xff]
      %v4237 = vld [vmem:[%s4226 + $0x50] sm:$0xff]
      %v4238 = vld [vmem:[%s4226 + $0x58] sm:$0xff]
      %v4239 = vld [vmem:[%s4226 + $0x60] sm:$0xff]
      %v4240 = vld [vmem:[%s4226 + $0x68] sm:$0xff]
      %v4241 = vld [vmem:[%s4226 + $0x70] sm:$0xff]
      %v4242 = vld [vmem:[%s4226 + $0x78] sm:$0xff]
      %4243 = vmatprep.subr.mxu0 0.0
      %4244 = vmatpush1.msra.mxu0 %v4242
      %4245 = vmatprep.subr.mxu0 0.0
      %4246 = vmatpush1.msra.mxu0 %v4241
      %4247 = vmatprep.subr.mxu0 0.0
      %4248 = vmatpush1.msra.mxu0 %v4240
      %4249 = vmatprep.subr.mxu0 0.0
      %4250 = vmatpush1.msra.mxu0 %v4239
      %4251 = vmatprep.subr.mxu0 0.0
      %4252 = vmatpush1.msra.mxu0 %v4238
      %4253 = vmatprep.subr.mxu0 0.0
      %4254 = vmatpush1.msra.mxu0 %v4237
      %4255 = vmatprep.subr.mxu0 0.0
      %4256 = vmatpush1.msra.mxu0 %v4236
      %4257 = vmatprep.subr.mxu0 0.0
      %4258 = vmatpush1.msra.mxu0 %v4235
      %4259 = vmatprep.subr.mxu0 0.0
      %4260 = vmatpush1.msra.mxu0 %v4234
      %4261 = vmatprep.subr.mxu0 0.0
      %4262 = vmatpush1.msra.mxu0 %v4233
      %4263 = vmatprep.subr.mxu0 0.0
      %4264 = vmatpush1.msra.mxu0 %v4232
      %4265 = vmatprep.subr.mxu0 0.0
      %4266 = vmatpush1.msra.mxu0 %v4231
      %4267 = vmatprep.subr.mxu0 0.0
      %4268 = vmatpush1.msra.mxu0 %v4230
      %4269 = vmatprep.subr.mxu0 0.0
      %4270 = vmatpush1.msra.mxu0 %v4229
      %4271 = vmatprep.subr.mxu0 0.0
      %4272 = vmatpush1.msra.mxu0 %v4228
      %4273 = vmatprep.subr.mxu0 0.0
      %4274 = vmatpush1.msra.mxu0 %v4227
      %4275 = vmatprep.subr.mxu0 0.0
      %4276 = vmatpush2.msra.mxu0 0.0
      %4277 = vmatprep.subr.mxu0 0.0
      %4278 = vmatpush2.msra.mxu0 0.0
      %4279 = vmatprep.subr.mxu0 0.0
      %4280 = vmatpush2.msra.mxu0 0.0
      %4281 = vmatprep.subr.mxu0 0.0
      %4282 = vmatpush2.msra.mxu0 0.0
      %4283 = vmatprep.subr.mxu0 0.0
      %4284 = vmatpush2.msra.mxu0 0.0
      %4285 = vmatprep.subr.mxu0 0.0
      %4286 = vmatpush2.msra.mxu0 0.0
      %4287 = vmatprep.subr.mxu0 0.0
      %4288 = vmatpush2.msra.mxu0 0.0
      %4289 = vmatprep.subr.mxu0 0.0
      %4290 = vmatpush2.msra.mxu0 0.0
      %4291 = vmatprep.subr.mxu0 0.0
      %4292 = vmatpush2.msra.mxu0 0.0
      %4293 = vmatprep.subr.mxu0 0.0
      %4294 = vmatpush2.msra.mxu0 0.0
      %4295 = vmatprep.subr.mxu0 0.0
      %4296 = vmatpush2.msra.mxu0 0.0
      %4297 = vmatprep.subr.mxu0 0.0
      %4298 = vmatpush2.msra.mxu0 0.0
      %4299 = vmatprep.subr.mxu0 0.0
      %4300 = vmatpush2.msra.mxu0 0.0
      %4301 = vmatprep.subr.mxu0 0.0
      %4302 = vmatpush2.msra.mxu0 0.0
      %4303 = vmatprep.subr.mxu0 0.0
      %4304 = vmatpush2.msra.mxu0 0.0
      %4305 = vmatprep.subr.mxu0 0.0
      %4306 = vmatpush2.msra.mxu0 0.0
      %4307 = vmatprep.mubr.f32.mxu0 0.0
      %4308 = vmatmul.mubr.f32.gmra.mxu0 %v4190
      %v4309 = vpop.f32.mrf.mxu0
      %v4310 = vadd.f32 0.0, %v4309
      %v4311 = vpop.f32.mrf.mxu0
      %4312 = vmatprep.mubr.f32.mxu0 0.0
      %4313 = vmatmul.mubr.f32.gmra.mxu0 %v4191
      %v4314 = vpop.f32.mrf.mxu0
      %v4315 = vadd.f32 0.0, %v4314
      %v4316 = vpop.f32.mrf.mxu0
      %4317 = vmatprep.mubr.f32.mxu0 0.0
      %4318 = vmatmul.mubr.f32.gmra.mxu0 %v4192
      %v4319 = vpop.f32.mrf.mxu0
      %v4320 = vadd.f32 0.0, %v4319
      %v4321 = vpop.f32.mrf.mxu0
      %4322 = vmatprep.mubr.f32.mxu0 0.0
      %4323 = vmatmul.mubr.f32.gmra.mxu0 %v4193
      %v4324 = vpop.f32.mrf.mxu0
      %v4325 = vadd.f32 0.0, %v4324
      %v4326 = vpop.f32.mrf.mxu0
      %4327 = vmatprep.mubr.f32.mxu0 0.0
      %4328 = vmatmul.mubr.f32.gmra.mxu0 %v4194
      %v4329 = vpop.f32.mrf.mxu0
      %v4330 = vadd.f32 0.0, %v4329
      %v4331 = vpop.f32.mrf.mxu0
      %4332 = vmatprep.mubr.f32.mxu0 0.0
      %4333 = vmatmul.mubr.f32.gmra.mxu0 %v4195
      %v4334 = vpop.f32.mrf.mxu0
      %v4335 = vadd.f32 0.0, %v4334
      %v4336 = vpop.f32.mrf.mxu0
      %4337 = vmatprep.mubr.f32.mxu0 0.0
      %4338 = vmatmul.mubr.f32.gmra.mxu0 %v4196
      %v4339 = vpop.f32.mrf.mxu0
      %v4340 = vadd.f32 0.0, %v4339
      %v4341 = vpop.f32.mrf.mxu0
      %4342 = vmatprep.mubr.f32.mxu0 0.0
      %4343 = vmatmul.mubr.f32.gmra.mxu0 %v4197
      %v4344 = vpop.f32.mrf.mxu0
      %v4345 = vadd.f32 0.0, %v4344
      %v4346 = vpop.f32.mrf.mxu0
      %4347 = vmatprep.mubr.f32.mxu0 0.0
      %4348 = vmatmul.mubr.f32.gmra.mxu0 %v4198
      %v4349 = vpop.f32.mrf.mxu0
      %v4350 = vadd.f32 0.0, %v4349
      %v4351 = vpop.f32.mrf.mxu0
      %4352 = vmatprep.mubr.f32.mxu0 0.0
      %4353 = vmatmul.mubr.f32.gmra.mxu0 %v4199
      %v4354 = vpop.f32.mrf.mxu0
      %v4355 = vadd.f32 0.0, %v4354
      %v4356 = vpop.f32.mrf.mxu0
      %4357 = vmatprep.mubr.f32.mxu0 0.0
      %4358 = vmatmul.mubr.f32.gmra.mxu0 %v4200
      %v4359 = vpop.f32.mrf.mxu0
      %v4360 = vadd.f32 0.0, %v4359
      %v4361 = vpop.f32.mrf.mxu0
      %4362 = vmatprep.mubr.f32.mxu0 0.0
      %4363 = vmatmul.mubr.f32.gmra.mxu0 %v4201
      %v4364 = vpop.f32.mrf.mxu0
      %v4365 = vadd.f32 0.0, %v4364
      %v4366 = vpop.f32.mrf.mxu0
      %4367 = vmatprep.mubr.f32.mxu0 0.0
      %4368 = vmatmul.mubr.f32.gmra.mxu0 %v4202
      %v4369 = vpop.f32.mrf.mxu0
      %v4370 = vadd.f32 0.0, %v4369
      %v4371 = vpop.f32.mrf.mxu0
      %4372 = vmatprep.mubr.f32.mxu0 0.0
      %4373 = vmatmul.mubr.f32.gmra.mxu0 %v4203
      %v4374 = vpop.f32.mrf.mxu0
      %v4375 = vadd.f32 0.0, %v4374
      %v4376 = vpop.f32.mrf.mxu0
      %4377 = vmatprep.mubr.f32.mxu0 0.0
      %4378 = vmatmul.mubr.f32.gmra.mxu0 %v4204
      %v4379 = vpop.f32.mrf.mxu0
      %v4380 = vadd.f32 0.0, %v4379
      %v4381 = vpop.f32.mrf.mxu0
      %4382 = vmatprep.mubr.f32.mxu0 0.0
      %4383 = vmatmul.mubr.f32.gmra.mxu0 %v4205
      %v4384 = vpop.f32.mrf.mxu0
      %v4385 = vadd.f32 0.0, %v4384
      %v4386 = vpop.f32.mrf.mxu0
      %4387 = vmatprep.mubr.f32.mxu0 0.0
      %4388 = vmatmul.mubr.f32.gmra.mxu0 %v4206
      %v4389 = vpop.f32.mrf.mxu0
      %v4390 = vadd.f32 0.0, %v4389
      %v4391 = vpop.f32.mrf.mxu0
      %4392 = vmatprep.mubr.f32.mxu0 0.0
      %4393 = vmatmul.mubr.f32.gmra.mxu0 %v4207
      %v4394 = vpop.f32.mrf.mxu0
      %v4395 = vadd.f32 0.0, %v4394
      %v4396 = vpop.f32.mrf.mxu0
      %4397 = vmatprep.mubr.f32.mxu0 0.0
      %4398 = vmatmul.mubr.f32.gmra.mxu0 %v4208
      %v4399 = vpop.f32.mrf.mxu0
      %v4400 = vadd.f32 0.0, %v4399
      %v4401 = vpop.f32.mrf.mxu0
      %4402 = vmatprep.mubr.f32.mxu0 0.0
      %4403 = vmatmul.mubr.f32.gmra.mxu0 %v4209
      %v4404 = vpop.f32.mrf.mxu0
      %v4405 = vadd.f32 0.0, %v4404
      %v4406 = vpop.f32.mrf.mxu0
      %4407 = vmatprep.mubr.f32.mxu0 0.0
      %4408 = vmatmul.mubr.f32.gmra.mxu0 %v4210
      %v4409 = vpop.f32.mrf.mxu0
      %v4410 = vadd.f32 0.0, %v4409
      %v4411 = vpop.f32.mrf.mxu0
      %4412 = vmatprep.mubr.f32.mxu0 0.0
      %4413 = vmatmul.mubr.f32.gmra.mxu0 %v4211
      %v4414 = vpop.f32.mrf.mxu0
      %v4415 = vadd.f32 0.0, %v4414
      %v4416 = vpop.f32.mrf.mxu0
      %4417 = vmatprep.mubr.f32.mxu0 0.0
      %4418 = vmatmul.mubr.f32.gmra.mxu0 %v4212
      %v4419 = vpop.f32.mrf.mxu0
      %v4420 = vadd.f32 0.0, %v4419
      %v4421 = vpop.f32.mrf.mxu0
      %4422 = vmatprep.mubr.f32.mxu0 0.0
      %4423 = vmatmul.mubr.f32.gmra.mxu0 %v4213
      %v4424 = vpop.f32.mrf.mxu0
      %v4425 = vadd.f32 0.0, %v4424
      %v4426 = vpop.f32.mrf.mxu0
      %4427 = vmatprep.mubr.f32.mxu0 0.0
      %4428 = vmatmul.mubr.f32.gmra.mxu0 %v4214
      %v4429 = vpop.f32.mrf.mxu0
      %v4430 = vadd.f32 0.0, %v4429
      %v4431 = vpop.f32.mrf.mxu0
      %4432 = vmatprep.mubr.f32.mxu0 0.0
      %4433 = vmatmul.mubr.f32.gmra.mxu0 %v4215
      %v4434 = vpop.f32.mrf.mxu0
      %v4435 = vadd.f32 0.0, %v4434
      %v4436 = vpop.f32.mrf.mxu0
      %4437 = vmatprep.mubr.f32.mxu0 0.0
      %4438 = vmatmul.mubr.f32.gmra.mxu0 %v4216
      %v4439 = vpop.f32.mrf.mxu0
      %v4440 = vadd.f32 0.0, %v4439
      %v4441 = vpop.f32.mrf.mxu0
      %4442 = vmatprep.mubr.f32.mxu0 0.0
      %4443 = vmatmul.mubr.f32.gmra.mxu0 %v4217
      %v4444 = vpop.f32.mrf.mxu0
      %v4445 = vadd.f32 0.0, %v4444
      %v4446 = vpop.f32.mrf.mxu0
      %4447 = vmatprep.mubr.f32.mxu0 0.0
      %4448 = vmatmul.mubr.f32.gmra.mxu0 %v4218
      %v4449 = vpop.f32.mrf.mxu0
      %v4450 = vadd.f32 0.0, %v4449
      %v4451 = vpop.f32.mrf.mxu0
      %4452 = vmatprep.mubr.f32.mxu0 0.0
      %4453 = vmatmul.mubr.f32.gmra.mxu0 %v4219
      %v4454 = vpop.f32.mrf.mxu0
      %v4455 = vadd.f32 0.0, %v4454
      %v4456 = vpop.f32.mrf.mxu0
      %4457 = vmatprep.mubr.f32.mxu0 0.0
      %4458 = vmatmul.mubr.f32.gmra.mxu0 %v4220
      %v4459 = vpop.f32.mrf.mxu0
      %v4460 = vadd.f32 0.0, %v4459
      %v4461 = vpop.f32.mrf.mxu0
      %4462 = vmatprep.mubr.f32.mxu0 0.0
      %4463 = vmatmul.mubr.f32.gmra.mxu0 %v4221
      %v4464 = vpop.f32.mrf.mxu0
      %v4465 = vadd.f32 0.0, %v4464
      %v4466 = vpop.f32.mrf.mxu0
      %4467 = vmatprep.mubr.f32.mxu0 0.0
      %4468 = vmatmul.mubr.f32.gmra.mxu0 %v4222
      %v4469 = vpop.f32.mrf.mxu0
      %v4470 = vadd.f32 0.0, %v4469
      %v4471 = vpop.f32.mrf.mxu0
      %4472 = vmatprep.mubr.f32.mxu0 0.0
      %4473 = vmatmul.mubr.f32.gmra.mxu0 %v4223
      %v4474 = vpop.f32.mrf.mxu0
      %v4475 = vadd.f32 0.0, %v4474
      %v4476 = vpop.f32.mrf.mxu0
      %4477 = vmatprep.mubr.f32.mxu0 0.0
      %4478 = vmatmul.mubr.f32.gmra.mxu0 %v4224
      %v4479 = vpop.f32.mrf.mxu0
      %v4480 = vadd.f32 0.0, %v4479
      %v4481 = vpop.f32.mrf.mxu0
      %4482 = vmatprep.mubr.f32.mxu0 0.0
      %4483 = vmatmul.mubr.f32.gmra.mxu0 %v4225
      %v4484 = vpop.f32.mrf.mxu0
      %v4485 = vadd.f32 0.0, %v4484
      %v4486 = vpop.f32.mrf.mxu0
      %4487 = vdwg.mxu0
      %v4488 = vadd.f32 %v4012, %v4310
      %v4489 = vadd.f32 %v4017, %v4315
      %v4490 = vadd.f32 %v4022, %v4320
      %v4491 = vadd.f32 %v4027, %v4325
      %v4492 = vadd.f32 %v4032, %v4330
      %v4493 = vadd.f32 %v4037, %v4335
      %v4494 = vadd.f32 %v4042, %v4340
      %v4495 = vadd.f32 %v4047, %v4345
      %v4496 = vadd.f32 %v4052, %v4350
      %v4497 = vadd.f32 %v4057, %v4355
      %v4498 = vadd.f32 %v4062, %v4360
      %v4499 = vadd.f32 %v4067, %v4365
      %v4500 = vadd.f32 %v4072, %v4370
      %v4501 = vadd.f32 %v4077, %v4375
      %v4502 = vadd.f32 %v4082, %v4380
      %v4503 = vadd.f32 %v4087, %v4385
      %v4504 = vadd.f32 %v4092, %v4390
      %v4505 = vadd.f32 %v4097, %v4395
      %v4506 = vadd.f32 %v4102, %v4400
      %v4507 = vadd.f32 %v4107, %v4405
      %v4508 = vadd.f32 %v4112, %v4410
      %v4509 = vadd.f32 %v4117, %v4415
      %v4510 = vadd.f32 %v4122, %v4420
      %v4511 = vadd.f32 %v4127, %v4425
      %v4512 = vadd.f32 %v4132, %v4430
      %v4513 = vadd.f32 %v4137, %v4435
      %v4514 = vadd.f32 %v4142, %v4440
      %v4515 = vadd.f32 %v4147, %v4445
      %v4516 = vadd.f32 %v4152, %v4450
      %v4517 = vadd.f32 %v4157, %v4455
      %v4518 = vadd.f32 %v4162, %v4460
      %v4519 = vadd.f32 %v4167, %v4465
      %v4520 = vadd.f32 %v4172, %v4470
      %v4521 = vadd.f32 %v4177, %v4475
      %v4522 = vadd.f32 %v4182, %v4480
      %v4523 = vadd.f32 %v4187, %v4485
      %v4524 = vld [vmem:[#allocation2 + $0x12] sm:$0xff]
      %v4525 = vld [vmem:[#allocation2 + $0x1a] sm:$0xff]
      %v4526 = vld [vmem:[#allocation2 + $0x22] sm:$0xff]
      %v4527 = vld [vmem:[#allocation2 + $0x2a] sm:$0xff]
      %v4528 = vld [vmem:[#allocation2 + $0x32] sm:$0xff]
      %v4529 = vld [vmem:[#allocation2 + $0x3a] sm:$0xff]
      %v4530 = vld [vmem:[#allocation2 + $0x42] sm:$0xff]
      %v4531 = vld [vmem:[#allocation2 + $0x4a] sm:$0xff]
      %v4532 = vld [vmem:[#allocation2 + $0x52] sm:$0xff]
      %v4533 = vld [vmem:[#allocation2 + $0x5a] sm:$0xff]
      %v4534 = vld [vmem:[#allocation2 + $0x62] sm:$0xff]
      %v4535 = vld [vmem:[#allocation2 + $0x6a] sm:$0xff]
      %v4536 = vld [vmem:[#allocation2 + $0x72] sm:$0xff]
      %v4537 = vld [vmem:[#allocation2 + $0x7a] sm:$0xff]
      %v4538 = vld [vmem:[#allocation2 + $0x82] sm:$0xff]
      %v4539 = vld [vmem:[#allocation2 + $0x8a] sm:$0xff]
      %v4540 = vld [vmem:[#allocation2 + $0x92] sm:$0xff]
      %v4541 = vld [vmem:[#allocation2 + $0x9a] sm:$0xff]
      %v4542 = vld [vmem:[#allocation2 + $0xa2] sm:$0xff]
      %v4543 = vld [vmem:[#allocation2 + $0xaa] sm:$0xff]
      %v4544 = vld [vmem:[#allocation2 + $0xb2] sm:$0xff]
      %v4545 = vld [vmem:[#allocation2 + $0xba] sm:$0xff]
      %v4546 = vld [vmem:[#allocation2 + $0xc2] sm:$0xff]
      %v4547 = vld [vmem:[#allocation2 + $0xca] sm:$0xff]
      %v4548 = vld [vmem:[#allocation2 + $0xd2] sm:$0xff]
      %v4549 = vld [vmem:[#allocation2 + $0xda] sm:$0xff]
      %v4550 = vld [vmem:[#allocation2 + $0xe2] sm:$0xff]
      %v4551 = vld [vmem:[#allocation2 + $0xea] sm:$0xff]
      %v4552 = vld [vmem:[#allocation2 + $0xf2] sm:$0xff]
      %v4553 = vld [vmem:[#allocation2 + $0xfa] sm:$0xff]
      %v4554 = vld [vmem:[#allocation2 + $0x102] sm:$0xff]
      %v4555 = vld [vmem:[#allocation2 + $0x10a] sm:$0xff]
      %v4556 = vld [vmem:[#allocation2 + $0x112] sm:$0xff]
      %v4557 = vld [vmem:[#allocation2 + $0x11a] sm:$0xff]
      %v4558 = vld [vmem:[#allocation2 + $0x122] sm:$0xff]
      %v4559 = vld [vmem:[#allocation2 + $0x12a] sm:$0xff]
      %s4560 = scalar_lea.vmem %s3, 384
      %v4561 = vld [vmem:[%s4560] sm:$0xff]
      %v4562 = vld [vmem:[%s4560 + $0x8] sm:$0xff]
      %v4563 = vld [vmem:[%s4560 + $0x10] sm:$0xff]
      %v4564 = vld [vmem:[%s4560 + $0x18] sm:$0xff]
      %v4565 = vld [vmem:[%s4560 + $0x20] sm:$0xff]
      %v4566 = vld [vmem:[%s4560 + $0x28] sm:$0xff]
      %v4567 = vld [vmem:[%s4560 + $0x30] sm:$0xff]
      %v4568 = vld [vmem:[%s4560 + $0x38] sm:$0xff]
      %v4569 = vld [vmem:[%s4560 + $0x40] sm:$0xff]
      %v4570 = vld [vmem:[%s4560 + $0x48] sm:$0xff]
      %v4571 = vld [vmem:[%s4560 + $0x50] sm:$0xff]
      %v4572 = vld [vmem:[%s4560 + $0x58] sm:$0xff]
      %v4573 = vld [vmem:[%s4560 + $0x60] sm:$0xff]
      %v4574 = vld [vmem:[%s4560 + $0x68] sm:$0xff]
      %v4575 = vld [vmem:[%s4560 + $0x70] sm:$0xff]
      %v4576 = vld [vmem:[%s4560 + $0x78] sm:$0xff]
      %4577 = vmatprep.subr.mxu0 0.0
      %4578 = vmatpush1.msra.mxu0 %v4576
      %4579 = vmatprep.subr.mxu0 0.0
      %4580 = vmatpush1.msra.mxu0 %v4575
      %4581 = vmatprep.subr.mxu0 0.0
      %4582 = vmatpush1.msra.mxu0 %v4574
      %4583 = vmatprep.subr.mxu0 0.0
      %4584 = vmatpush1.msra.mxu0 %v4573
      %4585 = vmatprep.subr.mxu0 0.0
      %4586 = vmatpush1.msra.mxu0 %v4572
      %4587 = vmatprep.subr.mxu0 0.0
      %4588 = vmatpush1.msra.mxu0 %v4571
      %4589 = vmatprep.subr.mxu0 0.0
      %4590 = vmatpush1.msra.mxu0 %v4570
      %4591 = vmatprep.subr.mxu0 0.0
      %4592 = vmatpush1.msra.mxu0 %v4569
      %4593 = vmatprep.subr.mxu0 0.0
      %4594 = vmatpush1.msra.mxu0 %v4568
      %4595 = vmatprep.subr.mxu0 0.0
      %4596 = vmatpush1.msra.mxu0 %v4567
      %4597 = vmatprep.subr.mxu0 0.0
      %4598 = vmatpush1.msra.mxu0 %v4566
      %4599 = vmatprep.subr.mxu0 0.0
      %4600 = vmatpush1.msra.mxu0 %v4565
      %4601 = vmatprep.subr.mxu0 0.0
      %4602 = vmatpush1.msra.mxu0 %v4564
      %4603 = vmatprep.subr.mxu0 0.0
      %4604 = vmatpush1.msra.mxu0 %v4563
      %4605 = vmatprep.subr.mxu0 0.0
      %4606 = vmatpush1.msra.mxu0 %v4562
      %4607 = vmatprep.subr.mxu0 0.0
      %4608 = vmatpush1.msra.mxu0 %v4561
      %4609 = vmatprep.subr.mxu0 0.0
      %4610 = vmatpush2.msra.mxu0 0.0
      %4611 = vmatprep.subr.mxu0 0.0
      %4612 = vmatpush2.msra.mxu0 0.0
      %4613 = vmatprep.subr.mxu0 0.0
      %4614 = vmatpush2.msra.mxu0 0.0
      %4615 = vmatprep.subr.mxu0 0.0
      %4616 = vmatpush2.msra.mxu0 0.0
      %4617 = vmatprep.subr.mxu0 0.0
      %4618 = vmatpush2.msra.mxu0 0.0
      %4619 = vmatprep.subr.mxu0 0.0
      %4620 = vmatpush2.msra.mxu0 0.0
      %4621 = vmatprep.subr.mxu0 0.0
      %4622 = vmatpush2.msra.mxu0 0.0
      %4623 = vmatprep.subr.mxu0 0.0
      %4624 = vmatpush2.msra.mxu0 0.0
      %4625 = vmatprep.subr.mxu0 0.0
      %4626 = vmatpush2.msra.mxu0 0.0
      %4627 = vmatprep.subr.mxu0 0.0
      %4628 = vmatpush2.msra.mxu0 0.0
      %4629 = vmatprep.subr.mxu0 0.0
      %4630 = vmatpush2.msra.mxu0 0.0
      %4631 = vmatprep.subr.mxu0 0.0
      %4632 = vmatpush2.msra.mxu0 0.0
      %4633 = vmatprep.subr.mxu0 0.0
      %4634 = vmatpush2.msra.mxu0 0.0
      %4635 = vmatprep.subr.mxu0 0.0
      %4636 = vmatpush2.msra.mxu0 0.0
      %4637 = vmatprep.subr.mxu0 0.0
      %4638 = vmatpush2.msra.mxu0 0.0
      %4639 = vmatprep.subr.mxu0 0.0
      %4640 = vmatpush2.msra.mxu0 0.0
      %4641 = vmatprep.mubr.f32.mxu0 0.0
      %4642 = vmatmul.mubr.f32.gmra.mxu0 %v4524
      %v4643 = vpop.f32.mrf.mxu0
      %v4644 = vadd.f32 0.0, %v4643
      %v4645 = vpop.f32.mrf.mxu0
      %4646 = vmatprep.mubr.f32.mxu0 0.0
      %4647 = vmatmul.mubr.f32.gmra.mxu0 %v4525
      %v4648 = vpop.f32.mrf.mxu0
      %v4649 = vadd.f32 0.0, %v4648
      %v4650 = vpop.f32.mrf.mxu0
      %4651 = vmatprep.mubr.f32.mxu0 0.0
      %4652 = vmatmul.mubr.f32.gmra.mxu0 %v4526
      %v4653 = vpop.f32.mrf.mxu0
      %v4654 = vadd.f32 0.0, %v4653
      %v4655 = vpop.f32.mrf.mxu0
      %4656 = vmatprep.mubr.f32.mxu0 0.0
      %4657 = vmatmul.mubr.f32.gmra.mxu0 %v4527
      %v4658 = vpop.f32.mrf.mxu0
      %v4659 = vadd.f32 0.0, %v4658
      %v4660 = vpop.f32.mrf.mxu0
      %4661 = vmatprep.mubr.f32.mxu0 0.0
      %4662 = vmatmul.mubr.f32.gmra.mxu0 %v4528
      %v4663 = vpop.f32.mrf.mxu0
      %v4664 = vadd.f32 0.0, %v4663
      %v4665 = vpop.f32.mrf.mxu0
      %4666 = vmatprep.mubr.f32.mxu0 0.0
      %4667 = vmatmul.mubr.f32.gmra.mxu0 %v4529
      %v4668 = vpop.f32.mrf.mxu0
      %v4669 = vadd.f32 0.0, %v4668
      %v4670 = vpop.f32.mrf.mxu0
      %4671 = vmatprep.mubr.f32.mxu0 0.0
      %4672 = vmatmul.mubr.f32.gmra.mxu0 %v4530
      %v4673 = vpop.f32.mrf.mxu0
      %v4674 = vadd.f32 0.0, %v4673
      %v4675 = vpop.f32.mrf.mxu0
      %4676 = vmatprep.mubr.f32.mxu0 0.0
      %4677 = vmatmul.mubr.f32.gmra.mxu0 %v4531
      %v4678 = vpop.f32.mrf.mxu0
      %v4679 = vadd.f32 0.0, %v4678
      %v4680 = vpop.f32.mrf.mxu0
      %4681 = vmatprep.mubr.f32.mxu0 0.0
      %4682 = vmatmul.mubr.f32.gmra.mxu0 %v4532
      %v4683 = vpop.f32.mrf.mxu0
      %v4684 = vadd.f32 0.0, %v4683
      %v4685 = vpop.f32.mrf.mxu0
      %4686 = vmatprep.mubr.f32.mxu0 0.0
      %4687 = vmatmul.mubr.f32.gmra.mxu0 %v4533
      %v4688 = vpop.f32.mrf.mxu0
      %v4689 = vadd.f32 0.0, %v4688
      %v4690 = vpop.f32.mrf.mxu0
      %4691 = vmatprep.mubr.f32.mxu0 0.0
      %4692 = vmatmul.mubr.f32.gmra.mxu0 %v4534
      %v4693 = vpop.f32.mrf.mxu0
      %v4694 = vadd.f32 0.0, %v4693
      %v4695 = vpop.f32.mrf.mxu0
      %4696 = vmatprep.mubr.f32.mxu0 0.0
      %4697 = vmatmul.mubr.f32.gmra.mxu0 %v4535
      %v4698 = vpop.f32.mrf.mxu0
      %v4699 = vadd.f32 0.0, %v4698
      %v4700 = vpop.f32.mrf.mxu0
      %4701 = vmatprep.mubr.f32.mxu0 0.0
      %4702 = vmatmul.mubr.f32.gmra.mxu0 %v4536
      %v4703 = vpop.f32.mrf.mxu0
      %v4704 = vadd.f32 0.0, %v4703
      %v4705 = vpop.f32.mrf.mxu0
      %4706 = vmatprep.mubr.f32.mxu0 0.0
      %4707 = vmatmul.mubr.f32.gmra.mxu0 %v4537
      %v4708 = vpop.f32.mrf.mxu0
      %v4709 = vadd.f32 0.0, %v4708
      %v4710 = vpop.f32.mrf.mxu0
      %4711 = vmatprep.mubr.f32.mxu0 0.0
      %4712 = vmatmul.mubr.f32.gmra.mxu0 %v4538
      %v4713 = vpop.f32.mrf.mxu0
      %v4714 = vadd.f32 0.0, %v4713
      %v4715 = vpop.f32.mrf.mxu0
      %4716 = vmatprep.mubr.f32.mxu0 0.0
      %4717 = vmatmul.mubr.f32.gmra.mxu0 %v4539
      %v4718 = vpop.f32.mrf.mxu0
      %v4719 = vadd.f32 0.0, %v4718
      %v4720 = vpop.f32.mrf.mxu0
      %4721 = vmatprep.mubr.f32.mxu0 0.0
      %4722 = vmatmul.mubr.f32.gmra.mxu0 %v4540
      %v4723 = vpop.f32.mrf.mxu0
      %v4724 = vadd.f32 0.0, %v4723
      %v4725 = vpop.f32.mrf.mxu0
      %4726 = vmatprep.mubr.f32.mxu0 0.0
      %4727 = vmatmul.mubr.f32.gmra.mxu0 %v4541
      %v4728 = vpop.f32.mrf.mxu0
      %v4729 = vadd.f32 0.0, %v4728
      %v4730 = vpop.f32.mrf.mxu0
      %4731 = vmatprep.mubr.f32.mxu0 0.0
      %4732 = vmatmul.mubr.f32.gmra.mxu0 %v4542
      %v4733 = vpop.f32.mrf.mxu0
      %v4734 = vadd.f32 0.0, %v4733
      %v4735 = vpop.f32.mrf.mxu0
      %4736 = vmatprep.mubr.f32.mxu0 0.0
      %4737 = vmatmul.mubr.f32.gmra.mxu0 %v4543
      %v4738 = vpop.f32.mrf.mxu0
      %v4739 = vadd.f32 0.0, %v4738
      %v4740 = vpop.f32.mrf.mxu0
      %4741 = vmatprep.mubr.f32.mxu0 0.0
      %4742 = vmatmul.mubr.f32.gmra.mxu0 %v4544
      %v4743 = vpop.f32.mrf.mxu0
      %v4744 = vadd.f32 0.0, %v4743
      %v4745 = vpop.f32.mrf.mxu0
      %4746 = vmatprep.mubr.f32.mxu0 0.0
      %4747 = vmatmul.mubr.f32.gmra.mxu0 %v4545
      %v4748 = vpop.f32.mrf.mxu0
      %v4749 = vadd.f32 0.0, %v4748
      %v4750 = vpop.f32.mrf.mxu0
      %4751 = vmatprep.mubr.f32.mxu0 0.0
      %4752 = vmatmul.mubr.f32.gmra.mxu0 %v4546
      %v4753 = vpop.f32.mrf.mxu0
      %v4754 = vadd.f32 0.0, %v4753
      %v4755 = vpop.f32.mrf.mxu0
      %4756 = vmatprep.mubr.f32.mxu0 0.0
      %4757 = vmatmul.mubr.f32.gmra.mxu0 %v4547
      %v4758 = vpop.f32.mrf.mxu0
      %v4759 = vadd.f32 0.0, %v4758
      %v4760 = vpop.f32.mrf.mxu0
      %4761 = vmatprep.mubr.f32.mxu0 0.0
      %4762 = vmatmul.mubr.f32.gmra.mxu0 %v4548
      %v4763 = vpop.f32.mrf.mxu0
      %v4764 = vadd.f32 0.0, %v4763
      %v4765 = vpop.f32.mrf.mxu0
      %4766 = vmatprep.mubr.f32.mxu0 0.0
      %4767 = vmatmul.mubr.f32.gmra.mxu0 %v4549
      %v4768 = vpop.f32.mrf.mxu0
      %v4769 = vadd.f32 0.0, %v4768
      %v4770 = vpop.f32.mrf.mxu0
      %4771 = vmatprep.mubr.f32.mxu0 0.0
      %4772 = vmatmul.mubr.f32.gmra.mxu0 %v4550
      %v4773 = vpop.f32.mrf.mxu0
      %v4774 = vadd.f32 0.0, %v4773
      %v4775 = vpop.f32.mrf.mxu0
      %4776 = vmatprep.mubr.f32.mxu0 0.0
      %4777 = vmatmul.mubr.f32.gmra.mxu0 %v4551
      %v4778 = vpop.f32.mrf.mxu0
      %v4779 = vadd.f32 0.0, %v4778
      %v4780 = vpop.f32.mrf.mxu0
      %4781 = vmatprep.mubr.f32.mxu0 0.0
      %4782 = vmatmul.mubr.f32.gmra.mxu0 %v4552
      %v4783 = vpop.f32.mrf.mxu0
      %v4784 = vadd.f32 0.0, %v4783
      %v4785 = vpop.f32.mrf.mxu0
      %4786 = vmatprep.mubr.f32.mxu0 0.0
      %4787 = vmatmul.mubr.f32.gmra.mxu0 %v4553
      %v4788 = vpop.f32.mrf.mxu0
      %v4789 = vadd.f32 0.0, %v4788
      %v4790 = vpop.f32.mrf.mxu0
      %4791 = vmatprep.mubr.f32.mxu0 0.0
      %4792 = vmatmul.mubr.f32.gmra.mxu0 %v4554
      %v4793 = vpop.f32.mrf.mxu0
      %v4794 = vadd.f32 0.0, %v4793
      %v4795 = vpop.f32.mrf.mxu0
      %4796 = vmatprep.mubr.f32.mxu0 0.0
      %4797 = vmatmul.mubr.f32.gmra.mxu0 %v4555
      %v4798 = vpop.f32.mrf.mxu0
      %v4799 = vadd.f32 0.0, %v4798
      %v4800 = vpop.f32.mrf.mxu0
      %4801 = vmatprep.mubr.f32.mxu0 0.0
      %4802 = vmatmul.mubr.f32.gmra.mxu0 %v4556
      %v4803 = vpop.f32.mrf.mxu0
      %v4804 = vadd.f32 0.0, %v4803
      %v4805 = vpop.f32.mrf.mxu0
      %4806 = vmatprep.mubr.f32.mxu0 0.0
      %4807 = vmatmul.mubr.f32.gmra.mxu0 %v4557
      %v4808 = vpop.f32.mrf.mxu0
      %v4809 = vadd.f32 0.0, %v4808
      %v4810 = vpop.f32.mrf.mxu0
      %4811 = vmatprep.mubr.f32.mxu0 0.0
      %4812 = vmatmul.mubr.f32.gmra.mxu0 %v4558
      %v4813 = vpop.f32.mrf.mxu0
      %v4814 = vadd.f32 0.0, %v4813
      %v4815 = vpop.f32.mrf.mxu0
      %4816 = vmatprep.mubr.f32.mxu0 0.0
      %4817 = vmatmul.mubr.f32.gmra.mxu0 %v4559
      %v4818 = vpop.f32.mrf.mxu0
      %v4819 = vadd.f32 0.0, %v4818
      %v4820 = vpop.f32.mrf.mxu0
      %4821 = vdwg.mxu0
      %v4822 = vadd.f32 %v4488, %v4644
      %v4823 = vadd.f32 %v4489, %v4649
      %v4824 = vadd.f32 %v4490, %v4654
      %v4825 = vadd.f32 %v4491, %v4659
      %v4826 = vadd.f32 %v4492, %v4664
      %v4827 = vadd.f32 %v4493, %v4669
      %v4828 = vadd.f32 %v4494, %v4674
      %v4829 = vadd.f32 %v4495, %v4679
      %v4830 = vadd.f32 %v4496, %v4684
      %v4831 = vadd.f32 %v4497, %v4689
      %v4832 = vadd.f32 %v4498, %v4694
      %v4833 = vadd.f32 %v4499, %v4699
      %v4834 = vadd.f32 %v4500, %v4704
      %v4835 = vadd.f32 %v4501, %v4709
      %v4836 = vadd.f32 %v4502, %v4714
      %v4837 = vadd.f32 %v4503, %v4719
      %v4838 = vadd.f32 %v4504, %v4724
      %v4839 = vadd.f32 %v4505, %v4729
      %v4840 = vadd.f32 %v4506, %v4734
      %v4841 = vadd.f32 %v4507, %v4739
      %v4842 = vadd.f32 %v4508, %v4744
      %v4843 = vadd.f32 %v4509, %v4749
      %v4844 = vadd.f32 %v4510, %v4754
      %v4845 = vadd.f32 %v4511, %v4759
      %v4846 = vadd.f32 %v4512, %v4764
      %v4847 = vadd.f32 %v4513, %v4769
      %v4848 = vadd.f32 %v4514, %v4774
      %v4849 = vadd.f32 %v4515, %v4779
      %v4850 = vadd.f32 %v4516, %v4784
      %v4851 = vadd.f32 %v4517, %v4789
      %v4852 = vadd.f32 %v4518, %v4794
      %v4853 = vadd.f32 %v4519, %v4799
      %v4854 = vadd.f32 %v4520, %v4804
      %v4855 = vadd.f32 %v4521, %v4809
      %v4856 = vadd.f32 %v4522, %v4814
      %v4857 = vadd.f32 %v4523, %v4819
      %v4858 = vld [vmem:[#allocation2 + $0x13] sm:$0xff]
      %v4859 = vld [vmem:[#allocation2 + $0x1b] sm:$0xff]
      %v4860 = vld [vmem:[#allocation2 + $0x23] sm:$0xff]
      %v4861 = vld [vmem:[#allocation2 + $0x2b] sm:$0xff]
      %v4862 = vld [vmem:[#allocation2 + $0x33] sm:$0xff]
      %v4863 = vld [vmem:[#allocation2 + $0x3b] sm:$0xff]
      %v4864 = vld [vmem:[#allocation2 + $0x43] sm:$0xff]
      %v4865 = vld [vmem:[#allocation2 + $0x4b] sm:$0xff]
      %v4866 = vld [vmem:[#allocation2 + $0x53] sm:$0xff]
      %v4867 = vld [vmem:[#allocation2 + $0x5b] sm:$0xff]
      %v4868 = vld [vmem:[#allocation2 + $0x63] sm:$0xff]
      %v4869 = vld [vmem:[#allocation2 + $0x6b] sm:$0xff]
      %v4870 = vld [vmem:[#allocation2 + $0x73] sm:$0xff]
      %v4871 = vld [vmem:[#allocation2 + $0x7b] sm:$0xff]
      %v4872 = vld [vmem:[#allocation2 + $0x83] sm:$0xff]
      %v4873 = vld [vmem:[#allocation2 + $0x8b] sm:$0xff]
      %v4874 = vld [vmem:[#allocation2 + $0x93] sm:$0xff]
      %v4875 = vld [vmem:[#allocation2 + $0x9b] sm:$0xff]
      %v4876 = vld [vmem:[#allocation2 + $0xa3] sm:$0xff]
      %v4877 = vld [vmem:[#allocation2 + $0xab] sm:$0xff]
      %v4878 = vld [vmem:[#allocation2 + $0xb3] sm:$0xff]
      %v4879 = vld [vmem:[#allocation2 + $0xbb] sm:$0xff]
      %v4880 = vld [vmem:[#allocation2 + $0xc3] sm:$0xff]
      %v4881 = vld [vmem:[#allocation2 + $0xcb] sm:$0xff]
      %v4882 = vld [vmem:[#allocation2 + $0xd3] sm:$0xff]
      %v4883 = vld [vmem:[#allocation2 + $0xdb] sm:$0xff]
      %v4884 = vld [vmem:[#allocation2 + $0xe3] sm:$0xff]
      %v4885 = vld [vmem:[#allocation2 + $0xeb] sm:$0xff]
      %v4886 = vld [vmem:[#allocation2 + $0xf3] sm:$0xff]
      %v4887 = vld [vmem:[#allocation2 + $0xfb] sm:$0xff]
      %v4888 = vld [vmem:[#allocation2 + $0x103] sm:$0xff]
      %v4889 = vld [vmem:[#allocation2 + $0x10b] sm:$0xff]
      %v4890 = vld [vmem:[#allocation2 + $0x113] sm:$0xff]
      %v4891 = vld [vmem:[#allocation2 + $0x11b] sm:$0xff]
      %v4892 = vld [vmem:[#allocation2 + $0x123] sm:$0xff]
      %v4893 = vld [vmem:[#allocation2 + $0x12b] sm:$0xff]
      %s4894 = scalar_lea.vmem %s3, 512
      %v4895 = vld [vmem:[%s4894] sm:$0xff]
      %v4896 = vld [vmem:[%s4894 + $0x8] sm:$0xff]
      %v4897 = vld [vmem:[%s4894 + $0x10] sm:$0xff]
      %v4898 = vld [vmem:[%s4894 + $0x18] sm:$0xff]
      %v4899 = vld [vmem:[%s4894 + $0x20] sm:$0xff]
      %v4900 = vld [vmem:[%s4894 + $0x28] sm:$0xff]
      %v4901 = vld [vmem:[%s4894 + $0x30] sm:$0xff]
      %v4902 = vld [vmem:[%s4894 + $0x38] sm:$0xff]
      %v4903 = vld [vmem:[%s4894 + $0x40] sm:$0xff]
      %v4904 = vld [vmem:[%s4894 + $0x48] sm:$0xff]
      %v4905 = vld [vmem:[%s4894 + $0x50] sm:$0xff]
      %v4906 = vld [vmem:[%s4894 + $0x58] sm:$0xff]
      %v4907 = vld [vmem:[%s4894 + $0x60] sm:$0xff]
      %v4908 = vld [vmem:[%s4894 + $0x68] sm:$0xff]
      %v4909 = vld [vmem:[%s4894 + $0x70] sm:$0xff]
      %v4910 = vld [vmem:[%s4894 + $0x78] sm:$0xff]
      %4911 = vmatprep.subr.mxu0 0.0
      %4912 = vmatpush1.msra.mxu0 %v4910
      %4913 = vmatprep.subr.mxu0 0.0
      %4914 = vmatpush1.msra.mxu0 %v4909
      %4915 = vmatprep.subr.mxu0 0.0
      %4916 = vmatpush1.msra.mxu0 %v4908
      %4917 = vmatprep.subr.mxu0 0.0
      %4918 = vmatpush1.msra.mxu0 %v4907
      %4919 = vmatprep.subr.mxu0 0.0
      %4920 = vmatpush1.msra.mxu0 %v4906
      %4921 = vmatprep.subr.mxu0 0.0
      %4922 = vmatpush1.msra.mxu0 %v4905
      %4923 = vmatprep.subr.mxu0 0.0
      %4924 = vmatpush1.msra.mxu0 %v4904
      %4925 = vmatprep.subr.mxu0 0.0
      %4926 = vmatpush1.msra.mxu0 %v4903
      %4927 = vmatprep.subr.mxu0 0.0
      %4928 = vmatpush1.msra.mxu0 %v4902
      %4929 = vmatprep.subr.mxu0 0.0
      %4930 = vmatpush1.msra.mxu0 %v4901
      %4931 = vmatprep.subr.mxu0 0.0
      %4932 = vmatpush1.msra.mxu0 %v4900
      %4933 = vmatprep.subr.mxu0 0.0
      %4934 = vmatpush1.msra.mxu0 %v4899
      %4935 = vmatprep.subr.mxu0 0.0
      %4936 = vmatpush1.msra.mxu0 %v4898
      %4937 = vmatprep.subr.mxu0 0.0
      %4938 = vmatpush1.msra.mxu0 %v4897
      %4939 = vmatprep.subr.mxu0 0.0
      %4940 = vmatpush1.msra.mxu0 %v4896
      %4941 = vmatprep.subr.mxu0 0.0
      %4942 = vmatpush1.msra.mxu0 %v4895
      %4943 = vmatprep.subr.mxu0 0.0
      %4944 = vmatpush2.msra.mxu0 0.0
      %4945 = vmatprep.subr.mxu0 0.0
      %4946 = vmatpush2.msra.mxu0 0.0
      %4947 = vmatprep.subr.mxu0 0.0
      %4948 = vmatpush2.msra.mxu0 0.0
      %4949 = vmatprep.subr.mxu0 0.0
      %4950 = vmatpush2.msra.mxu0 0.0
      %4951 = vmatprep.subr.mxu0 0.0
      %4952 = vmatpush2.msra.mxu0 0.0
      %4953 = vmatprep.subr.mxu0 0.0
      %4954 = vmatpush2.msra.mxu0 0.0
      %4955 = vmatprep.subr.mxu0 0.0
      %4956 = vmatpush2.msra.mxu0 0.0
      %4957 = vmatprep.subr.mxu0 0.0
      %4958 = vmatpush2.msra.mxu0 0.0
      %4959 = vmatprep.subr.mxu0 0.0
      %4960 = vmatpush2.msra.mxu0 0.0
      %4961 = vmatprep.subr.mxu0 0.0
      %4962 = vmatpush2.msra.mxu0 0.0
      %4963 = vmatprep.subr.mxu0 0.0
      %4964 = vmatpush2.msra.mxu0 0.0
      %4965 = vmatprep.subr.mxu0 0.0
      %4966 = vmatpush2.msra.mxu0 0.0
      %4967 = vmatprep.subr.mxu0 0.0
      %4968 = vmatpush2.msra.mxu0 0.0
      %4969 = vmatprep.subr.mxu0 0.0
      %4970 = vmatpush2.msra.mxu0 0.0
      %4971 = vmatprep.subr.mxu0 0.0
      %4972 = vmatpush2.msra.mxu0 0.0
      %4973 = vmatprep.subr.mxu0 0.0
      %4974 = vmatpush2.msra.mxu0 0.0
      %4975 = vmatprep.mubr.f32.mxu0 0.0
      %4976 = vmatmul.mubr.f32.gmra.mxu0 %v4858
      %v4977 = vpop.f32.mrf.mxu0
      %v4978 = vadd.f32 0.0, %v4977
      %v4979 = vpop.f32.mrf.mxu0
      %4980 = vmatprep.mubr.f32.mxu0 0.0
      %4981 = vmatmul.mubr.f32.gmra.mxu0 %v4859
      %v4982 = vpop.f32.mrf.mxu0
      %v4983 = vadd.f32 0.0, %v4982
      %v4984 = vpop.f32.mrf.mxu0
      %4985 = vmatprep.mubr.f32.mxu0 0.0
      %4986 = vmatmul.mubr.f32.gmra.mxu0 %v4860
      %v4987 = vpop.f32.mrf.mxu0
      %v4988 = vadd.f32 0.0, %v4987
      %v4989 = vpop.f32.mrf.mxu0
      %4990 = vmatprep.mubr.f32.mxu0 0.0
      %4991 = vmatmul.mubr.f32.gmra.mxu0 %v4861
      %v4992 = vpop.f32.mrf.mxu0
      %v4993 = vadd.f32 0.0, %v4992
      %v4994 = vpop.f32.mrf.mxu0
      %4995 = vmatprep.mubr.f32.mxu0 0.0
      %4996 = vmatmul.mubr.f32.gmra.mxu0 %v4862
      %v4997 = vpop.f32.mrf.mxu0
      %v4998 = vadd.f32 0.0, %v4997
      %v4999 = vpop.f32.mrf.mxu0
      %5000 = vmatprep.mubr.f32.mxu0 0.0
      %5001 = vmatmul.mubr.f32.gmra.mxu0 %v4863
      %v5002 = vpop.f32.mrf.mxu0
      %v5003 = vadd.f32 0.0, %v5002
      %v5004 = vpop.f32.mrf.mxu0
      %5005 = vmatprep.mubr.f32.mxu0 0.0
      %5006 = vmatmul.mubr.f32.gmra.mxu0 %v4864
      %v5007 = vpop.f32.mrf.mxu0
      %v5008 = vadd.f32 0.0, %v5007
      %v5009 = vpop.f32.mrf.mxu0
      %5010 = vmatprep.mubr.f32.mxu0 0.0
      %5011 = vmatmul.mubr.f32.gmra.mxu0 %v4865
      %v5012 = vpop.f32.mrf.mxu0
      %v5013 = vadd.f32 0.0, %v5012
      %v5014 = vpop.f32.mrf.mxu0
      %5015 = vmatprep.mubr.f32.mxu0 0.0
      %5016 = vmatmul.mubr.f32.gmra.mxu0 %v4866
      %v5017 = vpop.f32.mrf.mxu0
      %v5018 = vadd.f32 0.0, %v5017
      %v5019 = vpop.f32.mrf.mxu0
      %5020 = vmatprep.mubr.f32.mxu0 0.0
      %5021 = vmatmul.mubr.f32.gmra.mxu0 %v4867
      %v5022 = vpop.f32.mrf.mxu0
      %v5023 = vadd.f32 0.0, %v5022
      %v5024 = vpop.f32.mrf.mxu0
      %5025 = vmatprep.mubr.f32.mxu0 0.0
      %5026 = vmatmul.mubr.f32.gmra.mxu0 %v4868
      %v5027 = vpop.f32.mrf.mxu0
      %v5028 = vadd.f32 0.0, %v5027
      %v5029 = vpop.f32.mrf.mxu0
      %5030 = vmatprep.mubr.f32.mxu0 0.0
      %5031 = vmatmul.mubr.f32.gmra.mxu0 %v4869
      %v5032 = vpop.f32.mrf.mxu0
      %v5033 = vadd.f32 0.0, %v5032
      %v5034 = vpop.f32.mrf.mxu0
      %5035 = vmatprep.mubr.f32.mxu0 0.0
      %5036 = vmatmul.mubr.f32.gmra.mxu0 %v4870
      %v5037 = vpop.f32.mrf.mxu0
      %v5038 = vadd.f32 0.0, %v5037
      %v5039 = vpop.f32.mrf.mxu0
      %5040 = vmatprep.mubr.f32.mxu0 0.0
      %5041 = vmatmul.mubr.f32.gmra.mxu0 %v4871
      %v5042 = vpop.f32.mrf.mxu0
      %v5043 = vadd.f32 0.0, %v5042
      %v5044 = vpop.f32.mrf.mxu0
      %5045 = vmatprep.mubr.f32.mxu0 0.0
      %5046 = vmatmul.mubr.f32.gmra.mxu0 %v4872
      %v5047 = vpop.f32.mrf.mxu0
      %v5048 = vadd.f32 0.0, %v5047
      %v5049 = vpop.f32.mrf.mxu0
      %5050 = vmatprep.mubr.f32.mxu0 0.0
      %5051 = vmatmul.mubr.f32.gmra.mxu0 %v4873
      %v5052 = vpop.f32.mrf.mxu0
      %v5053 = vadd.f32 0.0, %v5052
      %v5054 = vpop.f32.mrf.mxu0
      %5055 = vmatprep.mubr.f32.mxu0 0.0
      %5056 = vmatmul.mubr.f32.gmra.mxu0 %v4874
      %v5057 = vpop.f32.mrf.mxu0
      %v5058 = vadd.f32 0.0, %v5057
      %v5059 = vpop.f32.mrf.mxu0
      %5060 = vmatprep.mubr.f32.mxu0 0.0
      %5061 = vmatmul.mubr.f32.gmra.mxu0 %v4875
      %v5062 = vpop.f32.mrf.mxu0
      %v5063 = vadd.f32 0.0, %v5062
      %v5064 = vpop.f32.mrf.mxu0
      %5065 = vmatprep.mubr.f32.mxu0 0.0
      %5066 = vmatmul.mubr.f32.gmra.mxu0 %v4876
      %v5067 = vpop.f32.mrf.mxu0
      %v5068 = vadd.f32 0.0, %v5067
      %v5069 = vpop.f32.mrf.mxu0
      %5070 = vmatprep.mubr.f32.mxu0 0.0
      %5071 = vmatmul.mubr.f32.gmra.mxu0 %v4877
      %v5072 = vpop.f32.mrf.mxu0
      %v5073 = vadd.f32 0.0, %v5072
      %v5074 = vpop.f32.mrf.mxu0
      %5075 = vmatprep.mubr.f32.mxu0 0.0
      %5076 = vmatmul.mubr.f32.gmra.mxu0 %v4878
      %v5077 = vpop.f32.mrf.mxu0
      %v5078 = vadd.f32 0.0, %v5077
      %v5079 = vpop.f32.mrf.mxu0
      %5080 = vmatprep.mubr.f32.mxu0 0.0
      %5081 = vmatmul.mubr.f32.gmra.mxu0 %v4879
      %v5082 = vpop.f32.mrf.mxu0
      %v5083 = vadd.f32 0.0, %v5082
      %v5084 = vpop.f32.mrf.mxu0
      %5085 = vmatprep.mubr.f32.mxu0 0.0
      %5086 = vmatmul.mubr.f32.gmra.mxu0 %v4880
      %v5087 = vpop.f32.mrf.mxu0
      %v5088 = vadd.f32 0.0, %v5087
      %v5089 = vpop.f32.mrf.mxu0
      %5090 = vmatprep.mubr.f32.mxu0 0.0
      %5091 = vmatmul.mubr.f32.gmra.mxu0 %v4881
      %v5092 = vpop.f32.mrf.mxu0
      %v5093 = vadd.f32 0.0, %v5092
      %v5094 = vpop.f32.mrf.mxu0
      %5095 = vmatprep.mubr.f32.mxu0 0.0
      %5096 = vmatmul.mubr.f32.gmra.mxu0 %v4882
      %v5097 = vpop.f32.mrf.mxu0
      %v5098 = vadd.f32 0.0, %v5097
      %v5099 = vpop.f32.mrf.mxu0
      %5100 = vmatprep.mubr.f32.mxu0 0.0
      %5101 = vmatmul.mubr.f32.gmra.mxu0 %v4883
      %v5102 = vpop.f32.mrf.mxu0
      %v5103 = vadd.f32 0.0, %v5102
      %v5104 = vpop.f32.mrf.mxu0
      %5105 = vmatprep.mubr.f32.mxu0 0.0
      %5106 = vmatmul.mubr.f32.gmra.mxu0 %v4884
      %v5107 = vpop.f32.mrf.mxu0
      %v5108 = vadd.f32 0.0, %v5107
      %v5109 = vpop.f32.mrf.mxu0
      %5110 = vmatprep.mubr.f32.mxu0 0.0
      %5111 = vmatmul.mubr.f32.gmra.mxu0 %v4885
      %v5112 = vpop.f32.mrf.mxu0
      %v5113 = vadd.f32 0.0, %v5112
      %v5114 = vpop.f32.mrf.mxu0
      %5115 = vmatprep.mubr.f32.mxu0 0.0
      %5116 = vmatmul.mubr.f32.gmra.mxu0 %v4886
      %v5117 = vpop.f32.mrf.mxu0
      %v5118 = vadd.f32 0.0, %v5117
      %v5119 = vpop.f32.mrf.mxu0
      %5120 = vmatprep.mubr.f32.mxu0 0.0
      %5121 = vmatmul.mubr.f32.gmra.mxu0 %v4887
      %v5122 = vpop.f32.mrf.mxu0
      %v5123 = vadd.f32 0.0, %v5122
      %v5124 = vpop.f32.mrf.mxu0
      %5125 = vmatprep.mubr.f32.mxu0 0.0
      %5126 = vmatmul.mubr.f32.gmra.mxu0 %v4888
      %v5127 = vpop.f32.mrf.mxu0
      %v5128 = vadd.f32 0.0, %v5127
      %v5129 = vpop.f32.mrf.mxu0
      %5130 = vmatprep.mubr.f32.mxu0 0.0
      %5131 = vmatmul.mubr.f32.gmra.mxu0 %v4889
      %v5132 = vpop.f32.mrf.mxu0
      %v5133 = vadd.f32 0.0, %v5132
      %v5134 = vpop.f32.mrf.mxu0
      %5135 = vmatprep.mubr.f32.mxu0 0.0
      %5136 = vmatmul.mubr.f32.gmra.mxu0 %v4890
      %v5137 = vpop.f32.mrf.mxu0
      %v5138 = vadd.f32 0.0, %v5137
      %v5139 = vpop.f32.mrf.mxu0
      %5140 = vmatprep.mubr.f32.mxu0 0.0
      %5141 = vmatmul.mubr.f32.gmra.mxu0 %v4891
      %v5142 = vpop.f32.mrf.mxu0
      %v5143 = vadd.f32 0.0, %v5142
      %v5144 = vpop.f32.mrf.mxu0
      %5145 = vmatprep.mubr.f32.mxu0 0.0
      %5146 = vmatmul.mubr.f32.gmra.mxu0 %v4892
      %v5147 = vpop.f32.mrf.mxu0
      %v5148 = vadd.f32 0.0, %v5147
      %v5149 = vpop.f32.mrf.mxu0
      %5150 = vmatprep.mubr.f32.mxu0 0.0
      %5151 = vmatmul.mubr.f32.gmra.mxu0 %v4893
      %v5152 = vpop.f32.mrf.mxu0
      %v5153 = vadd.f32 0.0, %v5152
      %v5154 = vpop.f32.mrf.mxu0
      %5155 = vdwg.mxu0
      %v5156 = vadd.f32 %v4822, %v4978
      %v5157 = vadd.f32 %v4823, %v4983
      %v5158 = vadd.f32 %v4824, %v4988
      %v5159 = vadd.f32 %v4825, %v4993
      %v5160 = vadd.f32 %v4826, %v4998
      %v5161 = vadd.f32 %v4827, %v5003
      %v5162 = vadd.f32 %v4828, %v5008
      %v5163 = vadd.f32 %v4829, %v5013
      %v5164 = vadd.f32 %v4830, %v5018
      %v5165 = vadd.f32 %v4831, %v5023
      %v5166 = vadd.f32 %v4832, %v5028
      %v5167 = vadd.f32 %v4833, %v5033
      %v5168 = vadd.f32 %v4834, %v5038
      %v5169 = vadd.f32 %v4835, %v5043
      %v5170 = vadd.f32 %v4836, %v5048
      %v5171 = vadd.f32 %v4837, %v5053
      %v5172 = vadd.f32 %v4838, %v5058
      %v5173 = vadd.f32 %v4839, %v5063
      %v5174 = vadd.f32 %v4840, %v5068
      %v5175 = vadd.f32 %v4841, %v5073
      %v5176 = vadd.f32 %v4842, %v5078
      %v5177 = vadd.f32 %v4843, %v5083
      %v5178 = vadd.f32 %v4844, %v5088
      %v5179 = vadd.f32 %v4845, %v5093
      %v5180 = vadd.f32 %v4846, %v5098
      %v5181 = vadd.f32 %v4847, %v5103
      %v5182 = vadd.f32 %v4848, %v5108
      %v5183 = vadd.f32 %v4849, %v5113
      %v5184 = vadd.f32 %v4850, %v5118
      %v5185 = vadd.f32 %v4851, %v5123
      %v5186 = vadd.f32 %v4852, %v5128
      %v5187 = vadd.f32 %v4853, %v5133
      %v5188 = vadd.f32 %v4854, %v5138
      %v5189 = vadd.f32 %v4855, %v5143
      %v5190 = vadd.f32 %v4856, %v5148
      %v5191 = vadd.f32 %v4857, %v5153
      %v5192 = vld [vmem:[#allocation2 + $0x14] sm:$0xff]
      %v5193 = vld [vmem:[#allocation2 + $0x1c] sm:$0xff]
      %v5194 = vld [vmem:[#allocation2 + $0x24] sm:$0xff]
      %v5195 = vld [vmem:[#allocation2 + $0x2c] sm:$0xff]
      %v5196 = vld [vmem:[#allocation2 + $0x34] sm:$0xff]
      %v5197 = vld [vmem:[#allocation2 + $0x3c] sm:$0xff]
      %v5198 = vld [vmem:[#allocation2 + $0x44] sm:$0xff]
      %v5199 = vld [vmem:[#allocation2 + $0x4c] sm:$0xff]
      %v5200 = vld [vmem:[#allocation2 + $0x54] sm:$0xff]
      %v5201 = vld [vmem:[#allocation2 + $0x5c] sm:$0xff]
      %v5202 = vld [vmem:[#allocation2 + $0x64] sm:$0xff]
      %v5203 = vld [vmem:[#allocation2 + $0x6c] sm:$0xff]
      %v5204 = vld [vmem:[#allocation2 + $0x74] sm:$0xff]
      %v5205 = vld [vmem:[#allocation2 + $0x7c] sm:$0xff]
      %v5206 = vld [vmem:[#allocation2 + $0x84] sm:$0xff]
      %v5207 = vld [vmem:[#allocation2 + $0x8c] sm:$0xff]
      %v5208 = vld [vmem:[#allocation2 + $0x94] sm:$0xff]
      %v5209 = vld [vmem:[#allocation2 + $0x9c] sm:$0xff]
      %v5210 = vld [vmem:[#allocation2 + $0xa4] sm:$0xff]
      %v5211 = vld [vmem:[#allocation2 + $0xac] sm:$0xff]
      %v5212 = vld [vmem:[#allocation2 + $0xb4] sm:$0xff]
      %v5213 = vld [vmem:[#allocation2 + $0xbc] sm:$0xff]
      %v5214 = vld [vmem:[#allocation2 + $0xc4] sm:$0xff]
      %v5215 = vld [vmem:[#allocation2 + $0xcc] sm:$0xff]
      %v5216 = vld [vmem:[#allocation2 + $0xd4] sm:$0xff]
      %v5217 = vld [vmem:[#allocation2 + $0xdc] sm:$0xff]
      %v5218 = vld [vmem:[#allocation2 + $0xe4] sm:$0xff]
      %v5219 = vld [vmem:[#allocation2 + $0xec] sm:$0xff]
      %v5220 = vld [vmem:[#allocation2 + $0xf4] sm:$0xff]
      %v5221 = vld [vmem:[#allocation2 + $0xfc] sm:$0xff]
      %v5222 = vld [vmem:[#allocation2 + $0x104] sm:$0xff]
      %v5223 = vld [vmem:[#allocation2 + $0x10c] sm:$0xff]
      %v5224 = vld [vmem:[#allocation2 + $0x114] sm:$0xff]
      %v5225 = vld [vmem:[#allocation2 + $0x11c] sm:$0xff]
      %v5226 = vld [vmem:[#allocation2 + $0x124] sm:$0xff]
      %v5227 = vld [vmem:[#allocation2 + $0x12c] sm:$0xff]
      %s5228 = scalar_lea.vmem %s3, 640
      %v5229 = vld [vmem:[%s5228] sm:$0xff]
      %v5230 = vld [vmem:[%s5228 + $0x8] sm:$0xff]
      %v5231 = vld [vmem:[%s5228 + $0x10] sm:$0xff]
      %v5232 = vld [vmem:[%s5228 + $0x18] sm:$0xff]
      %v5233 = vld [vmem:[%s5228 + $0x20] sm:$0xff]
      %v5234 = vld [vmem:[%s5228 + $0x28] sm:$0xff]
      %v5235 = vld [vmem:[%s5228 + $0x30] sm:$0xff]
      %v5236 = vld [vmem:[%s5228 + $0x38] sm:$0xff]
      %v5237 = vld [vmem:[%s5228 + $0x40] sm:$0xff]
      %v5238 = vld [vmem:[%s5228 + $0x48] sm:$0xff]
      %v5239 = vld [vmem:[%s5228 + $0x50] sm:$0xff]
      %v5240 = vld [vmem:[%s5228 + $0x58] sm:$0xff]
      %v5241 = vld [vmem:[%s5228 + $0x60] sm:$0xff]
      %v5242 = vld [vmem:[%s5228 + $0x68] sm:$0xff]
      %v5243 = vld [vmem:[%s5228 + $0x70] sm:$0xff]
      %v5244 = vld [vmem:[%s5228 + $0x78] sm:$0xff]
      %5245 = vmatprep.subr.mxu0 0.0
      %5246 = vmatpush1.msra.mxu0 %v5244
      %5247 = vmatprep.subr.mxu0 0.0
      %5248 = vmatpush1.msra.mxu0 %v5243
      %5249 = vmatprep.subr.mxu0 0.0
      %5250 = vmatpush1.msra.mxu0 %v5242
      %5251 = vmatprep.subr.mxu0 0.0
      %5252 = vmatpush1.msra.mxu0 %v5241
      %5253 = vmatprep.subr.mxu0 0.0
      %5254 = vmatpush1.msra.mxu0 %v5240
      %5255 = vmatprep.subr.mxu0 0.0
      %5256 = vmatpush1.msra.mxu0 %v5239
      %5257 = vmatprep.subr.mxu0 0.0
      %5258 = vmatpush1.msra.mxu0 %v5238
      %5259 = vmatprep.subr.mxu0 0.0
      %5260 = vmatpush1.msra.mxu0 %v5237
      %5261 = vmatprep.subr.mxu0 0.0
      %5262 = vmatpush1.msra.mxu0 %v5236
      %5263 = vmatprep.subr.mxu0 0.0
      %5264 = vmatpush1.msra.mxu0 %v5235
      %5265 = vmatprep.subr.mxu0 0.0
      %5266 = vmatpush1.msra.mxu0 %v5234
      %5267 = vmatprep.subr.mxu0 0.0
      %5268 = vmatpush1.msra.mxu0 %v5233
      %5269 = vmatprep.subr.mxu0 0.0
      %5270 = vmatpush1.msra.mxu0 %v5232
      %5271 = vmatprep.subr.mxu0 0.0
      %5272 = vmatpush1.msra.mxu0 %v5231
      %5273 = vmatprep.subr.mxu0 0.0
      %5274 = vmatpush1.msra.mxu0 %v5230
      %5275 = vmatprep.subr.mxu0 0.0
      %5276 = vmatpush1.msra.mxu0 %v5229
      %5277 = vmatprep.subr.mxu0 0.0
      %5278 = vmatpush2.msra.mxu0 0.0
      %5279 = vmatprep.subr.mxu0 0.0
      %5280 = vmatpush2.msra.mxu0 0.0
      %5281 = vmatprep.subr.mxu0 0.0
      %5282 = vmatpush2.msra.mxu0 0.0
      %5283 = vmatprep.subr.mxu0 0.0
      %5284 = vmatpush2.msra.mxu0 0.0
      %5285 = vmatprep.subr.mxu0 0.0
      %5286 = vmatpush2.msra.mxu0 0.0
      %5287 = vmatprep.subr.mxu0 0.0
      %5288 = vmatpush2.msra.mxu0 0.0
      %5289 = vmatprep.subr.mxu0 0.0
      %5290 = vmatpush2.msra.mxu0 0.0
      %5291 = vmatprep.subr.mxu0 0.0
      %5292 = vmatpush2.msra.mxu0 0.0
      %5293 = vmatprep.subr.mxu0 0.0
      %5294 = vmatpush2.msra.mxu0 0.0
      %5295 = vmatprep.subr.mxu0 0.0
      %5296 = vmatpush2.msra.mxu0 0.0
      %5297 = vmatprep.subr.mxu0 0.0
      %5298 = vmatpush2.msra.mxu0 0.0
      %5299 = vmatprep.subr.mxu0 0.0
      %5300 = vmatpush2.msra.mxu0 0.0
      %5301 = vmatprep.subr.mxu0 0.0
      %5302 = vmatpush2.msra.mxu0 0.0
      %5303 = vmatprep.subr.mxu0 0.0
      %5304 = vmatpush2.msra.mxu0 0.0
      %5305 = vmatprep.subr.mxu0 0.0
      %5306 = vmatpush2.msra.mxu0 0.0
      %5307 = vmatprep.subr.mxu0 0.0
      %5308 = vmatpush2.msra.mxu0 0.0
      %5309 = vmatprep.mubr.f32.mxu0 0.0
      %5310 = vmatmul.mubr.f32.gmra.mxu0 %v5192
      %v5311 = vpop.f32.mrf.mxu0
      %v5312 = vadd.f32 0.0, %v5311
      %v5313 = vpop.f32.mrf.mxu0
      %5314 = vmatprep.mubr.f32.mxu0 0.0
      %5315 = vmatmul.mubr.f32.gmra.mxu0 %v5193
      %v5316 = vpop.f32.mrf.mxu0
      %v5317 = vadd.f32 0.0, %v5316
      %v5318 = vpop.f32.mrf.mxu0
      %5319 = vmatprep.mubr.f32.mxu0 0.0
      %5320 = vmatmul.mubr.f32.gmra.mxu0 %v5194
      %v5321 = vpop.f32.mrf.mxu0
      %v5322 = vadd.f32 0.0, %v5321
      %v5323 = vpop.f32.mrf.mxu0
      %5324 = vmatprep.mubr.f32.mxu0 0.0
      %5325 = vmatmul.mubr.f32.gmra.mxu0 %v5195
      %v5326 = vpop.f32.mrf.mxu0
      %v5327 = vadd.f32 0.0, %v5326
      %v5328 = vpop.f32.mrf.mxu0
      %5329 = vmatprep.mubr.f32.mxu0 0.0
      %5330 = vmatmul.mubr.f32.gmra.mxu0 %v5196
      %v5331 = vpop.f32.mrf.mxu0
      %v5332 = vadd.f32 0.0, %v5331
      %v5333 = vpop.f32.mrf.mxu0
      %5334 = vmatprep.mubr.f32.mxu0 0.0
      %5335 = vmatmul.mubr.f32.gmra.mxu0 %v5197
      %v5336 = vpop.f32.mrf.mxu0
      %v5337 = vadd.f32 0.0, %v5336
      %v5338 = vpop.f32.mrf.mxu0
      %5339 = vmatprep.mubr.f32.mxu0 0.0
      %5340 = vmatmul.mubr.f32.gmra.mxu0 %v5198
      %v5341 = vpop.f32.mrf.mxu0
      %v5342 = vadd.f32 0.0, %v5341
      %v5343 = vpop.f32.mrf.mxu0
      %5344 = vmatprep.mubr.f32.mxu0 0.0
      %5345 = vmatmul.mubr.f32.gmra.mxu0 %v5199
      %v5346 = vpop.f32.mrf.mxu0
      %v5347 = vadd.f32 0.0, %v5346
      %v5348 = vpop.f32.mrf.mxu0
      %5349 = vmatprep.mubr.f32.mxu0 0.0
      %5350 = vmatmul.mubr.f32.gmra.mxu0 %v5200
      %v5351 = vpop.f32.mrf.mxu0
      %v5352 = vadd.f32 0.0, %v5351
      %v5353 = vpop.f32.mrf.mxu0
      %5354 = vmatprep.mubr.f32.mxu0 0.0
      %5355 = vmatmul.mubr.f32.gmra.mxu0 %v5201
      %v5356 = vpop.f32.mrf.mxu0
      %v5357 = vadd.f32 0.0, %v5356
      %v5358 = vpop.f32.mrf.mxu0
      %5359 = vmatprep.mubr.f32.mxu0 0.0
      %5360 = vmatmul.mubr.f32.gmra.mxu0 %v5202
      %v5361 = vpop.f32.mrf.mxu0
      %v5362 = vadd.f32 0.0, %v5361
      %v5363 = vpop.f32.mrf.mxu0
      %5364 = vmatprep.mubr.f32.mxu0 0.0
      %5365 = vmatmul.mubr.f32.gmra.mxu0 %v5203
      %v5366 = vpop.f32.mrf.mxu0
      %v5367 = vadd.f32 0.0, %v5366
      %v5368 = vpop.f32.mrf.mxu0
      %5369 = vmatprep.mubr.f32.mxu0 0.0
      %5370 = vmatmul.mubr.f32.gmra.mxu0 %v5204
      %v5371 = vpop.f32.mrf.mxu0
      %v5372 = vadd.f32 0.0, %v5371
      %v5373 = vpop.f32.mrf.mxu0
      %5374 = vmatprep.mubr.f32.mxu0 0.0
      %5375 = vmatmul.mubr.f32.gmra.mxu0 %v5205
      %v5376 = vpop.f32.mrf.mxu0
      %v5377 = vadd.f32 0.0, %v5376
      %v5378 = vpop.f32.mrf.mxu0
      %5379 = vmatprep.mubr.f32.mxu0 0.0
      %5380 = vmatmul.mubr.f32.gmra.mxu0 %v5206
      %v5381 = vpop.f32.mrf.mxu0
      %v5382 = vadd.f32 0.0, %v5381
      %v5383 = vpop.f32.mrf.mxu0
      %5384 = vmatprep.mubr.f32.mxu0 0.0
      %5385 = vmatmul.mubr.f32.gmra.mxu0 %v5207
      %v5386 = vpop.f32.mrf.mxu0
      %v5387 = vadd.f32 0.0, %v5386
      %v5388 = vpop.f32.mrf.mxu0
      %5389 = vmatprep.mubr.f32.mxu0 0.0
      %5390 = vmatmul.mubr.f32.gmra.mxu0 %v5208
      %v5391 = vpop.f32.mrf.mxu0
      %v5392 = vadd.f32 0.0, %v5391
      %v5393 = vpop.f32.mrf.mxu0
      %5394 = vmatprep.mubr.f32.mxu0 0.0
      %5395 = vmatmul.mubr.f32.gmra.mxu0 %v5209
      %v5396 = vpop.f32.mrf.mxu0
      %v5397 = vadd.f32 0.0, %v5396
      %v5398 = vpop.f32.mrf.mxu0
      %5399 = vmatprep.mubr.f32.mxu0 0.0
      %5400 = vmatmul.mubr.f32.gmra.mxu0 %v5210
      %v5401 = vpop.f32.mrf.mxu0
      %v5402 = vadd.f32 0.0, %v5401
      %v5403 = vpop.f32.mrf.mxu0
      %5404 = vmatprep.mubr.f32.mxu0 0.0
      %5405 = vmatmul.mubr.f32.gmra.mxu0 %v5211
      %v5406 = vpop.f32.mrf.mxu0
      %v5407 = vadd.f32 0.0, %v5406
      %v5408 = vpop.f32.mrf.mxu0
      %5409 = vmatprep.mubr.f32.mxu0 0.0
      %5410 = vmatmul.mubr.f32.gmra.mxu0 %v5212
      %v5411 = vpop.f32.mrf.mxu0
      %v5412 = vadd.f32 0.0, %v5411
      %v5413 = vpop.f32.mrf.mxu0
      %5414 = vmatprep.mubr.f32.mxu0 0.0
      %5415 = vmatmul.mubr.f32.gmra.mxu0 %v5213
      %v5416 = vpop.f32.mrf.mxu0
      %v5417 = vadd.f32 0.0, %v5416
      %v5418 = vpop.f32.mrf.mxu0
      %5419 = vmatprep.mubr.f32.mxu0 0.0
      %5420 = vmatmul.mubr.f32.gmra.mxu0 %v5214
      %v5421 = vpop.f32.mrf.mxu0
      %v5422 = vadd.f32 0.0, %v5421
      %v5423 = vpop.f32.mrf.mxu0
      %5424 = vmatprep.mubr.f32.mxu0 0.0
      %5425 = vmatmul.mubr.f32.gmra.mxu0 %v5215
      %v5426 = vpop.f32.mrf.mxu0
      %v5427 = vadd.f32 0.0, %v5426
      %v5428 = vpop.f32.mrf.mxu0
      %5429 = vmatprep.mubr.f32.mxu0 0.0
      %5430 = vmatmul.mubr.f32.gmra.mxu0 %v5216
      %v5431 = vpop.f32.mrf.mxu0
      %v5432 = vadd.f32 0.0, %v5431
      %v5433 = vpop.f32.mrf.mxu0
      %5434 = vmatprep.mubr.f32.mxu0 0.0
      %5435 = vmatmul.mubr.f32.gmra.mxu0 %v5217
      %v5436 = vpop.f32.mrf.mxu0
      %v5437 = vadd.f32 0.0, %v5436
      %v5438 = vpop.f32.mrf.mxu0
      %5439 = vmatprep.mubr.f32.mxu0 0.0
      %5440 = vmatmul.mubr.f32.gmra.mxu0 %v5218
      %v5441 = vpop.f32.mrf.mxu0
      %v5442 = vadd.f32 0.0, %v5441
      %v5443 = vpop.f32.mrf.mxu0
      %5444 = vmatprep.mubr.f32.mxu0 0.0
      %5445 = vmatmul.mubr.f32.gmra.mxu0 %v5219
      %v5446 = vpop.f32.mrf.mxu0
      %v5447 = vadd.f32 0.0, %v5446
      %v5448 = vpop.f32.mrf.mxu0
      %5449 = vmatprep.mubr.f32.mxu0 0.0
      %5450 = vmatmul.mubr.f32.gmra.mxu0 %v5220
      %v5451 = vpop.f32.mrf.mxu0
      %v5452 = vadd.f32 0.0, %v5451
      %v5453 = vpop.f32.mrf.mxu0
      %5454 = vmatprep.mubr.f32.mxu0 0.0
      %5455 = vmatmul.mubr.f32.gmra.mxu0 %v5221
      %v5456 = vpop.f32.mrf.mxu0
      %v5457 = vadd.f32 0.0, %v5456
      %v5458 = vpop.f32.mrf.mxu0
      %5459 = vmatprep.mubr.f32.mxu0 0.0
      %5460 = vmatmul.mubr.f32.gmra.mxu0 %v5222
      %v5461 = vpop.f32.mrf.mxu0
      %v5462 = vadd.f32 0.0, %v5461
      %v5463 = vpop.f32.mrf.mxu0
      %5464 = vmatprep.mubr.f32.mxu0 0.0
      %5465 = vmatmul.mubr.f32.gmra.mxu0 %v5223
      %v5466 = vpop.f32.mrf.mxu0
      %v5467 = vadd.f32 0.0, %v5466
      %v5468 = vpop.f32.mrf.mxu0
      %5469 = vmatprep.mubr.f32.mxu0 0.0
      %5470 = vmatmul.mubr.f32.gmra.mxu0 %v5224
      %v5471 = vpop.f32.mrf.mxu0
      %v5472 = vadd.f32 0.0, %v5471
      %v5473 = vpop.f32.mrf.mxu0
      %5474 = vmatprep.mubr.f32.mxu0 0.0
      %5475 = vmatmul.mubr.f32.gmra.mxu0 %v5225
      %v5476 = vpop.f32.mrf.mxu0
      %v5477 = vadd.f32 0.0, %v5476
      %v5478 = vpop.f32.mrf.mxu0
      %5479 = vmatprep.mubr.f32.mxu0 0.0
      %5480 = vmatmul.mubr.f32.gmra.mxu0 %v5226
      %v5481 = vpop.f32.mrf.mxu0
      %v5482 = vadd.f32 0.0, %v5481
      %v5483 = vpop.f32.mrf.mxu0
      %5484 = vmatprep.mubr.f32.mxu0 0.0
      %5485 = vmatmul.mubr.f32.gmra.mxu0 %v5227
      %v5486 = vpop.f32.mrf.mxu0
      %v5487 = vadd.f32 0.0, %v5486
      %v5488 = vpop.f32.mrf.mxu0
      %5489 = vdwg.mxu0
      %v5490 = vadd.f32 %v5156, %v5312
      %v5491 = vadd.f32 %v5157, %v5317
      %v5492 = vadd.f32 %v5158, %v5322
      %v5493 = vadd.f32 %v5159, %v5327
      %v5494 = vadd.f32 %v5160, %v5332
      %v5495 = vadd.f32 %v5161, %v5337
      %v5496 = vadd.f32 %v5162, %v5342
      %v5497 = vadd.f32 %v5163, %v5347
      %v5498 = vadd.f32 %v5164, %v5352
      %v5499 = vadd.f32 %v5165, %v5357
      %v5500 = vadd.f32 %v5166, %v5362
      %v5501 = vadd.f32 %v5167, %v5367
      %v5502 = vadd.f32 %v5168, %v5372
      %v5503 = vadd.f32 %v5169, %v5377
      %v5504 = vadd.f32 %v5170, %v5382
      %v5505 = vadd.f32 %v5171, %v5387
      %v5506 = vadd.f32 %v5172, %v5392
      %v5507 = vadd.f32 %v5173, %v5397
      %v5508 = vadd.f32 %v5174, %v5402
      %v5509 = vadd.f32 %v5175, %v5407
      %v5510 = vadd.f32 %v5176, %v5412
      %v5511 = vadd.f32 %v5177, %v5417
      %v5512 = vadd.f32 %v5178, %v5422
      %v5513 = vadd.f32 %v5179, %v5427
      %v5514 = vadd.f32 %v5180, %v5432
      %v5515 = vadd.f32 %v5181, %v5437
      %v5516 = vadd.f32 %v5182, %v5442
      %v5517 = vadd.f32 %v5183, %v5447
      %v5518 = vadd.f32 %v5184, %v5452
      %v5519 = vadd.f32 %v5185, %v5457
      %v5520 = vadd.f32 %v5186, %v5462
      %v5521 = vadd.f32 %v5187, %v5467
      %v5522 = vadd.f32 %v5188, %v5472
      %v5523 = vadd.f32 %v5189, %v5477
      %v5524 = vadd.f32 %v5190, %v5482
      %v5525 = vadd.f32 %v5191, %v5487
      %v5526 = vld [vmem:[#allocation2 + $0x24] sm:$0xff]
      %v5527 = vld [vmem:[#allocation2 + $0x2c] sm:$0xff]
      %v5528 = vld [vmem:[#allocation2 + $0x34] sm:$0xff]
      %v5529 = vld [vmem:[#allocation2 + $0x3c] sm:$0xff]
      %v5530 = vld [vmem:[#allocation2 + $0x44] sm:$0xff]
      %v5531 = vld [vmem:[#allocation2 + $0x4c] sm:$0xff]
      %v5532 = vld [vmem:[#allocation2 + $0x54] sm:$0xff]
      %v5533 = vld [vmem:[#allocation2 + $0x5c] sm:$0xff]
      %v5534 = vld [vmem:[#allocation2 + $0x64] sm:$0xff]
      %v5535 = vld [vmem:[#allocation2 + $0x6c] sm:$0xff]
      %v5536 = vld [vmem:[#allocation2 + $0x74] sm:$0xff]
      %v5537 = vld [vmem:[#allocation2 + $0x7c] sm:$0xff]
      %v5538 = vld [vmem:[#allocation2 + $0x84] sm:$0xff]
      %v5539 = vld [vmem:[#allocation2 + $0x8c] sm:$0xff]
      %v5540 = vld [vmem:[#allocation2 + $0x94] sm:$0xff]
      %v5541 = vld [vmem:[#allocation2 + $0x9c] sm:$0xff]
      %v5542 = vld [vmem:[#allocation2 + $0xa4] sm:$0xff]
      %v5543 = vld [vmem:[#allocation2 + $0xac] sm:$0xff]
      %v5544 = vld [vmem:[#allocation2 + $0xb4] sm:$0xff]
      %v5545 = vld [vmem:[#allocation2 + $0xbc] sm:$0xff]
      %v5546 = vld [vmem:[#allocation2 + $0xc4] sm:$0xff]
      %v5547 = vld [vmem:[#allocation2 + $0xcc] sm:$0xff]
      %v5548 = vld [vmem:[#allocation2 + $0xd4] sm:$0xff]
      %v5549 = vld [vmem:[#allocation2 + $0xdc] sm:$0xff]
      %v5550 = vld [vmem:[#allocation2 + $0xe4] sm:$0xff]
      %v5551 = vld [vmem:[#allocation2 + $0xec] sm:$0xff]
      %v5552 = vld [vmem:[#allocation2 + $0xf4] sm:$0xff]
      %v5553 = vld [vmem:[#allocation2 + $0xfc] sm:$0xff]
      %v5554 = vld [vmem:[#allocation2 + $0x104] sm:$0xff]
      %v5555 = vld [vmem:[#allocation2 + $0x10c] sm:$0xff]
      %v5556 = vld [vmem:[#allocation2 + $0x114] sm:$0xff]
      %v5557 = vld [vmem:[#allocation2 + $0x11c] sm:$0xff]
      %v5558 = vld [vmem:[#allocation2 + $0x124] sm:$0xff]
      %v5559 = vld [vmem:[#allocation2 + $0x12c] sm:$0xff]
      %v5560 = vld [vmem:[#allocation2 + $0x134] sm:$0xff]
      %v5561 = vld [vmem:[#allocation2 + $0x13c] sm:$0xff]
      %s5562 = scalar_lea.vmem %s3, 768
      %v5563 = vld [vmem:[%s5562] sm:$0xff]
      %v5564 = vld [vmem:[%s5562 + $0x8] sm:$0xff]
      %v5565 = vld [vmem:[%s5562 + $0x10] sm:$0xff]
      %v5566 = vld [vmem:[%s5562 + $0x18] sm:$0xff]
      %v5567 = vld [vmem:[%s5562 + $0x20] sm:$0xff]
      %v5568 = vld [vmem:[%s5562 + $0x28] sm:$0xff]
      %v5569 = vld [vmem:[%s5562 + $0x30] sm:$0xff]
      %v5570 = vld [vmem:[%s5562 + $0x38] sm:$0xff]
      %v5571 = vld [vmem:[%s5562 + $0x40] sm:$0xff]
      %v5572 = vld [vmem:[%s5562 + $0x48] sm:$0xff]
      %v5573 = vld [vmem:[%s5562 + $0x50] sm:$0xff]
      %v5574 = vld [vmem:[%s5562 + $0x58] sm:$0xff]
      %v5575 = vld [vmem:[%s5562 + $0x60] sm:$0xff]
      %v5576 = vld [vmem:[%s5562 + $0x68] sm:$0xff]
      %v5577 = vld [vmem:[%s5562 + $0x70] sm:$0xff]
      %v5578 = vld [vmem:[%s5562 + $0x78] sm:$0xff]
      %5579 = vmatprep.subr.mxu0 0.0
      %5580 = vmatpush1.msra.mxu0 %v5578
      %5581 = vmatprep.subr.mxu0 0.0
      %5582 = vmatpush1.msra.mxu0 %v5577
      %5583 = vmatprep.subr.mxu0 0.0
      %5584 = vmatpush1.msra.mxu0 %v5576
      %5585 = vmatprep.subr.mxu0 0.0
      %5586 = vmatpush1.msra.mxu0 %v5575
      %5587 = vmatprep.subr.mxu0 0.0
      %5588 = vmatpush1.msra.mxu0 %v5574
      %5589 = vmatprep.subr.mxu0 0.0
      %5590 = vmatpush1.msra.mxu0 %v5573
      %5591 = vmatprep.subr.mxu0 0.0
      %5592 = vmatpush1.msra.mxu0 %v5572
      %5593 = vmatprep.subr.mxu0 0.0
      %5594 = vmatpush1.msra.mxu0 %v5571
      %5595 = vmatprep.subr.mxu0 0.0
      %5596 = vmatpush1.msra.mxu0 %v5570
      %5597 = vmatprep.subr.mxu0 0.0
      %5598 = vmatpush1.msra.mxu0 %v5569
      %5599 = vmatprep.subr.mxu0 0.0
      %5600 = vmatpush1.msra.mxu0 %v5568
      %5601 = vmatprep.subr.mxu0 0.0
      %5602 = vmatpush1.msra.mxu0 %v5567
      %5603 = vmatprep.subr.mxu0 0.0
      %5604 = vmatpush1.msra.mxu0 %v5566
      %5605 = vmatprep.subr.mxu0 0.0
      %5606 = vmatpush1.msra.mxu0 %v5565
      %5607 = vmatprep.subr.mxu0 0.0
      %5608 = vmatpush1.msra.mxu0 %v5564
      %5609 = vmatprep.subr.mxu0 0.0
      %5610 = vmatpush1.msra.mxu0 %v5563
      %5611 = vmatprep.subr.mxu0 0.0
      %5612 = vmatpush2.msra.mxu0 0.0
      %5613 = vmatprep.subr.mxu0 0.0
      %5614 = vmatpush2.msra.mxu0 0.0
      %5615 = vmatprep.subr.mxu0 0.0
      %5616 = vmatpush2.msra.mxu0 0.0
      %5617 = vmatprep.subr.mxu0 0.0
      %5618 = vmatpush2.msra.mxu0 0.0
      %5619 = vmatprep.subr.mxu0 0.0
      %5620 = vmatpush2.msra.mxu0 0.0
      %5621 = vmatprep.subr.mxu0 0.0
      %5622 = vmatpush2.msra.mxu0 0.0
      %5623 = vmatprep.subr.mxu0 0.0
      %5624 = vmatpush2.msra.mxu0 0.0
      %5625 = vmatprep.subr.mxu0 0.0
      %5626 = vmatpush2.msra.mxu0 0.0
      %5627 = vmatprep.subr.mxu0 0.0
      %5628 = vmatpush2.msra.mxu0 0.0
      %5629 = vmatprep.subr.mxu0 0.0
      %5630 = vmatpush2.msra.mxu0 0.0
      %5631 = vmatprep.subr.mxu0 0.0
      %5632 = vmatpush2.msra.mxu0 0.0
      %5633 = vmatprep.subr.mxu0 0.0
      %5634 = vmatpush2.msra.mxu0 0.0
      %5635 = vmatprep.subr.mxu0 0.0
      %5636 = vmatpush2.msra.mxu0 0.0
      %5637 = vmatprep.subr.mxu0 0.0
      %5638 = vmatpush2.msra.mxu0 0.0
      %5639 = vmatprep.subr.mxu0 0.0
      %5640 = vmatpush2.msra.mxu0 0.0
      %5641 = vmatprep.subr.mxu0 0.0
      %5642 = vmatpush2.msra.mxu0 0.0
      %5643 = vmatprep.mubr.f32.mxu0 0.0
      %5644 = vmatmul.mubr.f32.gmra.mxu0 %v5526
      %v5645 = vpop.f32.mrf.mxu0
      %v5646 = vadd.f32 0.0, %v5645
      %v5647 = vpop.f32.mrf.mxu0
      %5648 = vmatprep.mubr.f32.mxu0 0.0
      %5649 = vmatmul.mubr.f32.gmra.mxu0 %v5527
      %v5650 = vpop.f32.mrf.mxu0
      %v5651 = vadd.f32 0.0, %v5650
      %v5652 = vpop.f32.mrf.mxu0
      %5653 = vmatprep.mubr.f32.mxu0 0.0
      %5654 = vmatmul.mubr.f32.gmra.mxu0 %v5528
      %v5655 = vpop.f32.mrf.mxu0
      %v5656 = vadd.f32 0.0, %v5655
      %v5657 = vpop.f32.mrf.mxu0
      %5658 = vmatprep.mubr.f32.mxu0 0.0
      %5659 = vmatmul.mubr.f32.gmra.mxu0 %v5529
      %v5660 = vpop.f32.mrf.mxu0
      %v5661 = vadd.f32 0.0, %v5660
      %v5662 = vpop.f32.mrf.mxu0
      %5663 = vmatprep.mubr.f32.mxu0 0.0
      %5664 = vmatmul.mubr.f32.gmra.mxu0 %v5530
      %v5665 = vpop.f32.mrf.mxu0
      %v5666 = vadd.f32 0.0, %v5665
      %v5667 = vpop.f32.mrf.mxu0
      %5668 = vmatprep.mubr.f32.mxu0 0.0
      %5669 = vmatmul.mubr.f32.gmra.mxu0 %v5531
      %v5670 = vpop.f32.mrf.mxu0
      %v5671 = vadd.f32 0.0, %v5670
      %v5672 = vpop.f32.mrf.mxu0
      %5673 = vmatprep.mubr.f32.mxu0 0.0
      %5674 = vmatmul.mubr.f32.gmra.mxu0 %v5532
      %v5675 = vpop.f32.mrf.mxu0
      %v5676 = vadd.f32 0.0, %v5675
      %v5677 = vpop.f32.mrf.mxu0
      %5678 = vmatprep.mubr.f32.mxu0 0.0
      %5679 = vmatmul.mubr.f32.gmra.mxu0 %v5533
      %v5680 = vpop.f32.mrf.mxu0
      %v5681 = vadd.f32 0.0, %v5680
      %v5682 = vpop.f32.mrf.mxu0
      %5683 = vmatprep.mubr.f32.mxu0 0.0
      %5684 = vmatmul.mubr.f32.gmra.mxu0 %v5534
      %v5685 = vpop.f32.mrf.mxu0
      %v5686 = vadd.f32 0.0, %v5685
      %v5687 = vpop.f32.mrf.mxu0
      %5688 = vmatprep.mubr.f32.mxu0 0.0
      %5689 = vmatmul.mubr.f32.gmra.mxu0 %v5535
      %v5690 = vpop.f32.mrf.mxu0
      %v5691 = vadd.f32 0.0, %v5690
      %v5692 = vpop.f32.mrf.mxu0
      %5693 = vmatprep.mubr.f32.mxu0 0.0
      %5694 = vmatmul.mubr.f32.gmra.mxu0 %v5536
      %v5695 = vpop.f32.mrf.mxu0
      %v5696 = vadd.f32 0.0, %v5695
      %v5697 = vpop.f32.mrf.mxu0
      %5698 = vmatprep.mubr.f32.mxu0 0.0
      %5699 = vmatmul.mubr.f32.gmra.mxu0 %v5537
      %v5700 = vpop.f32.mrf.mxu0
      %v5701 = vadd.f32 0.0, %v5700
      %v5702 = vpop.f32.mrf.mxu0
      %5703 = vmatprep.mubr.f32.mxu0 0.0
      %5704 = vmatmul.mubr.f32.gmra.mxu0 %v5538
      %v5705 = vpop.f32.mrf.mxu0
      %v5706 = vadd.f32 0.0, %v5705
      %v5707 = vpop.f32.mrf.mxu0
      %5708 = vmatprep.mubr.f32.mxu0 0.0
      %5709 = vmatmul.mubr.f32.gmra.mxu0 %v5539
      %v5710 = vpop.f32.mrf.mxu0
      %v5711 = vadd.f32 0.0, %v5710
      %v5712 = vpop.f32.mrf.mxu0
      %5713 = vmatprep.mubr.f32.mxu0 0.0
      %5714 = vmatmul.mubr.f32.gmra.mxu0 %v5540
      %v5715 = vpop.f32.mrf.mxu0
      %v5716 = vadd.f32 0.0, %v5715
      %v5717 = vpop.f32.mrf.mxu0
      %5718 = vmatprep.mubr.f32.mxu0 0.0
      %5719 = vmatmul.mubr.f32.gmra.mxu0 %v5541
      %v5720 = vpop.f32.mrf.mxu0
      %v5721 = vadd.f32 0.0, %v5720
      %v5722 = vpop.f32.mrf.mxu0
      %5723 = vmatprep.mubr.f32.mxu0 0.0
      %5724 = vmatmul.mubr.f32.gmra.mxu0 %v5542
      %v5725 = vpop.f32.mrf.mxu0
      %v5726 = vadd.f32 0.0, %v5725
      %v5727 = vpop.f32.mrf.mxu0
      %5728 = vmatprep.mubr.f32.mxu0 0.0
      %5729 = vmatmul.mubr.f32.gmra.mxu0 %v5543
      %v5730 = vpop.f32.mrf.mxu0
      %v5731 = vadd.f32 0.0, %v5730
      %v5732 = vpop.f32.mrf.mxu0
      %5733 = vmatprep.mubr.f32.mxu0 0.0
      %5734 = vmatmul.mubr.f32.gmra.mxu0 %v5544
      %v5735 = vpop.f32.mrf.mxu0
      %v5736 = vadd.f32 0.0, %v5735
      %v5737 = vpop.f32.mrf.mxu0
      %5738 = vmatprep.mubr.f32.mxu0 0.0
      %5739 = vmatmul.mubr.f32.gmra.mxu0 %v5545
      %v5740 = vpop.f32.mrf.mxu0
      %v5741 = vadd.f32 0.0, %v5740
      %v5742 = vpop.f32.mrf.mxu0
      %5743 = vmatprep.mubr.f32.mxu0 0.0
      %5744 = vmatmul.mubr.f32.gmra.mxu0 %v5546
      %v5745 = vpop.f32.mrf.mxu0
      %v5746 = vadd.f32 0.0, %v5745
      %v5747 = vpop.f32.mrf.mxu0
      %5748 = vmatprep.mubr.f32.mxu0 0.0
      %5749 = vmatmul.mubr.f32.gmra.mxu0 %v5547
      %v5750 = vpop.f32.mrf.mxu0
      %v5751 = vadd.f32 0.0, %v5750
      %v5752 = vpop.f32.mrf.mxu0
      %5753 = vmatprep.mubr.f32.mxu0 0.0
      %5754 = vmatmul.mubr.f32.gmra.mxu0 %v5548
      %v5755 = vpop.f32.mrf.mxu0
      %v5756 = vadd.f32 0.0, %v5755
      %v5757 = vpop.f32.mrf.mxu0
      %5758 = vmatprep.mubr.f32.mxu0 0.0
      %5759 = vmatmul.mubr.f32.gmra.mxu0 %v5549
      %v5760 = vpop.f32.mrf.mxu0
      %v5761 = vadd.f32 0.0, %v5760
      %v5762 = vpop.f32.mrf.mxu0
      %5763 = vmatprep.mubr.f32.mxu0 0.0
      %5764 = vmatmul.mubr.f32.gmra.mxu0 %v5550
      %v5765 = vpop.f32.mrf.mxu0
      %v5766 = vadd.f32 0.0, %v5765
      %v5767 = vpop.f32.mrf.mxu0
      %5768 = vmatprep.mubr.f32.mxu0 0.0
      %5769 = vmatmul.mubr.f32.gmra.mxu0 %v5551
      %v5770 = vpop.f32.mrf.mxu0
      %v5771 = vadd.f32 0.0, %v5770
      %v5772 = vpop.f32.mrf.mxu0
      %5773 = vmatprep.mubr.f32.mxu0 0.0
      %5774 = vmatmul.mubr.f32.gmra.mxu0 %v5552
      %v5775 = vpop.f32.mrf.mxu0
      %v5776 = vadd.f32 0.0, %v5775
      %v5777 = vpop.f32.mrf.mxu0
      %5778 = vmatprep.mubr.f32.mxu0 0.0
      %5779 = vmatmul.mubr.f32.gmra.mxu0 %v5553
      %v5780 = vpop.f32.mrf.mxu0
      %v5781 = vadd.f32 0.0, %v5780
      %v5782 = vpop.f32.mrf.mxu0
      %5783 = vmatprep.mubr.f32.mxu0 0.0
      %5784 = vmatmul.mubr.f32.gmra.mxu0 %v5554
      %v5785 = vpop.f32.mrf.mxu0
      %v5786 = vadd.f32 0.0, %v5785
      %v5787 = vpop.f32.mrf.mxu0
      %5788 = vmatprep.mubr.f32.mxu0 0.0
      %5789 = vmatmul.mubr.f32.gmra.mxu0 %v5555
      %v5790 = vpop.f32.mrf.mxu0
      %v5791 = vadd.f32 0.0, %v5790
      %v5792 = vpop.f32.mrf.mxu0
      %5793 = vmatprep.mubr.f32.mxu0 0.0
      %5794 = vmatmul.mubr.f32.gmra.mxu0 %v5556
      %v5795 = vpop.f32.mrf.mxu0
      %v5796 = vadd.f32 0.0, %v5795
      %v5797 = vpop.f32.mrf.mxu0
      %5798 = vmatprep.mubr.f32.mxu0 0.0
      %5799 = vmatmul.mubr.f32.gmra.mxu0 %v5557
      %v5800 = vpop.f32.mrf.mxu0
      %v5801 = vadd.f32 0.0, %v5800
      %v5802 = vpop.f32.mrf.mxu0
      %5803 = vmatprep.mubr.f32.mxu0 0.0
      %5804 = vmatmul.mubr.f32.gmra.mxu0 %v5558
      %v5805 = vpop.f32.mrf.mxu0
      %v5806 = vadd.f32 0.0, %v5805
      %v5807 = vpop.f32.mrf.mxu0
      %5808 = vmatprep.mubr.f32.mxu0 0.0
      %5809 = vmatmul.mubr.f32.gmra.mxu0 %v5559
      %v5810 = vpop.f32.mrf.mxu0
      %v5811 = vadd.f32 0.0, %v5810
      %v5812 = vpop.f32.mrf.mxu0
      %5813 = vmatprep.mubr.f32.mxu0 0.0
      %5814 = vmatmul.mubr.f32.gmra.mxu0 %v5560
      %v5815 = vpop.f32.mrf.mxu0
      %v5816 = vadd.f32 0.0, %v5815
      %v5817 = vpop.f32.mrf.mxu0
      %5818 = vmatprep.mubr.f32.mxu0 0.0
      %5819 = vmatmul.mubr.f32.gmra.mxu0 %v5561
      %v5820 = vpop.f32.mrf.mxu0
      %v5821 = vadd.f32 0.0, %v5820
      %v5822 = vpop.f32.mrf.mxu0
      %5823 = vdwg.mxu0
      %v5824 = vadd.f32 %v5490, %v5646
      %v5825 = vadd.f32 %v5491, %v5651
      %v5826 = vadd.f32 %v5492, %v5656
      %v5827 = vadd.f32 %v5493, %v5661
      %v5828 = vadd.f32 %v5494, %v5666
      %v5829 = vadd.f32 %v5495, %v5671
      %v5830 = vadd.f32 %v5496, %v5676
      %v5831 = vadd.f32 %v5497, %v5681
      %v5832 = vadd.f32 %v5498, %v5686
      %v5833 = vadd.f32 %v5499, %v5691
      %v5834 = vadd.f32 %v5500, %v5696
      %v5835 = vadd.f32 %v5501, %v5701
      %v5836 = vadd.f32 %v5502, %v5706
      %v5837 = vadd.f32 %v5503, %v5711
      %v5838 = vadd.f32 %v5504, %v5716
      %v5839 = vadd.f32 %v5505, %v5721
      %v5840 = vadd.f32 %v5506, %v5726
      %v5841 = vadd.f32 %v5507, %v5731
      %v5842 = vadd.f32 %v5508, %v5736
      %v5843 = vadd.f32 %v5509, %v5741
      %v5844 = vadd.f32 %v5510, %v5746
      %v5845 = vadd.f32 %v5511, %v5751
      %v5846 = vadd.f32 %v5512, %v5756
      %v5847 = vadd.f32 %v5513, %v5761
      %v5848 = vadd.f32 %v5514, %v5766
      %v5849 = vadd.f32 %v5515, %v5771
      %v5850 = vadd.f32 %v5516, %v5776
      %v5851 = vadd.f32 %v5517, %v5781
      %v5852 = vadd.f32 %v5518, %v5786
      %v5853 = vadd.f32 %v5519, %v5791
      %v5854 = vadd.f32 %v5520, %v5796
      %v5855 = vadd.f32 %v5521, %v5801
      %v5856 = vadd.f32 %v5522, %v5806
      %v5857 = vadd.f32 %v5523, %v5811
      %v5858 = vadd.f32 %v5524, %v5816
      %v5859 = vadd.f32 %v5525, %v5821
      %v5860 = vld [vmem:[#allocation2 + $0x25] sm:$0xff]
      %v5861 = vld [vmem:[#allocation2 + $0x2d] sm:$0xff]
      %v5862 = vld [vmem:[#allocation2 + $0x35] sm:$0xff]
      %v5863 = vld [vmem:[#allocation2 + $0x3d] sm:$0xff]
      %v5864 = vld [vmem:[#allocation2 + $0x45] sm:$0xff]
      %v5865 = vld [vmem:[#allocation2 + $0x4d] sm:$0xff]
      %v5866 = vld [vmem:[#allocation2 + $0x55] sm:$0xff]
      %v5867 = vld [vmem:[#allocation2 + $0x5d] sm:$0xff]
      %v5868 = vld [vmem:[#allocation2 + $0x65] sm:$0xff]
      %v5869 = vld [vmem:[#allocation2 + $0x6d] sm:$0xff]
      %v5870 = vld [vmem:[#allocation2 + $0x75] sm:$0xff]
      %v5871 = vld [vmem:[#allocation2 + $0x7d] sm:$0xff]
      %v5872 = vld [vmem:[#allocation2 + $0x85] sm:$0xff]
      %v5873 = vld [vmem:[#allocation2 + $0x8d] sm:$0xff]
      %v5874 = vld [vmem:[#allocation2 + $0x95] sm:$0xff]
      %v5875 = vld [vmem:[#allocation2 + $0x9d] sm:$0xff]
      %v5876 = vld [vmem:[#allocation2 + $0xa5] sm:$0xff]
      %v5877 = vld [vmem:[#allocation2 + $0xad] sm:$0xff]
      %v5878 = vld [vmem:[#allocation2 + $0xb5] sm:$0xff]
      %v5879 = vld [vmem:[#allocation2 + $0xbd] sm:$0xff]
      %v5880 = vld [vmem:[#allocation2 + $0xc5] sm:$0xff]
      %v5881 = vld [vmem:[#allocation2 + $0xcd] sm:$0xff]
      %v5882 = vld [vmem:[#allocation2 + $0xd5] sm:$0xff]
      %v5883 = vld [vmem:[#allocation2 + $0xdd] sm:$0xff]
      %v5884 = vld [vmem:[#allocation2 + $0xe5] sm:$0xff]
      %v5885 = vld [vmem:[#allocation2 + $0xed] sm:$0xff]
      %v5886 = vld [vmem:[#allocation2 + $0xf5] sm:$0xff]
      %v5887 = vld [vmem:[#allocation2 + $0xfd] sm:$0xff]
      %v5888 = vld [vmem:[#allocation2 + $0x105] sm:$0xff]
      %v5889 = vld [vmem:[#allocation2 + $0x10d] sm:$0xff]
      %v5890 = vld [vmem:[#allocation2 + $0x115] sm:$0xff]
      %v5891 = vld [vmem:[#allocation2 + $0x11d] sm:$0xff]
      %v5892 = vld [vmem:[#allocation2 + $0x125] sm:$0xff]
      %v5893 = vld [vmem:[#allocation2 + $0x12d] sm:$0xff]
      %v5894 = vld [vmem:[#allocation2 + $0x135] sm:$0xff]
      %v5895 = vld [vmem:[#allocation2 + $0x13d] sm:$0xff]
      %s5896 = scalar_lea.vmem %s3, 896
      %v5897 = vld [vmem:[%s5896] sm:$0xff]
      %v5898 = vld [vmem:[%s5896 + $0x8] sm:$0xff]
      %v5899 = vld [vmem:[%s5896 + $0x10] sm:$0xff]
      %v5900 = vld [vmem:[%s5896 + $0x18] sm:$0xff]
      %v5901 = vld [vmem:[%s5896 + $0x20] sm:$0xff]
      %v5902 = vld [vmem:[%s5896 + $0x28] sm:$0xff]
      %v5903 = vld [vmem:[%s5896 + $0x30] sm:$0xff]
      %v5904 = vld [vmem:[%s5896 + $0x38] sm:$0xff]
      %v5905 = vld [vmem:[%s5896 + $0x40] sm:$0xff]
      %v5906 = vld [vmem:[%s5896 + $0x48] sm:$0xff]
      %v5907 = vld [vmem:[%s5896 + $0x50] sm:$0xff]
      %v5908 = vld [vmem:[%s5896 + $0x58] sm:$0xff]
      %v5909 = vld [vmem:[%s5896 + $0x60] sm:$0xff]
      %v5910 = vld [vmem:[%s5896 + $0x68] sm:$0xff]
      %v5911 = vld [vmem:[%s5896 + $0x70] sm:$0xff]
      %v5912 = vld [vmem:[%s5896 + $0x78] sm:$0xff]
      %5913 = vmatprep.subr.mxu0 0.0
      %5914 = vmatpush1.msra.mxu0 %v5912
      %5915 = vmatprep.subr.mxu0 0.0
      %5916 = vmatpush1.msra.mxu0 %v5911
      %5917 = vmatprep.subr.mxu0 0.0
      %5918 = vmatpush1.msra.mxu0 %v5910
      %5919 = vmatprep.subr.mxu0 0.0
      %5920 = vmatpush1.msra.mxu0 %v5909
      %5921 = vmatprep.subr.mxu0 0.0
      %5922 = vmatpush1.msra.mxu0 %v5908
      %5923 = vmatprep.subr.mxu0 0.0
      %5924 = vmatpush1.msra.mxu0 %v5907
      %5925 = vmatprep.subr.mxu0 0.0
      %5926 = vmatpush1.msra.mxu0 %v5906
      %5927 = vmatprep.subr.mxu0 0.0
      %5928 = vmatpush1.msra.mxu0 %v5905
      %5929 = vmatprep.subr.mxu0 0.0
      %5930 = vmatpush1.msra.mxu0 %v5904
      %5931 = vmatprep.subr.mxu0 0.0
      %5932 = vmatpush1.msra.mxu0 %v5903
      %5933 = vmatprep.subr.mxu0 0.0
      %5934 = vmatpush1.msra.mxu0 %v5902
      %5935 = vmatprep.subr.mxu0 0.0
      %5936 = vmatpush1.msra.mxu0 %v5901
      %5937 = vmatprep.subr.mxu0 0.0
      %5938 = vmatpush1.msra.mxu0 %v5900
      %5939 = vmatprep.subr.mxu0 0.0
      %5940 = vmatpush1.msra.mxu0 %v5899
      %5941 = vmatprep.subr.mxu0 0.0
      %5942 = vmatpush1.msra.mxu0 %v5898
      %5943 = vmatprep.subr.mxu0 0.0
      %5944 = vmatpush1.msra.mxu0 %v5897
      %5945 = vmatprep.subr.mxu0 0.0
      %5946 = vmatpush2.msra.mxu0 0.0
      %5947 = vmatprep.subr.mxu0 0.0
      %5948 = vmatpush2.msra.mxu0 0.0
      %5949 = vmatprep.subr.mxu0 0.0
      %5950 = vmatpush2.msra.mxu0 0.0
      %5951 = vmatprep.subr.mxu0 0.0
      %5952 = vmatpush2.msra.mxu0 0.0
      %5953 = vmatprep.subr.mxu0 0.0
      %5954 = vmatpush2.msra.mxu0 0.0
      %5955 = vmatprep.subr.mxu0 0.0
      %5956 = vmatpush2.msra.mxu0 0.0
      %5957 = vmatprep.subr.mxu0 0.0
      %5958 = vmatpush2.msra.mxu0 0.0
      %5959 = vmatprep.subr.mxu0 0.0
      %5960 = vmatpush2.msra.mxu0 0.0
      %5961 = vmatprep.subr.mxu0 0.0
      %5962 = vmatpush2.msra.mxu0 0.0
      %5963 = vmatprep.subr.mxu0 0.0
      %5964 = vmatpush2.msra.mxu0 0.0
      %5965 = vmatprep.subr.mxu0 0.0
      %5966 = vmatpush2.msra.mxu0 0.0
      %5967 = vmatprep.subr.mxu0 0.0
      %5968 = vmatpush2.msra.mxu0 0.0
      %5969 = vmatprep.subr.mxu0 0.0
      %5970 = vmatpush2.msra.mxu0 0.0
      %5971 = vmatprep.subr.mxu0 0.0
      %5972 = vmatpush2.msra.mxu0 0.0
      %5973 = vmatprep.subr.mxu0 0.0
      %5974 = vmatpush2.msra.mxu0 0.0
      %5975 = vmatprep.subr.mxu0 0.0
      %5976 = vmatpush2.msra.mxu0 0.0
      %5977 = vmatprep.mubr.f32.mxu0 0.0
      %5978 = vmatmul.mubr.f32.gmra.mxu0 %v5860
      %v5979 = vpop.f32.mrf.mxu0
      %v5980 = vadd.f32 0.0, %v5979
      %v5981 = vpop.f32.mrf.mxu0
      %5982 = vmatprep.mubr.f32.mxu0 0.0
      %5983 = vmatmul.mubr.f32.gmra.mxu0 %v5861
      %v5984 = vpop.f32.mrf.mxu0
      %v5985 = vadd.f32 0.0, %v5984
      %v5986 = vpop.f32.mrf.mxu0
      %5987 = vmatprep.mubr.f32.mxu0 0.0
      %5988 = vmatmul.mubr.f32.gmra.mxu0 %v5862
      %v5989 = vpop.f32.mrf.mxu0
      %v5990 = vadd.f32 0.0, %v5989
      %v5991 = vpop.f32.mrf.mxu0
      %5992 = vmatprep.mubr.f32.mxu0 0.0
      %5993 = vmatmul.mubr.f32.gmra.mxu0 %v5863
      %v5994 = vpop.f32.mrf.mxu0
      %v5995 = vadd.f32 0.0, %v5994
      %v5996 = vpop.f32.mrf.mxu0
      %5997 = vmatprep.mubr.f32.mxu0 0.0
      %5998 = vmatmul.mubr.f32.gmra.mxu0 %v5864
      %v5999 = vpop.f32.mrf.mxu0
      %v6000 = vadd.f32 0.0, %v5999
      %v6001 = vpop.f32.mrf.mxu0
      %6002 = vmatprep.mubr.f32.mxu0 0.0
      %6003 = vmatmul.mubr.f32.gmra.mxu0 %v5865
      %v6004 = vpop.f32.mrf.mxu0
      %v6005 = vadd.f32 0.0, %v6004
      %v6006 = vpop.f32.mrf.mxu0
      %6007 = vmatprep.mubr.f32.mxu0 0.0
      %6008 = vmatmul.mubr.f32.gmra.mxu0 %v5866
      %v6009 = vpop.f32.mrf.mxu0
      %v6010 = vadd.f32 0.0, %v6009
      %v6011 = vpop.f32.mrf.mxu0
      %6012 = vmatprep.mubr.f32.mxu0 0.0
      %6013 = vmatmul.mubr.f32.gmra.mxu0 %v5867
      %v6014 = vpop.f32.mrf.mxu0
      %v6015 = vadd.f32 0.0, %v6014
      %v6016 = vpop.f32.mrf.mxu0
      %6017 = vmatprep.mubr.f32.mxu0 0.0
      %6018 = vmatmul.mubr.f32.gmra.mxu0 %v5868
      %v6019 = vpop.f32.mrf.mxu0
      %v6020 = vadd.f32 0.0, %v6019
      %v6021 = vpop.f32.mrf.mxu0
      %6022 = vmatprep.mubr.f32.mxu0 0.0
      %6023 = vmatmul.mubr.f32.gmra.mxu0 %v5869
      %v6024 = vpop.f32.mrf.mxu0
      %v6025 = vadd.f32 0.0, %v6024
      %v6026 = vpop.f32.mrf.mxu0
      %6027 = vmatprep.mubr.f32.mxu0 0.0
      %6028 = vmatmul.mubr.f32.gmra.mxu0 %v5870
      %v6029 = vpop.f32.mrf.mxu0
      %v6030 = vadd.f32 0.0, %v6029
      %v6031 = vpop.f32.mrf.mxu0
      %6032 = vmatprep.mubr.f32.mxu0 0.0
      %6033 = vmatmul.mubr.f32.gmra.mxu0 %v5871
      %v6034 = vpop.f32.mrf.mxu0
      %v6035 = vadd.f32 0.0, %v6034
      %v6036 = vpop.f32.mrf.mxu0
      %6037 = vmatprep.mubr.f32.mxu0 0.0
      %6038 = vmatmul.mubr.f32.gmra.mxu0 %v5872
      %v6039 = vpop.f32.mrf.mxu0
      %v6040 = vadd.f32 0.0, %v6039
      %v6041 = vpop.f32.mrf.mxu0
      %6042 = vmatprep.mubr.f32.mxu0 0.0
      %6043 = vmatmul.mubr.f32.gmra.mxu0 %v5873
      %v6044 = vpop.f32.mrf.mxu0
      %v6045 = vadd.f32 0.0, %v6044
      %v6046 = vpop.f32.mrf.mxu0
      %6047 = vmatprep.mubr.f32.mxu0 0.0
      %6048 = vmatmul.mubr.f32.gmra.mxu0 %v5874
      %v6049 = vpop.f32.mrf.mxu0
      %v6050 = vadd.f32 0.0, %v6049
      %v6051 = vpop.f32.mrf.mxu0
      %6052 = vmatprep.mubr.f32.mxu0 0.0
      %6053 = vmatmul.mubr.f32.gmra.mxu0 %v5875
      %v6054 = vpop.f32.mrf.mxu0
      %v6055 = vadd.f32 0.0, %v6054
      %v6056 = vpop.f32.mrf.mxu0
      %6057 = vmatprep.mubr.f32.mxu0 0.0
      %6058 = vmatmul.mubr.f32.gmra.mxu0 %v5876
      %v6059 = vpop.f32.mrf.mxu0
      %v6060 = vadd.f32 0.0, %v6059
      %v6061 = vpop.f32.mrf.mxu0
      %6062 = vmatprep.mubr.f32.mxu0 0.0
      %6063 = vmatmul.mubr.f32.gmra.mxu0 %v5877
      %v6064 = vpop.f32.mrf.mxu0
      %v6065 = vadd.f32 0.0, %v6064
      %v6066 = vpop.f32.mrf.mxu0
      %6067 = vmatprep.mubr.f32.mxu0 0.0
      %6068 = vmatmul.mubr.f32.gmra.mxu0 %v5878
      %v6069 = vpop.f32.mrf.mxu0
      %v6070 = vadd.f32 0.0, %v6069
      %v6071 = vpop.f32.mrf.mxu0
      %6072 = vmatprep.mubr.f32.mxu0 0.0
      %6073 = vmatmul.mubr.f32.gmra.mxu0 %v5879
      %v6074 = vpop.f32.mrf.mxu0
      %v6075 = vadd.f32 0.0, %v6074
      %v6076 = vpop.f32.mrf.mxu0
      %6077 = vmatprep.mubr.f32.mxu0 0.0
      %6078 = vmatmul.mubr.f32.gmra.mxu0 %v5880
      %v6079 = vpop.f32.mrf.mxu0
      %v6080 = vadd.f32 0.0, %v6079
      %v6081 = vpop.f32.mrf.mxu0
      %6082 = vmatprep.mubr.f32.mxu0 0.0
      %6083 = vmatmul.mubr.f32.gmra.mxu0 %v5881
      %v6084 = vpop.f32.mrf.mxu0
      %v6085 = vadd.f32 0.0, %v6084
      %v6086 = vpop.f32.mrf.mxu0
      %6087 = vmatprep.mubr.f32.mxu0 0.0
      %6088 = vmatmul.mubr.f32.gmra.mxu0 %v5882
      %v6089 = vpop.f32.mrf.mxu0
      %v6090 = vadd.f32 0.0, %v6089
      %v6091 = vpop.f32.mrf.mxu0
      %6092 = vmatprep.mubr.f32.mxu0 0.0
      %6093 = vmatmul.mubr.f32.gmra.mxu0 %v5883
      %v6094 = vpop.f32.mrf.mxu0
      %v6095 = vadd.f32 0.0, %v6094
      %v6096 = vpop.f32.mrf.mxu0
      %6097 = vmatprep.mubr.f32.mxu0 0.0
      %6098 = vmatmul.mubr.f32.gmra.mxu0 %v5884
      %v6099 = vpop.f32.mrf.mxu0
      %v6100 = vadd.f32 0.0, %v6099
      %v6101 = vpop.f32.mrf.mxu0
      %6102 = vmatprep.mubr.f32.mxu0 0.0
      %6103 = vmatmul.mubr.f32.gmra.mxu0 %v5885
      %v6104 = vpop.f32.mrf.mxu0
      %v6105 = vadd.f32 0.0, %v6104
      %v6106 = vpop.f32.mrf.mxu0
      %6107 = vmatprep.mubr.f32.mxu0 0.0
      %6108 = vmatmul.mubr.f32.gmra.mxu0 %v5886
      %v6109 = vpop.f32.mrf.mxu0
      %v6110 = vadd.f32 0.0, %v6109
      %v6111 = vpop.f32.mrf.mxu0
      %6112 = vmatprep.mubr.f32.mxu0 0.0
      %6113 = vmatmul.mubr.f32.gmra.mxu0 %v5887
      %v6114 = vpop.f32.mrf.mxu0
      %v6115 = vadd.f32 0.0, %v6114
      %v6116 = vpop.f32.mrf.mxu0
      %6117 = vmatprep.mubr.f32.mxu0 0.0
      %6118 = vmatmul.mubr.f32.gmra.mxu0 %v5888
      %v6119 = vpop.f32.mrf.mxu0
      %v6120 = vadd.f32 0.0, %v6119
      %v6121 = vpop.f32.mrf.mxu0
      %6122 = vmatprep.mubr.f32.mxu0 0.0
      %6123 = vmatmul.mubr.f32.gmra.mxu0 %v5889
      %v6124 = vpop.f32.mrf.mxu0
      %v6125 = vadd.f32 0.0, %v6124
      %v6126 = vpop.f32.mrf.mxu0
      %6127 = vmatprep.mubr.f32.mxu0 0.0
      %6128 = vmatmul.mubr.f32.gmra.mxu0 %v5890
      %v6129 = vpop.f32.mrf.mxu0
      %v6130 = vadd.f32 0.0, %v6129
      %v6131 = vpop.f32.mrf.mxu0
      %6132 = vmatprep.mubr.f32.mxu0 0.0
      %6133 = vmatmul.mubr.f32.gmra.mxu0 %v5891
      %v6134 = vpop.f32.mrf.mxu0
      %v6135 = vadd.f32 0.0, %v6134
      %v6136 = vpop.f32.mrf.mxu0
      %6137 = vmatprep.mubr.f32.mxu0 0.0
      %6138 = vmatmul.mubr.f32.gmra.mxu0 %v5892
      %v6139 = vpop.f32.mrf.mxu0
      %v6140 = vadd.f32 0.0, %v6139
      %v6141 = vpop.f32.mrf.mxu0
      %6142 = vmatprep.mubr.f32.mxu0 0.0
      %6143 = vmatmul.mubr.f32.gmra.mxu0 %v5893
      %v6144 = vpop.f32.mrf.mxu0
      %v6145 = vadd.f32 0.0, %v6144
      %v6146 = vpop.f32.mrf.mxu0
      %6147 = vmatprep.mubr.f32.mxu0 0.0
      %6148 = vmatmul.mubr.f32.gmra.mxu0 %v5894
      %v6149 = vpop.f32.mrf.mxu0
      %v6150 = vadd.f32 0.0, %v6149
      %v6151 = vpop.f32.mrf.mxu0
      %6152 = vmatprep.mubr.f32.mxu0 0.0
      %6153 = vmatmul.mubr.f32.gmra.mxu0 %v5895
      %v6154 = vpop.f32.mrf.mxu0
      %v6155 = vadd.f32 0.0, %v6154
      %v6156 = vpop.f32.mrf.mxu0
      %6157 = vdwg.mxu0
      %v6158 = vadd.f32 %v5824, %v5980
      %v6159 = vadd.f32 %v5825, %v5985
      %v6160 = vadd.f32 %v5826, %v5990
      %v6161 = vadd.f32 %v5827, %v5995
      %v6162 = vadd.f32 %v5828, %v6000
      %v6163 = vadd.f32 %v5829, %v6005
      %v6164 = vadd.f32 %v5830, %v6010
      %v6165 = vadd.f32 %v5831, %v6015
      %v6166 = vadd.f32 %v5832, %v6020
      %v6167 = vadd.f32 %v5833, %v6025
      %v6168 = vadd.f32 %v5834, %v6030
      %v6169 = vadd.f32 %v5835, %v6035
      %v6170 = vadd.f32 %v5836, %v6040
      %v6171 = vadd.f32 %v5837, %v6045
      %v6172 = vadd.f32 %v5838, %v6050
      %v6173 = vadd.f32 %v5839, %v6055
      %v6174 = vadd.f32 %v5840, %v6060
      %v6175 = vadd.f32 %v5841, %v6065
      %v6176 = vadd.f32 %v5842, %v6070
      %v6177 = vadd.f32 %v5843, %v6075
      %v6178 = vadd.f32 %v5844, %v6080
      %v6179 = vadd.f32 %v5845, %v6085
      %v6180 = vadd.f32 %v5846, %v6090
      %v6181 = vadd.f32 %v5847, %v6095
      %v6182 = vadd.f32 %v5848, %v6100
      %v6183 = vadd.f32 %v5849, %v6105
      %v6184 = vadd.f32 %v5850, %v6110
      %v6185 = vadd.f32 %v5851, %v6115
      %v6186 = vadd.f32 %v5852, %v6120
      %v6187 = vadd.f32 %v5853, %v6125
      %v6188 = vadd.f32 %v5854, %v6130
      %v6189 = vadd.f32 %v5855, %v6135
      %v6190 = vadd.f32 %v5856, %v6140
      %v6191 = vadd.f32 %v5857, %v6145
      %v6192 = vadd.f32 %v5858, %v6150
      %v6193 = vadd.f32 %v5859, %v6155
      %v6194 = vld [vmem:[#allocation2 + $0x26] sm:$0xff]
      %v6195 = vld [vmem:[#allocation2 + $0x2e] sm:$0xff]
      %v6196 = vld [vmem:[#allocation2 + $0x36] sm:$0xff]
      %v6197 = vld [vmem:[#allocation2 + $0x3e] sm:$0xff]
      %v6198 = vld [vmem:[#allocation2 + $0x46] sm:$0xff]
      %v6199 = vld [vmem:[#allocation2 + $0x4e] sm:$0xff]
      %v6200 = vld [vmem:[#allocation2 + $0x56] sm:$0xff]
      %v6201 = vld [vmem:[#allocation2 + $0x5e] sm:$0xff]
      %v6202 = vld [vmem:[#allocation2 + $0x66] sm:$0xff]
      %v6203 = vld [vmem:[#allocation2 + $0x6e] sm:$0xff]
      %v6204 = vld [vmem:[#allocation2 + $0x76] sm:$0xff]
      %v6205 = vld [vmem:[#allocation2 + $0x7e] sm:$0xff]
      %v6206 = vld [vmem:[#allocation2 + $0x86] sm:$0xff]
      %v6207 = vld [vmem:[#allocation2 + $0x8e] sm:$0xff]
      %v6208 = vld [vmem:[#allocation2 + $0x96] sm:$0xff]
      %v6209 = vld [vmem:[#allocation2 + $0x9e] sm:$0xff]
      %v6210 = vld [vmem:[#allocation2 + $0xa6] sm:$0xff]
      %v6211 = vld [vmem:[#allocation2 + $0xae] sm:$0xff]
      %v6212 = vld [vmem:[#allocation2 + $0xb6] sm:$0xff]
      %v6213 = vld [vmem:[#allocation2 + $0xbe] sm:$0xff]
      %v6214 = vld [vmem:[#allocation2 + $0xc6] sm:$0xff]
      %v6215 = vld [vmem:[#allocation2 + $0xce] sm:$0xff]
      %v6216 = vld [vmem:[#allocation2 + $0xd6] sm:$0xff]
      %v6217 = vld [vmem:[#allocation2 + $0xde] sm:$0xff]
      %v6218 = vld [vmem:[#allocation2 + $0xe6] sm:$0xff]
      %v6219 = vld [vmem:[#allocation2 + $0xee] sm:$0xff]
      %v6220 = vld [vmem:[#allocation2 + $0xf6] sm:$0xff]
      %v6221 = vld [vmem:[#allocation2 + $0xfe] sm:$0xff]
      %v6222 = vld [vmem:[#allocation2 + $0x106] sm:$0xff]
      %v6223 = vld [vmem:[#allocation2 + $0x10e] sm:$0xff]
      %v6224 = vld [vmem:[#allocation2 + $0x116] sm:$0xff]
      %v6225 = vld [vmem:[#allocation2 + $0x11e] sm:$0xff]
      %v6226 = vld [vmem:[#allocation2 + $0x126] sm:$0xff]
      %v6227 = vld [vmem:[#allocation2 + $0x12e] sm:$0xff]
      %v6228 = vld [vmem:[#allocation2 + $0x136] sm:$0xff]
      %v6229 = vld [vmem:[#allocation2 + $0x13e] sm:$0xff]
      %s6230 = scalar_lea.vmem %s3, 1024
      %v6231 = vld [vmem:[%s6230] sm:$0xff]
      %v6232 = vld [vmem:[%s6230 + $0x8] sm:$0xff]
      %v6233 = vld [vmem:[%s6230 + $0x10] sm:$0xff]
      %v6234 = vld [vmem:[%s6230 + $0x18] sm:$0xff]
      %v6235 = vld [vmem:[%s6230 + $0x20] sm:$0xff]
      %v6236 = vld [vmem:[%s6230 + $0x28] sm:$0xff]
      %v6237 = vld [vmem:[%s6230 + $0x30] sm:$0xff]
      %v6238 = vld [vmem:[%s6230 + $0x38] sm:$0xff]
      %v6239 = vld [vmem:[%s6230 + $0x40] sm:$0xff]
      %v6240 = vld [vmem:[%s6230 + $0x48] sm:$0xff]
      %v6241 = vld [vmem:[%s6230 + $0x50] sm:$0xff]
      %v6242 = vld [vmem:[%s6230 + $0x58] sm:$0xff]
      %v6243 = vld [vmem:[%s6230 + $0x60] sm:$0xff]
      %v6244 = vld [vmem:[%s6230 + $0x68] sm:$0xff]
      %v6245 = vld [vmem:[%s6230 + $0x70] sm:$0xff]
      %v6246 = vld [vmem:[%s6230 + $0x78] sm:$0xff]
      %6247 = vmatprep.subr.mxu0 0.0
      %6248 = vmatpush1.msra.mxu0 %v6246
      %6249 = vmatprep.subr.mxu0 0.0
      %6250 = vmatpush1.msra.mxu0 %v6245
      %6251 = vmatprep.subr.mxu0 0.0
      %6252 = vmatpush1.msra.mxu0 %v6244
      %6253 = vmatprep.subr.mxu0 0.0
      %6254 = vmatpush1.msra.mxu0 %v6243
      %6255 = vmatprep.subr.mxu0 0.0
      %6256 = vmatpush1.msra.mxu0 %v6242
      %6257 = vmatprep.subr.mxu0 0.0
      %6258 = vmatpush1.msra.mxu0 %v6241
      %6259 = vmatprep.subr.mxu0 0.0
      %6260 = vmatpush1.msra.mxu0 %v6240
      %6261 = vmatprep.subr.mxu0 0.0
      %6262 = vmatpush1.msra.mxu0 %v6239
      %6263 = vmatprep.subr.mxu0 0.0
      %6264 = vmatpush1.msra.mxu0 %v6238
      %6265 = vmatprep.subr.mxu0 0.0
      %6266 = vmatpush1.msra.mxu0 %v6237
      %6267 = vmatprep.subr.mxu0 0.0
      %6268 = vmatpush1.msra.mxu0 %v6236
      %6269 = vmatprep.subr.mxu0 0.0
      %6270 = vmatpush1.msra.mxu0 %v6235
      %6271 = vmatprep.subr.mxu0 0.0
      %6272 = vmatpush1.msra.mxu0 %v6234
      %6273 = vmatprep.subr.mxu0 0.0
      %6274 = vmatpush1.msra.mxu0 %v6233
      %6275 = vmatprep.subr.mxu0 0.0
      %6276 = vmatpush1.msra.mxu0 %v6232
      %6277 = vmatprep.subr.mxu0 0.0
      %6278 = vmatpush1.msra.mxu0 %v6231
      %6279 = vmatprep.subr.mxu0 0.0
      %6280 = vmatpush2.msra.mxu0 0.0
      %6281 = vmatprep.subr.mxu0 0.0
      %6282 = vmatpush2.msra.mxu0 0.0
      %6283 = vmatprep.subr.mxu0 0.0
      %6284 = vmatpush2.msra.mxu0 0.0
      %6285 = vmatprep.subr.mxu0 0.0
      %6286 = vmatpush2.msra.mxu0 0.0
      %6287 = vmatprep.subr.mxu0 0.0
      %6288 = vmatpush2.msra.mxu0 0.0
      %6289 = vmatprep.subr.mxu0 0.0
      %6290 = vmatpush2.msra.mxu0 0.0
      %6291 = vmatprep.subr.mxu0 0.0
      %6292 = vmatpush2.msra.mxu0 0.0
      %6293 = vmatprep.subr.mxu0 0.0
      %6294 = vmatpush2.msra.mxu0 0.0
      %6295 = vmatprep.subr.mxu0 0.0
      %6296 = vmatpush2.msra.mxu0 0.0
      %6297 = vmatprep.subr.mxu0 0.0
      %6298 = vmatpush2.msra.mxu0 0.0
      %6299 = vmatprep.subr.mxu0 0.0
      %6300 = vmatpush2.msra.mxu0 0.0
      %6301 = vmatprep.subr.mxu0 0.0
      %6302 = vmatpush2.msra.mxu0 0.0
      %6303 = vmatprep.subr.mxu0 0.0
      %6304 = vmatpush2.msra.mxu0 0.0
      %6305 = vmatprep.subr.mxu0 0.0
      %6306 = vmatpush2.msra.mxu0 0.0
      %6307 = vmatprep.subr.mxu0 0.0
      %6308 = vmatpush2.msra.mxu0 0.0
      %6309 = vmatprep.subr.mxu0 0.0
      %6310 = vmatpush2.msra.mxu0 0.0
      %6311 = vmatprep.mubr.f32.mxu0 0.0
      %6312 = vmatmul.mubr.f32.gmra.mxu0 %v6194
      %v6313 = vpop.f32.mrf.mxu0
      %v6314 = vadd.f32 0.0, %v6313
      %v6315 = vpop.f32.mrf.mxu0
      %6316 = vmatprep.mubr.f32.mxu0 0.0
      %6317 = vmatmul.mubr.f32.gmra.mxu0 %v6195
      %v6318 = vpop.f32.mrf.mxu0
      %v6319 = vadd.f32 0.0, %v6318
      %v6320 = vpop.f32.mrf.mxu0
      %6321 = vmatprep.mubr.f32.mxu0 0.0
      %6322 = vmatmul.mubr.f32.gmra.mxu0 %v6196
      %v6323 = vpop.f32.mrf.mxu0
      %v6324 = vadd.f32 0.0, %v6323
      %v6325 = vpop.f32.mrf.mxu0
      %6326 = vmatprep.mubr.f32.mxu0 0.0
      %6327 = vmatmul.mubr.f32.gmra.mxu0 %v6197
      %v6328 = vpop.f32.mrf.mxu0
      %v6329 = vadd.f32 0.0, %v6328
      %v6330 = vpop.f32.mrf.mxu0
      %6331 = vmatprep.mubr.f32.mxu0 0.0
      %6332 = vmatmul.mubr.f32.gmra.mxu0 %v6198
      %v6333 = vpop.f32.mrf.mxu0
      %v6334 = vadd.f32 0.0, %v6333
      %v6335 = vpop.f32.mrf.mxu0
      %6336 = vmatprep.mubr.f32.mxu0 0.0
      %6337 = vmatmul.mubr.f32.gmra.mxu0 %v6199
      %v6338 = vpop.f32.mrf.mxu0
      %v6339 = vadd.f32 0.0, %v6338
      %v6340 = vpop.f32.mrf.mxu0
      %6341 = vmatprep.mubr.f32.mxu0 0.0
      %6342 = vmatmul.mubr.f32.gmra.mxu0 %v6200
      %v6343 = vpop.f32.mrf.mxu0
      %v6344 = vadd.f32 0.0, %v6343
      %v6345 = vpop.f32.mrf.mxu0
      %6346 = vmatprep.mubr.f32.mxu0 0.0
      %6347 = vmatmul.mubr.f32.gmra.mxu0 %v6201
      %v6348 = vpop.f32.mrf.mxu0
      %v6349 = vadd.f32 0.0, %v6348
      %v6350 = vpop.f32.mrf.mxu0
      %6351 = vmatprep.mubr.f32.mxu0 0.0
      %6352 = vmatmul.mubr.f32.gmra.mxu0 %v6202
      %v6353 = vpop.f32.mrf.mxu0
      %v6354 = vadd.f32 0.0, %v6353
      %v6355 = vpop.f32.mrf.mxu0
      %6356 = vmatprep.mubr.f32.mxu0 0.0
      %6357 = vmatmul.mubr.f32.gmra.mxu0 %v6203
      %v6358 = vpop.f32.mrf.mxu0
      %v6359 = vadd.f32 0.0, %v6358
      %v6360 = vpop.f32.mrf.mxu0
      %6361 = vmatprep.mubr.f32.mxu0 0.0
      %6362 = vmatmul.mubr.f32.gmra.mxu0 %v6204
      %v6363 = vpop.f32.mrf.mxu0
      %v6364 = vadd.f32 0.0, %v6363
      %v6365 = vpop.f32.mrf.mxu0
      %6366 = vmatprep.mubr.f32.mxu0 0.0
      %6367 = vmatmul.mubr.f32.gmra.mxu0 %v6205
      %v6368 = vpop.f32.mrf.mxu0
      %v6369 = vadd.f32 0.0, %v6368
      %v6370 = vpop.f32.mrf.mxu0
      %6371 = vmatprep.mubr.f32.mxu0 0.0
      %6372 = vmatmul.mubr.f32.gmra.mxu0 %v6206
      %v6373 = vpop.f32.mrf.mxu0
      %v6374 = vadd.f32 0.0, %v6373
      %v6375 = vpop.f32.mrf.mxu0
      %6376 = vmatprep.mubr.f32.mxu0 0.0
      %6377 = vmatmul.mubr.f32.gmra.mxu0 %v6207
      %v6378 = vpop.f32.mrf.mxu0
      %v6379 = vadd.f32 0.0, %v6378
      %v6380 = vpop.f32.mrf.mxu0
      %6381 = vmatprep.mubr.f32.mxu0 0.0
      %6382 = vmatmul.mubr.f32.gmra.mxu0 %v6208
      %v6383 = vpop.f32.mrf.mxu0
      %v6384 = vadd.f32 0.0, %v6383
      %v6385 = vpop.f32.mrf.mxu0
      %6386 = vmatprep.mubr.f32.mxu0 0.0
      %6387 = vmatmul.mubr.f32.gmra.mxu0 %v6209
      %v6388 = vpop.f32.mrf.mxu0
      %v6389 = vadd.f32 0.0, %v6388
      %v6390 = vpop.f32.mrf.mxu0
      %6391 = vmatprep.mubr.f32.mxu0 0.0
      %6392 = vmatmul.mubr.f32.gmra.mxu0 %v6210
      %v6393 = vpop.f32.mrf.mxu0
      %v6394 = vadd.f32 0.0, %v6393
      %v6395 = vpop.f32.mrf.mxu0
      %6396 = vmatprep.mubr.f32.mxu0 0.0
      %6397 = vmatmul.mubr.f32.gmra.mxu0 %v6211
      %v6398 = vpop.f32.mrf.mxu0
      %v6399 = vadd.f32 0.0, %v6398
      %v6400 = vpop.f32.mrf.mxu0
      %6401 = vmatprep.mubr.f32.mxu0 0.0
      %6402 = vmatmul.mubr.f32.gmra.mxu0 %v6212
      %v6403 = vpop.f32.mrf.mxu0
      %v6404 = vadd.f32 0.0, %v6403
      %v6405 = vpop.f32.mrf.mxu0
      %6406 = vmatprep.mubr.f32.mxu0 0.0
      %6407 = vmatmul.mubr.f32.gmra.mxu0 %v6213
      %v6408 = vpop.f32.mrf.mxu0
      %v6409 = vadd.f32 0.0, %v6408
      %v6410 = vpop.f32.mrf.mxu0
      %6411 = vmatprep.mubr.f32.mxu0 0.0
      %6412 = vmatmul.mubr.f32.gmra.mxu0 %v6214
      %v6413 = vpop.f32.mrf.mxu0
      %v6414 = vadd.f32 0.0, %v6413
      %v6415 = vpop.f32.mrf.mxu0
      %6416 = vmatprep.mubr.f32.mxu0 0.0
      %6417 = vmatmul.mubr.f32.gmra.mxu0 %v6215
      %v6418 = vpop.f32.mrf.mxu0
      %v6419 = vadd.f32 0.0, %v6418
      %v6420 = vpop.f32.mrf.mxu0
      %6421 = vmatprep.mubr.f32.mxu0 0.0
      %6422 = vmatmul.mubr.f32.gmra.mxu0 %v6216
      %v6423 = vpop.f32.mrf.mxu0
      %v6424 = vadd.f32 0.0, %v6423
      %v6425 = vpop.f32.mrf.mxu0
      %6426 = vmatprep.mubr.f32.mxu0 0.0
      %6427 = vmatmul.mubr.f32.gmra.mxu0 %v6217
      %v6428 = vpop.f32.mrf.mxu0
      %v6429 = vadd.f32 0.0, %v6428
      %v6430 = vpop.f32.mrf.mxu0
      %6431 = vmatprep.mubr.f32.mxu0 0.0
      %6432 = vmatmul.mubr.f32.gmra.mxu0 %v6218
      %v6433 = vpop.f32.mrf.mxu0
      %v6434 = vadd.f32 0.0, %v6433
      %v6435 = vpop.f32.mrf.mxu0
      %6436 = vmatprep.mubr.f32.mxu0 0.0
      %6437 = vmatmul.mubr.f32.gmra.mxu0 %v6219
      %v6438 = vpop.f32.mrf.mxu0
      %v6439 = vadd.f32 0.0, %v6438
      %v6440 = vpop.f32.mrf.mxu0
      %6441 = vmatprep.mubr.f32.mxu0 0.0
      %6442 = vmatmul.mubr.f32.gmra.mxu0 %v6220
      %v6443 = vpop.f32.mrf.mxu0
      %v6444 = vadd.f32 0.0, %v6443
      %v6445 = vpop.f32.mrf.mxu0
      %6446 = vmatprep.mubr.f32.mxu0 0.0
      %6447 = vmatmul.mubr.f32.gmra.mxu0 %v6221
      %v6448 = vpop.f32.mrf.mxu0
      %v6449 = vadd.f32 0.0, %v6448
      %v6450 = vpop.f32.mrf.mxu0
      %6451 = vmatprep.mubr.f32.mxu0 0.0
      %6452 = vmatmul.mubr.f32.gmra.mxu0 %v6222
      %v6453 = vpop.f32.mrf.mxu0
      %v6454 = vadd.f32 0.0, %v6453
      %v6455 = vpop.f32.mrf.mxu0
      %6456 = vmatprep.mubr.f32.mxu0 0.0
      %6457 = vmatmul.mubr.f32.gmra.mxu0 %v6223
      %v6458 = vpop.f32.mrf.mxu0
      %v6459 = vadd.f32 0.0, %v6458
      %v6460 = vpop.f32.mrf.mxu0
      %6461 = vmatprep.mubr.f32.mxu0 0.0
      %6462 = vmatmul.mubr.f32.gmra.mxu0 %v6224
      %v6463 = vpop.f32.mrf.mxu0
      %v6464 = vadd.f32 0.0, %v6463
      %v6465 = vpop.f32.mrf.mxu0
      %6466 = vmatprep.mubr.f32.mxu0 0.0
      %6467 = vmatmul.mubr.f32.gmra.mxu0 %v6225
      %v6468 = vpop.f32.mrf.mxu0
      %v6469 = vadd.f32 0.0, %v6468
      %v6470 = vpop.f32.mrf.mxu0
      %6471 = vmatprep.mubr.f32.mxu0 0.0
      %6472 = vmatmul.mubr.f32.gmra.mxu0 %v6226
      %v6473 = vpop.f32.mrf.mxu0
      %v6474 = vadd.f32 0.0, %v6473
      %v6475 = vpop.f32.mrf.mxu0
      %6476 = vmatprep.mubr.f32.mxu0 0.0
      %6477 = vmatmul.mubr.f32.gmra.mxu0 %v6227
      %v6478 = vpop.f32.mrf.mxu0
      %v6479 = vadd.f32 0.0, %v6478
      %v6480 = vpop.f32.mrf.mxu0
      %6481 = vmatprep.mubr.f32.mxu0 0.0
      %6482 = vmatmul.mubr.f32.gmra.mxu0 %v6228
      %v6483 = vpop.f32.mrf.mxu0
      %v6484 = vadd.f32 0.0, %v6483
      %v6485 = vpop.f32.mrf.mxu0
      %6486 = vmatprep.mubr.f32.mxu0 0.0
      %6487 = vmatmul.mubr.f32.gmra.mxu0 %v6229
      %v6488 = vpop.f32.mrf.mxu0
      %v6489 = vadd.f32 0.0, %v6488
      %v6490 = vpop.f32.mrf.mxu0
      %6491 = vdwg.mxu0
      %v6492 = vadd.f32 %v6158, %v6314
      %v6493 = vadd.f32 %v6159, %v6319
      %v6494 = vadd.f32 %v6160, %v6324
      %v6495 = vadd.f32 %v6161, %v6329
      %v6496 = vadd.f32 %v6162, %v6334
      %v6497 = vadd.f32 %v6163, %v6339
      %v6498 = vadd.f32 %v6164, %v6344
      %v6499 = vadd.f32 %v6165, %v6349
      %v6500 = vadd.f32 %v6166, %v6354
      %v6501 = vadd.f32 %v6167, %v6359
      %v6502 = vadd.f32 %v6168, %v6364
      %v6503 = vadd.f32 %v6169, %v6369
      %v6504 = vadd.f32 %v6170, %v6374
      %v6505 = vadd.f32 %v6171, %v6379
      %v6506 = vadd.f32 %v6172, %v6384
      %v6507 = vadd.f32 %v6173, %v6389
      %v6508 = vadd.f32 %v6174, %v6394
      %v6509 = vadd.f32 %v6175, %v6399
      %v6510 = vadd.f32 %v6176, %v6404
      %v6511 = vadd.f32 %v6177, %v6409
      %v6512 = vadd.f32 %v6178, %v6414
      %v6513 = vadd.f32 %v6179, %v6419
      %v6514 = vadd.f32 %v6180, %v6424
      %v6515 = vadd.f32 %v6181, %v6429
      %v6516 = vadd.f32 %v6182, %v6434
      %v6517 = vadd.f32 %v6183, %v6439
      %v6518 = vadd.f32 %v6184, %v6444
      %v6519 = vadd.f32 %v6185, %v6449
      %v6520 = vadd.f32 %v6186, %v6454
      %v6521 = vadd.f32 %v6187, %v6459
      %v6522 = vadd.f32 %v6188, %v6464
      %v6523 = vadd.f32 %v6189, %v6469
      %v6524 = vadd.f32 %v6190, %v6474
      %v6525 = vadd.f32 %v6191, %v6479
      %v6526 = vadd.f32 %v6192, %v6484
      %v6527 = vadd.f32 %v6193, %v6489
      %v6528 = vld [vmem:[%s4] sm:$0x1]
      %v6530 = vlaneseq
      %v6531 = vshrl.u32 %v6530, 7
      %v6532 = vsub.s32 0, %v6531
      %v6533 = vrot.slane %v6528, %v6532
      %v6535 = vadd.f32 %v6492, %v6533
      %v6536 = vadd.f32 %v6493, %v6533
      %v6537 = vadd.f32 %v6494, %v6533
      %v6538 = vadd.f32 %v6495, %v6533
      %v6539 = vadd.f32 %v6496, %v6533
      %v6540 = vadd.f32 %v6497, %v6533
      %v6541 = vadd.f32 %v6498, %v6533
      %v6542 = vadd.f32 %v6499, %v6533
      %v6543 = vadd.f32 %v6500, %v6533
      %v6544 = vadd.f32 %v6501, %v6533
      %v6545 = vadd.f32 %v6502, %v6533
      %v6546 = vadd.f32 %v6503, %v6533
      %v6547 = vadd.f32 %v6504, %v6533
      %v6548 = vadd.f32 %v6505, %v6533
      %v6549 = vadd.f32 %v6506, %v6533
      %v6550 = vadd.f32 %v6507, %v6533
      %v6551 = vadd.f32 %v6508, %v6533
      %v6552 = vadd.f32 %v6509, %v6533
      %v6553 = vadd.f32 %v6510, %v6533
      %v6554 = vadd.f32 %v6511, %v6533
      %v6555 = vadd.f32 %v6512, %v6533
      %v6556 = vadd.f32 %v6513, %v6533
      %v6557 = vadd.f32 %v6514, %v6533
      %v6558 = vadd.f32 %v6515, %v6533
      %v6559 = vadd.f32 %v6516, %v6533
      %v6560 = vadd.f32 %v6517, %v6533
      %v6561 = vadd.f32 %v6518, %v6533
      %v6562 = vadd.f32 %v6519, %v6533
      %v6563 = vadd.f32 %v6520, %v6533
      %v6564 = vadd.f32 %v6521, %v6533
      %v6565 = vadd.f32 %v6522, %v6533
      %v6566 = vadd.f32 %v6523, %v6533
      %v6567 = vadd.f32 %v6524, %v6533
      %v6568 = vadd.f32 %v6525, %v6533
      %v6569 = vadd.f32 %v6526, %v6533
      %v6570 = vadd.f32 %v6527, %v6533
      %v6571 = vmax.f32 %v6535, 0.0
      %v6572 = vmax.f32 %v6536, 0.0
      %v6573 = vmax.f32 %v6537, 0.0
      %v6574 = vmax.f32 %v6538, 0.0
      %v6575 = vmax.f32 %v6539, 0.0
      %v6576 = vmax.f32 %v6540, 0.0
      %v6577 = vmax.f32 %v6541, 0.0
      %v6578 = vmax.f32 %v6542, 0.0
      %v6579 = vmax.f32 %v6543, 0.0
      %v6580 = vmax.f32 %v6544, 0.0
      %v6581 = vmax.f32 %v6545, 0.0
      %v6582 = vmax.f32 %v6546, 0.0
      %v6583 = vmax.f32 %v6547, 0.0
      %v6584 = vmax.f32 %v6548, 0.0
      %v6585 = vmax.f32 %v6549, 0.0
      %v6586 = vmax.f32 %v6550, 0.0
      %v6587 = vmax.f32 %v6551, 0.0
      %v6588 = vmax.f32 %v6552, 0.0
      %v6589 = vmax.f32 %v6553, 0.0
      %v6590 = vmax.f32 %v6554, 0.0
      %v6591 = vmax.f32 %v6555, 0.0
      %v6592 = vmax.f32 %v6556, 0.0
      %v6593 = vmax.f32 %v6557, 0.0
      %v6594 = vmax.f32 %v6558, 0.0
      %v6595 = vmax.f32 %v6559, 0.0
      %v6596 = vmax.f32 %v6560, 0.0
      %v6597 = vmax.f32 %v6561, 0.0
      %v6598 = vmax.f32 %v6562, 0.0
      %v6599 = vmax.f32 %v6563, 0.0
      %v6600 = vmax.f32 %v6564, 0.0
      %v6601 = vmax.f32 %v6565, 0.0
      %v6602 = vmax.f32 %v6566, 0.0
      %v6603 = vmax.f32 %v6567, 0.0
      %v6604 = vmax.f32 %v6568, 0.0
      %v6605 = vmax.f32 %v6569, 0.0
      %v6606 = vmax.f32 %v6570, 0.0
      %6607 = vst [vmem:[%s251] sm:$0xff] %v6571
      %6608 = vst [vmem:[%s251 + $0x8] sm:$0xff] %v6572
      %6609 = vst [vmem:[%s251 + $0x10] sm:$0xff] %v6573
      %6610 = vst [vmem:[%s251 + $0x18] sm:$0xff] %v6574
      %6611 = vst [vmem:[%s251 + $0x20] sm:$0xff] %v6575
      %6612 = vst [vmem:[%s251 + $0x28] sm:$0xff] %v6576
      %6613 = vst [vmem:[%s251 + $0x30] sm:$0xff] %v6577
      %6614 = vst [vmem:[%s251 + $0x38] sm:$0xff] %v6578
      %6615 = vst [vmem:[%s251 + $0x40] sm:$0xff] %v6579
      %6616 = vst [vmem:[%s251 + $0x48] sm:$0xff] %v6580
      %6617 = vst [vmem:[%s251 + $0x50] sm:$0xff] %v6581
      %6618 = vst [vmem:[%s251 + $0x58] sm:$0xff] %v6582
      %6619 = vst [vmem:[%s251 + $0x60] sm:$0xff] %v6583
      %6620 = vst [vmem:[%s251 + $0x68] sm:$0xff] %v6584
      %6621 = vst [vmem:[%s251 + $0x70] sm:$0xff] %v6585
      %6622 = vst [vmem:[%s251 + $0x78] sm:$0xff] %v6586
      %6623 = vst [vmem:[%s251 + $0x80] sm:$0xff] %v6587
      %6624 = vst [vmem:[%s251 + $0x88] sm:$0xff] %v6588
      %6625 = vst [vmem:[%s251 + $0x90] sm:$0xff] %v6589
      %6626 = vst [vmem:[%s251 + $0x98] sm:$0xff] %v6590
      %6627 = vst [vmem:[%s251 + $0xa0] sm:$0xff] %v6591
      %6628 = vst [vmem:[%s251 + $0xa8] sm:$0xff] %v6592
      %6629 = vst [vmem:[%s251 + $0xb0] sm:$0xff] %v6593
      %6630 = vst [vmem:[%s251 + $0xb8] sm:$0xff] %v6594
      %6631 = vst [vmem:[%s251 + $0xc0] sm:$0xff] %v6595
      %6632 = vst [vmem:[%s251 + $0xc8] sm:$0xff] %v6596
      %6633 = vst [vmem:[%s251 + $0xd0] sm:$0xff] %v6597
      %6634 = vst [vmem:[%s251 + $0xd8] sm:$0xff] %v6598
      %6635 = vst [vmem:[%s251 + $0xe0] sm:$0xff] %v6599
      %6636 = vst [vmem:[%s251 + $0xe8] sm:$0xff] %v6600
      %6637 = vst [vmem:[%s251 + $0xf0] sm:$0xff] %v6601
      %6638 = vst [vmem:[%s251 + $0xf8] sm:$0xff] %v6602
      %6639 = vst [vmem:[%s251 + $0x100] sm:$0xff] %v6603
      %6640 = vst [vmem:[%s251 + $0x108] sm:$0xff] %v6604
      %6641 = vst [vmem:[%s251 + $0x110] sm:$0xff] %v6605
      %6642 = vst [vmem:[%s251 + $0x118] sm:$0xff] %v6606
      %p6643 = scmp.lt.s32.totalorder %s17, 1
      %s6644 = scalar_select %p6643, %s17, 1
      %s6645 = smul.addr %s6644, 36
      %s6646 = smul.addr %s6645, 8
      %s6647 = scalar_lea.vmem %s6, %s6646
      // Predicated region
      $region45: #{unet_bottleneck.1} parent=43 // pred_check
        %p6648 = pneg %p166
      $region46: #{unet_bottleneck.1} parent=43 // pred_check_branch
        %6650 = sbr.rel (%p6648) target = $region48
      $region47: #{unet_bottleneck.1} parent=43 // pred_region
        _
      $region48: #{unet_bottleneck.1} parent=43 // pred_fallthru
        _
    $region44: #{unet_bottleneck.1} parent=5 // pred_fallthru
      _
    %p6651 = scmp.le.s32.totalorder 2, %s12
    // Predicated region
    $region49: #{unet_bottleneck.1} parent=5 // pred_check
      %p6652 = pneg %p6651
    $region50: #{unet_bottleneck.1} parent=5 // pred_check_branch
      %6654 = sbr.rel (%p6652) target = $region52
    $region51: #{unet_bottleneck.1} parent=5 // pred_region
      %s6655 = ssub.s32 %s12, 2
      // Predicated region
      $region53: #{unet_bottleneck.1} parent=51 // pred_check
        %p6656 = pneg %p172
      $region54: #{unet_bottleneck.1} parent=51 // pred_check_branch
        %6658 = sbr.rel (%p6656) target = $region56
      $region55: #{unet_bottleneck.1} parent=51 // pred_region
        %p6659 = scmp.lt.s32.totalorder %s18, 1
        %s6660 = scalar_select %p6659, %s18, 1
        %s6661 = smul.addr %s6660, 36
        %s6662 = smul.addr %s6661, 8
        %s6663 = scalar_lea.vmem %s6, %s6662
      $region56: #{unet_bottleneck.1} parent=51 // pred_fallthru
        _
    $region52: #{unet_bottleneck.1} parent=5 // pred_fallthru
      _
  $region6: #{unet_bottleneck.1} parent=0 // loop_footer
    %s16 = sadd.s32 1, %s12
  $region7: #{unet_bottleneck.1} parent=0 // loop_footer_branch
    %11 = sbr.rel target = $region3
  $region8: #{unet_bottleneck.1} parent=0 // loop_exit
    _

</llo_original>
